<compile_context>
chip_gen: v6e
topology: v6e:2x2x1
jax: 0.10.0
libtpu: 0.0.40
codegen_flags: <defaults>
</compile_context>

<pallas_src>
import functools

import jax
import jax.numpy as jnp
from jax.experimental import pallas as pl
from jax.experimental.pallas import tpu as pltpu


# Static architecture constants. Spatial must be 14x14 so AvgPool2d(5,3) -> 4x4
# and flatten gives 128*4*4 = 2048 = fc1.in_features (as in the PyTorch module).
H = W = 14
KPOOL, SPOOL = 5, 3
OH = (H - KPOOL) // SPOOL + 1          # 4
OW = (W - KPOOL) // SPOOL + 1          # 4
HWP = OH * OW                          # 16 pooled spatial positions
CONV_OUT = 128                         # 1x1 conv output channels
FC1_IN = CONV_OUT * HWP                # 2048
FC1_OUT = 1024
FC2_PAD = 128                          # fc2 output padded to one full lane width


def _make_pool_matrix_t():
    """(HWP, H*W) matrix M so pooled[p] = M[p, :] . x_flat  (5x5 mean, stride 3)."""
    m = [[0.0] * (H * W) for _ in range(HWP)]
    for oh in range(OH):
        for ow in range(OW):
            p = oh * OW + ow
            for kh in range(KPOOL):
                for kw in range(KPOOL):
                    m[p][(oh * SPOOL + kh) * W + (ow * SPOOL + kw)] = 1.0 / (KPOOL * KPOOL)
    return jnp.array(m, dtype=jnp.float32)


def prepare_params(params):
    """One-time weight prep (NOT in the per-forward hot path):
    transposes, fc1 row permutation, fc2 lane padding, bf16 casts."""
    cin = params["conv_w"].shape[1]
    num_classes = params["fc2_w"].shape[0]
    assert params["fc1_w"].shape == (FC1_OUT, FC1_IN)

    pool_t = _make_pool_matrix_t()                                       # (16, 196) f32
    wc = params["conv_w"].reshape(CONV_OUT, cin).T.astype(jnp.float32)   # (C, 128)
    bc = params["conv_b"].reshape(1, CONV_OUT).astype(jnp.float32)       # (1, 128)

    # PyTorch flatten order is channel-major: feature f = o*16 + p.
    # Kernel activations are position-major (p rows, o lanes), so permute the
    # fc1 weight rows here, once:  w1[p, o, n] = fc1_w[n, o*16 + p].
    w1 = (params["fc1_w"].T                   # (2048, 1024), rows f = o*16+p
          .reshape(CONV_OUT, HWP, FC1_OUT)    # (o, p, n)
          .transpose(1, 0, 2)                 # (p, o, n)
          .astype(jnp.bfloat16))              # (16, 128, 1024) bf16
    b1 = params["fc1_b"].reshape(1, FC1_OUT).astype(jnp.float32)

    w2 = (jnp.zeros((FC1_OUT, FC2_PAD), jnp.float32)
          .at[:, :num_classes].set(params["fc2_w"].T)
          .astype(jnp.bfloat16))                                         # (1024, 128) bf16
    b2 = jnp.zeros((1, FC2_PAD), jnp.float32).at[0, :num_classes].set(params["fc2_b"])

    prepped = dict(pool_t=pool_t, wc=wc, bc=bc, w1=w1, b1=b1, w2=w2, b2=b2)
    return prepped, num_classes


# ----------------------------------------------------------------------------
# Fused kernel: pool -> 1x1 conv + ReLU -> fc1 + ReLU -> fc2 (padded), one shot.
# ----------------------------------------------------------------------------
def _aux_fused_kernel(xt_ref, poolt_ref, wc_ref, bc_ref, w1_ref, b1_ref,
                      w2_ref, b2_ref, o_ref, *, batch, cin):
    pool_t = poolt_ref[...]                       # (16, 196) f32
    wc = wc_ref[...]                              # (C, 128)  f32
    bc = bc_ref[...]                              # (1, 128)  f32

    # --- AvgPool(5,3) + 1x1 conv + ReLU, per sample (batch is tiny & static) ---
    conv = []
    for b in range(batch):
        xb_t = xt_ref[:, b * cin:(b + 1) * cin]                               # (196, C)
        feat = jnp.dot(pool_t, xb_t, preferred_element_type=jnp.float32)      # (16, C) pooled
        cb = jnp.dot(feat, wc, preferred_element_type=jnp.float32) + bc       # (16, 128)
        conv.append(jnp.maximum(cb, 0.0))                                     # position-major

    # --- fc1 (2048 -> 1024): 16 K-blocks of 128, bf16 weights, f32 accumulation ---
    acc = jnp.zeros((batch, FC1_OUT), jnp.float32)
    for p in range(HWP):
        rows_p = jnp.concatenate([conv[b][p:p + 1, :] for b in range(batch)],
                                 axis=0)                                      # (B, 128)
        acc = acc + jnp.dot(rows_p.astype(jnp.bfloat16), w1_ref[p],
                            preferred_element_type=jnp.float32)
    h1 = jnp.maximum(acc + b1_ref[...], 0.0)                                  # (B, 1024)

    # --- dropout(training=False) is identity; fc2 (1024 -> 128 padded) ---
    out = jnp.dot(h1.astype(jnp.bfloat16), w2_ref[...],
                  preferred_element_type=jnp.float32) + b2_ref[...]
    o_ref[...] = out.astype(o_ref.dtype)


@functools.partial(jax.jit, static_argnames=("num_classes",))
def inception_aux_forward(x, prepped, *, num_classes):
    B, C, h, w = x.shape
    assert (h, w) == (H, W), "aux head needs 14x14 spatial (pool(5,3)->4x4->2048)"

    # Cheap input prep in XLA (6 KB): flatten spatial + transpose so the kernel
    # runs nothing but plain 2-D matmuls (no in-kernel relayouts).
    xt = jnp.transpose(x.reshape(B * C, h * w).astype(jnp.float32))           # (196, B*C)

    kernel = functools.partial(_aux_fused_kernel, batch=B, cin=C)
    in_specs = [
        pl.BlockSpec((h * w, B * C), lambda i: (0, 0)),                 # xt
        pl.BlockSpec((HWP, h * w), lambda i: (0, 0)),                   # pool_t
        pl.BlockSpec((C, CONV_OUT), lambda i: (0, 0)),                  # wc
        pl.BlockSpec((1, CONV_OUT), lambda i: (0, 0)),                  # bc
        pl.BlockSpec((HWP, CONV_OUT, FC1_OUT), lambda i: (0, 0, 0)),    # w1 (bf16)
        pl.BlockSpec((1, FC1_OUT), lambda i: (0, 0)),                   # b1
        pl.BlockSpec((FC1_OUT, FC2_PAD), lambda i: (0, 0)),             # w2 (bf16, padded)
        pl.BlockSpec((1, FC2_PAD), lambda i: (0, 0)),                   # b2
    ]
    out_pad = pl.pallas_call(
        kernel,
        out_shape=jax.ShapeDtypeStruct((B, FC2_PAD), jnp.float32),
        grid=(1,),
        in_specs=in_specs,
        out_specs=pl.BlockSpec((B, FC2_PAD), lambda i: (0, 0)),
        compiler_params=pltpu.CompilerParams(
            dimension_semantics=("arbitrary",),
            vmem_limit_bytes=32 * 1024 * 1024),
    )(xt, prepped["pool_t"], prepped["wc"], prepped["bc"],
      prepped["w1"], prepped["b1"], prepped["w2"], prepped["b2"])
    # TODO(synk): for very large batch, tile fc1's output dim over a "parallel"
    # grid axis to shard the weight stream across v7x's two TensorCores.
    return out_pad[:, :num_classes]


# ----------------------------------------------------------------------------
# Pure-JAX reference (mirrors the PyTorch forward; fc weights rounded through
# bf16 exactly like the kernel so only activation rounding differs).
# ----------------------------------------------------------------------------
def inception_aux_reference(x, params):
    B, C, h, w = x.shape
    xs = x.astype(jnp.float32)
    summed = jax.lax.reduce_window(xs, 0.0, jax.lax.add,
                                   (1, 1, KPOOL, KPOOL), (1, 1, SPOOL, SPOOL), "VALID")
    pooled = summed / float(KPOOL * KPOOL)                                   # (B, C, 4, 4)
    wc = params["conv_w"].reshape(CONV_OUT, C)
    conv = jnp.einsum("bchw,oc->bohw", pooled, wc) + params["conv_b"][None, :, None, None]
    conv = jnp.maximum(conv, 0.0)
    flat = conv.reshape(B, -1)                                               # channel-major flatten
    w1 = params["fc1_w"].astype(jnp.bfloat16).astype(jnp.float32)
    w2 = params["fc2_w"].astype(jnp.bfloat16).astype(jnp.float32)
    h1 = jnp.maximum(flat @ w1.T + params["fc1_b"], 0.0)
    return h1 @ w2.T + params["fc2_b"]


if __name__ == "__main__":
    B, C = 2, 4                      # small test shapes; spatial fixed at 14x14 by the module
    NUM_CLASSES = 10

    key = jax.random.PRNGKey(0)
    kx, k1, k2, k3, k4, k5, k6 = jax.random.split(key, 7)

    x = jax.random.normal(kx, (B, C, H, W), dtype=jnp.float32)

    params = {
        # Conv2d(C, 128, kernel_size=1): weight (128, C, 1, 1), bias (128,)
        "conv_w": jax.random.normal(k1, (CONV_OUT, C, 1, 1), jnp.float32) * 0.05,
        "conv_b": jax.random.normal(k2, (CONV_OUT,), jnp.float32) * 0.01,
        # Linear(2048, 1024)
        "fc1_w": jax.random.normal(k3, (FC1_OUT, FC1_IN), jnp.float32) * 0.02,
        "fc1_b": jax.random.normal(k4, (FC1_OUT,), jnp.float32) * 0.01,
        # Linear(1024, num_classes)
        "fc2_w": jax.random.normal(k5, (NUM_CLASSES, FC1_OUT), jnp.float32) * 0.02,
        "fc2_b": jax.random.normal(k6, (NUM_CLASSES,), jnp.float32) * 0.01,
    }

    prepped, nc = prepare_params(params)          # one-time weight prep (bf16, permuted)

    out = jax.block_until_ready(inception_aux_forward(x, prepped, num_classes=nc))
    ref = jax.block_until_ready(inception_aux_reference(x, params))

    assert out.shape == (B, NUM_CLASSES), out.shape
    assert jnp.allclose(out, ref, rtol=2e-2, atol=2e-3), (
        "mismatch", float(jnp.max(jnp.abs(out - ref))))

    print("KERNEL_OK")
</pallas_src>

<mosaic_0001>
module attributes {stable_mosaic.version = 11 : i64} {
  func.func @_aux_fused_kernel(%arg0: i32, %arg1: memref<196x8xf32, #tpu.memory_space<vmem>>, %arg2: memref<16x196xf32, #tpu.memory_space<vmem>>, %arg3: memref<4x128xf32, #tpu.memory_space<vmem>>, %arg4: memref<1x128xf32, #tpu.memory_space<vmem>>, %arg5: memref<16x128x1024xbf16, #tpu.memory_space<vmem>>, %arg6: memref<1x1024xf32, #tpu.memory_space<vmem>>, %arg7: memref<1024x128xbf16, #tpu.memory_space<vmem>>, %arg8: memref<1x128xf32, #tpu.memory_space<vmem>>, %arg9: memref<2x128xf32, #tpu.memory_space<vmem>>) attributes {dimension_semantics = [#tpu.dimension_semantics<arbitrary>], iteration_bounds = array<i64: 1>, scalar_prefetch = 0 : i64, scratch_operands = 0 : i64, tpu.core_type = #tpu.core_type<tc>, window_params = [{pipeline_mode = #tpu.pipeline_mode<synchronous>, transform_indices = @transform_0, window_bounds = array<i64: 196, 8>}, {pipeline_mode = #tpu.pipeline_mode<synchronous>, transform_indices = @transform_1, window_bounds = array<i64: 16, 196>}, {pipeline_mode = #tpu.pipeline_mode<synchronous>, transform_indices = @transform_2, window_bounds = array<i64: 4, 128>}, {pipeline_mode = #tpu.pipeline_mode<synchronous>, transform_indices = @transform_3, window_bounds = array<i64: 1, 128>}, {pipeline_mode = #tpu.pipeline_mode<synchronous>, transform_indices = @transform_4, window_bounds = array<i64: 16, 128, 1024>}, {pipeline_mode = #tpu.pipeline_mode<synchronous>, transform_indices = @transform_5, window_bounds = array<i64: 1, 1024>}, {pipeline_mode = #tpu.pipeline_mode<synchronous>, transform_indices = @transform_6, window_bounds = array<i64: 1024, 128>}, {pipeline_mode = #tpu.pipeline_mode<synchronous>, transform_indices = @transform_7, window_bounds = array<i64: 1, 128>}, {pipeline_mode = #tpu.pipeline_mode<synchronous>, transform_indices = @transform_8, window_bounds = array<i64: 2, 128>}]} {
    %c0 = arith.constant 0 : index
    %c0_0 = arith.constant 0 : index
    %0 = vector.load %arg2[%c0, %c0_0] : memref<16x196xf32, #tpu.memory_space<vmem>>, vector<16x196xf32>
    %c0_1 = arith.constant 0 : index
    %c0_2 = arith.constant 0 : index
    %1 = vector.load %arg3[%c0_1, %c0_2] : memref<4x128xf32, #tpu.memory_space<vmem>>, vector<4x128xf32>
    %c0_3 = arith.constant 0 : index
    %c0_4 = arith.constant 0 : index
    %2 = vector.load %arg4[%c0_3, %c0_4] : memref<1x128xf32, #tpu.memory_space<vmem>>, vector<1x128xf32>
    %c0_5 = arith.constant 0 : index
    %c0_6 = arith.constant 0 : index
    %3 = vector.load %arg1[%c0_5, %c0_6] : memref<196x8xf32, #tpu.memory_space<vmem>>, vector<196x4xf32>
    %cst = arith.constant dense<0.000000e+00> : vector<16x4xf32>
    %4 = tpu.matmul %0, %3, %cst {dimension_numbers = #tpu.dot_dimension_numbers<[1], [0], [0], [1], [0, 0, 1, 1], [], []>} : vector<16x196xf32>, vector<196x4xf32>, vector<16x4xf32> -> vector<16x4xf32>
    %cst_7 = arith.constant dense<0.000000e+00> : vector<16x128xf32>
    %5 = tpu.matmul %4, %1, %cst_7 {dimension_numbers = #tpu.dot_dimension_numbers<[1], [0], [0], [1], [0, 0, 1, 1], [], []>} : vector<16x4xf32>, vector<4x128xf32>, vector<16x128xf32> -> vector<16x128xf32>
    %6 = vector.broadcast %2 : vector<1x128xf32> to vector<16x128xf32>
    %7 = arith.addf %5, %6 : vector<16x128xf32>
    %cst_8 = arith.constant 0.000000e+00 : f32
    %8 = vector.broadcast %cst_8 : f32 to vector<16x128xf32>
    %9 = arith.maximumf %7, %8 : vector<16x128xf32>
    %c0_9 = arith.constant 0 : index
    %c4 = arith.constant 4 : index
    %10 = vector.load %arg1[%c0_9, %c4] : memref<196x8xf32, #tpu.memory_space<vmem>>, vector<196x4xf32>
    %cst_10 = arith.constant dense<0.000000e+00> : vector<16x4xf32>
    %11 = tpu.matmul %0, %10, %cst_10 {dimension_numbers = #tpu.dot_dimension_numbers<[1], [0], [0], [1], [0, 0, 1, 1], [], []>} : vector<16x196xf32>, vector<196x4xf32>, vector<16x4xf32> -> vector<16x4xf32>
    %cst_11 = arith.constant dense<0.000000e+00> : vector<16x128xf32>
    %12 = tpu.matmul %11, %1, %cst_11 {dimension_numbers = #tpu.dot_dimension_numbers<[1], [0], [0], [1], [0, 0, 1, 1], [], []>} : vector<16x4xf32>, vector<4x128xf32>, vector<16x128xf32> -> vector<16x128xf32>
    %13 = vector.broadcast %2 : vector<1x128xf32> to vector<16x128xf32>
    %14 = arith.addf %12, %13 : vector<16x128xf32>
    %cst_12 = arith.constant 0.000000e+00 : f32
    %15 = vector.broadcast %cst_12 : f32 to vector<16x128xf32>
    %16 = arith.maximumf %14, %15 : vector<16x128xf32>
    %cst_13 = arith.constant 0.000000e+00 : f32
    %17 = vector.broadcast %cst_13 : f32 to vector<2x1024xf32>
    %18 = vector.extract_strided_slice %9 {offsets = [0, 0], sizes = [1, 128], strides = [1, 1]} : vector<16x128xf32> to vector<1x128xf32>
    %19 = vector.extract_strided_slice %16 {offsets = [0, 0], sizes = [1, 128], strides = [1, 1]} : vector<16x128xf32> to vector<1x128xf32>
    %20 = tpu.concatenate %18, %19 in 0 : vector<1x128xf32>, vector<1x128xf32> -> vector<2x128xf32>
    %21 = arith.truncf %20 : vector<2x128xf32> to vector<2x128xbf16>
    %c0_14 = arith.constant 0 : index
    %c0_15 = arith.constant 0 : index
    %c0_16 = arith.constant 0 : index
    %22 = vector.load %arg5[%c0_14, %c0_15, %c0_16] : memref<16x128x1024xbf16, #tpu.memory_space<vmem>>, vector<1x128x1024xbf16>
    %23 = vector.shape_cast %22 : vector<1x128x1024xbf16> to vector<128x1024xbf16>
    %cst_17 = arith.constant dense<0.000000e+00> : vector<2x1024xf32>
    %24 = tpu.matmul %21, %23, %cst_17 {dimension_numbers = #tpu.dot_dimension_numbers<[1], [0], [0], [1], [0, 0, 1, 1], [], []>} : vector<2x128xbf16>, vector<128x1024xbf16>, vector<2x1024xf32> -> vector<2x1024xf32>
    %25 = arith.addf %17, %24 : vector<2x1024xf32>
    %26 = vector.extract_strided_slice %9 {offsets = [1, 0], sizes = [1, 128], strides = [1, 1]} : vector<16x128xf32> to vector<1x128xf32>
    %27 = vector.extract_strided_slice %16 {offsets = [1, 0], sizes = [1, 128], strides = [1, 1]} : vector<16x128xf32> to vector<1x128xf32>
    %28 = tpu.concatenate %26, %27 in 0 : vector<1x128xf32>, vector<1x128xf32> -> vector<2x128xf32>
    %29 = arith.truncf %28 : vector<2x128xf32> to vector<2x128xbf16>
    %c1 = arith.constant 1 : index
    %c0_18 = arith.constant 0 : index
    %c0_19 = arith.constant 0 : index
    %30 = vector.load %arg5[%c1, %c0_18, %c0_19] : memref<16x128x1024xbf16, #tpu.memory_space<vmem>>, vector<1x128x1024xbf16>
    %31 = vector.shape_cast %30 : vector<1x128x1024xbf16> to vector<128x1024xbf16>
    %cst_20 = arith.constant dense<0.000000e+00> : vector<2x1024xf32>
    %32 = tpu.matmul %29, %31, %cst_20 {dimension_numbers = #tpu.dot_dimension_numbers<[1], [0], [0], [1], [0, 0, 1, 1], [], []>} : vector<2x128xbf16>, vector<128x1024xbf16>, vector<2x1024xf32> -> vector<2x1024xf32>
    %33 = arith.addf %25, %32 : vector<2x1024xf32>
    %34 = vector.extract_strided_slice %9 {offsets = [2, 0], sizes = [1, 128], strides = [1, 1]} : vector<16x128xf32> to vector<1x128xf32>
    %35 = vector.extract_strided_slice %16 {offsets = [2, 0], sizes = [1, 128], strides = [1, 1]} : vector<16x128xf32> to vector<1x128xf32>
    %36 = tpu.concatenate %34, %35 in 0 : vector<1x128xf32>, vector<1x128xf32> -> vector<2x128xf32>
    %37 = arith.truncf %36 : vector<2x128xf32> to vector<2x128xbf16>
    %c2 = arith.constant 2 : index
    %c0_21 = arith.constant 0 : index
    %c0_22 = arith.constant 0 : index
    %38 = vector.load %arg5[%c2, %c0_21, %c0_22] : memref<16x128x1024xbf16, #tpu.memory_space<vmem>>, vector<1x128x1024xbf16>
    %39 = vector.shape_cast %38 : vector<1x128x1024xbf16> to vector<128x1024xbf16>
    %cst_23 = arith.constant dense<0.000000e+00> : vector<2x1024xf32>
    %40 = tpu.matmul %37, %39, %cst_23 {dimension_numbers = #tpu.dot_dimension_numbers<[1], [0], [0], [1], [0, 0, 1, 1], [], []>} : vector<2x128xbf16>, vector<128x1024xbf16>, vector<2x1024xf32> -> vector<2x1024xf32>
    %41 = arith.addf %33, %40 : vector<2x1024xf32>
    %42 = vector.extract_strided_slice %9 {offsets = [3, 0], sizes = [1, 128], strides = [1, 1]} : vector<16x128xf32> to vector<1x128xf32>
    %43 = vector.extract_strided_slice %16 {offsets = [3, 0], sizes = [1, 128], strides = [1, 1]} : vector<16x128xf32> to vector<1x128xf32>
    %44 = tpu.concatenate %42, %43 in 0 : vector<1x128xf32>, vector<1x128xf32> -> vector<2x128xf32>
    %45 = arith.truncf %44 : vector<2x128xf32> to vector<2x128xbf16>
    %c3 = arith.constant 3 : index
    %c0_24 = arith.constant 0 : index
    %c0_25 = arith.constant 0 : index
    %46 = vector.load %arg5[%c3, %c0_24, %c0_25] : memref<16x128x1024xbf16, #tpu.memory_space<vmem>>, vector<1x128x1024xbf16>
    %47 = vector.shape_cast %46 : vector<1x128x1024xbf16> to vector<128x1024xbf16>
    %cst_26 = arith.constant dense<0.000000e+00> : vector<2x1024xf32>
    %48 = tpu.matmul %45, %47, %cst_26 {dimension_numbers = #tpu.dot_dimension_numbers<[1], [0], [0], [1], [0, 0, 1, 1], [], []>} : vector<2x128xbf16>, vector<128x1024xbf16>, vector<2x1024xf32> -> vector<2x1024xf32>
    %49 = arith.addf %41, %48 : vector<2x1024xf32>
    %50 = vector.extract_strided_slice %9 {offsets = [4, 0], sizes = [1, 128], strides = [1, 1]} : vector<16x128xf32> to vector<1x128xf32>
    %51 = vector.extract_strided_slice %16 {offsets = [4, 0], sizes = [1, 128], strides = [1, 1]} : vector<16x128xf32> to vector<1x128xf32>
    %52 = tpu.concatenate %50, %51 in 0 : vector<1x128xf32>, vector<1x128xf32> -> vector<2x128xf32>
    %53 = arith.truncf %52 : vector<2x128xf32> to vector<2x128xbf16>
    %c4_27 = arith.constant 4 : index
    %c0_28 = arith.constant 0 : index
    %c0_29 = arith.constant 0 : index
    %54 = vector.load %arg5[%c4_27, %c0_28, %c0_29] : memref<16x128x1024xbf16, #tpu.memory_space<vmem>>, vector<1x128x1024xbf16>
    %55 = vector.shape_cast %54 : vector<1x128x1024xbf16> to vector<128x1024xbf16>
    %cst_30 = arith.constant dense<0.000000e+00> : vector<2x1024xf32>
    %56 = tpu.matmul %53, %55, %cst_30 {dimension_numbers = #tpu.dot_dimension_numbers<[1], [0], [0], [1], [0, 0, 1, 1], [], []>} : vector<2x128xbf16>, vector<128x1024xbf16>, vector<2x1024xf32> -> vector<2x1024xf32>
    %57 = arith.addf %49, %56 : vector<2x1024xf32>
    %58 = vector.extract_strided_slice %9 {offsets = [5, 0], sizes = [1, 128], strides = [1, 1]} : vector<16x128xf32> to vector<1x128xf32>
    %59 = vector.extract_strided_slice %16 {offsets = [5, 0], sizes = [1, 128], strides = [1, 1]} : vector<16x128xf32> to vector<1x128xf32>
    %60 = tpu.concatenate %58, %59 in 0 : vector<1x128xf32>, vector<1x128xf32> -> vector<2x128xf32>
    %61 = arith.truncf %60 : vector<2x128xf32> to vector<2x128xbf16>
    %c5 = arith.constant 5 : index
    %c0_31 = arith.constant 0 : index
    %c0_32 = arith.constant 0 : index
    %62 = vector.load %arg5[%c5, %c0_31, %c0_32] : memref<16x128x1024xbf16, #tpu.memory_space<vmem>>, vector<1x128x1024xbf16>
    %63 = vector.shape_cast %62 : vector<1x128x1024xbf16> to vector<128x1024xbf16>
    %cst_33 = arith.constant dense<0.000000e+00> : vector<2x1024xf32>
    %64 = tpu.matmul %61, %63, %cst_33 {dimension_numbers = #tpu.dot_dimension_numbers<[1], [0], [0], [1], [0, 0, 1, 1], [], []>} : vector<2x128xbf16>, vector<128x1024xbf16>, vector<2x1024xf32> -> vector<2x1024xf32>
    %65 = arith.addf %57, %64 : vector<2x1024xf32>
    %66 = vector.extract_strided_slice %9 {offsets = [6, 0], sizes = [1, 128], strides = [1, 1]} : vector<16x128xf32> to vector<1x128xf32>
    %67 = vector.extract_strided_slice %16 {offsets = [6, 0], sizes = [1, 128], strides = [1, 1]} : vector<16x128xf32> to vector<1x128xf32>
    %68 = tpu.concatenate %66, %67 in 0 : vector<1x128xf32>, vector<1x128xf32> -> vector<2x128xf32>
    %69 = arith.truncf %68 : vector<2x128xf32> to vector<2x128xbf16>
    %c6 = arith.constant 6 : index
    %c0_34 = arith.constant 0 : index
    %c0_35 = arith.constant 0 : index
    %70 = vector.load %arg5[%c6, %c0_34, %c0_35] : memref<16x128x1024xbf16, #tpu.memory_space<vmem>>, vector<1x128x1024xbf16>
    %71 = vector.shape_cast %70 : vector<1x128x1024xbf16> to vector<128x1024xbf16>
    %cst_36 = arith.constant dense<0.000000e+00> : vector<2x1024xf32>
    %72 = tpu.matmul %69, %71, %cst_36 {dimension_numbers = #tpu.dot_dimension_numbers<[1], [0], [0], [1], [0, 0, 1, 1], [], []>} : vector<2x128xbf16>, vector<128x1024xbf16>, vector<2x1024xf32> -> vector<2x1024xf32>
    %73 = arith.addf %65, %72 : vector<2x1024xf32>
    %74 = vector.extract_strided_slice %9 {offsets = [7, 0], sizes = [1, 128], strides = [1, 1]} : vector<16x128xf32> to vector<1x128xf32>
    %75 = vector.extract_strided_slice %16 {offsets = [7, 0], sizes = [1, 128], strides = [1, 1]} : vector<16x128xf32> to vector<1x128xf32>
    %76 = tpu.concatenate %74, %75 in 0 : vector<1x128xf32>, vector<1x128xf32> -> vector<2x128xf32>
    %77 = arith.truncf %76 : vector<2x128xf32> to vector<2x128xbf16>
    %c7 = arith.constant 7 : index
    %c0_37 = arith.constant 0 : index
    %c0_38 = arith.constant 0 : index
    %78 = vector.load %arg5[%c7, %c0_37, %c0_38] : memref<16x128x1024xbf16, #tpu.memory_space<vmem>>, vector<1x128x1024xbf16>
    %79 = vector.shape_cast %78 : vector<1x128x1024xbf16> to vector<128x1024xbf16>
    %cst_39 = arith.constant dense<0.000000e+00> : vector<2x1024xf32>
    %80 = tpu.matmul %77, %79, %cst_39 {dimension_numbers = #tpu.dot_dimension_numbers<[1], [0], [0], [1], [0, 0, 1, 1], [], []>} : vector<2x128xbf16>, vector<128x1024xbf16>, vector<2x1024xf32> -> vector<2x1024xf32>
    %81 = arith.addf %73, %80 : vector<2x1024xf32>
    %82 = vector.extract_strided_slice %9 {offsets = [8, 0], sizes = [1, 128], strides = [1, 1]} : vector<16x128xf32> to vector<1x128xf32>
    %83 = vector.extract_strided_slice %16 {offsets = [8, 0], sizes = [1, 128], strides = [1, 1]} : vector<16x128xf32> to vector<1x128xf32>
    %84 = tpu.concatenate %82, %83 in 0 : vector<1x128xf32>, vector<1x128xf32> -> vector<2x128xf32>
    %85 = arith.truncf %84 : vector<2x128xf32> to vector<2x128xbf16>
    %c8 = arith.constant 8 : index
    %c0_40 = arith.constant 0 : index
    %c0_41 = arith.constant 0 : index
    %86 = vector.load %arg5[%c8, %c0_40, %c0_41] : memref<16x128x1024xbf16, #tpu.memory_space<vmem>>, vector<1x128x1024xbf16>
    %87 = vector.shape_cast %86 : vector<1x128x1024xbf16> to vector<128x1024xbf16>
    %cst_42 = arith.constant dense<0.000000e+00> : vector<2x1024xf32>
    %88 = tpu.matmul %85, %87, %cst_42 {dimension_numbers = #tpu.dot_dimension_numbers<[1], [0], [0], [1], [0, 0, 1, 1], [], []>} : vector<2x128xbf16>, vector<128x1024xbf16>, vector<2x1024xf32> -> vector<2x1024xf32>
    %89 = arith.addf %81, %88 : vector<2x1024xf32>
    %90 = vector.extract_strided_slice %9 {offsets = [9, 0], sizes = [1, 128], strides = [1, 1]} : vector<16x128xf32> to vector<1x128xf32>
    %91 = vector.extract_strided_slice %16 {offsets = [9, 0], sizes = [1, 128], strides = [1, 1]} : vector<16x128xf32> to vector<1x128xf32>
    %92 = tpu.concatenate %90, %91 in 0 : vector<1x128xf32>, vector<1x128xf32> -> vector<2x128xf32>
    %93 = arith.truncf %92 : vector<2x128xf32> to vector<2x128xbf16>
    %c9 = arith.constant 9 : index
    %c0_43 = arith.constant 0 : index
    %c0_44 = arith.constant 0 : index
    %94 = vector.load %arg5[%c9, %c0_43, %c0_44] : memref<16x128x1024xbf16, #tpu.memory_space<vmem>>, vector<1x128x1024xbf16>
    %95 = vector.shape_cast %94 : vector<1x128x1024xbf16> to vector<128x1024xbf16>
    %cst_45 = arith.constant dense<0.000000e+00> : vector<2x1024xf32>
    %96 = tpu.matmul %93, %95, %cst_45 {dimension_numbers = #tpu.dot_dimension_numbers<[1], [0], [0], [1], [0, 0, 1, 1], [], []>} : vector<2x128xbf16>, vector<128x1024xbf16>, vector<2x1024xf32> -> vector<2x1024xf32>
    %97 = arith.addf %89, %96 : vector<2x1024xf32>
    %98 = vector.extract_strided_slice %9 {offsets = [10, 0], sizes = [1, 128], strides = [1, 1]} : vector<16x128xf32> to vector<1x128xf32>
    %99 = vector.extract_strided_slice %16 {offsets = [10, 0], sizes = [1, 128], strides = [1, 1]} : vector<16x128xf32> to vector<1x128xf32>
    %100 = tpu.concatenate %98, %99 in 0 : vector<1x128xf32>, vector<1x128xf32> -> vector<2x128xf32>
    %101 = arith.truncf %100 : vector<2x128xf32> to vector<2x128xbf16>
    %c10 = arith.constant 10 : index
    %c0_46 = arith.constant 0 : index
    %c0_47 = arith.constant 0 : index
    %102 = vector.load %arg5[%c10, %c0_46, %c0_47] : memref<16x128x1024xbf16, #tpu.memory_space<vmem>>, vector<1x128x1024xbf16>
    %103 = vector.shape_cast %102 : vector<1x128x1024xbf16> to vector<128x1024xbf16>
    %cst_48 = arith.constant dense<0.000000e+00> : vector<2x1024xf32>
    %104 = tpu.matmul %101, %103, %cst_48 {dimension_numbers = #tpu.dot_dimension_numbers<[1], [0], [0], [1], [0, 0, 1, 1], [], []>} : vector<2x128xbf16>, vector<128x1024xbf16>, vector<2x1024xf32> -> vector<2x1024xf32>
    %105 = arith.addf %97, %104 : vector<2x1024xf32>
    %106 = vector.extract_strided_slice %9 {offsets = [11, 0], sizes = [1, 128], strides = [1, 1]} : vector<16x128xf32> to vector<1x128xf32>
    %107 = vector.extract_strided_slice %16 {offsets = [11, 0], sizes = [1, 128], strides = [1, 1]} : vector<16x128xf32> to vector<1x128xf32>
    %108 = tpu.concatenate %106, %107 in 0 : vector<1x128xf32>, vector<1x128xf32> -> vector<2x128xf32>
    %109 = arith.truncf %108 : vector<2x128xf32> to vector<2x128xbf16>
    %c11 = arith.constant 11 : index
    %c0_49 = arith.constant 0 : index
    %c0_50 = arith.constant 0 : index
    %110 = vector.load %arg5[%c11, %c0_49, %c0_50] : memref<16x128x1024xbf16, #tpu.memory_space<vmem>>, vector<1x128x1024xbf16>
    %111 = vector.shape_cast %110 : vector<1x128x1024xbf16> to vector<128x1024xbf16>
    %cst_51 = arith.constant dense<0.000000e+00> : vector<2x1024xf32>
    %112 = tpu.matmul %109, %111, %cst_51 {dimension_numbers = #tpu.dot_dimension_numbers<[1], [0], [0], [1], [0, 0, 1, 1], [], []>} : vector<2x128xbf16>, vector<128x1024xbf16>, vector<2x1024xf32> -> vector<2x1024xf32>
    %113 = arith.addf %105, %112 : vector<2x1024xf32>
    %114 = vector.extract_strided_slice %9 {offsets = [12, 0], sizes = [1, 128], strides = [1, 1]} : vector<16x128xf32> to vector<1x128xf32>
    %115 = vector.extract_strided_slice %16 {offsets = [12, 0], sizes = [1, 128], strides = [1, 1]} : vector<16x128xf32> to vector<1x128xf32>
    %116 = tpu.concatenate %114, %115 in 0 : vector<1x128xf32>, vector<1x128xf32> -> vector<2x128xf32>
    %117 = arith.truncf %116 : vector<2x128xf32> to vector<2x128xbf16>
    %c12 = arith.constant 12 : index
    %c0_52 = arith.constant 0 : index
    %c0_53 = arith.constant 0 : index
    %118 = vector.load %arg5[%c12, %c0_52, %c0_53] : memref<16x128x1024xbf16, #tpu.memory_space<vmem>>, vector<1x128x1024xbf16>
    %119 = vector.shape_cast %118 : vector<1x128x1024xbf16> to vector<128x1024xbf16>
    %cst_54 = arith.constant dense<0.000000e+00> : vector<2x1024xf32>
    %120 = tpu.matmul %117, %119, %cst_54 {dimension_numbers = #tpu.dot_dimension_numbers<[1], [0], [0], [1], [0, 0, 1, 1], [], []>} : vector<2x128xbf16>, vector<128x1024xbf16>, vector<2x1024xf32> -> vector<2x1024xf32>
    %121 = arith.addf %113, %120 : vector<2x1024xf32>
    %122 = vector.extract_strided_slice %9 {offsets = [13, 0], sizes = [1, 128], strides = [1, 1]} : vector<16x128xf32> to vector<1x128xf32>
    %123 = vector.extract_strided_slice %16 {offsets = [13, 0], sizes = [1, 128], strides = [1, 1]} : vector<16x128xf32> to vector<1x128xf32>
    %124 = tpu.concatenate %122, %123 in 0 : vector<1x128xf32>, vector<1x128xf32> -> vector<2x128xf32>
    %125 = arith.truncf %124 : vector<2x128xf32> to vector<2x128xbf16>
    %c13 = arith.constant 13 : index
    %c0_55 = arith.constant 0 : index
    %c0_56 = arith.constant 0 : index
    %126 = vector.load %arg5[%c13, %c0_55, %c0_56] : memref<16x128x1024xbf16, #tpu.memory_space<vmem>>, vector<1x128x1024xbf16>
    %127 = vector.shape_cast %126 : vector<1x128x1024xbf16> to vector<128x1024xbf16>
    %cst_57 = arith.constant dense<0.000000e+00> : vector<2x1024xf32>
    %128 = tpu.matmul %125, %127, %cst_57 {dimension_numbers = #tpu.dot_dimension_numbers<[1], [0], [0], [1], [0, 0, 1, 1], [], []>} : vector<2x128xbf16>, vector<128x1024xbf16>, vector<2x1024xf32> -> vector<2x1024xf32>
    %129 = arith.addf %121, %128 : vector<2x1024xf32>
    %130 = vector.extract_strided_slice %9 {offsets = [14, 0], sizes = [1, 128], strides = [1, 1]} : vector<16x128xf32> to vector<1x128xf32>
    %131 = vector.extract_strided_slice %16 {offsets = [14, 0], sizes = [1, 128], strides = [1, 1]} : vector<16x128xf32> to vector<1x128xf32>
    %132 = tpu.concatenate %130, %131 in 0 : vector<1x128xf32>, vector<1x128xf32> -> vector<2x128xf32>
    %133 = arith.truncf %132 : vector<2x128xf32> to vector<2x128xbf16>
    %c14 = arith.constant 14 : index
    %c0_58 = arith.constant 0 : index
    %c0_59 = arith.constant 0 : index
    %134 = vector.load %arg5[%c14, %c0_58, %c0_59] : memref<16x128x1024xbf16, #tpu.memory_space<vmem>>, vector<1x128x1024xbf16>
    %135 = vector.shape_cast %134 : vector<1x128x1024xbf16> to vector<128x1024xbf16>
    %cst_60 = arith.constant dense<0.000000e+00> : vector<2x1024xf32>
    %136 = tpu.matmul %133, %135, %cst_60 {dimension_numbers = #tpu.dot_dimension_numbers<[1], [0], [0], [1], [0, 0, 1, 1], [], []>} : vector<2x128xbf16>, vector<128x1024xbf16>, vector<2x1024xf32> -> vector<2x1024xf32>
    %137 = arith.addf %129, %136 : vector<2x1024xf32>
    %138 = vector.extract_strided_slice %9 {offsets = [15, 0], sizes = [1, 128], strides = [1, 1]} : vector<16x128xf32> to vector<1x128xf32>
    %139 = vector.extract_strided_slice %16 {offsets = [15, 0], sizes = [1, 128], strides = [1, 1]} : vector<16x128xf32> to vector<1x128xf32>
    %140 = tpu.concatenate %138, %139 in 0 : vector<1x128xf32>, vector<1x128xf32> -> vector<2x128xf32>
    %141 = arith.truncf %140 : vector<2x128xf32> to vector<2x128xbf16>
    %c15 = arith.constant 15 : index
    %c0_61 = arith.constant 0 : index
    %c0_62 = arith.constant 0 : index
    %142 = vector.load %arg5[%c15, %c0_61, %c0_62] : memref<16x128x1024xbf16, #tpu.memory_space<vmem>>, vector<1x128x1024xbf16>
    %143 = vector.shape_cast %142 : vector<1x128x1024xbf16> to vector<128x1024xbf16>
    %cst_63 = arith.constant dense<0.000000e+00> : vector<2x1024xf32>
    %144 = tpu.matmul %141, %143, %cst_63 {dimension_numbers = #tpu.dot_dimension_numbers<[1], [0], [0], [1], [0, 0, 1, 1], [], []>} : vector<2x128xbf16>, vector<128x1024xbf16>, vector<2x1024xf32> -> vector<2x1024xf32>
    %145 = arith.addf %137, %144 : vector<2x1024xf32>
    %c0_64 = arith.constant 0 : index
    %c0_65 = arith.constant 0 : index
    %146 = vector.load %arg6[%c0_64, %c0_65] : memref<1x1024xf32, #tpu.memory_space<vmem>>, vector<1x1024xf32>
    %147 = vector.broadcast %146 : vector<1x1024xf32> to vector<2x1024xf32>
    %148 = arith.addf %145, %147 : vector<2x1024xf32>
    %cst_66 = arith.constant 0.000000e+00 : f32
    %149 = vector.broadcast %cst_66 : f32 to vector<2x1024xf32>
    %150 = arith.maximumf %148, %149 : vector<2x1024xf32>
    %151 = arith.truncf %150 : vector<2x1024xf32> to vector<2x1024xbf16>
    %c0_67 = arith.constant 0 : index
    %c0_68 = arith.constant 0 : index
    %152 = vector.load %arg7[%c0_67, %c0_68] : memref<1024x128xbf16, #tpu.memory_space<vmem>>, vector<1024x128xbf16>
    %cst_69 = arith.constant dense<0.000000e+00> : vector<2x128xf32>
    %153 = tpu.matmul %151, %152, %cst_69 {dimension_numbers = #tpu.dot_dimension_numbers<[1], [0], [0], [1], [0, 0, 1, 1], [], []>} : vector<2x1024xbf16>, vector<1024x128xbf16>, vector<2x128xf32> -> vector<2x128xf32>
    %c0_70 = arith.constant 0 : index
    %c0_71 = arith.constant 0 : index
    %154 = vector.load %arg8[%c0_70, %c0_71] : memref<1x128xf32, #tpu.memory_space<vmem>>, vector<1x128xf32>
    %155 = vector.broadcast %154 : vector<1x128xf32> to vector<2x128xf32>
    %156 = arith.addf %153, %155 : vector<2x128xf32>
    %c0_72 = arith.constant 0 : index
    %c0_73 = arith.constant 0 : index
    %157 = vector.load %arg9[%c0_72, %c0_73] : memref<2x128xf32, #tpu.memory_space<vmem>>, vector<2x128xf32>
    tpu.vector_store %arg9[%c0_72, %c0_73], %156 {strides = array<i32>} : memref<2x128xf32, #tpu.memory_space<vmem>>, vector<2x128xf32>,
    return
  }
  func.func @transform_0(%arg0: i32) -> (i32, i32) {
    %c0_i32 = arith.constant 0 : i32
    %c0_i32_0 = arith.constant 0 : i32
    %c0_i32_1 = arith.constant 0 : i32
    return %c0_i32, %c0_i32_0 : i32, i32
  }
  func.func @transform_1(%arg0: i32) -> (i32, i32) {
    %c0_i32 = arith.constant 0 : i32
    %c0_i32_0 = arith.constant 0 : i32
    %c0_i32_1 = arith.constant 0 : i32
    return %c0_i32, %c0_i32_0 : i32, i32
  }
  func.func @transform_2(%arg0: i32) -> (i32, i32) {
    %c0_i32 = arith.constant 0 : i32
    %c0_i32_0 = arith.constant 0 : i32
    %c0_i32_1 = arith.constant 0 : i32
    return %c0_i32, %c0_i32_0 : i32, i32
  }
  func.func @transform_3(%arg0: i32) -> (i32, i32) {
    %c0_i32 = arith.constant 0 : i32
    %c0_i32_0 = arith.constant 0 : i32
    %c0_i32_1 = arith.constant 0 : i32
    return %c0_i32, %c0_i32_0 : i32, i32
  }
  func.func @transform_4(%arg0: i32) -> (i32, i32, i32) {
    %c0_i32 = arith.constant 0 : i32
    %c0_i32_0 = arith.constant 0 : i32
    %c0_i32_1 = arith.constant 0 : i32
    %c0_i32_2 = arith.constant 0 : i32
    return %c0_i32, %c0_i32_0, %c0_i32_1 : i32, i32, i32
  }
  func.func @transform_5(%arg0: i32) -> (i32, i32) {
    %c0_i32 = arith.constant 0 : i32
    %c0_i32_0 = arith.constant 0 : i32
    %c0_i32_1 = arith.constant 0 : i32
    return %c0_i32, %c0_i32_0 : i32, i32
  }
  func.func @transform_6(%arg0: i32) -> (i32, i32) {
    %c0_i32 = arith.constant 0 : i32
    %c0_i32_0 = arith.constant 0 : i32
    %c0_i32_1 = arith.constant 0 : i32
    return %c0_i32, %c0_i32_0 : i32, i32
  }
  func.func @transform_7(%arg0: i32) -> (i32, i32) {
    %c0_i32 = arith.constant 0 : i32
    %c0_i32_0 = arith.constant 0 : i32
    %c0_i32_1 = arith.constant 0 : i32
    return %c0_i32, %c0_i32_0 : i32, i32
  }
  func.func @transform_8(%arg0: i32) -> (i32, i32) {
    %c0_i32 = arith.constant 0 : i32
    %c0_i32_0 = arith.constant 0 : i32
    %c0_i32_1 = arith.constant 0 : i32
    return %c0_i32, %c0_i32_0 : i32, i32
  }
}

</mosaic_0001>

<llo_original>
// kernel: inception_aux_forward.1
$region0: #{inception_aux_forward.1}
  #allocation0 [shape = 'u32[]', space=smem, size = 0x4, offset = 0x4, fixed_abs, tag = 'smem constant byte address 0x4 - core index']
  #allocation1 [shape = 'u32[144,128]{1,0:T(1,128)}', space=vmem, size = 0x12000, scoped, tag = 'internal scratch']
  %s0 = inlined_call_operand.vmem [shape: f32[196,8], index: 0, kind: input, shape index: {}]
  %s1 = inlined_call_operand.hbm [shape: f32[16,196], index: 1, kind: input, shape index: {}]
  %s2 = inlined_call_operand.hbm [shape: f32[4,128], index: 2, kind: input, shape index: {}]
  %s3 = inlined_call_operand.hbm [shape: f32[1,128], index: 3, kind: input, shape index: {}]
  %s4 = inlined_call_operand.hbm [shape: bf16[16,128,1024], index: 4, kind: input, shape index: {}]
  %s5 = inlined_call_operand.hbm [shape: f32[1,1024], index: 5, kind: input, shape index: {}]
  %s6 = inlined_call_operand.hbm [shape: bf16[1024,128], index: 6, kind: input, shape index: {}]
  %s7 = inlined_call_operand.hbm [shape: f32[1,128], index: 7, kind: input, shape index: {}]
  %s8 = inlined_call_operand.hbm [shape: f32[2,128], index: 8, kind: output, shape index: {}]
  %s9 = sld [smem:[#allocation0]]
  $region70: #{inception_aux_forward.1} parent=0
    _
  %s11 = ssub.s32 1, %s9
  %s12 = scalar_select 0, %s11, %s9
  $region1: #{inception_aux_forward.1} parent=0
    #allocation2 [shape = 'u8[16384]{0}', space=vmem, size = 0x4000, scoped, tag = 'input window, operand 1, single buffered']
    #allocation3 [shape = 's32[1]{0}', space=sflag, size = 0x4, scoped, tag = 'scoped memory for inception_aux_forward.1']
    #allocation4 [shape = 's32[1]{0}', space=sflag, size = 0x4, scoped, tag = 'scoped memory for inception_aux_forward.1']
    #allocation5 [shape = 'u8[2048]{0}', space=vmem, size = 0x800, scoped, tag = 'input window, operand 2, single buffered']
    #allocation6 [shape = 's32[1]{0}', space=sflag, size = 0x4, scoped, tag = 'scoped memory for inception_aux_forward.1']
    #allocation7 [shape = 'u8[512]{0}', space=vmem, size = 0x400, scoped, tag = 'input window, operand 3, single buffered']
    #allocation8 [shape = 'u8[4194304]{0}', space=vmem, size = 0x400000, scoped, tag = 'input window, operand 4, single buffered']
    #allocation9 [shape = 's32[1]{0}', space=sflag, size = 0x4, scoped, tag = 'scoped memory for inception_aux_forward.1']
    #allocation10 [shape = 'u8[4096]{0}', space=vmem, size = 0x1000, scoped, tag = 'input window, operand 5, single buffered']
    #allocation11 [shape = 'u8[262144]{0}', space=vmem, size = 0x40000, scoped, tag = 'input window, operand 6, single buffered']
    #allocation12 [shape = 's32[1]{0}', space=sflag, size = 0x4, scoped, tag = 'scoped memory for inception_aux_forward.1']
    #allocation13 [shape = 'u8[512]{0}', space=vmem, size = 0x400, scoped, tag = 'input window, operand 7, single buffered']
    #allocation14 [shape = 'u8[1024]{0}', space=vmem, size = 0x400, scoped, tag = 'output window, operand 0, single buffered']
    %13 = vsyncpa [#allocation3], 0
    %14 = vsyncpa [#allocation6], 0
    %15 = vsyncpa [#allocation9], 0
    %16 = vsyncpa [#allocation12], 0
    %17 = vsyncpa [#allocation4], 0
    // Predicated region
    $region2: #{inception_aux_forward.1} parent=1 // pred_check
      _
    $region3: #{inception_aux_forward.1} parent=1 // pred_check_branch
      %19 = sbr.rel (0) target = $region5
    $region4: #{inception_aux_forward.1} parent=1 // pred_region
      _
    $region5: #{inception_aux_forward.1} parent=1 // pred_fallthru
      _
    // Predicated region
    $region6: #{inception_aux_forward.1} parent=1 // pred_check
      _
    $region7: #{inception_aux_forward.1} parent=1 // pred_check_branch
      %21 = sbr.rel (0) target = $region9
    $region8: #{inception_aux_forward.1} parent=1 // pred_region
      %s23 = ssub.s32 512, 512
      %24 = vsyncadd [#allocation3], %s23
      %s25 = sshll.u32 [#allocation2], 4
      %s26 = int_to_ptr.vmem [resolvable:$true] %s25
      %31 = dma.hbm_to_vmem [thread:$0]  %s1, 512, %s26, [#allocation3], 256, 256, 16
    $region9: #{inception_aux_forward.1} parent=1 // pred_fallthru
      _
    // Predicated region
    $region10: #{inception_aux_forward.1} parent=1 // pred_check
      _
    $region11: #{inception_aux_forward.1} parent=1 // pred_check_branch
      %33 = sbr.rel (0) target = $region13
    $region12: #{inception_aux_forward.1} parent=1 // pred_region
      %s35 = ssub.s32 64, 64
      %36 = vsyncadd [#allocation6], %s35
      %s38 = sshll.u32 [#allocation5], 4
      %s39 = int_to_ptr.vmem [resolvable:$true] %s38
      %41 = dma.hbm_to_vmem [thread:$0]  %s2, 64, %s39, [#allocation6]
    $region13: #{inception_aux_forward.1} parent=1 // pred_fallthru
      _
    // Predicated region
    $region14: #{inception_aux_forward.1} parent=1 // pred_check
      _
    $region15: #{inception_aux_forward.1} parent=1 // pred_check_branch
      %43 = sbr.rel (0) target = $region17
    $region16: #{inception_aux_forward.1} parent=1 // pred_region
      %s45 = ssub.s32 16, 16
      %46 = vsyncadd [#allocation6], %s45
      %s48 = sshll.u32 [#allocation7], 4
      %s49 = int_to_ptr.vmem [resolvable:$true] %s48
      %51 = dma.hbm_to_vmem [thread:$0]  %s3, 16, %s49, [#allocation6]
    $region17: #{inception_aux_forward.1} parent=1 // pred_fallthru
      _
    // Predicated region
    $region18: #{inception_aux_forward.1} parent=1 // pred_check
      _
    $region19: #{inception_aux_forward.1} parent=1 // pred_check_branch
      %53 = sbr.rel (0) target = $region21
    $region20: #{inception_aux_forward.1} parent=1 // pred_region
      %s55 = ssub.s32 131072, 131072
      %56 = vsyncadd [#allocation9], %s55
      %s57 = sshll.u32 [#allocation8], 4
      %s58 = int_to_ptr.vmem [resolvable:$true] %s57
      %63 = dma.hbm_to_vmem [thread:$0]  %s4, 131072, %s58, [#allocation9], 512, 512, 32
    $region21: #{inception_aux_forward.1} parent=1 // pred_fallthru
      _
    // Predicated region
    $region22: #{inception_aux_forward.1} parent=1 // pred_check
      _
    $region23: #{inception_aux_forward.1} parent=1 // pred_check_branch
      %65 = sbr.rel (0) target = $region25
    $region24: #{inception_aux_forward.1} parent=1 // pred_region
      %s67 = ssub.s32 128, 128
      %68 = vsyncadd [#allocation9], %s67
      %s70 = sshll.u32 [#allocation10], 4
      %s71 = int_to_ptr.vmem [resolvable:$true] %s70
      %73 = dma.hbm_to_vmem [thread:$0]  %s5, 128, %s71, [#allocation9]
    $region25: #{inception_aux_forward.1} parent=1 // pred_fallthru
      _
    // Predicated region
    $region26: #{inception_aux_forward.1} parent=1 // pred_check
      _
    $region27: #{inception_aux_forward.1} parent=1 // pred_check_branch
      %75 = sbr.rel (0) target = $region29
    $region28: #{inception_aux_forward.1} parent=1 // pred_region
      %s77 = ssub.s32 8192, 8192
      %78 = vsyncadd [#allocation12], %s77
      %s79 = sshll.u32 [#allocation11], 4
      %s80 = int_to_ptr.vmem [resolvable:$true] %s79
      %85 = dma.hbm_to_vmem [thread:$0]  %s6, 8192, %s80, [#allocation12], 64, 64, 4
    $region29: #{inception_aux_forward.1} parent=1 // pred_fallthru
      _
    // Predicated region
    $region30: #{inception_aux_forward.1} parent=1 // pred_check
      _
    $region31: #{inception_aux_forward.1} parent=1 // pred_check_branch
      %87 = sbr.rel (0) target = $region33
    $region32: #{inception_aux_forward.1} parent=1 // pred_region
      %s89 = ssub.s32 16, 16
      %90 = vsyncadd [#allocation12], %s89
      %s92 = sshll.u32 [#allocation13], 4
      %s93 = int_to_ptr.vmem [resolvable:$true] %s92
      %95 = dma.hbm_to_vmem [thread:$0]  %s7, 16, %s93, [#allocation12]
    $region33: #{inception_aux_forward.1} parent=1 // pred_fallthru
      _
    // Predicated region
    $region34: #{inception_aux_forward.1} parent=1 // pred_check
      _
    $region35: #{inception_aux_forward.1} parent=1 // pred_check_branch
      %97 = sbr.rel (0) target = $region37
    $region36: #{inception_aux_forward.1} parent=1 // pred_region
      %98 = dma.done [#allocation3], 512
    $region37: #{inception_aux_forward.1} parent=1 // pred_fallthru
      _
    // Predicated region
    $region38: #{inception_aux_forward.1} parent=1 // pred_check
      _
    $region39: #{inception_aux_forward.1} parent=1 // pred_check_branch
      %100 = sbr.rel (0) target = $region41
    $region40: #{inception_aux_forward.1} parent=1 // pred_region
      %101 = dma.done [#allocation6], 64
    $region41: #{inception_aux_forward.1} parent=1 // pred_fallthru
      _
    // Predicated region
    $region42: #{inception_aux_forward.1} parent=1 // pred_check
      _
    $region43: #{inception_aux_forward.1} parent=1 // pred_check_branch
      %103 = sbr.rel (0) target = $region45
    $region44: #{inception_aux_forward.1} parent=1 // pred_region
      %104 = dma.done [#allocation6], 16
    $region45: #{inception_aux_forward.1} parent=1 // pred_fallthru
      _
    // Predicated region
    $region46: #{inception_aux_forward.1} parent=1 // pred_check
      _
    $region47: #{inception_aux_forward.1} parent=1 // pred_check_branch
      %106 = sbr.rel (0) target = $region49
    $region48: #{inception_aux_forward.1} parent=1 // pred_region
      %107 = dma.done [#allocation9], 131072
    $region49: #{inception_aux_forward.1} parent=1 // pred_fallthru
      _
    // Predicated region
    $region50: #{inception_aux_forward.1} parent=1 // pred_check
      _
    $region51: #{inception_aux_forward.1} parent=1 // pred_check_branch
      %109 = sbr.rel (0) target = $region53
    $region52: #{inception_aux_forward.1} parent=1 // pred_region
      %110 = dma.done [#allocation9], 128
    $region53: #{inception_aux_forward.1} parent=1 // pred_fallthru
      _
    // Predicated region
    $region54: #{inception_aux_forward.1} parent=1 // pred_check
      _
    $region55: #{inception_aux_forward.1} parent=1 // pred_check_branch
      %112 = sbr.rel (0) target = $region57
    $region56: #{inception_aux_forward.1} parent=1 // pred_region
      %113 = dma.done [#allocation12], 8192
    $region57: #{inception_aux_forward.1} parent=1 // pred_fallthru
      _
    // Predicated region
    $region58: #{inception_aux_forward.1} parent=1 // pred_check
      _
    $region59: #{inception_aux_forward.1} parent=1 // pred_check_branch
      %115 = sbr.rel (0) target = $region61
    $region60: #{inception_aux_forward.1} parent=1 // pred_region
      %116 = dma.done [#allocation12], 16
    $region61: #{inception_aux_forward.1} parent=1 // pred_fallthru
      _
    %v118 = vld [vmem:[#allocation2] sm:$0xff]
    %v119 = vld [vmem:[#allocation2 + $0x8] sm:$0xff]
    %v120 = vld [vmem:[#allocation2 + $0x10] sm:$0xff]
    %v121 = vld [vmem:[#allocation2 + $0x18] sm:$0xff]
    %v122 = vld [vmem:[#allocation5] sm:$0xf]
    %v123 = vld [vmem:[#allocation7] sm:$0x1]
    %v124 = vld [vmem:[%s0] sm:$0xff]
    %v125 = vld [vmem:[%s0 + $0x8] sm:$0xff]
    %v126 = vld [vmem:[%s0 + $0x10] sm:$0xff]
    %v127 = vld [vmem:[%s0 + $0x18] sm:$0xff]
    %v128 = vld [vmem:[%s0 + $0x20] sm:$0xff]
    %v129 = vld [vmem:[%s0 + $0x28] sm:$0xff]
    %v130 = vld [vmem:[%s0 + $0x30] sm:$0xff]
    %v131 = vld [vmem:[%s0 + $0x38] sm:$0xff]
    %v132 = vld [vmem:[%s0 + $0x40] sm:$0xff]
    %v133 = vld [vmem:[%s0 + $0x48] sm:$0xff]
    %v134 = vld [vmem:[%s0 + $0x50] sm:$0xff]
    %v135 = vld [vmem:[%s0 + $0x58] sm:$0xff]
    %v136 = vld [vmem:[%s0 + $0x60] sm:$0xff]
    %v137 = vld [vmem:[%s0 + $0x68] sm:$0xff]
    %v138 = vld [vmem:[%s0 + $0x70] sm:$0xff]
    %v139 = vld [vmem:[%s0 + $0x78] sm:$0xff]
    %v140 = vld [vmem:[%s0 + $0x80] sm:$0xff]
    %v141 = vld [vmem:[%s0 + $0x88] sm:$0xff]
    %v142 = vld [vmem:[%s0 + $0x90] sm:$0xff]
    %v143 = vld [vmem:[%s0 + $0x98] sm:$0xff]
    %v144 = vld [vmem:[%s0 + $0xa0] sm:$0xff]
    %v145 = vld [vmem:[%s0 + $0xa8] sm:$0xff]
    %v146 = vld [vmem:[%s0 + $0xb0] sm:$0xff]
    %v147 = vld [vmem:[%s0 + $0xb8] sm:$0xff]
    %v148 = vld [vmem:[%s0 + $0xc0] sm:$0xf]
    %vm149 = vcmask 556032
    %v151 = vsel %vm149, %v119, 0
    %v154 = vsel %vm149, %v121, 0
    %vm156 = vcmask 1043456
    %v158 = vsel %vm156, %v148, 0
    %160 = vmatprep.subr.mxu0 0.0
    %161 = vmatpush1.msra.mxu0 %v139
    %162 = vmatprep.subr.mxu0 0.0
    %163 = vmatpush1.msra.mxu0 %v138
    %164 = vmatprep.subr.mxu0 0.0
    %165 = vmatpush1.msra.mxu0 %v137
    %166 = vmatprep.subr.mxu0 0.0
    %167 = vmatpush1.msra.mxu0 %v136
    %168 = vmatprep.subr.mxu0 0.0
    %169 = vmatpush1.msra.mxu0 %v135
    %170 = vmatprep.subr.mxu0 0.0
    %171 = vmatpush1.msra.mxu0 %v134
    %172 = vmatprep.subr.mxu0 0.0
    %173 = vmatpush1.msra.mxu0 %v133
    %174 = vmatprep.subr.mxu0 0.0
    %175 = vmatpush1.msra.mxu0 %v132
    %176 = vmatprep.subr.mxu0 0.0
    %177 = vmatpush1.msra.mxu0 %v131
    %178 = vmatprep.subr.mxu0 0.0
    %179 = vmatpush1.msra.mxu0 %v130
    %180 = vmatprep.subr.mxu0 0.0
    %181 = vmatpush1.msra.mxu0 %v129
    %182 = vmatprep.subr.mxu0 0.0
    %183 = vmatpush1.msra.mxu0 %v128
    %184 = vmatprep.subr.mxu0 0.0
    %185 = vmatpush1.msra.mxu0 %v127
    %186 = vmatprep.subr.mxu0 0.0
    %187 = vmatpush1.msra.mxu0 %v126
    %188 = vmatprep.subr.mxu0 0.0
    %189 = vmatpush1.msra.mxu0 %v125
    %190 = vmatprep.subr.mxu0 0.0
    %191 = vmatpush1.msra.mxu0 %v124
    %192 = vmatprep.subr.mxu0 0.0
    %193 = vmatpush2.msra.mxu0 0.0
    %194 = vmatprep.subr.mxu0 0.0
    %195 = vmatpush2.msra.mxu0 0.0
    %196 = vmatprep.subr.mxu0 0.0
    %197 = vmatpush2.msra.mxu0 0.0
    %198 = vmatprep.subr.mxu0 0.0
    %199 = vmatpush2.msra.mxu0 0.0
    %200 = vmatprep.subr.mxu0 0.0
    %201 = vmatpush2.msra.mxu0 0.0
    %202 = vmatprep.subr.mxu0 0.0
    %203 = vmatpush2.msra.mxu0 0.0
    %204 = vmatprep.subr.mxu0 0.0
    %205 = vmatpush2.msra.mxu0 0.0
    %206 = vmatprep.subr.mxu0 0.0
    %207 = vmatpush2.msra.mxu0 %v158
    %208 = vmatprep.subr.mxu0 0.0
    %209 = vmatpush2.msra.mxu0 %v147
    %210 = vmatprep.subr.mxu0 0.0
    %211 = vmatpush2.msra.mxu0 %v146
    %212 = vmatprep.subr.mxu0 0.0
    %213 = vmatpush2.msra.mxu0 %v145
    %214 = vmatprep.subr.mxu0 0.0
    %215 = vmatpush2.msra.mxu0 %v144
    %216 = vmatprep.subr.mxu0 0.0
    %217 = vmatpush2.msra.mxu0 %v143
    %218 = vmatprep.subr.mxu0 0.0
    %219 = vmatpush2.msra.mxu0 %v142
    %220 = vmatprep.subr.mxu0 0.0
    %221 = vmatpush2.msra.mxu0 %v141
    %222 = vmatprep.subr.mxu0 0.0
    %223 = vmatpush2.msra.mxu0 %v140
    %224 = vmatprep.mubr.f32.mxu0 %v151
    %225 = vmatmul.mubr.f32.gmra.mxu0 %v118
    %v226 = vpop.f32.mrf.mxu0
    %v227 = vadd.f32 0.0, %v226
    %v228 = vpop.f32.mrf.mxu0
    %229 = vmatprep.mubr.f32.mxu0 %v154
    %230 = vmatmul.mubr.f32.gmra.mxu0 %v120
    %v231 = vpop.f32.mrf.mxu0
    %v232 = vadd.f32 0.0, %v231
    %v233 = vpop.f32.mrf.mxu0
    %234 = vdwg.mxu0
    %v236 = vlaneseq
    %v237 = vshrl.u32 %v236, 7
    %v238 = vsub.s32 0, %v237
    %v239 = vrot.slane %v123, %v238
    %vm241 = vcmask 31744
    %v243 = vsel %vm241, %v227, 0
    %v246 = vsel %vm241, %v232, 0
    %v249 = vsel %vm156, %v122, 0
    %251 = vmatprep.subr.mxu0 0.0
    %252 = vmatpush1.msra.mxu0 0.0
    %253 = vmatprep.subr.mxu0 0.0
    %254 = vmatpush1.msra.mxu0 0.0
    %255 = vmatprep.subr.mxu0 0.0
    %256 = vmatpush1.msra.mxu0 0.0
    %257 = vmatprep.subr.mxu0 0.0
    %258 = vmatpush1.msra.mxu0 0.0
    %259 = vmatprep.subr.mxu0 0.0
    %260 = vmatpush1.msra.mxu0 0.0
    %261 = vmatprep.subr.mxu0 0.0
    %262 = vmatpush1.msra.mxu0 0.0
    %263 = vmatprep.subr.mxu0 0.0
    %264 = vmatpush1.msra.mxu0 0.0
    %265 = vmatprep.subr.mxu0 0.0
    %266 = vmatpush1.msra.mxu0 0.0
    %267 = vmatprep.subr.mxu0 0.0
    %268 = vmatpush1.msra.mxu0 0.0
    %269 = vmatprep.subr.mxu0 0.0
    %270 = vmatpush1.msra.mxu0 0.0
    %271 = vmatprep.subr.mxu0 0.0
    %272 = vmatpush1.msra.mxu0 0.0
    %273 = vmatprep.subr.mxu0 0.0
    %274 = vmatpush1.msra.mxu0 0.0
    %275 = vmatprep.subr.mxu0 0.0
    %276 = vmatpush1.msra.mxu0 0.0
    %277 = vmatprep.subr.mxu0 0.0
    %278 = vmatpush1.msra.mxu0 0.0
    %279 = vmatprep.subr.mxu0 0.0
    %280 = vmatpush1.msra.mxu0 0.0
    %281 = vmatprep.subr.mxu0 0.0
    %282 = vmatpush1.msra.mxu0 %v249
    %283 = vmatprep.subr.mxu0 0.0
    %284 = vmatpush2.msra.mxu0 0.0
    %285 = vmatprep.subr.mxu0 0.0
    %286 = vmatpush2.msra.mxu0 0.0
    %287 = vmatprep.subr.mxu0 0.0
    %288 = vmatpush2.msra.mxu0 0.0
    %289 = vmatprep.subr.mxu0 0.0
    %290 = vmatpush2.msra.mxu0 0.0
    %291 = vmatprep.subr.mxu0 0.0
    %292 = vmatpush2.msra.mxu0 0.0
    %293 = vmatprep.subr.mxu0 0.0
    %294 = vmatpush2.msra.mxu0 0.0
    %295 = vmatprep.subr.mxu0 0.0
    %296 = vmatpush2.msra.mxu0 0.0
    %297 = vmatprep.subr.mxu0 0.0
    %298 = vmatpush2.msra.mxu0 0.0
    %299 = vmatprep.subr.mxu0 0.0
    %300 = vmatpush2.msra.mxu0 0.0
    %301 = vmatprep.subr.mxu0 0.0
    %302 = vmatpush2.msra.mxu0 0.0
    %303 = vmatprep.subr.mxu0 0.0
    %304 = vmatpush2.msra.mxu0 0.0
    %305 = vmatprep.subr.mxu0 0.0
    %306 = vmatpush2.msra.mxu0 0.0
    %307 = vmatprep.subr.mxu0 0.0
    %308 = vmatpush2.msra.mxu0 0.0
    %309 = vmatprep.subr.mxu0 0.0
    %310 = vmatpush2.msra.mxu0 0.0
    %311 = vmatprep.subr.mxu0 0.0
    %312 = vmatpush2.msra.mxu0 0.0
    %313 = vmatprep.subr.mxu0 0.0
    %314 = vmatpush2.msra.mxu0 0.0
    %315 = vmatprep.mubr.f32.mxu0 0.0
    %316 = vmatmul.mubr.f32.gmra.mxu0 %v243
    %v317 = vpop.f32.mrf.mxu0
    %v318 = vadd.f32 %v239, %v317
    %v319 = vpop.f32.mrf.mxu0
    %320 = vmatprep.mubr.f32.mxu0 0.0
    %321 = vmatmul.mubr.f32.gmra.mxu0 %v246
    %v322 = vpop.f32.mrf.mxu0
    %v323 = vadd.f32 %v239, %v322
    %v324 = vpop.f32.mrf.mxu0
    %325 = vdwg.mxu0
    %v326 = vmax.f32 %v318, 0.0
    %v327 = vmax.f32 %v323, 0.0
    %352 = vrot.lane.b32.xlu0 %v124, 124
    %v353 = vpop.permute.xlu0 %352
    %354 = vrot.lane.b32.xlu0 %v125, 124
    %v355 = vpop.permute.xlu0 %354
    %356 = vrot.lane.b32.xlu0 %v126, 124
    %v357 = vpop.permute.xlu0 %356
    %358 = vrot.lane.b32.xlu0 %v127, 124
    %v359 = vpop.permute.xlu0 %358
    %360 = vrot.lane.b32.xlu0 %v128, 124
    %v361 = vpop.permute.xlu0 %360
    %362 = vrot.lane.b32.xlu0 %v129, 124
    %v363 = vpop.permute.xlu0 %362
    %364 = vrot.lane.b32.xlu0 %v130, 124
    %v365 = vpop.permute.xlu0 %364
    %366 = vrot.lane.b32.xlu0 %v131, 124
    %v367 = vpop.permute.xlu0 %366
    %368 = vrot.lane.b32.xlu0 %v132, 124
    %v369 = vpop.permute.xlu0 %368
    %370 = vrot.lane.b32.xlu0 %v133, 124
    %v371 = vpop.permute.xlu0 %370
    %372 = vrot.lane.b32.xlu0 %v134, 124
    %v373 = vpop.permute.xlu0 %372
    %374 = vrot.lane.b32.xlu0 %v135, 124
    %v375 = vpop.permute.xlu0 %374
    %376 = vrot.lane.b32.xlu0 %v136, 124
    %v377 = vpop.permute.xlu0 %376
    %378 = vrot.lane.b32.xlu0 %v137, 124
    %v379 = vpop.permute.xlu0 %378
    %380 = vrot.lane.b32.xlu0 %v138, 124
    %v381 = vpop.permute.xlu0 %380
    %382 = vrot.lane.b32.xlu0 %v139, 124
    %v383 = vpop.permute.xlu0 %382
    %384 = vrot.lane.b32.xlu0 %v140, 124
    %v385 = vpop.permute.xlu0 %384
    %386 = vrot.lane.b32.xlu0 %v141, 124
    %v387 = vpop.permute.xlu0 %386
    %388 = vrot.lane.b32.xlu0 %v142, 124
    %v389 = vpop.permute.xlu0 %388
    %390 = vrot.lane.b32.xlu0 %v143, 124
    %v391 = vpop.permute.xlu0 %390
    %392 = vrot.lane.b32.xlu0 %v144, 124
    %v393 = vpop.permute.xlu0 %392
    %394 = vrot.lane.b32.xlu0 %v145, 124
    %v395 = vpop.permute.xlu0 %394
    %396 = vrot.lane.b32.xlu0 %v146, 124
    %v397 = vpop.permute.xlu0 %396
    %398 = vrot.lane.b32.xlu0 %v147, 124
    %v399 = vpop.permute.xlu0 %398
    %400 = vrot.lane.b32.xlu0 %v148, 124
    %v401 = vpop.permute.xlu0 %400
    %v426 = vsel %vm156, %v401, 0
    %428 = vmatprep.subr.mxu0 0.0
    %429 = vmatpush1.msra.mxu0 %v383
    %430 = vmatprep.subr.mxu0 0.0
    %431 = vmatpush1.msra.mxu0 %v381
    %432 = vmatprep.subr.mxu0 0.0
    %433 = vmatpush1.msra.mxu0 %v379
    %434 = vmatprep.subr.mxu0 0.0
    %435 = vmatpush1.msra.mxu0 %v377
    %436 = vmatprep.subr.mxu0 0.0
    %437 = vmatpush1.msra.mxu0 %v375
    %438 = vmatprep.subr.mxu0 0.0
    %439 = vmatpush1.msra.mxu0 %v373
    %440 = vmatprep.subr.mxu0 0.0
    %441 = vmatpush1.msra.mxu0 %v371
    %442 = vmatprep.subr.mxu0 0.0
    %443 = vmatpush1.msra.mxu0 %v369
    %444 = vmatprep.subr.mxu0 0.0
    %445 = vmatpush1.msra.mxu0 %v367
    %446 = vmatprep.subr.mxu0 0.0
    %447 = vmatpush1.msra.mxu0 %v365
    %448 = vmatprep.subr.mxu0 0.0
    %449 = vmatpush1.msra.mxu0 %v363
    %450 = vmatprep.subr.mxu0 0.0
    %451 = vmatpush1.msra.mxu0 %v361
    %452 = vmatprep.subr.mxu0 0.0
    %453 = vmatpush1.msra.mxu0 %v359
    %454 = vmatprep.subr.mxu0 0.0
    %455 = vmatpush1.msra.mxu0 %v357
    %456 = vmatprep.subr.mxu0 0.0
    %457 = vmatpush1.msra.mxu0 %v355
    %458 = vmatprep.subr.mxu0 0.0
    %459 = vmatpush1.msra.mxu0 %v353
    %460 = vmatprep.subr.mxu0 0.0
    %461 = vmatpush2.msra.mxu0 0.0
    %462 = vmatprep.subr.mxu0 0.0
    %463 = vmatpush2.msra.mxu0 0.0
    %464 = vmatprep.subr.mxu0 0.0
    %465 = vmatpush2.msra.mxu0 0.0
    %466 = vmatprep.subr.mxu0 0.0
    %467 = vmatpush2.msra.mxu0 0.0
    %468 = vmatprep.subr.mxu0 0.0
    %469 = vmatpush2.msra.mxu0 0.0
    %470 = vmatprep.subr.mxu0 0.0
    %471 = vmatpush2.msra.mxu0 0.0
    %472 = vmatprep.subr.mxu0 0.0
    %473 = vmatpush2.msra.mxu0 0.0
    %474 = vmatprep.subr.mxu0 0.0
    %475 = vmatpush2.msra.mxu0 %v426
    %476 = vmatprep.subr.mxu0 0.0
    %477 = vmatpush2.msra.mxu0 %v399
    %478 = vmatprep.subr.mxu0 0.0
    %479 = vmatpush2.msra.mxu0 %v397
    %480 = vmatprep.subr.mxu0 0.0
    %481 = vmatpush2.msra.mxu0 %v395
    %482 = vmatprep.subr.mxu0 0.0
    %483 = vmatpush2.msra.mxu0 %v393
    %484 = vmatprep.subr.mxu0 0.0
    %485 = vmatpush2.msra.mxu0 %v391
    %486 = vmatprep.subr.mxu0 0.0
    %487 = vmatpush2.msra.mxu0 %v389
    %488 = vmatprep.subr.mxu0 0.0
    %489 = vmatpush2.msra.mxu0 %v387
    %490 = vmatprep.subr.mxu0 0.0
    %491 = vmatpush2.msra.mxu0 %v385
    %492 = vmatprep.mubr.f32.mxu0 %v151
    %493 = vmatmul.mubr.f32.gmra.mxu0 %v118
    %v494 = vpop.f32.mrf.mxu0
    %v495 = vadd.f32 0.0, %v494
    %v496 = vpop.f32.mrf.mxu0
    %497 = vmatprep.mubr.f32.mxu0 %v154
    %498 = vmatmul.mubr.f32.gmra.mxu0 %v120
    %v499 = vpop.f32.mrf.mxu0
    %v500 = vadd.f32 0.0, %v499
    %v501 = vpop.f32.mrf.mxu0
    %502 = vdwg.mxu0
    %v504 = vsel %vm241, %v495, 0
    %v507 = vsel %vm241, %v500, 0
    %509 = vmatprep.subr.mxu0 0.0
    %510 = vmatpush1.msra.mxu0 0.0
    %511 = vmatprep.subr.mxu0 0.0
    %512 = vmatpush1.msra.mxu0 0.0
    %513 = vmatprep.subr.mxu0 0.0
    %514 = vmatpush1.msra.mxu0 0.0
    %515 = vmatprep.subr.mxu0 0.0
    %516 = vmatpush1.msra.mxu0 0.0
    %517 = vmatprep.subr.mxu0 0.0
    %518 = vmatpush1.msra.mxu0 0.0
    %519 = vmatprep.subr.mxu0 0.0
    %520 = vmatpush1.msra.mxu0 0.0
    %521 = vmatprep.subr.mxu0 0.0
    %522 = vmatpush1.msra.mxu0 0.0
    %523 = vmatprep.subr.mxu0 0.0
    %524 = vmatpush1.msra.mxu0 0.0
    %525 = vmatprep.subr.mxu0 0.0
    %526 = vmatpush1.msra.mxu0 0.0
    %527 = vmatprep.subr.mxu0 0.0
    %528 = vmatpush1.msra.mxu0 0.0
    %529 = vmatprep.subr.mxu0 0.0
    %530 = vmatpush1.msra.mxu0 0.0
    %531 = vmatprep.subr.mxu0 0.0
    %532 = vmatpush1.msra.mxu0 0.0
    %533 = vmatprep.subr.mxu0 0.0
    %534 = vmatpush1.msra.mxu0 0.0
    %535 = vmatprep.subr.mxu0 0.0
    %536 = vmatpush1.msra.mxu0 0.0
    %537 = vmatprep.subr.mxu0 0.0
    %538 = vmatpush1.msra.mxu0 0.0
    %539 = vmatprep.subr.mxu0 0.0
    %540 = vmatpush1.msra.mxu0 %v249
    %541 = vmatprep.subr.mxu0 0.0
    %542 = vmatpush2.msra.mxu0 0.0
    %543 = vmatprep.subr.mxu0 0.0
    %544 = vmatpush2.msra.mxu0 0.0
    %545 = vmatprep.subr.mxu0 0.0
    %546 = vmatpush2.msra.mxu0 0.0
    %547 = vmatprep.subr.mxu0 0.0
    %548 = vmatpush2.msra.mxu0 0.0
    %549 = vmatprep.subr.mxu0 0.0
    %550 = vmatpush2.msra.mxu0 0.0
    %551 = vmatprep.subr.mxu0 0.0
    %552 = vmatpush2.msra.mxu0 0.0
    %553 = vmatprep.subr.mxu0 0.0
    %554 = vmatpush2.msra.mxu0 0.0
    %555 = vmatprep.subr.mxu0 0.0
    %556 = vmatpush2.msra.mxu0 0.0
    %557 = vmatprep.subr.mxu0 0.0
    %558 = vmatpush2.msra.mxu0 0.0
    %559 = vmatprep.subr.mxu0 0.0
    %560 = vmatpush2.msra.mxu0 0.0
    %561 = vmatprep.subr.mxu0 0.0
    %562 = vmatpush2.msra.mxu0 0.0
    %563 = vmatprep.subr.mxu0 0.0
    %564 = vmatpush2.msra.mxu0 0.0
    %565 = vmatprep.subr.mxu0 0.0
    %566 = vmatpush2.msra.mxu0 0.0
    %567 = vmatprep.subr.mxu0 0.0
    %568 = vmatpush2.msra.mxu0 0.0
    %569 = vmatprep.subr.mxu0 0.0
    %570 = vmatpush2.msra.mxu0 0.0
    %571 = vmatprep.subr.mxu0 0.0
    %572 = vmatpush2.msra.mxu0 0.0
    %573 = vmatprep.mubr.f32.mxu0 0.0
    %574 = vmatmul.mubr.f32.gmra.mxu0 %v504
    %v575 = vpop.f32.mrf.mxu0
    %v576 = vadd.f32 %v239, %v575
    %v577 = vpop.f32.mrf.mxu0
    %578 = vmatprep.mubr.f32.mxu0 0.0
    %579 = vmatmul.mubr.f32.gmra.mxu0 %v507
    %v580 = vpop.f32.mrf.mxu0
    %v581 = vadd.f32 %v239, %v580
    %v582 = vpop.f32.mrf.mxu0
    %583 = vdwg.mxu0
    %v584 = vmax.f32 %v576, 0.0
    %v585 = vmax.f32 %v581, 0.0
    %v587 = vrot.slane %v584, 7
    %vm589 = vcmask 1040384
    %v590 = vsel %vm589, %v326, %v587
    %v591 = vpack.c.bf16 %v590, %v590
    %v592 = vld [vmem:[#allocation8] sm:$0xff]
    %v593 = vld [vmem:[#allocation8 + $0x8] sm:$0xff]
    %v594 = vld [vmem:[#allocation8 + $0x10] sm:$0xff]
    %v595 = vld [vmem:[#allocation8 + $0x18] sm:$0xff]
    %v596 = vld [vmem:[#allocation8 + $0x20] sm:$0xff]
    %v597 = vld [vmem:[#allocation8 + $0x28] sm:$0xff]
    %v598 = vld [vmem:[#allocation8 + $0x30] sm:$0xff]
    %v599 = vld [vmem:[#allocation8 + $0x38] sm:$0xff]
    %v600 = vld [vmem:[#allocation8 + $0x40] sm:$0xff]
    %v601 = vld [vmem:[#allocation8 + $0x48] sm:$0xff]
    %v602 = vld [vmem:[#allocation8 + $0x50] sm:$0xff]
    %v603 = vld [vmem:[#allocation8 + $0x58] sm:$0xff]
    %v604 = vld [vmem:[#allocation8 + $0x60] sm:$0xff]
    %v605 = vld [vmem:[#allocation8 + $0x68] sm:$0xff]
    %v606 = vld [vmem:[#allocation8 + $0x70] sm:$0xff]
    %v607 = vld [vmem:[#allocation8 + $0x78] sm:$0xff]
    %v608 = vld [vmem:[#allocation8 + $0x80] sm:$0xff]
    %v609 = vld [vmem:[#allocation8 + $0x88] sm:$0xff]
    %v610 = vld [vmem:[#allocation8 + $0x90] sm:$0xff]
    %v611 = vld [vmem:[#allocation8 + $0x98] sm:$0xff]
    %v612 = vld [vmem:[#allocation8 + $0xa0] sm:$0xff]
    %v613 = vld [vmem:[#allocation8 + $0xa8] sm:$0xff]
    %v614 = vld [vmem:[#allocation8 + $0xb0] sm:$0xff]
    %v615 = vld [vmem:[#allocation8 + $0xb8] sm:$0xff]
    %v616 = vld [vmem:[#allocation8 + $0xc0] sm:$0xff]
    %v617 = vld [vmem:[#allocation8 + $0xc8] sm:$0xff]
    %v618 = vld [vmem:[#allocation8 + $0xd0] sm:$0xff]
    %v619 = vld [vmem:[#allocation8 + $0xd8] sm:$0xff]
    %v620 = vld [vmem:[#allocation8 + $0xe0] sm:$0xff]
    %v621 = vld [vmem:[#allocation8 + $0xe8] sm:$0xff]
    %v622 = vld [vmem:[#allocation8 + $0xf0] sm:$0xff]
    %v623 = vld [vmem:[#allocation8 + $0xf8] sm:$0xff]
    %v624 = vld [vmem:[#allocation8 + $0x100] sm:$0xff]
    %v625 = vld [vmem:[#allocation8 + $0x108] sm:$0xff]
    %v626 = vld [vmem:[#allocation8 + $0x110] sm:$0xff]
    %v627 = vld [vmem:[#allocation8 + $0x118] sm:$0xff]
    %v628 = vld [vmem:[#allocation8 + $0x120] sm:$0xff]
    %v629 = vld [vmem:[#allocation8 + $0x128] sm:$0xff]
    %v630 = vld [vmem:[#allocation8 + $0x130] sm:$0xff]
    %v631 = vld [vmem:[#allocation8 + $0x138] sm:$0xff]
    %v632 = vld [vmem:[#allocation8 + $0x140] sm:$0xff]
    %v633 = vld [vmem:[#allocation8 + $0x148] sm:$0xff]
    %v634 = vld [vmem:[#allocation8 + $0x150] sm:$0xff]
    %v635 = vld [vmem:[#allocation8 + $0x158] sm:$0xff]
    %v636 = vld [vmem:[#allocation8 + $0x160] sm:$0xff]
    %v637 = vld [vmem:[#allocation8 + $0x168] sm:$0xff]
    %v638 = vld [vmem:[#allocation8 + $0x170] sm:$0xff]
    %v639 = vld [vmem:[#allocation8 + $0x178] sm:$0xff]
    %v640 = vld [vmem:[#allocation8 + $0x180] sm:$0xff]
    %v641 = vld [vmem:[#allocation8 + $0x188] sm:$0xff]
    %v642 = vld [vmem:[#allocation8 + $0x190] sm:$0xff]
    %v643 = vld [vmem:[#allocation8 + $0x198] sm:$0xff]
    %v644 = vld [vmem:[#allocation8 + $0x1a0] sm:$0xff]
    %v645 = vld [vmem:[#allocation8 + $0x1a8] sm:$0xff]
    %v646 = vld [vmem:[#allocation8 + $0x1b0] sm:$0xff]
    %v647 = vld [vmem:[#allocation8 + $0x1b8] sm:$0xff]
    %v648 = vld [vmem:[#allocation8 + $0x1c0] sm:$0xff]
    %v649 = vld [vmem:[#allocation8 + $0x1c8] sm:$0xff]
    %v650 = vld [vmem:[#allocation8 + $0x1d0] sm:$0xff]
    %v651 = vld [vmem:[#allocation8 + $0x1d8] sm:$0xff]
    %v652 = vld [vmem:[#allocation8 + $0x1e0] sm:$0xff]
    %v653 = vld [vmem:[#allocation8 + $0x1e8] sm:$0xff]
    %v654 = vld [vmem:[#allocation8 + $0x1f0] sm:$0xff]
    %v655 = vld [vmem:[#allocation8 + $0x1f8] sm:$0xff]
    %v657 = vrot.slane %v326, 1
    %v659 = vsel %vm589, %v657, %v584
    %v660 = vpack.c.bf16 %v659, %v659
    %s661 = scalar_lea.vmem [#allocation8], 512
    %v662 = vld [vmem:[%s661] sm:$0xff]
    %v663 = vld [vmem:[%s661 + $0x8] sm:$0xff]
    %v664 = vld [vmem:[%s661 + $0x10] sm:$0xff]
    %v665 = vld [vmem:[%s661 + $0x18] sm:$0xff]
    %v666 = vld [vmem:[%s661 + $0x20] sm:$0xff]
    %v667 = vld [vmem:[%s661 + $0x28] sm:$0xff]
    %v668 = vld [vmem:[%s661 + $0x30] sm:$0xff]
    %v669 = vld [vmem:[%s661 + $0x38] sm:$0xff]
    %v670 = vld [vmem:[%s661 + $0x40] sm:$0xff]
    %v671 = vld [vmem:[%s661 + $0x48] sm:$0xff]
    %v672 = vld [vmem:[%s661 + $0x50] sm:$0xff]
    %v673 = vld [vmem:[%s661 + $0x58] sm:$0xff]
    %v674 = vld [vmem:[%s661 + $0x60] sm:$0xff]
    %v675 = vld [vmem:[%s661 + $0x68] sm:$0xff]
    %v676 = vld [vmem:[%s661 + $0x70] sm:$0xff]
    %v677 = vld [vmem:[%s661 + $0x78] sm:$0xff]
    %v678 = vld [vmem:[%s661 + $0x80] sm:$0xff]
    %v679 = vld [vmem:[%s661 + $0x88] sm:$0xff]
    %v680 = vld [vmem:[%s661 + $0x90] sm:$0xff]
    %v681 = vld [vmem:[%s661 + $0x98] sm:$0xff]
    %v682 = vld [vmem:[%s661 + $0xa0] sm:$0xff]
    %v683 = vld [vmem:[%s661 + $0xa8] sm:$0xff]
    %v684 = vld [vmem:[%s661 + $0xb0] sm:$0xff]
    %v685 = vld [vmem:[%s661 + $0xb8] sm:$0xff]
    %v686 = vld [vmem:[%s661 + $0xc0] sm:$0xff]
    %v687 = vld [vmem:[%s661 + $0xc8] sm:$0xff]
    %v688 = vld [vmem:[%s661 + $0xd0] sm:$0xff]
    %v689 = vld [vmem:[%s661 + $0xd8] sm:$0xff]
    %v690 = vld [vmem:[%s661 + $0xe0] sm:$0xff]
    %v691 = vld [vmem:[%s661 + $0xe8] sm:$0xff]
    %v692 = vld [vmem:[%s661 + $0xf0] sm:$0xff]
    %v693 = vld [vmem:[%s661 + $0xf8] sm:$0xff]
    %v694 = vld [vmem:[%s661 + $0x100] sm:$0xff]
    %v695 = vld [vmem:[%s661 + $0x108] sm:$0xff]
    %v696 = vld [vmem:[%s661 + $0x110] sm:$0xff]
    %v697 = vld [vmem:[%s661 + $0x118] sm:$0xff]
    %v698 = vld [vmem:[%s661 + $0x120] sm:$0xff]
    %v699 = vld [vmem:[%s661 + $0x128] sm:$0xff]
    %v700 = vld [vmem:[%s661 + $0x130] sm:$0xff]
    %v701 = vld [vmem:[%s661 + $0x138] sm:$0xff]
    %v702 = vld [vmem:[%s661 + $0x140] sm:$0xff]
    %v703 = vld [vmem:[%s661 + $0x148] sm:$0xff]
    %v704 = vld [vmem:[%s661 + $0x150] sm:$0xff]
    %v705 = vld [vmem:[%s661 + $0x158] sm:$0xff]
    %v706 = vld [vmem:[%s661 + $0x160] sm:$0xff]
    %v707 = vld [vmem:[%s661 + $0x168] sm:$0xff]
    %v708 = vld [vmem:[%s661 + $0x170] sm:$0xff]
    %v709 = vld [vmem:[%s661 + $0x178] sm:$0xff]
    %v710 = vld [vmem:[%s661 + $0x180] sm:$0xff]
    %v711 = vld [vmem:[%s661 + $0x188] sm:$0xff]
    %v712 = vld [vmem:[%s661 + $0x190] sm:$0xff]
    %v713 = vld [vmem:[%s661 + $0x198] sm:$0xff]
    %v714 = vld [vmem:[%s661 + $0x1a0] sm:$0xff]
    %v715 = vld [vmem:[%s661 + $0x1a8] sm:$0xff]
    %v716 = vld [vmem:[%s661 + $0x1b0] sm:$0xff]
    %v717 = vld [vmem:[%s661 + $0x1b8] sm:$0xff]
    %v718 = vld [vmem:[%s661 + $0x1c0] sm:$0xff]
    %v719 = vld [vmem:[%s661 + $0x1c8] sm:$0xff]
    %v720 = vld [vmem:[%s661 + $0x1d0] sm:$0xff]
    %v721 = vld [vmem:[%s661 + $0x1d8] sm:$0xff]
    %v722 = vld [vmem:[%s661 + $0x1e0] sm:$0xff]
    %v723 = vld [vmem:[%s661 + $0x1e8] sm:$0xff]
    %v724 = vld [vmem:[%s661 + $0x1f0] sm:$0xff]
    %v725 = vld [vmem:[%s661 + $0x1f8] sm:$0xff]
    %v790 = vunpack.c.l.b16 %v662
    %v791 = vunpack.c.h.b16 %v662
    %v792 = vunpack.c.l.b16 %v663
    %v793 = vunpack.c.h.b16 %v663
    %v794 = vunpack.c.l.b16 %v664
    %v795 = vunpack.c.h.b16 %v664
    %v796 = vunpack.c.l.b16 %v665
    %v797 = vunpack.c.h.b16 %v665
    %v798 = vunpack.c.l.b16 %v666
    %v799 = vunpack.c.h.b16 %v666
    %v800 = vunpack.c.l.b16 %v667
    %v801 = vunpack.c.h.b16 %v667
    %v802 = vunpack.c.l.b16 %v668
    %v803 = vunpack.c.h.b16 %v668
    %v804 = vunpack.c.l.b16 %v669
    %v805 = vunpack.c.h.b16 %v669
    %v806 = vunpack.c.l.b16 %v670
    %v807 = vunpack.c.h.b16 %v670
    %v808 = vunpack.c.l.b16 %v671
    %v809 = vunpack.c.h.b16 %v671
    %v810 = vunpack.c.l.b16 %v672
    %v811 = vunpack.c.h.b16 %v672
    %v812 = vunpack.c.l.b16 %v673
    %v813 = vunpack.c.h.b16 %v673
    %v814 = vunpack.c.l.b16 %v674
    %v815 = vunpack.c.h.b16 %v674
    %v816 = vunpack.c.l.b16 %v675
    %v817 = vunpack.c.h.b16 %v675
    %v818 = vunpack.c.l.b16 %v676
    %v819 = vunpack.c.h.b16 %v676
    %v820 = vunpack.c.l.b16 %v677
    %v821 = vunpack.c.h.b16 %v677
    %v822 = vunpack.c.l.b16 %v678
    %v823 = vunpack.c.h.b16 %v678
    %v824 = vunpack.c.l.b16 %v679
    %v825 = vunpack.c.h.b16 %v679
    %v826 = vunpack.c.l.b16 %v680
    %v827 = vunpack.c.h.b16 %v680
    %v828 = vunpack.c.l.b16 %v681
    %v829 = vunpack.c.h.b16 %v681
    %v830 = vunpack.c.l.b16 %v682
    %v831 = vunpack.c.h.b16 %v682
    %v832 = vunpack.c.l.b16 %v683
    %v833 = vunpack.c.h.b16 %v683
    %v834 = vunpack.c.l.b16 %v684
    %v835 = vunpack.c.h.b16 %v684
    %v836 = vunpack.c.l.b16 %v685
    %v837 = vunpack.c.h.b16 %v685
    %v838 = vunpack.c.l.b16 %v686
    %v839 = vunpack.c.h.b16 %v686
    %v840 = vunpack.c.l.b16 %v687
    %v841 = vunpack.c.h.b16 %v687
    %v842 = vunpack.c.l.b16 %v688
    %v843 = vunpack.c.h.b16 %v688
    %v844 = vunpack.c.l.b16 %v689
    %v845 = vunpack.c.h.b16 %v689
    %v846 = vunpack.c.l.b16 %v690
    %v847 = vunpack.c.h.b16 %v690
    %v848 = vunpack.c.l.b16 %v691
    %v849 = vunpack.c.h.b16 %v691
    %v850 = vunpack.c.l.b16 %v692
    %v851 = vunpack.c.h.b16 %v692
    %v852 = vunpack.c.l.b16 %v693
    %v853 = vunpack.c.h.b16 %v693
    %v854 = vunpack.c.l.b16 %v694
    %v855 = vunpack.c.h.b16 %v694
    %v856 = vunpack.c.l.b16 %v695
    %v857 = vunpack.c.h.b16 %v695
    %v858 = vunpack.c.l.b16 %v696
    %v859 = vunpack.c.h.b16 %v696
    %v860 = vunpack.c.l.b16 %v697
    %v861 = vunpack.c.h.b16 %v697
    %v862 = vunpack.c.l.b16 %v698
    %v863 = vunpack.c.h.b16 %v698
    %v864 = vunpack.c.l.b16 %v699
    %v865 = vunpack.c.h.b16 %v699
    %v866 = vunpack.c.l.b16 %v700
    %v867 = vunpack.c.h.b16 %v700
    %v868 = vunpack.c.l.b16 %v701
    %v869 = vunpack.c.h.b16 %v701
    %v870 = vunpack.c.l.b16 %v702
    %v871 = vunpack.c.h.b16 %v702
    %v872 = vunpack.c.l.b16 %v703
    %v873 = vunpack.c.h.b16 %v703
    %v874 = vunpack.c.l.b16 %v704
    %v875 = vunpack.c.h.b16 %v704
    %v876 = vunpack.c.l.b16 %v705
    %v877 = vunpack.c.h.b16 %v705
    %v878 = vunpack.c.l.b16 %v706
    %v879 = vunpack.c.h.b16 %v706
    %v880 = vunpack.c.l.b16 %v707
    %v881 = vunpack.c.h.b16 %v707
    %v882 = vunpack.c.l.b16 %v708
    %v883 = vunpack.c.h.b16 %v708
    %v884 = vunpack.c.l.b16 %v709
    %v885 = vunpack.c.h.b16 %v709
    %v886 = vunpack.c.l.b16 %v710
    %v887 = vunpack.c.h.b16 %v710
    %v888 = vunpack.c.l.b16 %v711
    %v889 = vunpack.c.h.b16 %v711
    %v890 = vunpack.c.l.b16 %v712
    %v891 = vunpack.c.h.b16 %v712
    %v892 = vunpack.c.l.b16 %v713
    %v893 = vunpack.c.h.b16 %v713
    %v894 = vunpack.c.l.b16 %v714
    %v895 = vunpack.c.h.b16 %v714
    %v896 = vunpack.c.l.b16 %v715
    %v897 = vunpack.c.h.b16 %v715
    %v898 = vunpack.c.l.b16 %v716
    %v899 = vunpack.c.h.b16 %v716
    %v900 = vunpack.c.l.b16 %v717
    %v901 = vunpack.c.h.b16 %v717
    %v902 = vunpack.c.l.b16 %v718
    %v903 = vunpack.c.h.b16 %v718
    %v904 = vunpack.c.l.b16 %v719
    %v905 = vunpack.c.h.b16 %v719
    %v906 = vunpack.c.l.b16 %v720
    %v907 = vunpack.c.h.b16 %v720
    %v908 = vunpack.c.l.b16 %v721
    %v909 = vunpack.c.h.b16 %v721
    %v910 = vunpack.c.l.b16 %v722
    %v911 = vunpack.c.h.b16 %v722
    %v912 = vunpack.c.l.b16 %v723
    %v913 = vunpack.c.h.b16 %v723
    %v914 = vunpack.c.l.b16 %v724
    %v915 = vunpack.c.h.b16 %v724
    %v916 = vunpack.c.l.b16 %v725
    %v917 = vunpack.c.h.b16 %v725
    %v918 = vpack.c.b16 %v798, %v790
    %v919 = vpack.c.b16 %v799, %v791
    %v920 = vpack.c.b16 %v800, %v792
    %v921 = vpack.c.b16 %v801, %v793
    %v922 = vpack.c.b16 %v802, %v794
    %v923 = vpack.c.b16 %v803, %v795
    %v924 = vpack.c.b16 %v804, %v796
    %v925 = vpack.c.b16 %v805, %v797
    %v926 = vpack.c.b16 %v814, %v806
    %v927 = vpack.c.b16 %v815, %v807
    %v928 = vpack.c.b16 %v816, %v808
    %v929 = vpack.c.b16 %v817, %v809
    %v930 = vpack.c.b16 %v818, %v810
    %v931 = vpack.c.b16 %v819, %v811
    %v932 = vpack.c.b16 %v820, %v812
    %v933 = vpack.c.b16 %v821, %v813
    %v934 = vpack.c.b16 %v830, %v822
    %v935 = vpack.c.b16 %v831, %v823
    %v936 = vpack.c.b16 %v832, %v824
    %v937 = vpack.c.b16 %v833, %v825
    %v938 = vpack.c.b16 %v834, %v826
    %v939 = vpack.c.b16 %v835, %v827
    %v940 = vpack.c.b16 %v836, %v828
    %v941 = vpack.c.b16 %v837, %v829
    %v942 = vpack.c.b16 %v846, %v838
    %v943 = vpack.c.b16 %v847, %v839
    %v944 = vpack.c.b16 %v848, %v840
    %v945 = vpack.c.b16 %v849, %v841
    %v946 = vpack.c.b16 %v850, %v842
    %v947 = vpack.c.b16 %v851, %v843
    %v948 = vpack.c.b16 %v852, %v844
    %v949 = vpack.c.b16 %v853, %v845
    %v950 = vpack.c.b16 %v862, %v854
    %v951 = vpack.c.b16 %v863, %v855
    %v952 = vpack.c.b16 %v864, %v856
    %v953 = vpack.c.b16 %v865, %v857
    %v954 = vpack.c.b16 %v866, %v858
    %v955 = vpack.c.b16 %v867, %v859
    %v956 = vpack.c.b16 %v868, %v860
    %v957 = vpack.c.b16 %v869, %v861
    %v958 = vpack.c.b16 %v878, %v870
    %v959 = vpack.c.b16 %v879, %v871
    %v960 = vpack.c.b16 %v880, %v872
    %v961 = vpack.c.b16 %v881, %v873
    %v962 = vpack.c.b16 %v882, %v874
    %v963 = vpack.c.b16 %v883, %v875
    %v964 = vpack.c.b16 %v884, %v876
    %v965 = vpack.c.b16 %v885, %v877
    %v966 = vpack.c.b16 %v894, %v886
    %v967 = vpack.c.b16 %v895, %v887
    %v968 = vpack.c.b16 %v896, %v888
    %v969 = vpack.c.b16 %v897, %v889
    %v970 = vpack.c.b16 %v898, %v890
    %v971 = vpack.c.b16 %v899, %v891
    %v972 = vpack.c.b16 %v900, %v892
    %v973 = vpack.c.b16 %v901, %v893
    %v974 = vpack.c.b16 %v910, %v902
    %v975 = vpack.c.b16 %v911, %v903
    %v976 = vpack.c.b16 %v912, %v904
    %v977 = vpack.c.b16 %v913, %v905
    %v978 = vpack.c.b16 %v914, %v906
    %v979 = vpack.c.b16 %v915, %v907
    %v980 = vpack.c.b16 %v916, %v908
    %v981 = vpack.c.b16 %v917, %v909
    %1046 = vmatprep.subr.bf16.mxu0 %v975
    %1047 = vmatpush1.bf16.msra.mxu0 %v974
    %1048 = vmatprep.subr.bf16.mxu0 %v967
    %1049 = vmatpush1.bf16.msra.mxu0 %v966
    %1050 = vmatprep.subr.bf16.mxu0 %v959
    %1051 = vmatpush1.bf16.msra.mxu0 %v958
    %1052 = vmatprep.subr.bf16.mxu0 %v951
    %1053 = vmatpush1.bf16.msra.mxu0 %v950
    %1054 = vmatprep.subr.bf16.mxu0 %v943
    %1055 = vmatpush1.bf16.msra.mxu0 %v942
    %1056 = vmatprep.subr.bf16.mxu0 %v935
    %1057 = vmatpush1.bf16.msra.mxu0 %v934
    %1058 = vmatprep.subr.bf16.mxu0 %v927
    %1059 = vmatpush1.bf16.msra.mxu0 %v926
    %1060 = vmatprep.subr.bf16.mxu0 %v919
    %1061 = vmatpush1.bf16.msra.mxu0 %v918
    %1062 = vmatprep.subr.bf16.mxu0 0
    %1063 = vmatpush2.bf16.msra.mxu0 0
    %1064 = vmatprep.subr.bf16.mxu0 0
    %1065 = vmatpush2.bf16.msra.mxu0 0
    %1066 = vmatprep.subr.bf16.mxu0 0
    %1067 = vmatpush2.bf16.msra.mxu0 0
    %1068 = vmatprep.subr.bf16.mxu0 0
    %1069 = vmatpush2.bf16.msra.mxu0 0
    %1070 = vmatprep.subr.bf16.mxu0 0
    %1071 = vmatpush2.bf16.msra.mxu0 0
    %1072 = vmatprep.subr.bf16.mxu0 0
    %1073 = vmatpush2.bf16.msra.mxu0 0
    %1074 = vmatprep.subr.bf16.mxu0 0
    %1075 = vmatpush2.bf16.msra.mxu0 0
    %1076 = vmatprep.subr.bf16.mxu0 0
    %1077 = vmatpush2.bf16.msra.mxu0 0
    %1078 = vmatprep.mubr.bf16.mxu0 0
    %1079 = vmatmul.mubr.bf16.gmra.mxu0 %v660
    %v1080 = vpop.f32.mrf.mxu0
    %v1081 = vadd.f32 0.0, %v1080
    %v1082 = vpop.f32.mrf.mxu0
    %v1083 = vadd.f32 0.0, %v1082
    %v1084 = vpop.f32.mrf.mxu0
    %v1085 = vpop.f32.mrf.mxu0
    %1086 = vdwg.mxu0
    %1087 = vmatprep.subr.bf16.mxu0 %v977
    %1088 = vmatpush1.bf16.msra.mxu0 %v976
    %1089 = vmatprep.subr.bf16.mxu0 %v969
    %1090 = vmatpush1.bf16.msra.mxu0 %v968
    %1091 = vmatprep.subr.bf16.mxu0 %v961
    %1092 = vmatpush1.bf16.msra.mxu0 %v960
    %1093 = vmatprep.subr.bf16.mxu0 %v953
    %1094 = vmatpush1.bf16.msra.mxu0 %v952
    %1095 = vmatprep.subr.bf16.mxu0 %v945
    %1096 = vmatpush1.bf16.msra.mxu0 %v944
    %1097 = vmatprep.subr.bf16.mxu0 %v937
    %1098 = vmatpush1.bf16.msra.mxu0 %v936
    %1099 = vmatprep.subr.bf16.mxu0 %v929
    %1100 = vmatpush1.bf16.msra.mxu0 %v928
    %1101 = vmatprep.subr.bf16.mxu0 %v921
    %1102 = vmatpush1.bf16.msra.mxu0 %v920
    %1103 = vmatprep.subr.bf16.mxu0 0
    %1104 = vmatpush2.bf16.msra.mxu0 0
    %1105 = vmatprep.subr.bf16.mxu0 0
    %1106 = vmatpush2.bf16.msra.mxu0 0
    %1107 = vmatprep.subr.bf16.mxu0 0
    %1108 = vmatpush2.bf16.msra.mxu0 0
    %1109 = vmatprep.subr.bf16.mxu0 0
    %1110 = vmatpush2.bf16.msra.mxu0 0
    %1111 = vmatprep.subr.bf16.mxu0 0
    %1112 = vmatpush2.bf16.msra.mxu0 0
    %1113 = vmatprep.subr.bf16.mxu0 0
    %1114 = vmatpush2.bf16.msra.mxu0 0
    %1115 = vmatprep.subr.bf16.mxu0 0
    %1116 = vmatpush2.bf16.msra.mxu0 0
    %1117 = vmatprep.subr.bf16.mxu0 0
    %1118 = vmatpush2.bf16.msra.mxu0 0
    %1119 = vmatprep.mubr.bf16.mxu0 0
    %1120 = vmatmul.mubr.bf16.gmra.mxu0 %v660
    %v1121 = vpop.f32.mrf.mxu0
    %v1122 = vadd.f32 0.0, %v1121
    %v1123 = vpop.f32.mrf.mxu0
    %v1124 = vadd.f32 0.0, %v1123
    %v1125 = vpop.f32.mrf.mxu0
    %v1126 = vpop.f32.mrf.mxu0
    %1127 = vdwg.mxu0
    %1128 = vmatprep.subr.bf16.mxu0 %v979
    %1129 = vmatpush1.bf16.msra.mxu0 %v978
    %1130 = vmatprep.subr.bf16.mxu0 %v971
    %1131 = vmatpush1.bf16.msra.mxu0 %v970
    %1132 = vmatprep.subr.bf16.mxu0 %v963
    %1133 = vmatpush1.bf16.msra.mxu0 %v962
    %1134 = vmatprep.subr.bf16.mxu0 %v955
    %1135 = vmatpush1.bf16.msra.mxu0 %v954
    %1136 = vmatprep.subr.bf16.mxu0 %v947
    %1137 = vmatpush1.bf16.msra.mxu0 %v946
    %1138 = vmatprep.subr.bf16.mxu0 %v939
    %1139 = vmatpush1.bf16.msra.mxu0 %v938
    %1140 = vmatprep.subr.bf16.mxu0 %v931
    %1141 = vmatpush1.bf16.msra.mxu0 %v930
    %1142 = vmatprep.subr.bf16.mxu0 %v923
    %1143 = vmatpush1.bf16.msra.mxu0 %v922
    %1144 = vmatprep.subr.bf16.mxu0 0
    %1145 = vmatpush2.bf16.msra.mxu0 0
    %1146 = vmatprep.subr.bf16.mxu0 0
    %1147 = vmatpush2.bf16.msra.mxu0 0
    %1148 = vmatprep.subr.bf16.mxu0 0
    %1149 = vmatpush2.bf16.msra.mxu0 0
    %1150 = vmatprep.subr.bf16.mxu0 0
    %1151 = vmatpush2.bf16.msra.mxu0 0
    %1152 = vmatprep.subr.bf16.mxu0 0
    %1153 = vmatpush2.bf16.msra.mxu0 0
    %1154 = vmatprep.subr.bf16.mxu0 0
    %1155 = vmatpush2.bf16.msra.mxu0 0
    %1156 = vmatprep.subr.bf16.mxu0 0
    %1157 = vmatpush2.bf16.msra.mxu0 0
    %1158 = vmatprep.subr.bf16.mxu0 0
    %1159 = vmatpush2.bf16.msra.mxu0 0
    %1160 = vmatprep.mubr.bf16.mxu0 0
    %1161 = vmatmul.mubr.bf16.gmra.mxu0 %v660
    %v1162 = vpop.f32.mrf.mxu0
    %v1163 = vadd.f32 0.0, %v1162
    %v1164 = vpop.f32.mrf.mxu0
    %v1165 = vadd.f32 0.0, %v1164
    %v1166 = vpop.f32.mrf.mxu0
    %v1167 = vpop.f32.mrf.mxu0
    %1168 = vdwg.mxu0
    %1169 = vmatprep.subr.bf16.mxu0 %v981
    %1170 = vmatpush1.bf16.msra.mxu0 %v980
    %1171 = vmatprep.subr.bf16.mxu0 %v973
    %1172 = vmatpush1.bf16.msra.mxu0 %v972
    %1173 = vmatprep.subr.bf16.mxu0 %v965
    %1174 = vmatpush1.bf16.msra.mxu0 %v964
    %1175 = vmatprep.subr.bf16.mxu0 %v957
    %1176 = vmatpush1.bf16.msra.mxu0 %v956
    %1177 = vmatprep.subr.bf16.mxu0 %v949
    %1178 = vmatpush1.bf16.msra.mxu0 %v948
    %1179 = vmatprep.subr.bf16.mxu0 %v941
    %1180 = vmatpush1.bf16.msra.mxu0 %v940
    %1181 = vmatprep.subr.bf16.mxu0 %v933
    %1182 = vmatpush1.bf16.msra.mxu0 %v932
    %1183 = vmatprep.subr.bf16.mxu0 %v925
    %1184 = vmatpush1.bf16.msra.mxu0 %v924
    %1185 = vmatprep.subr.bf16.mxu0 0
    %1186 = vmatpush2.bf16.msra.mxu0 0
    %1187 = vmatprep.subr.bf16.mxu0 0
    %1188 = vmatpush2.bf16.msra.mxu0 0
    %1189 = vmatprep.subr.bf16.mxu0 0
    %1190 = vmatpush2.bf16.msra.mxu0 0
    %1191 = vmatprep.subr.bf16.mxu0 0
    %1192 = vmatpush2.bf16.msra.mxu0 0
    %1193 = vmatprep.subr.bf16.mxu0 0
    %1194 = vmatpush2.bf16.msra.mxu0 0
    %1195 = vmatprep.subr.bf16.mxu0 0
    %1196 = vmatpush2.bf16.msra.mxu0 0
    %1197 = vmatprep.subr.bf16.mxu0 0
    %1198 = vmatpush2.bf16.msra.mxu0 0
    %1199 = vmatprep.subr.bf16.mxu0 0
    %1200 = vmatpush2.bf16.msra.mxu0 0
    %1201 = vmatprep.mubr.bf16.mxu0 0
    %1202 = vmatmul.mubr.bf16.gmra.mxu0 %v660
    %v1203 = vpop.f32.mrf.mxu0
    %v1204 = vadd.f32 0.0, %v1203
    %v1205 = vpop.f32.mrf.mxu0
    %v1206 = vadd.f32 0.0, %v1205
    %v1207 = vpop.f32.mrf.mxu0
    %v1208 = vpop.f32.mrf.mxu0
    %1209 = vdwg.mxu0
    %v1274 = vunpack.c.l.b16 %v592
    %v1275 = vunpack.c.h.b16 %v592
    %v1276 = vunpack.c.l.b16 %v593
    %v1277 = vunpack.c.h.b16 %v593
    %v1278 = vunpack.c.l.b16 %v594
    %v1279 = vunpack.c.h.b16 %v594
    %v1280 = vunpack.c.l.b16 %v595
    %v1281 = vunpack.c.h.b16 %v595
    %v1282 = vunpack.c.l.b16 %v596
    %v1283 = vunpack.c.h.b16 %v596
    %v1284 = vunpack.c.l.b16 %v597
    %v1285 = vunpack.c.h.b16 %v597
    %v1286 = vunpack.c.l.b16 %v598
    %v1287 = vunpack.c.h.b16 %v598
    %v1288 = vunpack.c.l.b16 %v599
    %v1289 = vunpack.c.h.b16 %v599
    %v1290 = vunpack.c.l.b16 %v600
    %v1291 = vunpack.c.h.b16 %v600
    %v1292 = vunpack.c.l.b16 %v601
    %v1293 = vunpack.c.h.b16 %v601
    %v1294 = vunpack.c.l.b16 %v602
    %v1295 = vunpack.c.h.b16 %v602
    %v1296 = vunpack.c.l.b16 %v603
    %v1297 = vunpack.c.h.b16 %v603
    %v1298 = vunpack.c.l.b16 %v604
    %v1299 = vunpack.c.h.b16 %v604
    %v1300 = vunpack.c.l.b16 %v605
    %v1301 = vunpack.c.h.b16 %v605
    %v1302 = vunpack.c.l.b16 %v606
    %v1303 = vunpack.c.h.b16 %v606
    %v1304 = vunpack.c.l.b16 %v607
    %v1305 = vunpack.c.h.b16 %v607
    %v1306 = vunpack.c.l.b16 %v608
    %v1307 = vunpack.c.h.b16 %v608
    %v1308 = vunpack.c.l.b16 %v609
    %v1309 = vunpack.c.h.b16 %v609
    %v1310 = vunpack.c.l.b16 %v610
    %v1311 = vunpack.c.h.b16 %v610
    %v1312 = vunpack.c.l.b16 %v611
    %v1313 = vunpack.c.h.b16 %v611
    %v1314 = vunpack.c.l.b16 %v612
    %v1315 = vunpack.c.h.b16 %v612
    %v1316 = vunpack.c.l.b16 %v613
    %v1317 = vunpack.c.h.b16 %v613
    %v1318 = vunpack.c.l.b16 %v614
    %v1319 = vunpack.c.h.b16 %v614
    %v1320 = vunpack.c.l.b16 %v615
    %v1321 = vunpack.c.h.b16 %v615
    %v1322 = vunpack.c.l.b16 %v616
    %v1323 = vunpack.c.h.b16 %v616
    %v1324 = vunpack.c.l.b16 %v617
    %v1325 = vunpack.c.h.b16 %v617
    %v1326 = vunpack.c.l.b16 %v618
    %v1327 = vunpack.c.h.b16 %v618
    %v1328 = vunpack.c.l.b16 %v619
    %v1329 = vunpack.c.h.b16 %v619
    %v1330 = vunpack.c.l.b16 %v620
    %v1331 = vunpack.c.h.b16 %v620
    %v1332 = vunpack.c.l.b16 %v621
    %v1333 = vunpack.c.h.b16 %v621
    %v1334 = vunpack.c.l.b16 %v622
    %v1335 = vunpack.c.h.b16 %v622
    %v1336 = vunpack.c.l.b16 %v623
    %v1337 = vunpack.c.h.b16 %v623
    %v1338 = vunpack.c.l.b16 %v624
    %v1339 = vunpack.c.h.b16 %v624
    %v1340 = vunpack.c.l.b16 %v625
    %v1341 = vunpack.c.h.b16 %v625
    %v1342 = vunpack.c.l.b16 %v626
    %v1343 = vunpack.c.h.b16 %v626
    %v1344 = vunpack.c.l.b16 %v627
    %v1345 = vunpack.c.h.b16 %v627
    %v1346 = vunpack.c.l.b16 %v628
    %v1347 = vunpack.c.h.b16 %v628
    %v1348 = vunpack.c.l.b16 %v629
    %v1349 = vunpack.c.h.b16 %v629
    %v1350 = vunpack.c.l.b16 %v630
    %v1351 = vunpack.c.h.b16 %v630
    %v1352 = vunpack.c.l.b16 %v631
    %v1353 = vunpack.c.h.b16 %v631
    %v1354 = vunpack.c.l.b16 %v632
    %v1355 = vunpack.c.h.b16 %v632
    %v1356 = vunpack.c.l.b16 %v633
    %v1357 = vunpack.c.h.b16 %v633
    %v1358 = vunpack.c.l.b16 %v634
    %v1359 = vunpack.c.h.b16 %v634
    %v1360 = vunpack.c.l.b16 %v635
    %v1361 = vunpack.c.h.b16 %v635
    %v1362 = vunpack.c.l.b16 %v636
    %v1363 = vunpack.c.h.b16 %v636
    %v1364 = vunpack.c.l.b16 %v637
    %v1365 = vunpack.c.h.b16 %v637
    %v1366 = vunpack.c.l.b16 %v638
    %v1367 = vunpack.c.h.b16 %v638
    %v1368 = vunpack.c.l.b16 %v639
    %v1369 = vunpack.c.h.b16 %v639
    %v1370 = vunpack.c.l.b16 %v640
    %v1371 = vunpack.c.h.b16 %v640
    %v1372 = vunpack.c.l.b16 %v641
    %v1373 = vunpack.c.h.b16 %v641
    %v1374 = vunpack.c.l.b16 %v642
    %v1375 = vunpack.c.h.b16 %v642
    %v1376 = vunpack.c.l.b16 %v643
    %v1377 = vunpack.c.h.b16 %v643
    %v1378 = vunpack.c.l.b16 %v644
    %v1379 = vunpack.c.h.b16 %v644
    %v1380 = vunpack.c.l.b16 %v645
    %v1381 = vunpack.c.h.b16 %v645
    %v1382 = vunpack.c.l.b16 %v646
    %v1383 = vunpack.c.h.b16 %v646
    %v1384 = vunpack.c.l.b16 %v647
    %v1385 = vunpack.c.h.b16 %v647
    %v1386 = vunpack.c.l.b16 %v648
    %v1387 = vunpack.c.h.b16 %v648
    %v1388 = vunpack.c.l.b16 %v649
    %v1389 = vunpack.c.h.b16 %v649
    %v1390 = vunpack.c.l.b16 %v650
    %v1391 = vunpack.c.h.b16 %v650
    %v1392 = vunpack.c.l.b16 %v651
    %v1393 = vunpack.c.h.b16 %v651
    %v1394 = vunpack.c.l.b16 %v652
    %v1395 = vunpack.c.h.b16 %v652
    %v1396 = vunpack.c.l.b16 %v653
    %v1397 = vunpack.c.h.b16 %v653
    %v1398 = vunpack.c.l.b16 %v654
    %v1399 = vunpack.c.h.b16 %v654
    %v1400 = vunpack.c.l.b16 %v655
    %v1401 = vunpack.c.h.b16 %v655
    %v1402 = vpack.c.b16 %v1282, %v1274
    %v1403 = vpack.c.b16 %v1283, %v1275
    %v1404 = vpack.c.b16 %v1284, %v1276
    %v1405 = vpack.c.b16 %v1285, %v1277
    %v1406 = vpack.c.b16 %v1286, %v1278
    %v1407 = vpack.c.b16 %v1287, %v1279
    %v1408 = vpack.c.b16 %v1288, %v1280
    %v1409 = vpack.c.b16 %v1289, %v1281
    %v1410 = vpack.c.b16 %v1298, %v1290
    %v1411 = vpack.c.b16 %v1299, %v1291
    %v1412 = vpack.c.b16 %v1300, %v1292
    %v1413 = vpack.c.b16 %v1301, %v1293
    %v1414 = vpack.c.b16 %v1302, %v1294
    %v1415 = vpack.c.b16 %v1303, %v1295
    %v1416 = vpack.c.b16 %v1304, %v1296
    %v1417 = vpack.c.b16 %v1305, %v1297
    %v1418 = vpack.c.b16 %v1314, %v1306
    %v1419 = vpack.c.b16 %v1315, %v1307
    %v1420 = vpack.c.b16 %v1316, %v1308
    %v1421 = vpack.c.b16 %v1317, %v1309
    %v1422 = vpack.c.b16 %v1318, %v1310
    %v1423 = vpack.c.b16 %v1319, %v1311
    %v1424 = vpack.c.b16 %v1320, %v1312
    %v1425 = vpack.c.b16 %v1321, %v1313
    %v1426 = vpack.c.b16 %v1330, %v1322
    %v1427 = vpack.c.b16 %v1331, %v1323
    %v1428 = vpack.c.b16 %v1332, %v1324
    %v1429 = vpack.c.b16 %v1333, %v1325
    %v1430 = vpack.c.b16 %v1334, %v1326
    %v1431 = vpack.c.b16 %v1335, %v1327
    %v1432 = vpack.c.b16 %v1336, %v1328
    %v1433 = vpack.c.b16 %v1337, %v1329
    %v1434 = vpack.c.b16 %v1346, %v1338
    %v1435 = vpack.c.b16 %v1347, %v1339
    %v1436 = vpack.c.b16 %v1348, %v1340
    %v1437 = vpack.c.b16 %v1349, %v1341
    %v1438 = vpack.c.b16 %v1350, %v1342
    %v1439 = vpack.c.b16 %v1351, %v1343
    %v1440 = vpack.c.b16 %v1352, %v1344
    %v1441 = vpack.c.b16 %v1353, %v1345
    %v1442 = vpack.c.b16 %v1362, %v1354
    %v1443 = vpack.c.b16 %v1363, %v1355
    %v1444 = vpack.c.b16 %v1364, %v1356
    %v1445 = vpack.c.b16 %v1365, %v1357
    %v1446 = vpack.c.b16 %v1366, %v1358
    %v1447 = vpack.c.b16 %v1367, %v1359
    %v1448 = vpack.c.b16 %v1368, %v1360
    %v1449 = vpack.c.b16 %v1369, %v1361
    %v1450 = vpack.c.b16 %v1378, %v1370
    %v1451 = vpack.c.b16 %v1379, %v1371
    %v1452 = vpack.c.b16 %v1380, %v1372
    %v1453 = vpack.c.b16 %v1381, %v1373
    %v1454 = vpack.c.b16 %v1382, %v1374
    %v1455 = vpack.c.b16 %v1383, %v1375
    %v1456 = vpack.c.b16 %v1384, %v1376
    %v1457 = vpack.c.b16 %v1385, %v1377
    %v1458 = vpack.c.b16 %v1394, %v1386
    %v1459 = vpack.c.b16 %v1395, %v1387
    %v1460 = vpack.c.b16 %v1396, %v1388
    %v1461 = vpack.c.b16 %v1397, %v1389
    %v1462 = vpack.c.b16 %v1398, %v1390
    %v1463 = vpack.c.b16 %v1399, %v1391
    %v1464 = vpack.c.b16 %v1400, %v1392
    %v1465 = vpack.c.b16 %v1401, %v1393
    %1530 = vmatprep.subr.bf16.mxu0 %v1459
    %1531 = vmatpush1.bf16.msra.mxu0 %v1458
    %1532 = vmatprep.subr.bf16.mxu0 %v1451
    %1533 = vmatpush1.bf16.msra.mxu0 %v1450
    %1534 = vmatprep.subr.bf16.mxu0 %v1443
    %1535 = vmatpush1.bf16.msra.mxu0 %v1442
    %1536 = vmatprep.subr.bf16.mxu0 %v1435
    %1537 = vmatpush1.bf16.msra.mxu0 %v1434
    %1538 = vmatprep.subr.bf16.mxu0 %v1427
    %1539 = vmatpush1.bf16.msra.mxu0 %v1426
    %1540 = vmatprep.subr.bf16.mxu0 %v1419
    %1541 = vmatpush1.bf16.msra.mxu0 %v1418
    %1542 = vmatprep.subr.bf16.mxu0 %v1411
    %1543 = vmatpush1.bf16.msra.mxu0 %v1410
    %1544 = vmatprep.subr.bf16.mxu0 %v1403
    %1545 = vmatpush1.bf16.msra.mxu0 %v1402
    %1546 = vmatprep.subr.bf16.mxu0 0
    %1547 = vmatpush2.bf16.msra.mxu0 0
    %1548 = vmatprep.subr.bf16.mxu0 0
    %1549 = vmatpush2.bf16.msra.mxu0 0
    %1550 = vmatprep.subr.bf16.mxu0 0
    %1551 = vmatpush2.bf16.msra.mxu0 0
    %1552 = vmatprep.subr.bf16.mxu0 0
    %1553 = vmatpush2.bf16.msra.mxu0 0
    %1554 = vmatprep.subr.bf16.mxu0 0
    %1555 = vmatpush2.bf16.msra.mxu0 0
    %1556 = vmatprep.subr.bf16.mxu0 0
    %1557 = vmatpush2.bf16.msra.mxu0 0
    %1558 = vmatprep.subr.bf16.mxu0 0
    %1559 = vmatpush2.bf16.msra.mxu0 0
    %1560 = vmatprep.subr.bf16.mxu0 0
    %1561 = vmatpush2.bf16.msra.mxu0 0
    %1562 = vmatprep.mubr.bf16.mxu0 0
    %1563 = vmatmul.mubr.bf16.gmra.mxu0 %v591
    %v1564 = vpop.f32.mrf.mxu0
    %v1565 = vadd.f32 %v1081, %v1564
    %v1566 = vpop.f32.mrf.mxu0
    %v1567 = vadd.f32 %v1083, %v1566
    %v1568 = vpop.f32.mrf.mxu0
    %v1569 = vpop.f32.mrf.mxu0
    %1570 = vdwg.mxu0
    %1571 = vmatprep.subr.bf16.mxu0 %v1461
    %1572 = vmatpush1.bf16.msra.mxu0 %v1460
    %1573 = vmatprep.subr.bf16.mxu0 %v1453
    %1574 = vmatpush1.bf16.msra.mxu0 %v1452
    %1575 = vmatprep.subr.bf16.mxu0 %v1445
    %1576 = vmatpush1.bf16.msra.mxu0 %v1444
    %1577 = vmatprep.subr.bf16.mxu0 %v1437
    %1578 = vmatpush1.bf16.msra.mxu0 %v1436
    %1579 = vmatprep.subr.bf16.mxu0 %v1429
    %1580 = vmatpush1.bf16.msra.mxu0 %v1428
    %1581 = vmatprep.subr.bf16.mxu0 %v1421
    %1582 = vmatpush1.bf16.msra.mxu0 %v1420
    %1583 = vmatprep.subr.bf16.mxu0 %v1413
    %1584 = vmatpush1.bf16.msra.mxu0 %v1412
    %1585 = vmatprep.subr.bf16.mxu0 %v1405
    %1586 = vmatpush1.bf16.msra.mxu0 %v1404
    %1587 = vmatprep.subr.bf16.mxu0 0
    %1588 = vmatpush2.bf16.msra.mxu0 0
    %1589 = vmatprep.subr.bf16.mxu0 0
    %1590 = vmatpush2.bf16.msra.mxu0 0
    %1591 = vmatprep.subr.bf16.mxu0 0
    %1592 = vmatpush2.bf16.msra.mxu0 0
    %1593 = vmatprep.subr.bf16.mxu0 0
    %1594 = vmatpush2.bf16.msra.mxu0 0
    %1595 = vmatprep.subr.bf16.mxu0 0
    %1596 = vmatpush2.bf16.msra.mxu0 0
    %1597 = vmatprep.subr.bf16.mxu0 0
    %1598 = vmatpush2.bf16.msra.mxu0 0
    %1599 = vmatprep.subr.bf16.mxu0 0
    %1600 = vmatpush2.bf16.msra.mxu0 0
    %1601 = vmatprep.subr.bf16.mxu0 0
    %1602 = vmatpush2.bf16.msra.mxu0 0
    %1603 = vmatprep.mubr.bf16.mxu0 0
    %1604 = vmatmul.mubr.bf16.gmra.mxu0 %v591
    %v1605 = vpop.f32.mrf.mxu0
    %v1606 = vadd.f32 %v1122, %v1605
    %v1607 = vpop.f32.mrf.mxu0
    %v1608 = vadd.f32 %v1124, %v1607
    %v1609 = vpop.f32.mrf.mxu0
    %v1610 = vpop.f32.mrf.mxu0
    %1611 = vdwg.mxu0
    %1612 = vmatprep.subr.bf16.mxu0 %v1463
    %1613 = vmatpush1.bf16.msra.mxu0 %v1462
    %1614 = vmatprep.subr.bf16.mxu0 %v1455
    %1615 = vmatpush1.bf16.msra.mxu0 %v1454
    %1616 = vmatprep.subr.bf16.mxu0 %v1447
    %1617 = vmatpush1.bf16.msra.mxu0 %v1446
    %1618 = vmatprep.subr.bf16.mxu0 %v1439
    %1619 = vmatpush1.bf16.msra.mxu0 %v1438
    %1620 = vmatprep.subr.bf16.mxu0 %v1431
    %1621 = vmatpush1.bf16.msra.mxu0 %v1430
    %1622 = vmatprep.subr.bf16.mxu0 %v1423
    %1623 = vmatpush1.bf16.msra.mxu0 %v1422
    %1624 = vmatprep.subr.bf16.mxu0 %v1415
    %1625 = vmatpush1.bf16.msra.mxu0 %v1414
    %1626 = vmatprep.subr.bf16.mxu0 %v1407
    %1627 = vmatpush1.bf16.msra.mxu0 %v1406
    %1628 = vmatprep.subr.bf16.mxu0 0
    %1629 = vmatpush2.bf16.msra.mxu0 0
    %1630 = vmatprep.subr.bf16.mxu0 0
    %1631 = vmatpush2.bf16.msra.mxu0 0
    %1632 = vmatprep.subr.bf16.mxu0 0
    %1633 = vmatpush2.bf16.msra.mxu0 0
    %1634 = vmatprep.subr.bf16.mxu0 0
    %1635 = vmatpush2.bf16.msra.mxu0 0
    %1636 = vmatprep.subr.bf16.mxu0 0
    %1637 = vmatpush2.bf16.msra.mxu0 0
    %1638 = vmatprep.subr.bf16.mxu0 0
    %1639 = vmatpush2.bf16.msra.mxu0 0
    %1640 = vmatprep.subr.bf16.mxu0 0
    %1641 = vmatpush2.bf16.msra.mxu0 0
    %1642 = vmatprep.subr.bf16.mxu0 0
    %1643 = vmatpush2.bf16.msra.mxu0 0
    %1644 = vmatprep.mubr.bf16.mxu0 0
    %1645 = vmatmul.mubr.bf16.gmra.mxu0 %v591
    %v1646 = vpop.f32.mrf.mxu0
    %v1647 = vadd.f32 %v1163, %v1646
    %v1648 = vpop.f32.mrf.mxu0
    %v1649 = vadd.f32 %v1165, %v1648
    %v1650 = vpop.f32.mrf.mxu0
    %v1651 = vpop.f32.mrf.mxu0
    %1652 = vdwg.mxu0
    %1653 = vmatprep.subr.bf16.mxu0 %v1465
    %1654 = vmatpush1.bf16.msra.mxu0 %v1464
    %1655 = vmatprep.subr.bf16.mxu0 %v1457
    %1656 = vmatpush1.bf16.msra.mxu0 %v1456
    %1657 = vmatprep.subr.bf16.mxu0 %v1449
    %1658 = vmatpush1.bf16.msra.mxu0 %v1448
    %1659 = vmatprep.subr.bf16.mxu0 %v1441
    %1660 = vmatpush1.bf16.msra.mxu0 %v1440
    %1661 = vmatprep.subr.bf16.mxu0 %v1433
    %1662 = vmatpush1.bf16.msra.mxu0 %v1432
    %1663 = vmatprep.subr.bf16.mxu0 %v1425
    %1664 = vmatpush1.bf16.msra.mxu0 %v1424
    %1665 = vmatprep.subr.bf16.mxu0 %v1417
    %1666 = vmatpush1.bf16.msra.mxu0 %v1416
    %1667 = vmatprep.subr.bf16.mxu0 %v1409
    %1668 = vmatpush1.bf16.msra.mxu0 %v1408
    %1669 = vmatprep.subr.bf16.mxu0 0
    %1670 = vmatpush2.bf16.msra.mxu0 0
    %1671 = vmatprep.subr.bf16.mxu0 0
    %1672 = vmatpush2.bf16.msra.mxu0 0
    %1673 = vmatprep.subr.bf16.mxu0 0
    %1674 = vmatpush2.bf16.msra.mxu0 0
    %1675 = vmatprep.subr.bf16.mxu0 0
    %1676 = vmatpush2.bf16.msra.mxu0 0
    %1677 = vmatprep.subr.bf16.mxu0 0
    %1678 = vmatpush2.bf16.msra.mxu0 0
    %1679 = vmatprep.subr.bf16.mxu0 0
    %1680 = vmatpush2.bf16.msra.mxu0 0
    %1681 = vmatprep.subr.bf16.mxu0 0
    %1682 = vmatpush2.bf16.msra.mxu0 0
    %1683 = vmatprep.subr.bf16.mxu0 0
    %1684 = vmatpush2.bf16.msra.mxu0 0
    %1685 = vmatprep.mubr.bf16.mxu0 0
    %1686 = vmatmul.mubr.bf16.gmra.mxu0 %v591
    %v1687 = vpop.f32.mrf.mxu0
    %v1688 = vadd.f32 %v1204, %v1687
    %v1689 = vpop.f32.mrf.mxu0
    %v1690 = vadd.f32 %v1206, %v1689
    %v1691 = vpop.f32.mrf.mxu0
    %v1692 = vpop.f32.mrf.mxu0
    %1693 = vdwg.mxu0
    %v1694 = vrot.slane %v326, 2
    %v1696 = vrot.slane %v584, 1
    %v1698 = vsel %vm589, %v1694, %v1696
    %v1699 = vpack.c.bf16 %v1698, %v1698
    %s1700 = scalar_lea.vmem [#allocation8], 1024
    %v1701 = vld [vmem:[%s1700] sm:$0xff]
    %v1702 = vld [vmem:[%s1700 + $0x8] sm:$0xff]
    %v1703 = vld [vmem:[%s1700 + $0x10] sm:$0xff]
    %v1704 = vld [vmem:[%s1700 + $0x18] sm:$0xff]
    %v1705 = vld [vmem:[%s1700 + $0x20] sm:$0xff]
    %v1706 = vld [vmem:[%s1700 + $0x28] sm:$0xff]
    %v1707 = vld [vmem:[%s1700 + $0x30] sm:$0xff]
    %v1708 = vld [vmem:[%s1700 + $0x38] sm:$0xff]
    %v1709 = vld [vmem:[%s1700 + $0x40] sm:$0xff]
    %v1710 = vld [vmem:[%s1700 + $0x48] sm:$0xff]
    %v1711 = vld [vmem:[%s1700 + $0x50] sm:$0xff]
    %v1712 = vld [vmem:[%s1700 + $0x58] sm:$0xff]
    %v1713 = vld [vmem:[%s1700 + $0x60] sm:$0xff]
    %v1714 = vld [vmem:[%s1700 + $0x68] sm:$0xff]
    %v1715 = vld [vmem:[%s1700 + $0x70] sm:$0xff]
    %v1716 = vld [vmem:[%s1700 + $0x78] sm:$0xff]
    %v1717 = vld [vmem:[%s1700 + $0x80] sm:$0xff]
    %v1718 = vld [vmem:[%s1700 + $0x88] sm:$0xff]
    %v1719 = vld [vmem:[%s1700 + $0x90] sm:$0xff]
    %v1720 = vld [vmem:[%s1700 + $0x98] sm:$0xff]
    %v1721 = vld [vmem:[%s1700 + $0xa0] sm:$0xff]
    %v1722 = vld [vmem:[%s1700 + $0xa8] sm:$0xff]
    %v1723 = vld [vmem:[%s1700 + $0xb0] sm:$0xff]
    %v1724 = vld [vmem:[%s1700 + $0xb8] sm:$0xff]
    %v1725 = vld [vmem:[%s1700 + $0xc0] sm:$0xff]
    %v1726 = vld [vmem:[%s1700 + $0xc8] sm:$0xff]
    %v1727 = vld [vmem:[%s1700 + $0xd0] sm:$0xff]
    %v1728 = vld [vmem:[%s1700 + $0xd8] sm:$0xff]
    %v1729 = vld [vmem:[%s1700 + $0xe0] sm:$0xff]
    %v1730 = vld [vmem:[%s1700 + $0xe8] sm:$0xff]
    %v1731 = vld [vmem:[%s1700 + $0xf0] sm:$0xff]
    %v1732 = vld [vmem:[%s1700 + $0xf8] sm:$0xff]
    %v1733 = vld [vmem:[%s1700 + $0x100] sm:$0xff]
    %v1734 = vld [vmem:[%s1700 + $0x108] sm:$0xff]
    %v1735 = vld [vmem:[%s1700 + $0x110] sm:$0xff]
    %v1736 = vld [vmem:[%s1700 + $0x118] sm:$0xff]
    %v1737 = vld [vmem:[%s1700 + $0x120] sm:$0xff]
    %v1738 = vld [vmem:[%s1700 + $0x128] sm:$0xff]
    %v1739 = vld [vmem:[%s1700 + $0x130] sm:$0xff]
    %v1740 = vld [vmem:[%s1700 + $0x138] sm:$0xff]
    %v1741 = vld [vmem:[%s1700 + $0x140] sm:$0xff]
    %v1742 = vld [vmem:[%s1700 + $0x148] sm:$0xff]
    %v1743 = vld [vmem:[%s1700 + $0x150] sm:$0xff]
    %v1744 = vld [vmem:[%s1700 + $0x158] sm:$0xff]
    %v1745 = vld [vmem:[%s1700 + $0x160] sm:$0xff]
    %v1746 = vld [vmem:[%s1700 + $0x168] sm:$0xff]
    %v1747 = vld [vmem:[%s1700 + $0x170] sm:$0xff]
    %v1748 = vld [vmem:[%s1700 + $0x178] sm:$0xff]
    %v1749 = vld [vmem:[%s1700 + $0x180] sm:$0xff]
    %v1750 = vld [vmem:[%s1700 + $0x188] sm:$0xff]
    %v1751 = vld [vmem:[%s1700 + $0x190] sm:$0xff]
    %v1752 = vld [vmem:[%s1700 + $0x198] sm:$0xff]
    %v1753 = vld [vmem:[%s1700 + $0x1a0] sm:$0xff]
    %v1754 = vld [vmem:[%s1700 + $0x1a8] sm:$0xff]
    %v1755 = vld [vmem:[%s1700 + $0x1b0] sm:$0xff]
    %v1756 = vld [vmem:[%s1700 + $0x1b8] sm:$0xff]
    %v1757 = vld [vmem:[%s1700 + $0x1c0] sm:$0xff]
    %v1758 = vld [vmem:[%s1700 + $0x1c8] sm:$0xff]
    %v1759 = vld [vmem:[%s1700 + $0x1d0] sm:$0xff]
    %v1760 = vld [vmem:[%s1700 + $0x1d8] sm:$0xff]
    %v1761 = vld [vmem:[%s1700 + $0x1e0] sm:$0xff]
    %v1762 = vld [vmem:[%s1700 + $0x1e8] sm:$0xff]
    %v1763 = vld [vmem:[%s1700 + $0x1f0] sm:$0xff]
    %v1764 = vld [vmem:[%s1700 + $0x1f8] sm:$0xff]
    %v1829 = vunpack.c.l.b16 %v1701
    %v1830 = vunpack.c.h.b16 %v1701
    %v1831 = vunpack.c.l.b16 %v1702
    %v1832 = vunpack.c.h.b16 %v1702
    %v1833 = vunpack.c.l.b16 %v1703
    %v1834 = vunpack.c.h.b16 %v1703
    %v1835 = vunpack.c.l.b16 %v1704
    %v1836 = vunpack.c.h.b16 %v1704
    %v1837 = vunpack.c.l.b16 %v1705
    %v1838 = vunpack.c.h.b16 %v1705
    %v1839 = vunpack.c.l.b16 %v1706
    %v1840 = vunpack.c.h.b16 %v1706
    %v1841 = vunpack.c.l.b16 %v1707
    %v1842 = vunpack.c.h.b16 %v1707
    %v1843 = vunpack.c.l.b16 %v1708
    %v1844 = vunpack.c.h.b16 %v1708
    %v1845 = vunpack.c.l.b16 %v1709
    %v1846 = vunpack.c.h.b16 %v1709
    %v1847 = vunpack.c.l.b16 %v1710
    %v1848 = vunpack.c.h.b16 %v1710
    %v1849 = vunpack.c.l.b16 %v1711
    %v1850 = vunpack.c.h.b16 %v1711
    %v1851 = vunpack.c.l.b16 %v1712
    %v1852 = vunpack.c.h.b16 %v1712
    %v1853 = vunpack.c.l.b16 %v1713
    %v1854 = vunpack.c.h.b16 %v1713
    %v1855 = vunpack.c.l.b16 %v1714
    %v1856 = vunpack.c.h.b16 %v1714
    %v1857 = vunpack.c.l.b16 %v1715
    %v1858 = vunpack.c.h.b16 %v1715
    %v1859 = vunpack.c.l.b16 %v1716
    %v1860 = vunpack.c.h.b16 %v1716
    %v1861 = vunpack.c.l.b16 %v1717
    %v1862 = vunpack.c.h.b16 %v1717
    %v1863 = vunpack.c.l.b16 %v1718
    %v1864 = vunpack.c.h.b16 %v1718
    %v1865 = vunpack.c.l.b16 %v1719
    %v1866 = vunpack.c.h.b16 %v1719
    %v1867 = vunpack.c.l.b16 %v1720
    %v1868 = vunpack.c.h.b16 %v1720
    %v1869 = vunpack.c.l.b16 %v1721
    %v1870 = vunpack.c.h.b16 %v1721
    %v1871 = vunpack.c.l.b16 %v1722
    %v1872 = vunpack.c.h.b16 %v1722
    %v1873 = vunpack.c.l.b16 %v1723
    %v1874 = vunpack.c.h.b16 %v1723
    %v1875 = vunpack.c.l.b16 %v1724
    %v1876 = vunpack.c.h.b16 %v1724
    %v1877 = vunpack.c.l.b16 %v1725
    %v1878 = vunpack.c.h.b16 %v1725
    %v1879 = vunpack.c.l.b16 %v1726
    %v1880 = vunpack.c.h.b16 %v1726
    %v1881 = vunpack.c.l.b16 %v1727
    %v1882 = vunpack.c.h.b16 %v1727
    %v1883 = vunpack.c.l.b16 %v1728
    %v1884 = vunpack.c.h.b16 %v1728
    %v1885 = vunpack.c.l.b16 %v1729
    %v1886 = vunpack.c.h.b16 %v1729
    %v1887 = vunpack.c.l.b16 %v1730
    %v1888 = vunpack.c.h.b16 %v1730
    %v1889 = vunpack.c.l.b16 %v1731
    %v1890 = vunpack.c.h.b16 %v1731
    %v1891 = vunpack.c.l.b16 %v1732
    %v1892 = vunpack.c.h.b16 %v1732
    %v1893 = vunpack.c.l.b16 %v1733
    %v1894 = vunpack.c.h.b16 %v1733
    %v1895 = vunpack.c.l.b16 %v1734
    %v1896 = vunpack.c.h.b16 %v1734
    %v1897 = vunpack.c.l.b16 %v1735
    %v1898 = vunpack.c.h.b16 %v1735
    %v1899 = vunpack.c.l.b16 %v1736
    %v1900 = vunpack.c.h.b16 %v1736
    %v1901 = vunpack.c.l.b16 %v1737
    %v1902 = vunpack.c.h.b16 %v1737
    %v1903 = vunpack.c.l.b16 %v1738
    %v1904 = vunpack.c.h.b16 %v1738
    %v1905 = vunpack.c.l.b16 %v1739
    %v1906 = vunpack.c.h.b16 %v1739
    %v1907 = vunpack.c.l.b16 %v1740
    %v1908 = vunpack.c.h.b16 %v1740
    %v1909 = vunpack.c.l.b16 %v1741
    %v1910 = vunpack.c.h.b16 %v1741
    %v1911 = vunpack.c.l.b16 %v1742
    %v1912 = vunpack.c.h.b16 %v1742
    %v1913 = vunpack.c.l.b16 %v1743
    %v1914 = vunpack.c.h.b16 %v1743
    %v1915 = vunpack.c.l.b16 %v1744
    %v1916 = vunpack.c.h.b16 %v1744
    %v1917 = vunpack.c.l.b16 %v1745
    %v1918 = vunpack.c.h.b16 %v1745
    %v1919 = vunpack.c.l.b16 %v1746
    %v1920 = vunpack.c.h.b16 %v1746
    %v1921 = vunpack.c.l.b16 %v1747
    %v1922 = vunpack.c.h.b16 %v1747
    %v1923 = vunpack.c.l.b16 %v1748
    %v1924 = vunpack.c.h.b16 %v1748
    %v1925 = vunpack.c.l.b16 %v1749
    %v1926 = vunpack.c.h.b16 %v1749
    %v1927 = vunpack.c.l.b16 %v1750
    %v1928 = vunpack.c.h.b16 %v1750
    %v1929 = vunpack.c.l.b16 %v1751
    %v1930 = vunpack.c.h.b16 %v1751
    %v1931 = vunpack.c.l.b16 %v1752
    %v1932 = vunpack.c.h.b16 %v1752
    %v1933 = vunpack.c.l.b16 %v1753
    %v1934 = vunpack.c.h.b16 %v1753
    %v1935 = vunpack.c.l.b16 %v1754
    %v1936 = vunpack.c.h.b16 %v1754
    %v1937 = vunpack.c.l.b16 %v1755
    %v1938 = vunpack.c.h.b16 %v1755
    %v1939 = vunpack.c.l.b16 %v1756
    %v1940 = vunpack.c.h.b16 %v1756
    %v1941 = vunpack.c.l.b16 %v1757
    %v1942 = vunpack.c.h.b16 %v1757
    %v1943 = vunpack.c.l.b16 %v1758
    %v1944 = vunpack.c.h.b16 %v1758
    %v1945 = vunpack.c.l.b16 %v1759
    %v1946 = vunpack.c.h.b16 %v1759
    %v1947 = vunpack.c.l.b16 %v1760
    %v1948 = vunpack.c.h.b16 %v1760
    %v1949 = vunpack.c.l.b16 %v1761
    %v1950 = vunpack.c.h.b16 %v1761
    %v1951 = vunpack.c.l.b16 %v1762
    %v1952 = vunpack.c.h.b16 %v1762
    %v1953 = vunpack.c.l.b16 %v1763
    %v1954 = vunpack.c.h.b16 %v1763
    %v1955 = vunpack.c.l.b16 %v1764
    %v1956 = vunpack.c.h.b16 %v1764
    %v1957 = vpack.c.b16 %v1837, %v1829
    %v1958 = vpack.c.b16 %v1838, %v1830
    %v1959 = vpack.c.b16 %v1839, %v1831
    %v1960 = vpack.c.b16 %v1840, %v1832
    %v1961 = vpack.c.b16 %v1841, %v1833
    %v1962 = vpack.c.b16 %v1842, %v1834
    %v1963 = vpack.c.b16 %v1843, %v1835
    %v1964 = vpack.c.b16 %v1844, %v1836
    %v1965 = vpack.c.b16 %v1853, %v1845
    %v1966 = vpack.c.b16 %v1854, %v1846
    %v1967 = vpack.c.b16 %v1855, %v1847
    %v1968 = vpack.c.b16 %v1856, %v1848
    %v1969 = vpack.c.b16 %v1857, %v1849
    %v1970 = vpack.c.b16 %v1858, %v1850
    %v1971 = vpack.c.b16 %v1859, %v1851
    %v1972 = vpack.c.b16 %v1860, %v1852
    %v1973 = vpack.c.b16 %v1869, %v1861
    %v1974 = vpack.c.b16 %v1870, %v1862
    %v1975 = vpack.c.b16 %v1871, %v1863
    %v1976 = vpack.c.b16 %v1872, %v1864
    %v1977 = vpack.c.b16 %v1873, %v1865
    %v1978 = vpack.c.b16 %v1874, %v1866
    %v1979 = vpack.c.b16 %v1875, %v1867
    %v1980 = vpack.c.b16 %v1876, %v1868
    %v1981 = vpack.c.b16 %v1885, %v1877
    %v1982 = vpack.c.b16 %v1886, %v1878
    %v1983 = vpack.c.b16 %v1887, %v1879
    %v1984 = vpack.c.b16 %v1888, %v1880
    %v1985 = vpack.c.b16 %v1889, %v1881
    %v1986 = vpack.c.b16 %v1890, %v1882
    %v1987 = vpack.c.b16 %v1891, %v1883
    %v1988 = vpack.c.b16 %v1892, %v1884
    %v1989 = vpack.c.b16 %v1901, %v1893
    %v1990 = vpack.c.b16 %v1902, %v1894
    %v1991 = vpack.c.b16 %v1903, %v1895
    %v1992 = vpack.c.b16 %v1904, %v1896
    %v1993 = vpack.c.b16 %v1905, %v1897
    %v1994 = vpack.c.b16 %v1906, %v1898
    %v1995 = vpack.c.b16 %v1907, %v1899
    %v1996 = vpack.c.b16 %v1908, %v1900
    %v1997 = vpack.c.b16 %v1917, %v1909
    %v1998 = vpack.c.b16 %v1918, %v1910
    %v1999 = vpack.c.b16 %v1919, %v1911
    %v2000 = vpack.c.b16 %v1920, %v1912
    %v2001 = vpack.c.b16 %v1921, %v1913
    %v2002 = vpack.c.b16 %v1922, %v1914
    %v2003 = vpack.c.b16 %v1923, %v1915
    %v2004 = vpack.c.b16 %v1924, %v1916
    %v2005 = vpack.c.b16 %v1933, %v1925
    %v2006 = vpack.c.b16 %v1934, %v1926
    %v2007 = vpack.c.b16 %v1935, %v1927
    %v2008 = vpack.c.b16 %v1936, %v1928
    %v2009 = vpack.c.b16 %v1937, %v1929
    %v2010 = vpack.c.b16 %v1938, %v1930
    %v2011 = vpack.c.b16 %v1939, %v1931
    %v2012 = vpack.c.b16 %v1940, %v1932
    %v2013 = vpack.c.b16 %v1949, %v1941
    %v2014 = vpack.c.b16 %v1950, %v1942
    %v2015 = vpack.c.b16 %v1951, %v1943
    %v2016 = vpack.c.b16 %v1952, %v1944
    %v2017 = vpack.c.b16 %v1953, %v1945
    %v2018 = vpack.c.b16 %v1954, %v1946
    %v2019 = vpack.c.b16 %v1955, %v1947
    %v2020 = vpack.c.b16 %v1956, %v1948
    %2085 = vmatprep.subr.bf16.mxu0 %v2014
    %2086 = vmatpush1.bf16.msra.mxu0 %v2013
    %2087 = vmatprep.subr.bf16.mxu0 %v2006
    %2088 = vmatpush1.bf16.msra.mxu0 %v2005
    %2089 = vmatprep.subr.bf16.mxu0 %v1998
    %2090 = vmatpush1.bf16.msra.mxu0 %v1997
    %2091 = vmatprep.subr.bf16.mxu0 %v1990
    %2092 = vmatpush1.bf16.msra.mxu0 %v1989
    %2093 = vmatprep.subr.bf16.mxu0 %v1982
    %2094 = vmatpush1.bf16.msra.mxu0 %v1981
    %2095 = vmatprep.subr.bf16.mxu0 %v1974
    %2096 = vmatpush1.bf16.msra.mxu0 %v1973
    %2097 = vmatprep.subr.bf16.mxu0 %v1966
    %2098 = vmatpush1.bf16.msra.mxu0 %v1965
    %2099 = vmatprep.subr.bf16.mxu0 %v1958
    %2100 = vmatpush1.bf16.msra.mxu0 %v1957
    %2101 = vmatprep.subr.bf16.mxu0 0
    %2102 = vmatpush2.bf16.msra.mxu0 0
    %2103 = vmatprep.subr.bf16.mxu0 0
    %2104 = vmatpush2.bf16.msra.mxu0 0
    %2105 = vmatprep.subr.bf16.mxu0 0
    %2106 = vmatpush2.bf16.msra.mxu0 0
    %2107 = vmatprep.subr.bf16.mxu0 0
    %2108 = vmatpush2.bf16.msra.mxu0 0
    %2109 = vmatprep.subr.bf16.mxu0 0
    %2110 = vmatpush2.bf16.msra.mxu0 0
    %2111 = vmatprep.subr.bf16.mxu0 0
    %2112 = vmatpush2.bf16.msra.mxu0 0
    %2113 = vmatprep.subr.bf16.mxu0 0
    %2114 = vmatpush2.bf16.msra.mxu0 0
    %2115 = vmatprep.subr.bf16.mxu0 0
    %2116 = vmatpush2.bf16.msra.mxu0 0
    %2117 = vmatprep.mubr.bf16.mxu0 0
    %2118 = vmatmul.mubr.bf16.gmra.mxu0 %v1699
    %v2119 = vpop.f32.mrf.mxu0
    %v2120 = vadd.f32 0.0, %v2119
    %v2121 = vpop.f32.mrf.mxu0
    %v2122 = vadd.f32 0.0, %v2121
    %v2123 = vpop.f32.mrf.mxu0
    %v2124 = vpop.f32.mrf.mxu0
    %2125 = vdwg.mxu0
    %2126 = vmatprep.subr.bf16.mxu0 %v2016
    %2127 = vmatpush1.bf16.msra.mxu0 %v2015
    %2128 = vmatprep.subr.bf16.mxu0 %v2008
    %2129 = vmatpush1.bf16.msra.mxu0 %v2007
    %2130 = vmatprep.subr.bf16.mxu0 %v2000
    %2131 = vmatpush1.bf16.msra.mxu0 %v1999
    %2132 = vmatprep.subr.bf16.mxu0 %v1992
    %2133 = vmatpush1.bf16.msra.mxu0 %v1991
    %2134 = vmatprep.subr.bf16.mxu0 %v1984
    %2135 = vmatpush1.bf16.msra.mxu0 %v1983
    %2136 = vmatprep.subr.bf16.mxu0 %v1976
    %2137 = vmatpush1.bf16.msra.mxu0 %v1975
    %2138 = vmatprep.subr.bf16.mxu0 %v1968
    %2139 = vmatpush1.bf16.msra.mxu0 %v1967
    %2140 = vmatprep.subr.bf16.mxu0 %v1960
    %2141 = vmatpush1.bf16.msra.mxu0 %v1959
    %2142 = vmatprep.subr.bf16.mxu0 0
    %2143 = vmatpush2.bf16.msra.mxu0 0
    %2144 = vmatprep.subr.bf16.mxu0 0
    %2145 = vmatpush2.bf16.msra.mxu0 0
    %2146 = vmatprep.subr.bf16.mxu0 0
    %2147 = vmatpush2.bf16.msra.mxu0 0
    %2148 = vmatprep.subr.bf16.mxu0 0
    %2149 = vmatpush2.bf16.msra.mxu0 0
    %2150 = vmatprep.subr.bf16.mxu0 0
    %2151 = vmatpush2.bf16.msra.mxu0 0
    %2152 = vmatprep.subr.bf16.mxu0 0
    %2153 = vmatpush2.bf16.msra.mxu0 0
    %2154 = vmatprep.subr.bf16.mxu0 0
    %2155 = vmatpush2.bf16.msra.mxu0 0
    %2156 = vmatprep.subr.bf16.mxu0 0
    %2157 = vmatpush2.bf16.msra.mxu0 0
    %2158 = vmatprep.mubr.bf16.mxu0 0
    %2159 = vmatmul.mubr.bf16.gmra.mxu0 %v1699
    %v2160 = vpop.f32.mrf.mxu0
    %v2161 = vadd.f32 0.0, %v2160
    %v2162 = vpop.f32.mrf.mxu0
    %v2163 = vadd.f32 0.0, %v2162
    %v2164 = vpop.f32.mrf.mxu0
    %v2165 = vpop.f32.mrf.mxu0
    %2166 = vdwg.mxu0
    %2167 = vmatprep.subr.bf16.mxu0 %v2018
    %2168 = vmatpush1.bf16.msra.mxu0 %v2017
    %2169 = vmatprep.subr.bf16.mxu0 %v2010
    %2170 = vmatpush1.bf16.msra.mxu0 %v2009
    %2171 = vmatprep.subr.bf16.mxu0 %v2002
    %2172 = vmatpush1.bf16.msra.mxu0 %v2001
    %2173 = vmatprep.subr.bf16.mxu0 %v1994
    %2174 = vmatpush1.bf16.msra.mxu0 %v1993
    %2175 = vmatprep.subr.bf16.mxu0 %v1986
    %2176 = vmatpush1.bf16.msra.mxu0 %v1985
    %2177 = vmatprep.subr.bf16.mxu0 %v1978
    %2178 = vmatpush1.bf16.msra.mxu0 %v1977
    %2179 = vmatprep.subr.bf16.mxu0 %v1970
    %2180 = vmatpush1.bf16.msra.mxu0 %v1969
    %2181 = vmatprep.subr.bf16.mxu0 %v1962
    %2182 = vmatpush1.bf16.msra.mxu0 %v1961
    %2183 = vmatprep.subr.bf16.mxu0 0
    %2184 = vmatpush2.bf16.msra.mxu0 0
    %2185 = vmatprep.subr.bf16.mxu0 0
    %2186 = vmatpush2.bf16.msra.mxu0 0
    %2187 = vmatprep.subr.bf16.mxu0 0
    %2188 = vmatpush2.bf16.msra.mxu0 0
    %2189 = vmatprep.subr.bf16.mxu0 0
    %2190 = vmatpush2.bf16.msra.mxu0 0
    %2191 = vmatprep.subr.bf16.mxu0 0
    %2192 = vmatpush2.bf16.msra.mxu0 0
    %2193 = vmatprep.subr.bf16.mxu0 0
    %2194 = vmatpush2.bf16.msra.mxu0 0
    %2195 = vmatprep.subr.bf16.mxu0 0
    %2196 = vmatpush2.bf16.msra.mxu0 0
    %2197 = vmatprep.subr.bf16.mxu0 0
    %2198 = vmatpush2.bf16.msra.mxu0 0
    %2199 = vmatprep.mubr.bf16.mxu0 0
    %2200 = vmatmul.mubr.bf16.gmra.mxu0 %v1699
    %v2201 = vpop.f32.mrf.mxu0
    %v2202 = vadd.f32 0.0, %v2201
    %v2203 = vpop.f32.mrf.mxu0
    %v2204 = vadd.f32 0.0, %v2203
    %v2205 = vpop.f32.mrf.mxu0
    %v2206 = vpop.f32.mrf.mxu0
    %2207 = vdwg.mxu0
    %2208 = vmatprep.subr.bf16.mxu0 %v2020
    %2209 = vmatpush1.bf16.msra.mxu0 %v2019
    %2210 = vmatprep.subr.bf16.mxu0 %v2012
    %2211 = vmatpush1.bf16.msra.mxu0 %v2011
    %2212 = vmatprep.subr.bf16.mxu0 %v2004
    %2213 = vmatpush1.bf16.msra.mxu0 %v2003
    %2214 = vmatprep.subr.bf16.mxu0 %v1996
    %2215 = vmatpush1.bf16.msra.mxu0 %v1995
    %2216 = vmatprep.subr.bf16.mxu0 %v1988
    %2217 = vmatpush1.bf16.msra.mxu0 %v1987
    %2218 = vmatprep.subr.bf16.mxu0 %v1980
    %2219 = vmatpush1.bf16.msra.mxu0 %v1979
    %2220 = vmatprep.subr.bf16.mxu0 %v1972
    %2221 = vmatpush1.bf16.msra.mxu0 %v1971
    %2222 = vmatprep.subr.bf16.mxu0 %v1964
    %2223 = vmatpush1.bf16.msra.mxu0 %v1963
    %2224 = vmatprep.subr.bf16.mxu0 0
    %2225 = vmatpush2.bf16.msra.mxu0 0
    %2226 = vmatprep.subr.bf16.mxu0 0
    %2227 = vmatpush2.bf16.msra.mxu0 0
    %2228 = vmatprep.subr.bf16.mxu0 0
    %2229 = vmatpush2.bf16.msra.mxu0 0
    %2230 = vmatprep.subr.bf16.mxu0 0
    %2231 = vmatpush2.bf16.msra.mxu0 0
    %2232 = vmatprep.subr.bf16.mxu0 0
    %2233 = vmatpush2.bf16.msra.mxu0 0
    %2234 = vmatprep.subr.bf16.mxu0 0
    %2235 = vmatpush2.bf16.msra.mxu0 0
    %2236 = vmatprep.subr.bf16.mxu0 0
    %2237 = vmatpush2.bf16.msra.mxu0 0
    %2238 = vmatprep.subr.bf16.mxu0 0
    %2239 = vmatpush2.bf16.msra.mxu0 0
    %2240 = vmatprep.mubr.bf16.mxu0 0
    %2241 = vmatmul.mubr.bf16.gmra.mxu0 %v1699
    %v2242 = vpop.f32.mrf.mxu0
    %v2243 = vadd.f32 0.0, %v2242
    %v2244 = vpop.f32.mrf.mxu0
    %v2245 = vadd.f32 0.0, %v2244
    %v2246 = vpop.f32.mrf.mxu0
    %v2247 = vpop.f32.mrf.mxu0
    %2248 = vdwg.mxu0
    %v2249 = vadd.f32 %v1565, %v2120
    %v2250 = vadd.f32 %v1567, %v2122
    %v2251 = vadd.f32 %v1606, %v2161
    %v2252 = vadd.f32 %v1608, %v2163
    %v2253 = vadd.f32 %v1647, %v2202
    %v2254 = vadd.f32 %v1649, %v2204
    %v2255 = vadd.f32 %v1688, %v2243
    %v2256 = vadd.f32 %v1690, %v2245
    %v2257 = vrot.slane %v326, 3
    %v2259 = vrot.slane %v584, 2
    %v2261 = vsel %vm589, %v2257, %v2259
    %v2262 = vpack.c.bf16 %v2261, %v2261
    %s2263 = scalar_lea.vmem [#allocation8], 1536
    %v2264 = vld [vmem:[%s2263] sm:$0xff]
    %v2265 = vld [vmem:[%s2263 + $0x8] sm:$0xff]
    %v2266 = vld [vmem:[%s2263 + $0x10] sm:$0xff]
    %v2267 = vld [vmem:[%s2263 + $0x18] sm:$0xff]
    %v2268 = vld [vmem:[%s2263 + $0x20] sm:$0xff]
    %v2269 = vld [vmem:[%s2263 + $0x28] sm:$0xff]
    %v2270 = vld [vmem:[%s2263 + $0x30] sm:$0xff]
    %v2271 = vld [vmem:[%s2263 + $0x38] sm:$0xff]
    %v2272 = vld [vmem:[%s2263 + $0x40] sm:$0xff]
    %v2273 = vld [vmem:[%s2263 + $0x48] sm:$0xff]
    %v2274 = vld [vmem:[%s2263 + $0x50] sm:$0xff]
    %v2275 = vld [vmem:[%s2263 + $0x58] sm:$0xff]
    %v2276 = vld [vmem:[%s2263 + $0x60] sm:$0xff]
    %v2277 = vld [vmem:[%s2263 + $0x68] sm:$0xff]
    %v2278 = vld [vmem:[%s2263 + $0x70] sm:$0xff]
    %v2279 = vld [vmem:[%s2263 + $0x78] sm:$0xff]
    %v2280 = vld [vmem:[%s2263 + $0x80] sm:$0xff]
    %v2281 = vld [vmem:[%s2263 + $0x88] sm:$0xff]
    %v2282 = vld [vmem:[%s2263 + $0x90] sm:$0xff]
    %v2283 = vld [vmem:[%s2263 + $0x98] sm:$0xff]
    %v2284 = vld [vmem:[%s2263 + $0xa0] sm:$0xff]
    %v2285 = vld [vmem:[%s2263 + $0xa8] sm:$0xff]
    %v2286 = vld [vmem:[%s2263 + $0xb0] sm:$0xff]
    %v2287 = vld [vmem:[%s2263 + $0xb8] sm:$0xff]
    %v2288 = vld [vmem:[%s2263 + $0xc0] sm:$0xff]
    %v2289 = vld [vmem:[%s2263 + $0xc8] sm:$0xff]
    %v2290 = vld [vmem:[%s2263 + $0xd0] sm:$0xff]
    %v2291 = vld [vmem:[%s2263 + $0xd8] sm:$0xff]
    %v2292 = vld [vmem:[%s2263 + $0xe0] sm:$0xff]
    %v2293 = vld [vmem:[%s2263 + $0xe8] sm:$0xff]
    %v2294 = vld [vmem:[%s2263 + $0xf0] sm:$0xff]
    %v2295 = vld [vmem:[%s2263 + $0xf8] sm:$0xff]
    %v2296 = vld [vmem:[%s2263 + $0x100] sm:$0xff]
    %v2297 = vld [vmem:[%s2263 + $0x108] sm:$0xff]
    %v2298 = vld [vmem:[%s2263 + $0x110] sm:$0xff]
    %v2299 = vld [vmem:[%s2263 + $0x118] sm:$0xff]
    %v2300 = vld [vmem:[%s2263 + $0x120] sm:$0xff]
    %v2301 = vld [vmem:[%s2263 + $0x128] sm:$0xff]
    %v2302 = vld [vmem:[%s2263 + $0x130] sm:$0xff]
    %v2303 = vld [vmem:[%s2263 + $0x138] sm:$0xff]
    %v2304 = vld [vmem:[%s2263 + $0x140] sm:$0xff]
    %v2305 = vld [vmem:[%s2263 + $0x148] sm:$0xff]
    %v2306 = vld [vmem:[%s2263 + $0x150] sm:$0xff]
    %v2307 = vld [vmem:[%s2263 + $0x158] sm:$0xff]
    %v2308 = vld [vmem:[%s2263 + $0x160] sm:$0xff]
    %v2309 = vld [vmem:[%s2263 + $0x168] sm:$0xff]
    %v2310 = vld [vmem:[%s2263 + $0x170] sm:$0xff]
    %v2311 = vld [vmem:[%s2263 + $0x178] sm:$0xff]
    %v2312 = vld [vmem:[%s2263 + $0x180] sm:$0xff]
    %v2313 = vld [vmem:[%s2263 + $0x188] sm:$0xff]
    %v2314 = vld [vmem:[%s2263 + $0x190] sm:$0xff]
    %v2315 = vld [vmem:[%s2263 + $0x198] sm:$0xff]
    %v2316 = vld [vmem:[%s2263 + $0x1a0] sm:$0xff]
    %v2317 = vld [vmem:[%s2263 + $0x1a8] sm:$0xff]
    %v2318 = vld [vmem:[%s2263 + $0x1b0] sm:$0xff]
    %v2319 = vld [vmem:[%s2263 + $0x1b8] sm:$0xff]
    %v2320 = vld [vmem:[%s2263 + $0x1c0] sm:$0xff]
    %v2321 = vld [vmem:[%s2263 + $0x1c8] sm:$0xff]
    %v2322 = vld [vmem:[%s2263 + $0x1d0] sm:$0xff]
    %v2323 = vld [vmem:[%s2263 + $0x1d8] sm:$0xff]
    %v2324 = vld [vmem:[%s2263 + $0x1e0] sm:$0xff]
    %v2325 = vld [vmem:[%s2263 + $0x1e8] sm:$0xff]
    %v2326 = vld [vmem:[%s2263 + $0x1f0] sm:$0xff]
    %v2327 = vld [vmem:[%s2263 + $0x1f8] sm:$0xff]
    %v2392 = vunpack.c.l.b16 %v2264
    %v2393 = vunpack.c.h.b16 %v2264
    %v2394 = vunpack.c.l.b16 %v2265
    %v2395 = vunpack.c.h.b16 %v2265
    %v2396 = vunpack.c.l.b16 %v2266
    %v2397 = vunpack.c.h.b16 %v2266
    %v2398 = vunpack.c.l.b16 %v2267
    %v2399 = vunpack.c.h.b16 %v2267
    %v2400 = vunpack.c.l.b16 %v2268
    %v2401 = vunpack.c.h.b16 %v2268
    %v2402 = vunpack.c.l.b16 %v2269
    %v2403 = vunpack.c.h.b16 %v2269
    %v2404 = vunpack.c.l.b16 %v2270
    %v2405 = vunpack.c.h.b16 %v2270
    %v2406 = vunpack.c.l.b16 %v2271
    %v2407 = vunpack.c.h.b16 %v2271
    %v2408 = vunpack.c.l.b16 %v2272
    %v2409 = vunpack.c.h.b16 %v2272
    %v2410 = vunpack.c.l.b16 %v2273
    %v2411 = vunpack.c.h.b16 %v2273
    %v2412 = vunpack.c.l.b16 %v2274
    %v2413 = vunpack.c.h.b16 %v2274
    %v2414 = vunpack.c.l.b16 %v2275
    %v2415 = vunpack.c.h.b16 %v2275
    %v2416 = vunpack.c.l.b16 %v2276
    %v2417 = vunpack.c.h.b16 %v2276
    %v2418 = vunpack.c.l.b16 %v2277
    %v2419 = vunpack.c.h.b16 %v2277
    %v2420 = vunpack.c.l.b16 %v2278
    %v2421 = vunpack.c.h.b16 %v2278
    %v2422 = vunpack.c.l.b16 %v2279
    %v2423 = vunpack.c.h.b16 %v2279
    %v2424 = vunpack.c.l.b16 %v2280
    %v2425 = vunpack.c.h.b16 %v2280
    %v2426 = vunpack.c.l.b16 %v2281
    %v2427 = vunpack.c.h.b16 %v2281
    %v2428 = vunpack.c.l.b16 %v2282
    %v2429 = vunpack.c.h.b16 %v2282
    %v2430 = vunpack.c.l.b16 %v2283
    %v2431 = vunpack.c.h.b16 %v2283
    %v2432 = vunpack.c.l.b16 %v2284
    %v2433 = vunpack.c.h.b16 %v2284
    %v2434 = vunpack.c.l.b16 %v2285
    %v2435 = vunpack.c.h.b16 %v2285
    %v2436 = vunpack.c.l.b16 %v2286
    %v2437 = vunpack.c.h.b16 %v2286
    %v2438 = vunpack.c.l.b16 %v2287
    %v2439 = vunpack.c.h.b16 %v2287
    %v2440 = vunpack.c.l.b16 %v2288
    %v2441 = vunpack.c.h.b16 %v2288
    %v2442 = vunpack.c.l.b16 %v2289
    %v2443 = vunpack.c.h.b16 %v2289
    %v2444 = vunpack.c.l.b16 %v2290
    %v2445 = vunpack.c.h.b16 %v2290
    %v2446 = vunpack.c.l.b16 %v2291
    %v2447 = vunpack.c.h.b16 %v2291
    %v2448 = vunpack.c.l.b16 %v2292
    %v2449 = vunpack.c.h.b16 %v2292
    %v2450 = vunpack.c.l.b16 %v2293
    %v2451 = vunpack.c.h.b16 %v2293
    %v2452 = vunpack.c.l.b16 %v2294
    %v2453 = vunpack.c.h.b16 %v2294
    %v2454 = vunpack.c.l.b16 %v2295
    %v2455 = vunpack.c.h.b16 %v2295
    %v2456 = vunpack.c.l.b16 %v2296
    %v2457 = vunpack.c.h.b16 %v2296
    %v2458 = vunpack.c.l.b16 %v2297
    %v2459 = vunpack.c.h.b16 %v2297
    %v2460 = vunpack.c.l.b16 %v2298
    %v2461 = vunpack.c.h.b16 %v2298
    %v2462 = vunpack.c.l.b16 %v2299
    %v2463 = vunpack.c.h.b16 %v2299
    %v2464 = vunpack.c.l.b16 %v2300
    %v2465 = vunpack.c.h.b16 %v2300
    %v2466 = vunpack.c.l.b16 %v2301
    %v2467 = vunpack.c.h.b16 %v2301
    %v2468 = vunpack.c.l.b16 %v2302
    %v2469 = vunpack.c.h.b16 %v2302
    %v2470 = vunpack.c.l.b16 %v2303
    %v2471 = vunpack.c.h.b16 %v2303
    %v2472 = vunpack.c.l.b16 %v2304
    %v2473 = vunpack.c.h.b16 %v2304
    %v2474 = vunpack.c.l.b16 %v2305
    %v2475 = vunpack.c.h.b16 %v2305
    %v2476 = vunpack.c.l.b16 %v2306
    %v2477 = vunpack.c.h.b16 %v2306
    %v2478 = vunpack.c.l.b16 %v2307
    %v2479 = vunpack.c.h.b16 %v2307
    %v2480 = vunpack.c.l.b16 %v2308
    %v2481 = vunpack.c.h.b16 %v2308
    %v2482 = vunpack.c.l.b16 %v2309
    %v2483 = vunpack.c.h.b16 %v2309
    %v2484 = vunpack.c.l.b16 %v2310
    %v2485 = vunpack.c.h.b16 %v2310
    %v2486 = vunpack.c.l.b16 %v2311
    %v2487 = vunpack.c.h.b16 %v2311
    %v2488 = vunpack.c.l.b16 %v2312
    %v2489 = vunpack.c.h.b16 %v2312
    %v2490 = vunpack.c.l.b16 %v2313
    %v2491 = vunpack.c.h.b16 %v2313
    %v2492 = vunpack.c.l.b16 %v2314
    %v2493 = vunpack.c.h.b16 %v2314
    %v2494 = vunpack.c.l.b16 %v2315
    %v2495 = vunpack.c.h.b16 %v2315
    %v2496 = vunpack.c.l.b16 %v2316
    %v2497 = vunpack.c.h.b16 %v2316
    %v2498 = vunpack.c.l.b16 %v2317
    %v2499 = vunpack.c.h.b16 %v2317
    %v2500 = vunpack.c.l.b16 %v2318
    %v2501 = vunpack.c.h.b16 %v2318
    %v2502 = vunpack.c.l.b16 %v2319
    %v2503 = vunpack.c.h.b16 %v2319
    %v2504 = vunpack.c.l.b16 %v2320
    %v2505 = vunpack.c.h.b16 %v2320
    %v2506 = vunpack.c.l.b16 %v2321
    %v2507 = vunpack.c.h.b16 %v2321
    %v2508 = vunpack.c.l.b16 %v2322
    %v2509 = vunpack.c.h.b16 %v2322
    %v2510 = vunpack.c.l.b16 %v2323
    %v2511 = vunpack.c.h.b16 %v2323
    %v2512 = vunpack.c.l.b16 %v2324
    %v2513 = vunpack.c.h.b16 %v2324
    %v2514 = vunpack.c.l.b16 %v2325
    %v2515 = vunpack.c.h.b16 %v2325
    %v2516 = vunpack.c.l.b16 %v2326
    %v2517 = vunpack.c.h.b16 %v2326
    %v2518 = vunpack.c.l.b16 %v2327
    %v2519 = vunpack.c.h.b16 %v2327
    %v2520 = vpack.c.b16 %v2400, %v2392
    %v2521 = vpack.c.b16 %v2401, %v2393
    %v2522 = vpack.c.b16 %v2402, %v2394
    %v2523 = vpack.c.b16 %v2403, %v2395
    %v2524 = vpack.c.b16 %v2404, %v2396
    %v2525 = vpack.c.b16 %v2405, %v2397
    %v2526 = vpack.c.b16 %v2406, %v2398
    %v2527 = vpack.c.b16 %v2407, %v2399
    %v2528 = vpack.c.b16 %v2416, %v2408
    %v2529 = vpack.c.b16 %v2417, %v2409
    %v2530 = vpack.c.b16 %v2418, %v2410
    %v2531 = vpack.c.b16 %v2419, %v2411
    %v2532 = vpack.c.b16 %v2420, %v2412
    %v2533 = vpack.c.b16 %v2421, %v2413
    %v2534 = vpack.c.b16 %v2422, %v2414
    %v2535 = vpack.c.b16 %v2423, %v2415
    %v2536 = vpack.c.b16 %v2432, %v2424
    %v2537 = vpack.c.b16 %v2433, %v2425
    %v2538 = vpack.c.b16 %v2434, %v2426
    %v2539 = vpack.c.b16 %v2435, %v2427
    %v2540 = vpack.c.b16 %v2436, %v2428
    %v2541 = vpack.c.b16 %v2437, %v2429
    %v2542 = vpack.c.b16 %v2438, %v2430
    %v2543 = vpack.c.b16 %v2439, %v2431
    %v2544 = vpack.c.b16 %v2448, %v2440
    %v2545 = vpack.c.b16 %v2449, %v2441
    %v2546 = vpack.c.b16 %v2450, %v2442
    %v2547 = vpack.c.b16 %v2451, %v2443
    %v2548 = vpack.c.b16 %v2452, %v2444
    %v2549 = vpack.c.b16 %v2453, %v2445
    %v2550 = vpack.c.b16 %v2454, %v2446
    %v2551 = vpack.c.b16 %v2455, %v2447
    %v2552 = vpack.c.b16 %v2464, %v2456
    %v2553 = vpack.c.b16 %v2465, %v2457
    %v2554 = vpack.c.b16 %v2466, %v2458
    %v2555 = vpack.c.b16 %v2467, %v2459
    %v2556 = vpack.c.b16 %v2468, %v2460
    %v2557 = vpack.c.b16 %v2469, %v2461
    %v2558 = vpack.c.b16 %v2470, %v2462
    %v2559 = vpack.c.b16 %v2471, %v2463
    %v2560 = vpack.c.b16 %v2480, %v2472
    %v2561 = vpack.c.b16 %v2481, %v2473
    %v2562 = vpack.c.b16 %v2482, %v2474
    %v2563 = vpack.c.b16 %v2483, %v2475
    %v2564 = vpack.c.b16 %v2484, %v2476
    %v2565 = vpack.c.b16 %v2485, %v2477
    %v2566 = vpack.c.b16 %v2486, %v2478
    %v2567 = vpack.c.b16 %v2487, %v2479
    %v2568 = vpack.c.b16 %v2496, %v2488
    %v2569 = vpack.c.b16 %v2497, %v2489
    %v2570 = vpack.c.b16 %v2498, %v2490
    %v2571 = vpack.c.b16 %v2499, %v2491
    %v2572 = vpack.c.b16 %v2500, %v2492
    %v2573 = vpack.c.b16 %v2501, %v2493
    %v2574 = vpack.c.b16 %v2502, %v2494
    %v2575 = vpack.c.b16 %v2503, %v2495
    %v2576 = vpack.c.b16 %v2512, %v2504
    %v2577 = vpack.c.b16 %v2513, %v2505
    %v2578 = vpack.c.b16 %v2514, %v2506
    %v2579 = vpack.c.b16 %v2515, %v2507
    %v2580 = vpack.c.b16 %v2516, %v2508
    %v2581 = vpack.c.b16 %v2517, %v2509
    %v2582 = vpack.c.b16 %v2518, %v2510
    %v2583 = vpack.c.b16 %v2519, %v2511
    %2648 = vmatprep.subr.bf16.mxu0 %v2577
    %2649 = vmatpush1.bf16.msra.mxu0 %v2576
    %2650 = vmatprep.subr.bf16.mxu0 %v2569
    %2651 = vmatpush1.bf16.msra.mxu0 %v2568
    %2652 = vmatprep.subr.bf16.mxu0 %v2561
    %2653 = vmatpush1.bf16.msra.mxu0 %v2560
    %2654 = vmatprep.subr.bf16.mxu0 %v2553
    %2655 = vmatpush1.bf16.msra.mxu0 %v2552
    %2656 = vmatprep.subr.bf16.mxu0 %v2545
    %2657 = vmatpush1.bf16.msra.mxu0 %v2544
    %2658 = vmatprep.subr.bf16.mxu0 %v2537
    %2659 = vmatpush1.bf16.msra.mxu0 %v2536
    %2660 = vmatprep.subr.bf16.mxu0 %v2529
    %2661 = vmatpush1.bf16.msra.mxu0 %v2528
    %2662 = vmatprep.subr.bf16.mxu0 %v2521
    %2663 = vmatpush1.bf16.msra.mxu0 %v2520
    %2664 = vmatprep.subr.bf16.mxu0 0
    %2665 = vmatpush2.bf16.msra.mxu0 0
    %2666 = vmatprep.subr.bf16.mxu0 0
    %2667 = vmatpush2.bf16.msra.mxu0 0
    %2668 = vmatprep.subr.bf16.mxu0 0
    %2669 = vmatpush2.bf16.msra.mxu0 0
    %2670 = vmatprep.subr.bf16.mxu0 0
    %2671 = vmatpush2.bf16.msra.mxu0 0
    %2672 = vmatprep.subr.bf16.mxu0 0
    %2673 = vmatpush2.bf16.msra.mxu0 0
    %2674 = vmatprep.subr.bf16.mxu0 0
    %2675 = vmatpush2.bf16.msra.mxu0 0
    %2676 = vmatprep.subr.bf16.mxu0 0
    %2677 = vmatpush2.bf16.msra.mxu0 0
    %2678 = vmatprep.subr.bf16.mxu0 0
    %2679 = vmatpush2.bf16.msra.mxu0 0
    %2680 = vmatprep.mubr.bf16.mxu0 0
    %2681 = vmatmul.mubr.bf16.gmra.mxu0 %v2262
    %v2682 = vpop.f32.mrf.mxu0
    %v2683 = vadd.f32 0.0, %v2682
    %v2684 = vpop.f32.mrf.mxu0
    %v2685 = vadd.f32 0.0, %v2684
    %v2686 = vpop.f32.mrf.mxu0
    %v2687 = vpop.f32.mrf.mxu0
    %2688 = vdwg.mxu0
    %2689 = vmatprep.subr.bf16.mxu0 %v2579
    %2690 = vmatpush1.bf16.msra.mxu0 %v2578
    %2691 = vmatprep.subr.bf16.mxu0 %v2571
    %2692 = vmatpush1.bf16.msra.mxu0 %v2570
    %2693 = vmatprep.subr.bf16.mxu0 %v2563
    %2694 = vmatpush1.bf16.msra.mxu0 %v2562
    %2695 = vmatprep.subr.bf16.mxu0 %v2555
    %2696 = vmatpush1.bf16.msra.mxu0 %v2554
    %2697 = vmatprep.subr.bf16.mxu0 %v2547
    %2698 = vmatpush1.bf16.msra.mxu0 %v2546
    %2699 = vmatprep.subr.bf16.mxu0 %v2539
    %2700 = vmatpush1.bf16.msra.mxu0 %v2538
    %2701 = vmatprep.subr.bf16.mxu0 %v2531
    %2702 = vmatpush1.bf16.msra.mxu0 %v2530
    %2703 = vmatprep.subr.bf16.mxu0 %v2523
    %2704 = vmatpush1.bf16.msra.mxu0 %v2522
    %2705 = vmatprep.subr.bf16.mxu0 0
    %2706 = vmatpush2.bf16.msra.mxu0 0
    %2707 = vmatprep.subr.bf16.mxu0 0
    %2708 = vmatpush2.bf16.msra.mxu0 0
    %2709 = vmatprep.subr.bf16.mxu0 0
    %2710 = vmatpush2.bf16.msra.mxu0 0
    %2711 = vmatprep.subr.bf16.mxu0 0
    %2712 = vmatpush2.bf16.msra.mxu0 0
    %2713 = vmatprep.subr.bf16.mxu0 0
    %2714 = vmatpush2.bf16.msra.mxu0 0
    %2715 = vmatprep.subr.bf16.mxu0 0
    %2716 = vmatpush2.bf16.msra.mxu0 0
    %2717 = vmatprep.subr.bf16.mxu0 0
    %2718 = vmatpush2.bf16.msra.mxu0 0
    %2719 = vmatprep.subr.bf16.mxu0 0
    %2720 = vmatpush2.bf16.msra.mxu0 0
    %2721 = vmatprep.mubr.bf16.mxu0 0
    %2722 = vmatmul.mubr.bf16.gmra.mxu0 %v2262
    %v2723 = vpop.f32.mrf.mxu0
    %v2724 = vadd.f32 0.0, %v2723
    %v2725 = vpop.f32.mrf.mxu0
    %v2726 = vadd.f32 0.0, %v2725
    %v2727 = vpop.f32.mrf.mxu0
    %v2728 = vpop.f32.mrf.mxu0
    %2729 = vdwg.mxu0
    %2730 = vmatprep.subr.bf16.mxu0 %v2581
    %2731 = vmatpush1.bf16.msra.mxu0 %v2580
    %2732 = vmatprep.subr.bf16.mxu0 %v2573
    %2733 = vmatpush1.bf16.msra.mxu0 %v2572
    %2734 = vmatprep.subr.bf16.mxu0 %v2565
    %2735 = vmatpush1.bf16.msra.mxu0 %v2564
    %2736 = vmatprep.subr.bf16.mxu0 %v2557
    %2737 = vmatpush1.bf16.msra.mxu0 %v2556
    %2738 = vmatprep.subr.bf16.mxu0 %v2549
    %2739 = vmatpush1.bf16.msra.mxu0 %v2548
    %2740 = vmatprep.subr.bf16.mxu0 %v2541
    %2741 = vmatpush1.bf16.msra.mxu0 %v2540
    %2742 = vmatprep.subr.bf16.mxu0 %v2533
    %2743 = vmatpush1.bf16.msra.mxu0 %v2532
    %2744 = vmatprep.subr.bf16.mxu0 %v2525
    %2745 = vmatpush1.bf16.msra.mxu0 %v2524
    %2746 = vmatprep.subr.bf16.mxu0 0
    %2747 = vmatpush2.bf16.msra.mxu0 0
    %2748 = vmatprep.subr.bf16.mxu0 0
    %2749 = vmatpush2.bf16.msra.mxu0 0
    %2750 = vmatprep.subr.bf16.mxu0 0
    %2751 = vmatpush2.bf16.msra.mxu0 0
    %2752 = vmatprep.subr.bf16.mxu0 0
    %2753 = vmatpush2.bf16.msra.mxu0 0
    %2754 = vmatprep.subr.bf16.mxu0 0
    %2755 = vmatpush2.bf16.msra.mxu0 0
    %2756 = vmatprep.subr.bf16.mxu0 0
    %2757 = vmatpush2.bf16.msra.mxu0 0
    %2758 = vmatprep.subr.bf16.mxu0 0
    %2759 = vmatpush2.bf16.msra.mxu0 0
    %2760 = vmatprep.subr.bf16.mxu0 0
    %2761 = vmatpush2.bf16.msra.mxu0 0
    %2762 = vmatprep.mubr.bf16.mxu0 0
    %2763 = vmatmul.mubr.bf16.gmra.mxu0 %v2262
    %v2764 = vpop.f32.mrf.mxu0
    %v2765 = vadd.f32 0.0, %v2764
    %v2766 = vpop.f32.mrf.mxu0
    %v2767 = vadd.f32 0.0, %v2766
    %v2768 = vpop.f32.mrf.mxu0
    %v2769 = vpop.f32.mrf.mxu0
    %2770 = vdwg.mxu0
    %2771 = vmatprep.subr.bf16.mxu0 %v2583
    %2772 = vmatpush1.bf16.msra.mxu0 %v2582
    %2773 = vmatprep.subr.bf16.mxu0 %v2575
    %2774 = vmatpush1.bf16.msra.mxu0 %v2574
    %2775 = vmatprep.subr.bf16.mxu0 %v2567
    %2776 = vmatpush1.bf16.msra.mxu0 %v2566
    %2777 = vmatprep.subr.bf16.mxu0 %v2559
    %2778 = vmatpush1.bf16.msra.mxu0 %v2558
    %2779 = vmatprep.subr.bf16.mxu0 %v2551
    %2780 = vmatpush1.bf16.msra.mxu0 %v2550
    %2781 = vmatprep.subr.bf16.mxu0 %v2543
    %2782 = vmatpush1.bf16.msra.mxu0 %v2542
    %2783 = vmatprep.subr.bf16.mxu0 %v2535
    %2784 = vmatpush1.bf16.msra.mxu0 %v2534
    %2785 = vmatprep.subr.bf16.mxu0 %v2527
    %2786 = vmatpush1.bf16.msra.mxu0 %v2526
    %2787 = vmatprep.subr.bf16.mxu0 0
    %2788 = vmatpush2.bf16.msra.mxu0 0
    %2789 = vmatprep.subr.bf16.mxu0 0
    %2790 = vmatpush2.bf16.msra.mxu0 0
    %2791 = vmatprep.subr.bf16.mxu0 0
    %2792 = vmatpush2.bf16.msra.mxu0 0
    %2793 = vmatprep.subr.bf16.mxu0 0
    %2794 = vmatpush2.bf16.msra.mxu0 0
    %2795 = vmatprep.subr.bf16.mxu0 0
    %2796 = vmatpush2.bf16.msra.mxu0 0
    %2797 = vmatprep.subr.bf16.mxu0 0
    %2798 = vmatpush2.bf16.msra.mxu0 0
    %2799 = vmatprep.subr.bf16.mxu0 0
    %2800 = vmatpush2.bf16.msra.mxu0 0
    %2801 = vmatprep.subr.bf16.mxu0 0
    %2802 = vmatpush2.bf16.msra.mxu0 0
    %2803 = vmatprep.mubr.bf16.mxu0 0
    %2804 = vmatmul.mubr.bf16.gmra.mxu0 %v2262
    %v2805 = vpop.f32.mrf.mxu0
    %v2806 = vadd.f32 0.0, %v2805
    %v2807 = vpop.f32.mrf.mxu0
    %v2808 = vadd.f32 0.0, %v2807
    %v2809 = vpop.f32.mrf.mxu0
    %v2810 = vpop.f32.mrf.mxu0
    %2811 = vdwg.mxu0
    %v2812 = vadd.f32 %v2249, %v2683
    %v2813 = vadd.f32 %v2250, %v2685
    %v2814 = vadd.f32 %v2251, %v2724
    %v2815 = vadd.f32 %v2252, %v2726
    %v2816 = vadd.f32 %v2253, %v2765
    %v2817 = vadd.f32 %v2254, %v2767
    %v2818 = vadd.f32 %v2255, %v2806
    %v2819 = vadd.f32 %v2256, %v2808
    %v2820 = vrot.slane %v326, 4
    %v2822 = vrot.slane %v584, 3
    %v2824 = vsel %vm589, %v2820, %v2822
    %v2825 = vpack.c.bf16 %v2824, %v2824
    %s2826 = scalar_lea.vmem [#allocation8], 2048
    %v2827 = vld [vmem:[%s2826] sm:$0xff]
    %v2828 = vld [vmem:[%s2826 + $0x8] sm:$0xff]
    %v2829 = vld [vmem:[%s2826 + $0x10] sm:$0xff]
    %v2830 = vld [vmem:[%s2826 + $0x18] sm:$0xff]
    %v2831 = vld [vmem:[%s2826 + $0x20] sm:$0xff]
    %v2832 = vld [vmem:[%s2826 + $0x28] sm:$0xff]
    %v2833 = vld [vmem:[%s2826 + $0x30] sm:$0xff]
    %v2834 = vld [vmem:[%s2826 + $0x38] sm:$0xff]
    %v2835 = vld [vmem:[%s2826 + $0x40] sm:$0xff]
    %v2836 = vld [vmem:[%s2826 + $0x48] sm:$0xff]
    %v2837 = vld [vmem:[%s2826 + $0x50] sm:$0xff]
    %v2838 = vld [vmem:[%s2826 + $0x58] sm:$0xff]
    %v2839 = vld [vmem:[%s2826 + $0x60] sm:$0xff]
    %v2840 = vld [vmem:[%s2826 + $0x68] sm:$0xff]
    %v2841 = vld [vmem:[%s2826 + $0x70] sm:$0xff]
    %v2842 = vld [vmem:[%s2826 + $0x78] sm:$0xff]
    %v2843 = vld [vmem:[%s2826 + $0x80] sm:$0xff]
    %v2844 = vld [vmem:[%s2826 + $0x88] sm:$0xff]
    %v2845 = vld [vmem:[%s2826 + $0x90] sm:$0xff]
    %v2846 = vld [vmem:[%s2826 + $0x98] sm:$0xff]
    %v2847 = vld [vmem:[%s2826 + $0xa0] sm:$0xff]
    %v2848 = vld [vmem:[%s2826 + $0xa8] sm:$0xff]
    %v2849 = vld [vmem:[%s2826 + $0xb0] sm:$0xff]
    %v2850 = vld [vmem:[%s2826 + $0xb8] sm:$0xff]
    %v2851 = vld [vmem:[%s2826 + $0xc0] sm:$0xff]
    %v2852 = vld [vmem:[%s2826 + $0xc8] sm:$0xff]
    %v2853 = vld [vmem:[%s2826 + $0xd0] sm:$0xff]
    %v2854 = vld [vmem:[%s2826 + $0xd8] sm:$0xff]
    %v2855 = vld [vmem:[%s2826 + $0xe0] sm:$0xff]
    %v2856 = vld [vmem:[%s2826 + $0xe8] sm:$0xff]
    %v2857 = vld [vmem:[%s2826 + $0xf0] sm:$0xff]
    %v2858 = vld [vmem:[%s2826 + $0xf8] sm:$0xff]
    %v2859 = vld [vmem:[%s2826 + $0x100] sm:$0xff]
    %v2860 = vld [vmem:[%s2826 + $0x108] sm:$0xff]
    %v2861 = vld [vmem:[%s2826 + $0x110] sm:$0xff]
    %v2862 = vld [vmem:[%s2826 + $0x118] sm:$0xff]
    %v2863 = vld [vmem:[%s2826 + $0x120] sm:$0xff]
    %v2864 = vld [vmem:[%s2826 + $0x128] sm:$0xff]
    %v2865 = vld [vmem:[%s2826 + $0x130] sm:$0xff]
    %v2866 = vld [vmem:[%s2826 + $0x138] sm:$0xff]
    %v2867 = vld [vmem:[%s2826 + $0x140] sm:$0xff]
    %v2868 = vld [vmem:[%s2826 + $0x148] sm:$0xff]
    %v2869 = vld [vmem:[%s2826 + $0x150] sm:$0xff]
    %v2870 = vld [vmem:[%s2826 + $0x158] sm:$0xff]
    %v2871 = vld [vmem:[%s2826 + $0x160] sm:$0xff]
    %v2872 = vld [vmem:[%s2826 + $0x168] sm:$0xff]
    %v2873 = vld [vmem:[%s2826 + $0x170] sm:$0xff]
    %v2874 = vld [vmem:[%s2826 + $0x178] sm:$0xff]
    %v2875 = vld [vmem:[%s2826 + $0x180] sm:$0xff]
    %v2876 = vld [vmem:[%s2826 + $0x188] sm:$0xff]
    %v2877 = vld [vmem:[%s2826 + $0x190] sm:$0xff]
    %v2878 = vld [vmem:[%s2826 + $0x198] sm:$0xff]
    %v2879 = vld [vmem:[%s2826 + $0x1a0] sm:$0xff]
    %v2880 = vld [vmem:[%s2826 + $0x1a8] sm:$0xff]
    %v2881 = vld [vmem:[%s2826 + $0x1b0] sm:$0xff]
    %v2882 = vld [vmem:[%s2826 + $0x1b8] sm:$0xff]
    %v2883 = vld [vmem:[%s2826 + $0x1c0] sm:$0xff]
    %v2884 = vld [vmem:[%s2826 + $0x1c8] sm:$0xff]
    %v2885 = vld [vmem:[%s2826 + $0x1d0] sm:$0xff]
    %v2886 = vld [vmem:[%s2826 + $0x1d8] sm:$0xff]
    %v2887 = vld [vmem:[%s2826 + $0x1e0] sm:$0xff]
    %v2888 = vld [vmem:[%s2826 + $0x1e8] sm:$0xff]
    %v2889 = vld [vmem:[%s2826 + $0x1f0] sm:$0xff]
    %v2890 = vld [vmem:[%s2826 + $0x1f8] sm:$0xff]
    %v2955 = vunpack.c.l.b16 %v2827
    %v2956 = vunpack.c.h.b16 %v2827
    %v2957 = vunpack.c.l.b16 %v2828
    %v2958 = vunpack.c.h.b16 %v2828
    %v2959 = vunpack.c.l.b16 %v2829
    %v2960 = vunpack.c.h.b16 %v2829
    %v2961 = vunpack.c.l.b16 %v2830
    %v2962 = vunpack.c.h.b16 %v2830
    %v2963 = vunpack.c.l.b16 %v2831
    %v2964 = vunpack.c.h.b16 %v2831
    %v2965 = vunpack.c.l.b16 %v2832
    %v2966 = vunpack.c.h.b16 %v2832
    %v2967 = vunpack.c.l.b16 %v2833
    %v2968 = vunpack.c.h.b16 %v2833
    %v2969 = vunpack.c.l.b16 %v2834
    %v2970 = vunpack.c.h.b16 %v2834
    %v2971 = vunpack.c.l.b16 %v2835
    %v2972 = vunpack.c.h.b16 %v2835
    %v2973 = vunpack.c.l.b16 %v2836
    %v2974 = vunpack.c.h.b16 %v2836
    %v2975 = vunpack.c.l.b16 %v2837
    %v2976 = vunpack.c.h.b16 %v2837
    %v2977 = vunpack.c.l.b16 %v2838
    %v2978 = vunpack.c.h.b16 %v2838
    %v2979 = vunpack.c.l.b16 %v2839
    %v2980 = vunpack.c.h.b16 %v2839
    %v2981 = vunpack.c.l.b16 %v2840
    %v2982 = vunpack.c.h.b16 %v2840
    %v2983 = vunpack.c.l.b16 %v2841
    %v2984 = vunpack.c.h.b16 %v2841
    %v2985 = vunpack.c.l.b16 %v2842
    %v2986 = vunpack.c.h.b16 %v2842
    %v2987 = vunpack.c.l.b16 %v2843
    %v2988 = vunpack.c.h.b16 %v2843
    %v2989 = vunpack.c.l.b16 %v2844
    %v2990 = vunpack.c.h.b16 %v2844
    %v2991 = vunpack.c.l.b16 %v2845
    %v2992 = vunpack.c.h.b16 %v2845
    %v2993 = vunpack.c.l.b16 %v2846
    %v2994 = vunpack.c.h.b16 %v2846
    %v2995 = vunpack.c.l.b16 %v2847
    %v2996 = vunpack.c.h.b16 %v2847
    %v2997 = vunpack.c.l.b16 %v2848
    %v2998 = vunpack.c.h.b16 %v2848
    %v2999 = vunpack.c.l.b16 %v2849
    %v3000 = vunpack.c.h.b16 %v2849
    %v3001 = vunpack.c.l.b16 %v2850
    %v3002 = vunpack.c.h.b16 %v2850
    %v3003 = vunpack.c.l.b16 %v2851
    %v3004 = vunpack.c.h.b16 %v2851
    %v3005 = vunpack.c.l.b16 %v2852
    %v3006 = vunpack.c.h.b16 %v2852
    %v3007 = vunpack.c.l.b16 %v2853
    %v3008 = vunpack.c.h.b16 %v2853
    %v3009 = vunpack.c.l.b16 %v2854
    %v3010 = vunpack.c.h.b16 %v2854
    %v3011 = vunpack.c.l.b16 %v2855
    %v3012 = vunpack.c.h.b16 %v2855
    %v3013 = vunpack.c.l.b16 %v2856
    %v3014 = vunpack.c.h.b16 %v2856
    %v3015 = vunpack.c.l.b16 %v2857
    %v3016 = vunpack.c.h.b16 %v2857
    %v3017 = vunpack.c.l.b16 %v2858
    %v3018 = vunpack.c.h.b16 %v2858
    %v3019 = vunpack.c.l.b16 %v2859
    %v3020 = vunpack.c.h.b16 %v2859
    %v3021 = vunpack.c.l.b16 %v2860
    %v3022 = vunpack.c.h.b16 %v2860
    %v3023 = vunpack.c.l.b16 %v2861
    %v3024 = vunpack.c.h.b16 %v2861
    %v3025 = vunpack.c.l.b16 %v2862
    %v3026 = vunpack.c.h.b16 %v2862
    %v3027 = vunpack.c.l.b16 %v2863
    %v3028 = vunpack.c.h.b16 %v2863
    %v3029 = vunpack.c.l.b16 %v2864
    %v3030 = vunpack.c.h.b16 %v2864
    %v3031 = vunpack.c.l.b16 %v2865
    %v3032 = vunpack.c.h.b16 %v2865
    %v3033 = vunpack.c.l.b16 %v2866
    %v3034 = vunpack.c.h.b16 %v2866
    %v3035 = vunpack.c.l.b16 %v2867
    %v3036 = vunpack.c.h.b16 %v2867
    %v3037 = vunpack.c.l.b16 %v2868
    %v3038 = vunpack.c.h.b16 %v2868
    %v3039 = vunpack.c.l.b16 %v2869
    %v3040 = vunpack.c.h.b16 %v2869
    %v3041 = vunpack.c.l.b16 %v2870
    %v3042 = vunpack.c.h.b16 %v2870
    %v3043 = vunpack.c.l.b16 %v2871
    %v3044 = vunpack.c.h.b16 %v2871
    %v3045 = vunpack.c.l.b16 %v2872
    %v3046 = vunpack.c.h.b16 %v2872
    %v3047 = vunpack.c.l.b16 %v2873
    %v3048 = vunpack.c.h.b16 %v2873
    %v3049 = vunpack.c.l.b16 %v2874
    %v3050 = vunpack.c.h.b16 %v2874
    %v3051 = vunpack.c.l.b16 %v2875
    %v3052 = vunpack.c.h.b16 %v2875
    %v3053 = vunpack.c.l.b16 %v2876
    %v3054 = vunpack.c.h.b16 %v2876
    %v3055 = vunpack.c.l.b16 %v2877
    %v3056 = vunpack.c.h.b16 %v2877
    %v3057 = vunpack.c.l.b16 %v2878
    %v3058 = vunpack.c.h.b16 %v2878
    %v3059 = vunpack.c.l.b16 %v2879
    %v3060 = vunpack.c.h.b16 %v2879
    %v3061 = vunpack.c.l.b16 %v2880
    %v3062 = vunpack.c.h.b16 %v2880
    %v3063 = vunpack.c.l.b16 %v2881
    %v3064 = vunpack.c.h.b16 %v2881
    %v3065 = vunpack.c.l.b16 %v2882
    %v3066 = vunpack.c.h.b16 %v2882
    %v3067 = vunpack.c.l.b16 %v2883
    %v3068 = vunpack.c.h.b16 %v2883
    %v3069 = vunpack.c.l.b16 %v2884
    %v3070 = vunpack.c.h.b16 %v2884
    %v3071 = vunpack.c.l.b16 %v2885
    %v3072 = vunpack.c.h.b16 %v2885
    %v3073 = vunpack.c.l.b16 %v2886
    %v3074 = vunpack.c.h.b16 %v2886
    %v3075 = vunpack.c.l.b16 %v2887
    %v3076 = vunpack.c.h.b16 %v2887
    %v3077 = vunpack.c.l.b16 %v2888
    %v3078 = vunpack.c.h.b16 %v2888
    %v3079 = vunpack.c.l.b16 %v2889
    %v3080 = vunpack.c.h.b16 %v2889
    %v3081 = vunpack.c.l.b16 %v2890
    %v3082 = vunpack.c.h.b16 %v2890
    %v3083 = vpack.c.b16 %v2963, %v2955
    %v3084 = vpack.c.b16 %v2964, %v2956
    %v3085 = vpack.c.b16 %v2965, %v2957
    %v3086 = vpack.c.b16 %v2966, %v2958
    %v3087 = vpack.c.b16 %v2967, %v2959
    %v3088 = vpack.c.b16 %v2968, %v2960
    %v3089 = vpack.c.b16 %v2969, %v2961
    %v3090 = vpack.c.b16 %v2970, %v2962
    %v3091 = vpack.c.b16 %v2979, %v2971
    %v3092 = vpack.c.b16 %v2980, %v2972
    %v3093 = vpack.c.b16 %v2981, %v2973
    %v3094 = vpack.c.b16 %v2982, %v2974
    %v3095 = vpack.c.b16 %v2983, %v2975
    %v3096 = vpack.c.b16 %v2984, %v2976
    %v3097 = vpack.c.b16 %v2985, %v2977
    %v3098 = vpack.c.b16 %v2986, %v2978
    %v3099 = vpack.c.b16 %v2995, %v2987
    %v3100 = vpack.c.b16 %v2996, %v2988
    %v3101 = vpack.c.b16 %v2997, %v2989
    %v3102 = vpack.c.b16 %v2998, %v2990
    %v3103 = vpack.c.b16 %v2999, %v2991
    %v3104 = vpack.c.b16 %v3000, %v2992
    %v3105 = vpack.c.b16 %v3001, %v2993
    %v3106 = vpack.c.b16 %v3002, %v2994
    %v3107 = vpack.c.b16 %v3011, %v3003
    %v3108 = vpack.c.b16 %v3012, %v3004
    %v3109 = vpack.c.b16 %v3013, %v3005
    %v3110 = vpack.c.b16 %v3014, %v3006
    %v3111 = vpack.c.b16 %v3015, %v3007
    %v3112 = vpack.c.b16 %v3016, %v3008
    %v3113 = vpack.c.b16 %v3017, %v3009
    %v3114 = vpack.c.b16 %v3018, %v3010
    %v3115 = vpack.c.b16 %v3027, %v3019
    %v3116 = vpack.c.b16 %v3028, %v3020
    %v3117 = vpack.c.b16 %v3029, %v3021
    %v3118 = vpack.c.b16 %v3030, %v3022
    %v3119 = vpack.c.b16 %v3031, %v3023
    %v3120 = vpack.c.b16 %v3032, %v3024
    %v3121 = vpack.c.b16 %v3033, %v3025
    %v3122 = vpack.c.b16 %v3034, %v3026
    %v3123 = vpack.c.b16 %v3043, %v3035
    %v3124 = vpack.c.b16 %v3044, %v3036
    %v3125 = vpack.c.b16 %v3045, %v3037
    %v3126 = vpack.c.b16 %v3046, %v3038
    %v3127 = vpack.c.b16 %v3047, %v3039
    %v3128 = vpack.c.b16 %v3048, %v3040
    %v3129 = vpack.c.b16 %v3049, %v3041
    %v3130 = vpack.c.b16 %v3050, %v3042
    %v3131 = vpack.c.b16 %v3059, %v3051
    %v3132 = vpack.c.b16 %v3060, %v3052
    %v3133 = vpack.c.b16 %v3061, %v3053
    %v3134 = vpack.c.b16 %v3062, %v3054
    %v3135 = vpack.c.b16 %v3063, %v3055
    %v3136 = vpack.c.b16 %v3064, %v3056
    %v3137 = vpack.c.b16 %v3065, %v3057
    %v3138 = vpack.c.b16 %v3066, %v3058
    %v3139 = vpack.c.b16 %v3075, %v3067
    %v3140 = vpack.c.b16 %v3076, %v3068
    %v3141 = vpack.c.b16 %v3077, %v3069
    %v3142 = vpack.c.b16 %v3078, %v3070
    %v3143 = vpack.c.b16 %v3079, %v3071
    %v3144 = vpack.c.b16 %v3080, %v3072
    %v3145 = vpack.c.b16 %v3081, %v3073
    %v3146 = vpack.c.b16 %v3082, %v3074
    %3211 = vmatprep.subr.bf16.mxu0 %v3140
    %3212 = vmatpush1.bf16.msra.mxu0 %v3139
    %3213 = vmatprep.subr.bf16.mxu0 %v3132
    %3214 = vmatpush1.bf16.msra.mxu0 %v3131
    %3215 = vmatprep.subr.bf16.mxu0 %v3124
    %3216 = vmatpush1.bf16.msra.mxu0 %v3123
    %3217 = vmatprep.subr.bf16.mxu0 %v3116
    %3218 = vmatpush1.bf16.msra.mxu0 %v3115
    %3219 = vmatprep.subr.bf16.mxu0 %v3108
    %3220 = vmatpush1.bf16.msra.mxu0 %v3107
    %3221 = vmatprep.subr.bf16.mxu0 %v3100
    %3222 = vmatpush1.bf16.msra.mxu0 %v3099
    %3223 = vmatprep.subr.bf16.mxu0 %v3092
    %3224 = vmatpush1.bf16.msra.mxu0 %v3091
    %3225 = vmatprep.subr.bf16.mxu0 %v3084
    %3226 = vmatpush1.bf16.msra.mxu0 %v3083
    %3227 = vmatprep.subr.bf16.mxu0 0
    %3228 = vmatpush2.bf16.msra.mxu0 0
    %3229 = vmatprep.subr.bf16.mxu0 0
    %3230 = vmatpush2.bf16.msra.mxu0 0
    %3231 = vmatprep.subr.bf16.mxu0 0
    %3232 = vmatpush2.bf16.msra.mxu0 0
    %3233 = vmatprep.subr.bf16.mxu0 0
    %3234 = vmatpush2.bf16.msra.mxu0 0
    %3235 = vmatprep.subr.bf16.mxu0 0
    %3236 = vmatpush2.bf16.msra.mxu0 0
    %3237 = vmatprep.subr.bf16.mxu0 0
    %3238 = vmatpush2.bf16.msra.mxu0 0
    %3239 = vmatprep.subr.bf16.mxu0 0
    %3240 = vmatpush2.bf16.msra.mxu0 0
    %3241 = vmatprep.subr.bf16.mxu0 0
    %3242 = vmatpush2.bf16.msra.mxu0 0
    %3243 = vmatprep.mubr.bf16.mxu0 0
    %3244 = vmatmul.mubr.bf16.gmra.mxu0 %v2825
    %v3245 = vpop.f32.mrf.mxu0
    %v3246 = vadd.f32 0.0, %v3245
    %v3247 = vpop.f32.mrf.mxu0
    %v3248 = vadd.f32 0.0, %v3247
    %v3249 = vpop.f32.mrf.mxu0
    %v3250 = vpop.f32.mrf.mxu0
    %3251 = vdwg.mxu0
    %3252 = vmatprep.subr.bf16.mxu0 %v3142
    %3253 = vmatpush1.bf16.msra.mxu0 %v3141
    %3254 = vmatprep.subr.bf16.mxu0 %v3134
    %3255 = vmatpush1.bf16.msra.mxu0 %v3133
    %3256 = vmatprep.subr.bf16.mxu0 %v3126
    %3257 = vmatpush1.bf16.msra.mxu0 %v3125
    %3258 = vmatprep.subr.bf16.mxu0 %v3118
    %3259 = vmatpush1.bf16.msra.mxu0 %v3117
    %3260 = vmatprep.subr.bf16.mxu0 %v3110
    %3261 = vmatpush1.bf16.msra.mxu0 %v3109
    %3262 = vmatprep.subr.bf16.mxu0 %v3102
    %3263 = vmatpush1.bf16.msra.mxu0 %v3101
    %3264 = vmatprep.subr.bf16.mxu0 %v3094
    %3265 = vmatpush1.bf16.msra.mxu0 %v3093
    %3266 = vmatprep.subr.bf16.mxu0 %v3086
    %3267 = vmatpush1.bf16.msra.mxu0 %v3085
    %3268 = vmatprep.subr.bf16.mxu0 0
    %3269 = vmatpush2.bf16.msra.mxu0 0
    %3270 = vmatprep.subr.bf16.mxu0 0
    %3271 = vmatpush2.bf16.msra.mxu0 0
    %3272 = vmatprep.subr.bf16.mxu0 0
    %3273 = vmatpush2.bf16.msra.mxu0 0
    %3274 = vmatprep.subr.bf16.mxu0 0
    %3275 = vmatpush2.bf16.msra.mxu0 0
    %3276 = vmatprep.subr.bf16.mxu0 0
    %3277 = vmatpush2.bf16.msra.mxu0 0
    %3278 = vmatprep.subr.bf16.mxu0 0
    %3279 = vmatpush2.bf16.msra.mxu0 0
    %3280 = vmatprep.subr.bf16.mxu0 0
    %3281 = vmatpush2.bf16.msra.mxu0 0
    %3282 = vmatprep.subr.bf16.mxu0 0
    %3283 = vmatpush2.bf16.msra.mxu0 0
    %3284 = vmatprep.mubr.bf16.mxu0 0
    %3285 = vmatmul.mubr.bf16.gmra.mxu0 %v2825
    %v3286 = vpop.f32.mrf.mxu0
    %v3287 = vadd.f32 0.0, %v3286
    %v3288 = vpop.f32.mrf.mxu0
    %v3289 = vadd.f32 0.0, %v3288
    %v3290 = vpop.f32.mrf.mxu0
    %v3291 = vpop.f32.mrf.mxu0
    %3292 = vdwg.mxu0
    %3293 = vmatprep.subr.bf16.mxu0 %v3144
    %3294 = vmatpush1.bf16.msra.mxu0 %v3143
    %3295 = vmatprep.subr.bf16.mxu0 %v3136
    %3296 = vmatpush1.bf16.msra.mxu0 %v3135
    %3297 = vmatprep.subr.bf16.mxu0 %v3128
    %3298 = vmatpush1.bf16.msra.mxu0 %v3127
    %3299 = vmatprep.subr.bf16.mxu0 %v3120
    %3300 = vmatpush1.bf16.msra.mxu0 %v3119
    %3301 = vmatprep.subr.bf16.mxu0 %v3112
    %3302 = vmatpush1.bf16.msra.mxu0 %v3111
    %3303 = vmatprep.subr.bf16.mxu0 %v3104
    %3304 = vmatpush1.bf16.msra.mxu0 %v3103
    %3305 = vmatprep.subr.bf16.mxu0 %v3096
    %3306 = vmatpush1.bf16.msra.mxu0 %v3095
    %3307 = vmatprep.subr.bf16.mxu0 %v3088
    %3308 = vmatpush1.bf16.msra.mxu0 %v3087
    %3309 = vmatprep.subr.bf16.mxu0 0
    %3310 = vmatpush2.bf16.msra.mxu0 0
    %3311 = vmatprep.subr.bf16.mxu0 0
    %3312 = vmatpush2.bf16.msra.mxu0 0
    %3313 = vmatprep.subr.bf16.mxu0 0
    %3314 = vmatpush2.bf16.msra.mxu0 0
    %3315 = vmatprep.subr.bf16.mxu0 0
    %3316 = vmatpush2.bf16.msra.mxu0 0
    %3317 = vmatprep.subr.bf16.mxu0 0
    %3318 = vmatpush2.bf16.msra.mxu0 0
    %3319 = vmatprep.subr.bf16.mxu0 0
    %3320 = vmatpush2.bf16.msra.mxu0 0
    %3321 = vmatprep.subr.bf16.mxu0 0
    %3322 = vmatpush2.bf16.msra.mxu0 0
    %3323 = vmatprep.subr.bf16.mxu0 0
    %3324 = vmatpush2.bf16.msra.mxu0 0
    %3325 = vmatprep.mubr.bf16.mxu0 0
    %3326 = vmatmul.mubr.bf16.gmra.mxu0 %v2825
    %v3327 = vpop.f32.mrf.mxu0
    %v3328 = vadd.f32 0.0, %v3327
    %v3329 = vpop.f32.mrf.mxu0
    %v3330 = vadd.f32 0.0, %v3329
    %v3331 = vpop.f32.mrf.mxu0
    %v3332 = vpop.f32.mrf.mxu0
    %3333 = vdwg.mxu0
    %3334 = vmatprep.subr.bf16.mxu0 %v3146
    %3335 = vmatpush1.bf16.msra.mxu0 %v3145
    %3336 = vmatprep.subr.bf16.mxu0 %v3138
    %3337 = vmatpush1.bf16.msra.mxu0 %v3137
    %3338 = vmatprep.subr.bf16.mxu0 %v3130
    %3339 = vmatpush1.bf16.msra.mxu0 %v3129
    %3340 = vmatprep.subr.bf16.mxu0 %v3122
    %3341 = vmatpush1.bf16.msra.mxu0 %v3121
    %3342 = vmatprep.subr.bf16.mxu0 %v3114
    %3343 = vmatpush1.bf16.msra.mxu0 %v3113
    %3344 = vmatprep.subr.bf16.mxu0 %v3106
    %3345 = vmatpush1.bf16.msra.mxu0 %v3105
    %3346 = vmatprep.subr.bf16.mxu0 %v3098
    %3347 = vmatpush1.bf16.msra.mxu0 %v3097
    %3348 = vmatprep.subr.bf16.mxu0 %v3090
    %3349 = vmatpush1.bf16.msra.mxu0 %v3089
    %3350 = vmatprep.subr.bf16.mxu0 0
    %3351 = vmatpush2.bf16.msra.mxu0 0
    %3352 = vmatprep.subr.bf16.mxu0 0
    %3353 = vmatpush2.bf16.msra.mxu0 0
    %3354 = vmatprep.subr.bf16.mxu0 0
    %3355 = vmatpush2.bf16.msra.mxu0 0
    %3356 = vmatprep.subr.bf16.mxu0 0
    %3357 = vmatpush2.bf16.msra.mxu0 0
    %3358 = vmatprep.subr.bf16.mxu0 0
    %3359 = vmatpush2.bf16.msra.mxu0 0
    %3360 = vmatprep.subr.bf16.mxu0 0
    %3361 = vmatpush2.bf16.msra.mxu0 0
    %3362 = vmatprep.subr.bf16.mxu0 0
    %3363 = vmatpush2.bf16.msra.mxu0 0
    %3364 = vmatprep.subr.bf16.mxu0 0
    %3365 = vmatpush2.bf16.msra.mxu0 0
    %3366 = vmatprep.mubr.bf16.mxu0 0
    %3367 = vmatmul.mubr.bf16.gmra.mxu0 %v2825
    %v3368 = vpop.f32.mrf.mxu0
    %v3369 = vadd.f32 0.0, %v3368
    %v3370 = vpop.f32.mrf.mxu0
    %v3371 = vadd.f32 0.0, %v3370
    %v3372 = vpop.f32.mrf.mxu0
    %v3373 = vpop.f32.mrf.mxu0
    %3374 = vdwg.mxu0
    %v3375 = vadd.f32 %v2812, %v3246
    %v3376 = vadd.f32 %v2813, %v3248
    %v3377 = vadd.f32 %v2814, %v3287
    %v3378 = vadd.f32 %v2815, %v3289
    %v3379 = vadd.f32 %v2816, %v3328
    %v3380 = vadd.f32 %v2817, %v3330
    %v3381 = vadd.f32 %v2818, %v3369
    %v3382 = vadd.f32 %v2819, %v3371
    %v3383 = vrot.slane %v326, 5
    %v3385 = vrot.slane %v584, 4
    %v3387 = vsel %vm589, %v3383, %v3385
    %v3388 = vpack.c.bf16 %v3387, %v3387
    %s3389 = scalar_lea.vmem [#allocation8], 2560
    %v3390 = vld [vmem:[%s3389] sm:$0xff]
    %v3391 = vld [vmem:[%s3389 + $0x8] sm:$0xff]
    %v3392 = vld [vmem:[%s3389 + $0x10] sm:$0xff]
    %v3393 = vld [vmem:[%s3389 + $0x18] sm:$0xff]
    %v3394 = vld [vmem:[%s3389 + $0x20] sm:$0xff]
    %v3395 = vld [vmem:[%s3389 + $0x28] sm:$0xff]
    %v3396 = vld [vmem:[%s3389 + $0x30] sm:$0xff]
    %v3397 = vld [vmem:[%s3389 + $0x38] sm:$0xff]
    %v3398 = vld [vmem:[%s3389 + $0x40] sm:$0xff]
    %v3399 = vld [vmem:[%s3389 + $0x48] sm:$0xff]
    %v3400 = vld [vmem:[%s3389 + $0x50] sm:$0xff]
    %v3401 = vld [vmem:[%s3389 + $0x58] sm:$0xff]
    %v3402 = vld [vmem:[%s3389 + $0x60] sm:$0xff]
    %v3403 = vld [vmem:[%s3389 + $0x68] sm:$0xff]
    %v3404 = vld [vmem:[%s3389 + $0x70] sm:$0xff]
    %v3405 = vld [vmem:[%s3389 + $0x78] sm:$0xff]
    %v3406 = vld [vmem:[%s3389 + $0x80] sm:$0xff]
    %v3407 = vld [vmem:[%s3389 + $0x88] sm:$0xff]
    %v3408 = vld [vmem:[%s3389 + $0x90] sm:$0xff]
    %v3409 = vld [vmem:[%s3389 + $0x98] sm:$0xff]
    %v3410 = vld [vmem:[%s3389 + $0xa0] sm:$0xff]
    %v3411 = vld [vmem:[%s3389 + $0xa8] sm:$0xff]
    %v3412 = vld [vmem:[%s3389 + $0xb0] sm:$0xff]
    %v3413 = vld [vmem:[%s3389 + $0xb8] sm:$0xff]
    %v3414 = vld [vmem:[%s3389 + $0xc0] sm:$0xff]
    %v3415 = vld [vmem:[%s3389 + $0xc8] sm:$0xff]
    %v3416 = vld [vmem:[%s3389 + $0xd0] sm:$0xff]
    %v3417 = vld [vmem:[%s3389 + $0xd8] sm:$0xff]
    %v3418 = vld [vmem:[%s3389 + $0xe0] sm:$0xff]
    %v3419 = vld [vmem:[%s3389 + $0xe8] sm:$0xff]
    %v3420 = vld [vmem:[%s3389 + $0xf0] sm:$0xff]
    %v3421 = vld [vmem:[%s3389 + $0xf8] sm:$0xff]
    %v3422 = vld [vmem:[%s3389 + $0x100] sm:$0xff]
    %v3423 = vld [vmem:[%s3389 + $0x108] sm:$0xff]
    %v3424 = vld [vmem:[%s3389 + $0x110] sm:$0xff]
    %v3425 = vld [vmem:[%s3389 + $0x118] sm:$0xff]
    %v3426 = vld [vmem:[%s3389 + $0x120] sm:$0xff]
    %v3427 = vld [vmem:[%s3389 + $0x128] sm:$0xff]
    %v3428 = vld [vmem:[%s3389 + $0x130] sm:$0xff]
    %v3429 = vld [vmem:[%s3389 + $0x138] sm:$0xff]
    %v3430 = vld [vmem:[%s3389 + $0x140] sm:$0xff]
    %v3431 = vld [vmem:[%s3389 + $0x148] sm:$0xff]
    %v3432 = vld [vmem:[%s3389 + $0x150] sm:$0xff]
    %v3433 = vld [vmem:[%s3389 + $0x158] sm:$0xff]
    %v3434 = vld [vmem:[%s3389 + $0x160] sm:$0xff]
    %v3435 = vld [vmem:[%s3389 + $0x168] sm:$0xff]
    %v3436 = vld [vmem:[%s3389 + $0x170] sm:$0xff]
    %v3437 = vld [vmem:[%s3389 + $0x178] sm:$0xff]
    %v3438 = vld [vmem:[%s3389 + $0x180] sm:$0xff]
    %v3439 = vld [vmem:[%s3389 + $0x188] sm:$0xff]
    %v3440 = vld [vmem:[%s3389 + $0x190] sm:$0xff]
    %v3441 = vld [vmem:[%s3389 + $0x198] sm:$0xff]
    %v3442 = vld [vmem:[%s3389 + $0x1a0] sm:$0xff]
    %v3443 = vld [vmem:[%s3389 + $0x1a8] sm:$0xff]
    %v3444 = vld [vmem:[%s3389 + $0x1b0] sm:$0xff]
    %v3445 = vld [vmem:[%s3389 + $0x1b8] sm:$0xff]
    %v3446 = vld [vmem:[%s3389 + $0x1c0] sm:$0xff]
    %v3447 = vld [vmem:[%s3389 + $0x1c8] sm:$0xff]
    %v3448 = vld [vmem:[%s3389 + $0x1d0] sm:$0xff]
    %v3449 = vld [vmem:[%s3389 + $0x1d8] sm:$0xff]
    %v3450 = vld [vmem:[%s3389 + $0x1e0] sm:$0xff]
    %v3451 = vld [vmem:[%s3389 + $0x1e8] sm:$0xff]
    %v3452 = vld [vmem:[%s3389 + $0x1f0] sm:$0xff]
    %v3453 = vld [vmem:[%s3389 + $0x1f8] sm:$0xff]
    %v3518 = vunpack.c.l.b16 %v3390
    %v3519 = vunpack.c.h.b16 %v3390
    %v3520 = vunpack.c.l.b16 %v3391
    %v3521 = vunpack.c.h.b16 %v3391
    %v3522 = vunpack.c.l.b16 %v3392
    %v3523 = vunpack.c.h.b16 %v3392
    %v3524 = vunpack.c.l.b16 %v3393
    %v3525 = vunpack.c.h.b16 %v3393
    %v3526 = vunpack.c.l.b16 %v3394
    %v3527 = vunpack.c.h.b16 %v3394
    %v3528 = vunpack.c.l.b16 %v3395
    %v3529 = vunpack.c.h.b16 %v3395
    %v3530 = vunpack.c.l.b16 %v3396
    %v3531 = vunpack.c.h.b16 %v3396
    %v3532 = vunpack.c.l.b16 %v3397
    %v3533 = vunpack.c.h.b16 %v3397
    %v3534 = vunpack.c.l.b16 %v3398
    %v3535 = vunpack.c.h.b16 %v3398
    %v3536 = vunpack.c.l.b16 %v3399
    %v3537 = vunpack.c.h.b16 %v3399
    %v3538 = vunpack.c.l.b16 %v3400
    %v3539 = vunpack.c.h.b16 %v3400
    %v3540 = vunpack.c.l.b16 %v3401
    %v3541 = vunpack.c.h.b16 %v3401
    %v3542 = vunpack.c.l.b16 %v3402
    %v3543 = vunpack.c.h.b16 %v3402
    %v3544 = vunpack.c.l.b16 %v3403
    %v3545 = vunpack.c.h.b16 %v3403
    %v3546 = vunpack.c.l.b16 %v3404
    %v3547 = vunpack.c.h.b16 %v3404
    %v3548 = vunpack.c.l.b16 %v3405
    %v3549 = vunpack.c.h.b16 %v3405
    %v3550 = vunpack.c.l.b16 %v3406
    %v3551 = vunpack.c.h.b16 %v3406
    %v3552 = vunpack.c.l.b16 %v3407
    %v3553 = vunpack.c.h.b16 %v3407
    %v3554 = vunpack.c.l.b16 %v3408
    %v3555 = vunpack.c.h.b16 %v3408
    %v3556 = vunpack.c.l.b16 %v3409
    %v3557 = vunpack.c.h.b16 %v3409
    %v3558 = vunpack.c.l.b16 %v3410
    %v3559 = vunpack.c.h.b16 %v3410
    %v3560 = vunpack.c.l.b16 %v3411
    %v3561 = vunpack.c.h.b16 %v3411
    %v3562 = vunpack.c.l.b16 %v3412
    %v3563 = vunpack.c.h.b16 %v3412
    %v3564 = vunpack.c.l.b16 %v3413
    %v3565 = vunpack.c.h.b16 %v3413
    %v3566 = vunpack.c.l.b16 %v3414
    %v3567 = vunpack.c.h.b16 %v3414
    %v3568 = vunpack.c.l.b16 %v3415
    %v3569 = vunpack.c.h.b16 %v3415
    %v3570 = vunpack.c.l.b16 %v3416
    %v3571 = vunpack.c.h.b16 %v3416
    %v3572 = vunpack.c.l.b16 %v3417
    %v3573 = vunpack.c.h.b16 %v3417
    %v3574 = vunpack.c.l.b16 %v3418
    %v3575 = vunpack.c.h.b16 %v3418
    %v3576 = vunpack.c.l.b16 %v3419
    %v3577 = vunpack.c.h.b16 %v3419
    %v3578 = vunpack.c.l.b16 %v3420
    %v3579 = vunpack.c.h.b16 %v3420
    %v3580 = vunpack.c.l.b16 %v3421
    %v3581 = vunpack.c.h.b16 %v3421
    %v3582 = vunpack.c.l.b16 %v3422
    %v3583 = vunpack.c.h.b16 %v3422
    %v3584 = vunpack.c.l.b16 %v3423
    %v3585 = vunpack.c.h.b16 %v3423
    %v3586 = vunpack.c.l.b16 %v3424
    %v3587 = vunpack.c.h.b16 %v3424
    %v3588 = vunpack.c.l.b16 %v3425
    %v3589 = vunpack.c.h.b16 %v3425
    %v3590 = vunpack.c.l.b16 %v3426
    %v3591 = vunpack.c.h.b16 %v3426
    %v3592 = vunpack.c.l.b16 %v3427
    %v3593 = vunpack.c.h.b16 %v3427
    %v3594 = vunpack.c.l.b16 %v3428
    %v3595 = vunpack.c.h.b16 %v3428
    %v3596 = vunpack.c.l.b16 %v3429
    %v3597 = vunpack.c.h.b16 %v3429
    %v3598 = vunpack.c.l.b16 %v3430
    %v3599 = vunpack.c.h.b16 %v3430
    %v3600 = vunpack.c.l.b16 %v3431
    %v3601 = vunpack.c.h.b16 %v3431
    %v3602 = vunpack.c.l.b16 %v3432
    %v3603 = vunpack.c.h.b16 %v3432
    %v3604 = vunpack.c.l.b16 %v3433
    %v3605 = vunpack.c.h.b16 %v3433
    %v3606 = vunpack.c.l.b16 %v3434
    %v3607 = vunpack.c.h.b16 %v3434
    %v3608 = vunpack.c.l.b16 %v3435
    %v3609 = vunpack.c.h.b16 %v3435
    %v3610 = vunpack.c.l.b16 %v3436
    %v3611 = vunpack.c.h.b16 %v3436
    %v3612 = vunpack.c.l.b16 %v3437
    %v3613 = vunpack.c.h.b16 %v3437
    %v3614 = vunpack.c.l.b16 %v3438
    %v3615 = vunpack.c.h.b16 %v3438
    %v3616 = vunpack.c.l.b16 %v3439
    %v3617 = vunpack.c.h.b16 %v3439
    %v3618 = vunpack.c.l.b16 %v3440
    %v3619 = vunpack.c.h.b16 %v3440
    %v3620 = vunpack.c.l.b16 %v3441
    %v3621 = vunpack.c.h.b16 %v3441
    %v3622 = vunpack.c.l.b16 %v3442
    %v3623 = vunpack.c.h.b16 %v3442
    %v3624 = vunpack.c.l.b16 %v3443
    %v3625 = vunpack.c.h.b16 %v3443
    %v3626 = vunpack.c.l.b16 %v3444
    %v3627 = vunpack.c.h.b16 %v3444
    %v3628 = vunpack.c.l.b16 %v3445
    %v3629 = vunpack.c.h.b16 %v3445
    %v3630 = vunpack.c.l.b16 %v3446
    %v3631 = vunpack.c.h.b16 %v3446
    %v3632 = vunpack.c.l.b16 %v3447
    %v3633 = vunpack.c.h.b16 %v3447
    %v3634 = vunpack.c.l.b16 %v3448
    %v3635 = vunpack.c.h.b16 %v3448
    %v3636 = vunpack.c.l.b16 %v3449
    %v3637 = vunpack.c.h.b16 %v3449
    %v3638 = vunpack.c.l.b16 %v3450
    %v3639 = vunpack.c.h.b16 %v3450
    %v3640 = vunpack.c.l.b16 %v3451
    %v3641 = vunpack.c.h.b16 %v3451
    %v3642 = vunpack.c.l.b16 %v3452
    %v3643 = vunpack.c.h.b16 %v3452
    %v3644 = vunpack.c.l.b16 %v3453
    %v3645 = vunpack.c.h.b16 %v3453
    %v3646 = vpack.c.b16 %v3526, %v3518
    %v3647 = vpack.c.b16 %v3527, %v3519
    %v3648 = vpack.c.b16 %v3528, %v3520
    %v3649 = vpack.c.b16 %v3529, %v3521
    %v3650 = vpack.c.b16 %v3530, %v3522
    %v3651 = vpack.c.b16 %v3531, %v3523
    %v3652 = vpack.c.b16 %v3532, %v3524
    %v3653 = vpack.c.b16 %v3533, %v3525
    %v3654 = vpack.c.b16 %v3542, %v3534
    %v3655 = vpack.c.b16 %v3543, %v3535
    %v3656 = vpack.c.b16 %v3544, %v3536
    %v3657 = vpack.c.b16 %v3545, %v3537
    %v3658 = vpack.c.b16 %v3546, %v3538
    %v3659 = vpack.c.b16 %v3547, %v3539
    %v3660 = vpack.c.b16 %v3548, %v3540
    %v3661 = vpack.c.b16 %v3549, %v3541
    %v3662 = vpack.c.b16 %v3558, %v3550
    %v3663 = vpack.c.b16 %v3559, %v3551
    %v3664 = vpack.c.b16 %v3560, %v3552
    %v3665 = vpack.c.b16 %v3561, %v3553
    %v3666 = vpack.c.b16 %v3562, %v3554
    %v3667 = vpack.c.b16 %v3563, %v3555
    %v3668 = vpack.c.b16 %v3564, %v3556
    %v3669 = vpack.c.b16 %v3565, %v3557
    %v3670 = vpack.c.b16 %v3574, %v3566
    %v3671 = vpack.c.b16 %v3575, %v3567
    %v3672 = vpack.c.b16 %v3576, %v3568
    %v3673 = vpack.c.b16 %v3577, %v3569
    %v3674 = vpack.c.b16 %v3578, %v3570
    %v3675 = vpack.c.b16 %v3579, %v3571
    %v3676 = vpack.c.b16 %v3580, %v3572
    %v3677 = vpack.c.b16 %v3581, %v3573
    %v3678 = vpack.c.b16 %v3590, %v3582
    %v3679 = vpack.c.b16 %v3591, %v3583
    %v3680 = vpack.c.b16 %v3592, %v3584
    %v3681 = vpack.c.b16 %v3593, %v3585
    %v3682 = vpack.c.b16 %v3594, %v3586
    %v3683 = vpack.c.b16 %v3595, %v3587
    %v3684 = vpack.c.b16 %v3596, %v3588
    %v3685 = vpack.c.b16 %v3597, %v3589
    %v3686 = vpack.c.b16 %v3606, %v3598
    %v3687 = vpack.c.b16 %v3607, %v3599
    %v3688 = vpack.c.b16 %v3608, %v3600
    %v3689 = vpack.c.b16 %v3609, %v3601
    %v3690 = vpack.c.b16 %v3610, %v3602
    %v3691 = vpack.c.b16 %v3611, %v3603
    %v3692 = vpack.c.b16 %v3612, %v3604
    %v3693 = vpack.c.b16 %v3613, %v3605
    %v3694 = vpack.c.b16 %v3622, %v3614
    %v3695 = vpack.c.b16 %v3623, %v3615
    %v3696 = vpack.c.b16 %v3624, %v3616
    %v3697 = vpack.c.b16 %v3625, %v3617
    %v3698 = vpack.c.b16 %v3626, %v3618
    %v3699 = vpack.c.b16 %v3627, %v3619
    %v3700 = vpack.c.b16 %v3628, %v3620
    %v3701 = vpack.c.b16 %v3629, %v3621
    %v3702 = vpack.c.b16 %v3638, %v3630
    %v3703 = vpack.c.b16 %v3639, %v3631
    %v3704 = vpack.c.b16 %v3640, %v3632
    %v3705 = vpack.c.b16 %v3641, %v3633
    %v3706 = vpack.c.b16 %v3642, %v3634
    %v3707 = vpack.c.b16 %v3643, %v3635
    %v3708 = vpack.c.b16 %v3644, %v3636
    %v3709 = vpack.c.b16 %v3645, %v3637
    %3774 = vmatprep.subr.bf16.mxu0 %v3703
    %3775 = vmatpush1.bf16.msra.mxu0 %v3702
    %3776 = vmatprep.subr.bf16.mxu0 %v3695
    %3777 = vmatpush1.bf16.msra.mxu0 %v3694
    %3778 = vmatprep.subr.bf16.mxu0 %v3687
    %3779 = vmatpush1.bf16.msra.mxu0 %v3686
    %3780 = vmatprep.subr.bf16.mxu0 %v3679
    %3781 = vmatpush1.bf16.msra.mxu0 %v3678
    %3782 = vmatprep.subr.bf16.mxu0 %v3671
    %3783 = vmatpush1.bf16.msra.mxu0 %v3670
    %3784 = vmatprep.subr.bf16.mxu0 %v3663
    %3785 = vmatpush1.bf16.msra.mxu0 %v3662
    %3786 = vmatprep.subr.bf16.mxu0 %v3655
    %3787 = vmatpush1.bf16.msra.mxu0 %v3654
    %3788 = vmatprep.subr.bf16.mxu0 %v3647
    %3789 = vmatpush1.bf16.msra.mxu0 %v3646
    %3790 = vmatprep.subr.bf16.mxu0 0
    %3791 = vmatpush2.bf16.msra.mxu0 0
    %3792 = vmatprep.subr.bf16.mxu0 0
    %3793 = vmatpush2.bf16.msra.mxu0 0
    %3794 = vmatprep.subr.bf16.mxu0 0
    %3795 = vmatpush2.bf16.msra.mxu0 0
    %3796 = vmatprep.subr.bf16.mxu0 0
    %3797 = vmatpush2.bf16.msra.mxu0 0
    %3798 = vmatprep.subr.bf16.mxu0 0
    %3799 = vmatpush2.bf16.msra.mxu0 0
    %3800 = vmatprep.subr.bf16.mxu0 0
    %3801 = vmatpush2.bf16.msra.mxu0 0
    %3802 = vmatprep.subr.bf16.mxu0 0
    %3803 = vmatpush2.bf16.msra.mxu0 0
    %3804 = vmatprep.subr.bf16.mxu0 0
    %3805 = vmatpush2.bf16.msra.mxu0 0
    %3806 = vmatprep.mubr.bf16.mxu0 0
    %3807 = vmatmul.mubr.bf16.gmra.mxu0 %v3388
    %v3808 = vpop.f32.mrf.mxu0
    %v3809 = vadd.f32 0.0, %v3808
    %v3810 = vpop.f32.mrf.mxu0
    %v3811 = vadd.f32 0.0, %v3810
    %v3812 = vpop.f32.mrf.mxu0
    %v3813 = vpop.f32.mrf.mxu0
    %3814 = vdwg.mxu0
    %3815 = vmatprep.subr.bf16.mxu0 %v3705
    %3816 = vmatpush1.bf16.msra.mxu0 %v3704
    %3817 = vmatprep.subr.bf16.mxu0 %v3697
    %3818 = vmatpush1.bf16.msra.mxu0 %v3696
    %3819 = vmatprep.subr.bf16.mxu0 %v3689
    %3820 = vmatpush1.bf16.msra.mxu0 %v3688
    %3821 = vmatprep.subr.bf16.mxu0 %v3681
    %3822 = vmatpush1.bf16.msra.mxu0 %v3680
    %3823 = vmatprep.subr.bf16.mxu0 %v3673
    %3824 = vmatpush1.bf16.msra.mxu0 %v3672
    %3825 = vmatprep.subr.bf16.mxu0 %v3665
    %3826 = vmatpush1.bf16.msra.mxu0 %v3664
    %3827 = vmatprep.subr.bf16.mxu0 %v3657
    %3828 = vmatpush1.bf16.msra.mxu0 %v3656
    %3829 = vmatprep.subr.bf16.mxu0 %v3649
    %3830 = vmatpush1.bf16.msra.mxu0 %v3648
    %3831 = vmatprep.subr.bf16.mxu0 0
    %3832 = vmatpush2.bf16.msra.mxu0 0
    %3833 = vmatprep.subr.bf16.mxu0 0
    %3834 = vmatpush2.bf16.msra.mxu0 0
    %3835 = vmatprep.subr.bf16.mxu0 0
    %3836 = vmatpush2.bf16.msra.mxu0 0
    %3837 = vmatprep.subr.bf16.mxu0 0
    %3838 = vmatpush2.bf16.msra.mxu0 0
    %3839 = vmatprep.subr.bf16.mxu0 0
    %3840 = vmatpush2.bf16.msra.mxu0 0
    %3841 = vmatprep.subr.bf16.mxu0 0
    %3842 = vmatpush2.bf16.msra.mxu0 0
    %3843 = vmatprep.subr.bf16.mxu0 0
    %3844 = vmatpush2.bf16.msra.mxu0 0
    %3845 = vmatprep.subr.bf16.mxu0 0
    %3846 = vmatpush2.bf16.msra.mxu0 0
    %3847 = vmatprep.mubr.bf16.mxu0 0
    %3848 = vmatmul.mubr.bf16.gmra.mxu0 %v3388
    %v3849 = vpop.f32.mrf.mxu0
    %v3850 = vadd.f32 0.0, %v3849
    %v3851 = vpop.f32.mrf.mxu0
    %v3852 = vadd.f32 0.0, %v3851
    %v3853 = vpop.f32.mrf.mxu0
    %v3854 = vpop.f32.mrf.mxu0
    %3855 = vdwg.mxu0
    %3856 = vmatprep.subr.bf16.mxu0 %v3707
    %3857 = vmatpush1.bf16.msra.mxu0 %v3706
    %3858 = vmatprep.subr.bf16.mxu0 %v3699
    %3859 = vmatpush1.bf16.msra.mxu0 %v3698
    %3860 = vmatprep.subr.bf16.mxu0 %v3691
    %3861 = vmatpush1.bf16.msra.mxu0 %v3690
    %3862 = vmatprep.subr.bf16.mxu0 %v3683
    %3863 = vmatpush1.bf16.msra.mxu0 %v3682
    %3864 = vmatprep.subr.bf16.mxu0 %v3675
    %3865 = vmatpush1.bf16.msra.mxu0 %v3674
    %3866 = vmatprep.subr.bf16.mxu0 %v3667
    %3867 = vmatpush1.bf16.msra.mxu0 %v3666
    %3868 = vmatprep.subr.bf16.mxu0 %v3659
    %3869 = vmatpush1.bf16.msra.mxu0 %v3658
    %3870 = vmatprep.subr.bf16.mxu0 %v3651
    %3871 = vmatpush1.bf16.msra.mxu0 %v3650
    %3872 = vmatprep.subr.bf16.mxu0 0
    %3873 = vmatpush2.bf16.msra.mxu0 0
    %3874 = vmatprep.subr.bf16.mxu0 0
    %3875 = vmatpush2.bf16.msra.mxu0 0
    %3876 = vmatprep.subr.bf16.mxu0 0
    %3877 = vmatpush2.bf16.msra.mxu0 0
    %3878 = vmatprep.subr.bf16.mxu0 0
    %3879 = vmatpush2.bf16.msra.mxu0 0
    %3880 = vmatprep.subr.bf16.mxu0 0
    %3881 = vmatpush2.bf16.msra.mxu0 0
    %3882 = vmatprep.subr.bf16.mxu0 0
    %3883 = vmatpush2.bf16.msra.mxu0 0
    %3884 = vmatprep.subr.bf16.mxu0 0
    %3885 = vmatpush2.bf16.msra.mxu0 0
    %3886 = vmatprep.subr.bf16.mxu0 0
    %3887 = vmatpush2.bf16.msra.mxu0 0
    %3888 = vmatprep.mubr.bf16.mxu0 0
    %3889 = vmatmul.mubr.bf16.gmra.mxu0 %v3388
    %v3890 = vpop.f32.mrf.mxu0
    %v3891 = vadd.f32 0.0, %v3890
    %v3892 = vpop.f32.mrf.mxu0
    %v3893 = vadd.f32 0.0, %v3892
    %v3894 = vpop.f32.mrf.mxu0
    %v3895 = vpop.f32.mrf.mxu0
    %3896 = vdwg.mxu0
    %3897 = vmatprep.subr.bf16.mxu0 %v3709
    %3898 = vmatpush1.bf16.msra.mxu0 %v3708
    %3899 = vmatprep.subr.bf16.mxu0 %v3701
    %3900 = vmatpush1.bf16.msra.mxu0 %v3700
    %3901 = vmatprep.subr.bf16.mxu0 %v3693
    %3902 = vmatpush1.bf16.msra.mxu0 %v3692
    %3903 = vmatprep.subr.bf16.mxu0 %v3685
    %3904 = vmatpush1.bf16.msra.mxu0 %v3684
    %3905 = vmatprep.subr.bf16.mxu0 %v3677
    %3906 = vmatpush1.bf16.msra.mxu0 %v3676
    %3907 = vmatprep.subr.bf16.mxu0 %v3669
    %3908 = vmatpush1.bf16.msra.mxu0 %v3668
    %3909 = vmatprep.subr.bf16.mxu0 %v3661
    %3910 = vmatpush1.bf16.msra.mxu0 %v3660
    %3911 = vmatprep.subr.bf16.mxu0 %v3653
    %3912 = vmatpush1.bf16.msra.mxu0 %v3652
    %3913 = vmatprep.subr.bf16.mxu0 0
    %3914 = vmatpush2.bf16.msra.mxu0 0
    %3915 = vmatprep.subr.bf16.mxu0 0
    %3916 = vmatpush2.bf16.msra.mxu0 0
    %3917 = vmatprep.subr.bf16.mxu0 0
    %3918 = vmatpush2.bf16.msra.mxu0 0
    %3919 = vmatprep.subr.bf16.mxu0 0
    %3920 = vmatpush2.bf16.msra.mxu0 0
    %3921 = vmatprep.subr.bf16.mxu0 0
    %3922 = vmatpush2.bf16.msra.mxu0 0
    %3923 = vmatprep.subr.bf16.mxu0 0
    %3924 = vmatpush2.bf16.msra.mxu0 0
    %3925 = vmatprep.subr.bf16.mxu0 0
    %3926 = vmatpush2.bf16.msra.mxu0 0
    %3927 = vmatprep.subr.bf16.mxu0 0
    %3928 = vmatpush2.bf16.msra.mxu0 0
    %3929 = vmatprep.mubr.bf16.mxu0 0
    %3930 = vmatmul.mubr.bf16.gmra.mxu0 %v3388
    %v3931 = vpop.f32.mrf.mxu0
    %v3932 = vadd.f32 0.0, %v3931
    %v3933 = vpop.f32.mrf.mxu0
    %v3934 = vadd.f32 0.0, %v3933
    %v3935 = vpop.f32.mrf.mxu0
    %v3936 = vpop.f32.mrf.mxu0
    %3937 = vdwg.mxu0
    %v3938 = vadd.f32 %v3375, %v3809
    %v3939 = vadd.f32 %v3376, %v3811
    %v3940 = vadd.f32 %v3377, %v3850
    %v3941 = vadd.f32 %v3378, %v3852
    %v3942 = vadd.f32 %v3379, %v3891
    %v3943 = vadd.f32 %v3380, %v3893
    %v3944 = vadd.f32 %v3381, %v3932
    %v3945 = vadd.f32 %v3382, %v3934
    %v3946 = vrot.slane %v326, 6
    %v3948 = vrot.slane %v584, 5
    %v3950 = vsel %vm589, %v3946, %v3948
    %v3951 = vpack.c.bf16 %v3950, %v3950
    %s3952 = scalar_lea.vmem [#allocation8], 3072
    %v3953 = vld [vmem:[%s3952] sm:$0xff]
    %v3954 = vld [vmem:[%s3952 + $0x8] sm:$0xff]
    %v3955 = vld [vmem:[%s3952 + $0x10] sm:$0xff]
    %v3956 = vld [vmem:[%s3952 + $0x18] sm:$0xff]
    %v3957 = vld [vmem:[%s3952 + $0x20] sm:$0xff]
    %v3958 = vld [vmem:[%s3952 + $0x28] sm:$0xff]
    %v3959 = vld [vmem:[%s3952 + $0x30] sm:$0xff]
    %v3960 = vld [vmem:[%s3952 + $0x38] sm:$0xff]
    %v3961 = vld [vmem:[%s3952 + $0x40] sm:$0xff]
    %v3962 = vld [vmem:[%s3952 + $0x48] sm:$0xff]
    %v3963 = vld [vmem:[%s3952 + $0x50] sm:$0xff]
    %v3964 = vld [vmem:[%s3952 + $0x58] sm:$0xff]
    %v3965 = vld [vmem:[%s3952 + $0x60] sm:$0xff]
    %v3966 = vld [vmem:[%s3952 + $0x68] sm:$0xff]
    %v3967 = vld [vmem:[%s3952 + $0x70] sm:$0xff]
    %v3968 = vld [vmem:[%s3952 + $0x78] sm:$0xff]
    %v3969 = vld [vmem:[%s3952 + $0x80] sm:$0xff]
    %v3970 = vld [vmem:[%s3952 + $0x88] sm:$0xff]
    %v3971 = vld [vmem:[%s3952 + $0x90] sm:$0xff]
    %v3972 = vld [vmem:[%s3952 + $0x98] sm:$0xff]
    %v3973 = vld [vmem:[%s3952 + $0xa0] sm:$0xff]
    %v3974 = vld [vmem:[%s3952 + $0xa8] sm:$0xff]
    %v3975 = vld [vmem:[%s3952 + $0xb0] sm:$0xff]
    %v3976 = vld [vmem:[%s3952 + $0xb8] sm:$0xff]
    %v3977 = vld [vmem:[%s3952 + $0xc0] sm:$0xff]
    %v3978 = vld [vmem:[%s3952 + $0xc8] sm:$0xff]
    %v3979 = vld [vmem:[%s3952 + $0xd0] sm:$0xff]
    %v3980 = vld [vmem:[%s3952 + $0xd8] sm:$0xff]
    %v3981 = vld [vmem:[%s3952 + $0xe0] sm:$0xff]
    %v3982 = vld [vmem:[%s3952 + $0xe8] sm:$0xff]
    %v3983 = vld [vmem:[%s3952 + $0xf0] sm:$0xff]
    %v3984 = vld [vmem:[%s3952 + $0xf8] sm:$0xff]
    %v3985 = vld [vmem:[%s3952 + $0x100] sm:$0xff]
    %v3986 = vld [vmem:[%s3952 + $0x108] sm:$0xff]
    %v3987 = vld [vmem:[%s3952 + $0x110] sm:$0xff]
    %v3988 = vld [vmem:[%s3952 + $0x118] sm:$0xff]
    %v3989 = vld [vmem:[%s3952 + $0x120] sm:$0xff]
    %v3990 = vld [vmem:[%s3952 + $0x128] sm:$0xff]
    %v3991 = vld [vmem:[%s3952 + $0x130] sm:$0xff]
    %v3992 = vld [vmem:[%s3952 + $0x138] sm:$0xff]
    %v3993 = vld [vmem:[%s3952 + $0x140] sm:$0xff]
    %v3994 = vld [vmem:[%s3952 + $0x148] sm:$0xff]
    %v3995 = vld [vmem:[%s3952 + $0x150] sm:$0xff]
    %v3996 = vld [vmem:[%s3952 + $0x158] sm:$0xff]
    %v3997 = vld [vmem:[%s3952 + $0x160] sm:$0xff]
    %v3998 = vld [vmem:[%s3952 + $0x168] sm:$0xff]
    %v3999 = vld [vmem:[%s3952 + $0x170] sm:$0xff]
    %v4000 = vld [vmem:[%s3952 + $0x178] sm:$0xff]
    %v4001 = vld [vmem:[%s3952 + $0x180] sm:$0xff]
    %v4002 = vld [vmem:[%s3952 + $0x188] sm:$0xff]
    %v4003 = vld [vmem:[%s3952 + $0x190] sm:$0xff]
    %v4004 = vld [vmem:[%s3952 + $0x198] sm:$0xff]
    %v4005 = vld [vmem:[%s3952 + $0x1a0] sm:$0xff]
    %v4006 = vld [vmem:[%s3952 + $0x1a8] sm:$0xff]
    %v4007 = vld [vmem:[%s3952 + $0x1b0] sm:$0xff]
    %v4008 = vld [vmem:[%s3952 + $0x1b8] sm:$0xff]
    %v4009 = vld [vmem:[%s3952 + $0x1c0] sm:$0xff]
    %v4010 = vld [vmem:[%s3952 + $0x1c8] sm:$0xff]
    %v4011 = vld [vmem:[%s3952 + $0x1d0] sm:$0xff]
    %v4012 = vld [vmem:[%s3952 + $0x1d8] sm:$0xff]
    %v4013 = vld [vmem:[%s3952 + $0x1e0] sm:$0xff]
    %v4014 = vld [vmem:[%s3952 + $0x1e8] sm:$0xff]
    %v4015 = vld [vmem:[%s3952 + $0x1f0] sm:$0xff]
    %v4016 = vld [vmem:[%s3952 + $0x1f8] sm:$0xff]
    %v4081 = vunpack.c.l.b16 %v3953
    %v4082 = vunpack.c.h.b16 %v3953
    %v4083 = vunpack.c.l.b16 %v3954
    %v4084 = vunpack.c.h.b16 %v3954
    %v4085 = vunpack.c.l.b16 %v3955
    %v4086 = vunpack.c.h.b16 %v3955
    %v4087 = vunpack.c.l.b16 %v3956
    %v4088 = vunpack.c.h.b16 %v3956
    %v4089 = vunpack.c.l.b16 %v3957
    %v4090 = vunpack.c.h.b16 %v3957
    %v4091 = vunpack.c.l.b16 %v3958
    %v4092 = vunpack.c.h.b16 %v3958
    %v4093 = vunpack.c.l.b16 %v3959
    %v4094 = vunpack.c.h.b16 %v3959
    %v4095 = vunpack.c.l.b16 %v3960
    %v4096 = vunpack.c.h.b16 %v3960
    %v4097 = vunpack.c.l.b16 %v3961
    %v4098 = vunpack.c.h.b16 %v3961
    %v4099 = vunpack.c.l.b16 %v3962
    %v4100 = vunpack.c.h.b16 %v3962
    %v4101 = vunpack.c.l.b16 %v3963
    %v4102 = vunpack.c.h.b16 %v3963
    %v4103 = vunpack.c.l.b16 %v3964
    %v4104 = vunpack.c.h.b16 %v3964
    %v4105 = vunpack.c.l.b16 %v3965
    %v4106 = vunpack.c.h.b16 %v3965
    %v4107 = vunpack.c.l.b16 %v3966
    %v4108 = vunpack.c.h.b16 %v3966
    %v4109 = vunpack.c.l.b16 %v3967
    %v4110 = vunpack.c.h.b16 %v3967
    %v4111 = vunpack.c.l.b16 %v3968
    %v4112 = vunpack.c.h.b16 %v3968
    %v4113 = vunpack.c.l.b16 %v3969
    %v4114 = vunpack.c.h.b16 %v3969
    %v4115 = vunpack.c.l.b16 %v3970
    %v4116 = vunpack.c.h.b16 %v3970
    %v4117 = vunpack.c.l.b16 %v3971
    %v4118 = vunpack.c.h.b16 %v3971
    %v4119 = vunpack.c.l.b16 %v3972
    %v4120 = vunpack.c.h.b16 %v3972
    %v4121 = vunpack.c.l.b16 %v3973
    %v4122 = vunpack.c.h.b16 %v3973
    %v4123 = vunpack.c.l.b16 %v3974
    %v4124 = vunpack.c.h.b16 %v3974
    %v4125 = vunpack.c.l.b16 %v3975
    %v4126 = vunpack.c.h.b16 %v3975
    %v4127 = vunpack.c.l.b16 %v3976
    %v4128 = vunpack.c.h.b16 %v3976
    %v4129 = vunpack.c.l.b16 %v3977
    %v4130 = vunpack.c.h.b16 %v3977
    %v4131 = vunpack.c.l.b16 %v3978
    %v4132 = vunpack.c.h.b16 %v3978
    %v4133 = vunpack.c.l.b16 %v3979
    %v4134 = vunpack.c.h.b16 %v3979
    %v4135 = vunpack.c.l.b16 %v3980
    %v4136 = vunpack.c.h.b16 %v3980
    %v4137 = vunpack.c.l.b16 %v3981
    %v4138 = vunpack.c.h.b16 %v3981
    %v4139 = vunpack.c.l.b16 %v3982
    %v4140 = vunpack.c.h.b16 %v3982
    %v4141 = vunpack.c.l.b16 %v3983
    %v4142 = vunpack.c.h.b16 %v3983
    %v4143 = vunpack.c.l.b16 %v3984
    %v4144 = vunpack.c.h.b16 %v3984
    %v4145 = vunpack.c.l.b16 %v3985
    %v4146 = vunpack.c.h.b16 %v3985
    %v4147 = vunpack.c.l.b16 %v3986
    %v4148 = vunpack.c.h.b16 %v3986
    %v4149 = vunpack.c.l.b16 %v3987
    %v4150 = vunpack.c.h.b16 %v3987
    %v4151 = vunpack.c.l.b16 %v3988
    %v4152 = vunpack.c.h.b16 %v3988
    %v4153 = vunpack.c.l.b16 %v3989
    %v4154 = vunpack.c.h.b16 %v3989
    %v4155 = vunpack.c.l.b16 %v3990
    %v4156 = vunpack.c.h.b16 %v3990
    %v4157 = vunpack.c.l.b16 %v3991
    %v4158 = vunpack.c.h.b16 %v3991
    %v4159 = vunpack.c.l.b16 %v3992
    %v4160 = vunpack.c.h.b16 %v3992
    %v4161 = vunpack.c.l.b16 %v3993
    %v4162 = vunpack.c.h.b16 %v3993
    %v4163 = vunpack.c.l.b16 %v3994
    %v4164 = vunpack.c.h.b16 %v3994
    %v4165 = vunpack.c.l.b16 %v3995
    %v4166 = vunpack.c.h.b16 %v3995
    %v4167 = vunpack.c.l.b16 %v3996
    %v4168 = vunpack.c.h.b16 %v3996
    %v4169 = vunpack.c.l.b16 %v3997
    %v4170 = vunpack.c.h.b16 %v3997
    %v4171 = vunpack.c.l.b16 %v3998
    %v4172 = vunpack.c.h.b16 %v3998
    %v4173 = vunpack.c.l.b16 %v3999
    %v4174 = vunpack.c.h.b16 %v3999
    %v4175 = vunpack.c.l.b16 %v4000
    %v4176 = vunpack.c.h.b16 %v4000
    %v4177 = vunpack.c.l.b16 %v4001
    %v4178 = vunpack.c.h.b16 %v4001
    %v4179 = vunpack.c.l.b16 %v4002
    %v4180 = vunpack.c.h.b16 %v4002
    %v4181 = vunpack.c.l.b16 %v4003
    %v4182 = vunpack.c.h.b16 %v4003
    %v4183 = vunpack.c.l.b16 %v4004
    %v4184 = vunpack.c.h.b16 %v4004
    %v4185 = vunpack.c.l.b16 %v4005
    %v4186 = vunpack.c.h.b16 %v4005
    %v4187 = vunpack.c.l.b16 %v4006
    %v4188 = vunpack.c.h.b16 %v4006
    %v4189 = vunpack.c.l.b16 %v4007
    %v4190 = vunpack.c.h.b16 %v4007
    %v4191 = vunpack.c.l.b16 %v4008
    %v4192 = vunpack.c.h.b16 %v4008
    %v4193 = vunpack.c.l.b16 %v4009
    %v4194 = vunpack.c.h.b16 %v4009
    %v4195 = vunpack.c.l.b16 %v4010
    %v4196 = vunpack.c.h.b16 %v4010
    %v4197 = vunpack.c.l.b16 %v4011
    %v4198 = vunpack.c.h.b16 %v4011
    %v4199 = vunpack.c.l.b16 %v4012
    %v4200 = vunpack.c.h.b16 %v4012
    %v4201 = vunpack.c.l.b16 %v4013
    %v4202 = vunpack.c.h.b16 %v4013
    %v4203 = vunpack.c.l.b16 %v4014
    %v4204 = vunpack.c.h.b16 %v4014
    %v4205 = vunpack.c.l.b16 %v4015
    %v4206 = vunpack.c.h.b16 %v4015
    %v4207 = vunpack.c.l.b16 %v4016
    %v4208 = vunpack.c.h.b16 %v4016
    %v4209 = vpack.c.b16 %v4089, %v4081
    %v4210 = vpack.c.b16 %v4090, %v4082
    %v4211 = vpack.c.b16 %v4091, %v4083
    %v4212 = vpack.c.b16 %v4092, %v4084
    %v4213 = vpack.c.b16 %v4093, %v4085
    %v4214 = vpack.c.b16 %v4094, %v4086
    %v4215 = vpack.c.b16 %v4095, %v4087
    %v4216 = vpack.c.b16 %v4096, %v4088
    %v4217 = vpack.c.b16 %v4105, %v4097
    %v4218 = vpack.c.b16 %v4106, %v4098
    %v4219 = vpack.c.b16 %v4107, %v4099
    %v4220 = vpack.c.b16 %v4108, %v4100
    %v4221 = vpack.c.b16 %v4109, %v4101
    %v4222 = vpack.c.b16 %v4110, %v4102
    %v4223 = vpack.c.b16 %v4111, %v4103
    %v4224 = vpack.c.b16 %v4112, %v4104
    %v4225 = vpack.c.b16 %v4121, %v4113
    %v4226 = vpack.c.b16 %v4122, %v4114
    %v4227 = vpack.c.b16 %v4123, %v4115
    %v4228 = vpack.c.b16 %v4124, %v4116
    %v4229 = vpack.c.b16 %v4125, %v4117
    %v4230 = vpack.c.b16 %v4126, %v4118
    %v4231 = vpack.c.b16 %v4127, %v4119
    %v4232 = vpack.c.b16 %v4128, %v4120
    %v4233 = vpack.c.b16 %v4137, %v4129
    %v4234 = vpack.c.b16 %v4138, %v4130
    %v4235 = vpack.c.b16 %v4139, %v4131
    %v4236 = vpack.c.b16 %v4140, %v4132
    %v4237 = vpack.c.b16 %v4141, %v4133
    %v4238 = vpack.c.b16 %v4142, %v4134
    %v4239 = vpack.c.b16 %v4143, %v4135
    %v4240 = vpack.c.b16 %v4144, %v4136
    %v4241 = vpack.c.b16 %v4153, %v4145
    %v4242 = vpack.c.b16 %v4154, %v4146
    %v4243 = vpack.c.b16 %v4155, %v4147
    %v4244 = vpack.c.b16 %v4156, %v4148
    %v4245 = vpack.c.b16 %v4157, %v4149
    %v4246 = vpack.c.b16 %v4158, %v4150
    %v4247 = vpack.c.b16 %v4159, %v4151
    %v4248 = vpack.c.b16 %v4160, %v4152
    %v4249 = vpack.c.b16 %v4169, %v4161
    %v4250 = vpack.c.b16 %v4170, %v4162
    %v4251 = vpack.c.b16 %v4171, %v4163
    %v4252 = vpack.c.b16 %v4172, %v4164
    %v4253 = vpack.c.b16 %v4173, %v4165
    %v4254 = vpack.c.b16 %v4174, %v4166
    %v4255 = vpack.c.b16 %v4175, %v4167
    %v4256 = vpack.c.b16 %v4176, %v4168
    %v4257 = vpack.c.b16 %v4185, %v4177
    %v4258 = vpack.c.b16 %v4186, %v4178
    %v4259 = vpack.c.b16 %v4187, %v4179
    %v4260 = vpack.c.b16 %v4188, %v4180
    %v4261 = vpack.c.b16 %v4189, %v4181
    %v4262 = vpack.c.b16 %v4190, %v4182
    %v4263 = vpack.c.b16 %v4191, %v4183
    %v4264 = vpack.c.b16 %v4192, %v4184
    %v4265 = vpack.c.b16 %v4201, %v4193
    %v4266 = vpack.c.b16 %v4202, %v4194
    %v4267 = vpack.c.b16 %v4203, %v4195
    %v4268 = vpack.c.b16 %v4204, %v4196
    %v4269 = vpack.c.b16 %v4205, %v4197
    %v4270 = vpack.c.b16 %v4206, %v4198
    %v4271 = vpack.c.b16 %v4207, %v4199
    %v4272 = vpack.c.b16 %v4208, %v4200
    %4337 = vmatprep.subr.bf16.mxu0 %v4266
    %4338 = vmatpush1.bf16.msra.mxu0 %v4265
    %4339 = vmatprep.subr.bf16.mxu0 %v4258
    %4340 = vmatpush1.bf16.msra.mxu0 %v4257
    %4341 = vmatprep.subr.bf16.mxu0 %v4250
    %4342 = vmatpush1.bf16.msra.mxu0 %v4249
    %4343 = vmatprep.subr.bf16.mxu0 %v4242
    %4344 = vmatpush1.bf16.msra.mxu0 %v4241
    %4345 = vmatprep.subr.bf16.mxu0 %v4234
    %4346 = vmatpush1.bf16.msra.mxu0 %v4233
    %4347 = vmatprep.subr.bf16.mxu0 %v4226
    %4348 = vmatpush1.bf16.msra.mxu0 %v4225
    %4349 = vmatprep.subr.bf16.mxu0 %v4218
    %4350 = vmatpush1.bf16.msra.mxu0 %v4217
    %4351 = vmatprep.subr.bf16.mxu0 %v4210
    %4352 = vmatpush1.bf16.msra.mxu0 %v4209
    %4353 = vmatprep.subr.bf16.mxu0 0
    %4354 = vmatpush2.bf16.msra.mxu0 0
    %4355 = vmatprep.subr.bf16.mxu0 0
    %4356 = vmatpush2.bf16.msra.mxu0 0
    %4357 = vmatprep.subr.bf16.mxu0 0
    %4358 = vmatpush2.bf16.msra.mxu0 0
    %4359 = vmatprep.subr.bf16.mxu0 0
    %4360 = vmatpush2.bf16.msra.mxu0 0
    %4361 = vmatprep.subr.bf16.mxu0 0
    %4362 = vmatpush2.bf16.msra.mxu0 0
    %4363 = vmatprep.subr.bf16.mxu0 0
    %4364 = vmatpush2.bf16.msra.mxu0 0
    %4365 = vmatprep.subr.bf16.mxu0 0
    %4366 = vmatpush2.bf16.msra.mxu0 0
    %4367 = vmatprep.subr.bf16.mxu0 0
    %4368 = vmatpush2.bf16.msra.mxu0 0
    %4369 = vmatprep.mubr.bf16.mxu0 0
    %4370 = vmatmul.mubr.bf16.gmra.mxu0 %v3951
    %v4371 = vpop.f32.mrf.mxu0
    %v4372 = vadd.f32 0.0, %v4371
    %v4373 = vpop.f32.mrf.mxu0
    %v4374 = vadd.f32 0.0, %v4373
    %v4375 = vpop.f32.mrf.mxu0
    %v4376 = vpop.f32.mrf.mxu0
    %4377 = vdwg.mxu0
    %4378 = vmatprep.subr.bf16.mxu0 %v4268
    %4379 = vmatpush1.bf16.msra.mxu0 %v4267
    %4380 = vmatprep.subr.bf16.mxu0 %v4260
    %4381 = vmatpush1.bf16.msra.mxu0 %v4259
    %4382 = vmatprep.subr.bf16.mxu0 %v4252
    %4383 = vmatpush1.bf16.msra.mxu0 %v4251
    %4384 = vmatprep.subr.bf16.mxu0 %v4244
    %4385 = vmatpush1.bf16.msra.mxu0 %v4243
    %4386 = vmatprep.subr.bf16.mxu0 %v4236
    %4387 = vmatpush1.bf16.msra.mxu0 %v4235
    %4388 = vmatprep.subr.bf16.mxu0 %v4228
    %4389 = vmatpush1.bf16.msra.mxu0 %v4227
    %4390 = vmatprep.subr.bf16.mxu0 %v4220
    %4391 = vmatpush1.bf16.msra.mxu0 %v4219
    %4392 = vmatprep.subr.bf16.mxu0 %v4212
    %4393 = vmatpush1.bf16.msra.mxu0 %v4211
    %4394 = vmatprep.subr.bf16.mxu0 0
    %4395 = vmatpush2.bf16.msra.mxu0 0
    %4396 = vmatprep.subr.bf16.mxu0 0
    %4397 = vmatpush2.bf16.msra.mxu0 0
    %4398 = vmatprep.subr.bf16.mxu0 0
    %4399 = vmatpush2.bf16.msra.mxu0 0
    %4400 = vmatprep.subr.bf16.mxu0 0
    %4401 = vmatpush2.bf16.msra.mxu0 0
    %4402 = vmatprep.subr.bf16.mxu0 0
    %4403 = vmatpush2.bf16.msra.mxu0 0
    %4404 = vmatprep.subr.bf16.mxu0 0
    %4405 = vmatpush2.bf16.msra.mxu0 0
    %4406 = vmatprep.subr.bf16.mxu0 0
    %4407 = vmatpush2.bf16.msra.mxu0 0
    %4408 = vmatprep.subr.bf16.mxu0 0
    %4409 = vmatpush2.bf16.msra.mxu0 0
    %4410 = vmatprep.mubr.bf16.mxu0 0
    %4411 = vmatmul.mubr.bf16.gmra.mxu0 %v3951
    %v4412 = vpop.f32.mrf.mxu0
    %v4413 = vadd.f32 0.0, %v4412
    %v4414 = vpop.f32.mrf.mxu0
    %v4415 = vadd.f32 0.0, %v4414
    %v4416 = vpop.f32.mrf.mxu0
    %v4417 = vpop.f32.mrf.mxu0
    %4418 = vdwg.mxu0
    %4419 = vmatprep.subr.bf16.mxu0 %v4270
    %4420 = vmatpush1.bf16.msra.mxu0 %v4269
    %4421 = vmatprep.subr.bf16.mxu0 %v4262
    %4422 = vmatpush1.bf16.msra.mxu0 %v4261
    %4423 = vmatprep.subr.bf16.mxu0 %v4254
    %4424 = vmatpush1.bf16.msra.mxu0 %v4253
    %4425 = vmatprep.subr.bf16.mxu0 %v4246
    %4426 = vmatpush1.bf16.msra.mxu0 %v4245
    %4427 = vmatprep.subr.bf16.mxu0 %v4238
    %4428 = vmatpush1.bf16.msra.mxu0 %v4237
    %4429 = vmatprep.subr.bf16.mxu0 %v4230
    %4430 = vmatpush1.bf16.msra.mxu0 %v4229
    %4431 = vmatprep.subr.bf16.mxu0 %v4222
    %4432 = vmatpush1.bf16.msra.mxu0 %v4221
    %4433 = vmatprep.subr.bf16.mxu0 %v4214
    %4434 = vmatpush1.bf16.msra.mxu0 %v4213
    %4435 = vmatprep.subr.bf16.mxu0 0
    %4436 = vmatpush2.bf16.msra.mxu0 0
    %4437 = vmatprep.subr.bf16.mxu0 0
    %4438 = vmatpush2.bf16.msra.mxu0 0
    %4439 = vmatprep.subr.bf16.mxu0 0
    %4440 = vmatpush2.bf16.msra.mxu0 0
    %4441 = vmatprep.subr.bf16.mxu0 0
    %4442 = vmatpush2.bf16.msra.mxu0 0
    %4443 = vmatprep.subr.bf16.mxu0 0
    %4444 = vmatpush2.bf16.msra.mxu0 0
    %4445 = vmatprep.subr.bf16.mxu0 0
    %4446 = vmatpush2.bf16.msra.mxu0 0
    %4447 = vmatprep.subr.bf16.mxu0 0
    %4448 = vmatpush2.bf16.msra.mxu0 0
    %4449 = vmatprep.subr.bf16.mxu0 0
    %4450 = vmatpush2.bf16.msra.mxu0 0
    %4451 = vmatprep.mubr.bf16.mxu0 0
    %4452 = vmatmul.mubr.bf16.gmra.mxu0 %v3951
    %v4453 = vpop.f32.mrf.mxu0
    %v4454 = vadd.f32 0.0, %v4453
    %v4455 = vpop.f32.mrf.mxu0
    %v4456 = vadd.f32 0.0, %v4455
    %v4457 = vpop.f32.mrf.mxu0
    %v4458 = vpop.f32.mrf.mxu0
    %4459 = vdwg.mxu0
    %4460 = vmatprep.subr.bf16.mxu0 %v4272
    %4461 = vmatpush1.bf16.msra.mxu0 %v4271
    %4462 = vmatprep.subr.bf16.mxu0 %v4264
    %4463 = vmatpush1.bf16.msra.mxu0 %v4263
    %4464 = vmatprep.subr.bf16.mxu0 %v4256
    %4465 = vmatpush1.bf16.msra.mxu0 %v4255
    %4466 = vmatprep.subr.bf16.mxu0 %v4248
    %4467 = vmatpush1.bf16.msra.mxu0 %v4247
    %4468 = vmatprep.subr.bf16.mxu0 %v4240
    %4469 = vmatpush1.bf16.msra.mxu0 %v4239
    %4470 = vmatprep.subr.bf16.mxu0 %v4232
    %4471 = vmatpush1.bf16.msra.mxu0 %v4231
    %4472 = vmatprep.subr.bf16.mxu0 %v4224
    %4473 = vmatpush1.bf16.msra.mxu0 %v4223
    %4474 = vmatprep.subr.bf16.mxu0 %v4216
    %4475 = vmatpush1.bf16.msra.mxu0 %v4215
    %4476 = vmatprep.subr.bf16.mxu0 0
    %4477 = vmatpush2.bf16.msra.mxu0 0
    %4478 = vmatprep.subr.bf16.mxu0 0
    %4479 = vmatpush2.bf16.msra.mxu0 0
    %4480 = vmatprep.subr.bf16.mxu0 0
    %4481 = vmatpush2.bf16.msra.mxu0 0
    %4482 = vmatprep.subr.bf16.mxu0 0
    %4483 = vmatpush2.bf16.msra.mxu0 0
    %4484 = vmatprep.subr.bf16.mxu0 0
    %4485 = vmatpush2.bf16.msra.mxu0 0
    %4486 = vmatprep.subr.bf16.mxu0 0
    %4487 = vmatpush2.bf16.msra.mxu0 0
    %4488 = vmatprep.subr.bf16.mxu0 0
    %4489 = vmatpush2.bf16.msra.mxu0 0
    %4490 = vmatprep.subr.bf16.mxu0 0
    %4491 = vmatpush2.bf16.msra.mxu0 0
    %4492 = vmatprep.mubr.bf16.mxu0 0
    %4493 = vmatmul.mubr.bf16.gmra.mxu0 %v3951
    %v4494 = vpop.f32.mrf.mxu0
    %v4495 = vadd.f32 0.0, %v4494
    %v4496 = vpop.f32.mrf.mxu0
    %v4497 = vadd.f32 0.0, %v4496
    %v4498 = vpop.f32.mrf.mxu0
    %v4499 = vpop.f32.mrf.mxu0
    %4500 = vdwg.mxu0
    %v4501 = vadd.f32 %v3938, %v4372
    %v4502 = vadd.f32 %v3939, %v4374
    %v4503 = vadd.f32 %v3940, %v4413
    %v4504 = vadd.f32 %v3941, %v4415
    %v4505 = vadd.f32 %v3942, %v4454
    %v4506 = vadd.f32 %v3943, %v4456
    %v4507 = vadd.f32 %v3944, %v4495
    %v4508 = vadd.f32 %v3945, %v4497
    %v4509 = vrot.slane %v326, 7
    %v4511 = vrot.slane %v584, 6
    %v4513 = vsel %vm589, %v4509, %v4511
    %v4514 = vpack.c.bf16 %v4513, %v4513
    %s4515 = scalar_lea.vmem [#allocation8], 3584
    %v4516 = vld [vmem:[%s4515] sm:$0xff]
    %v4517 = vld [vmem:[%s4515 + $0x8] sm:$0xff]
    %v4518 = vld [vmem:[%s4515 + $0x10] sm:$0xff]
    %v4519 = vld [vmem:[%s4515 + $0x18] sm:$0xff]
    %v4520 = vld [vmem:[%s4515 + $0x20] sm:$0xff]
    %v4521 = vld [vmem:[%s4515 + $0x28] sm:$0xff]
    %v4522 = vld [vmem:[%s4515 + $0x30] sm:$0xff]
    %v4523 = vld [vmem:[%s4515 + $0x38] sm:$0xff]
    %v4524 = vld [vmem:[%s4515 + $0x40] sm:$0xff]
    %v4525 = vld [vmem:[%s4515 + $0x48] sm:$0xff]
    %v4526 = vld [vmem:[%s4515 + $0x50] sm:$0xff]
    %v4527 = vld [vmem:[%s4515 + $0x58] sm:$0xff]
    %v4528 = vld [vmem:[%s4515 + $0x60] sm:$0xff]
    %v4529 = vld [vmem:[%s4515 + $0x68] sm:$0xff]
    %v4530 = vld [vmem:[%s4515 + $0x70] sm:$0xff]
    %v4531 = vld [vmem:[%s4515 + $0x78] sm:$0xff]
    %v4532 = vld [vmem:[%s4515 + $0x80] sm:$0xff]
    %v4533 = vld [vmem:[%s4515 + $0x88] sm:$0xff]
    %v4534 = vld [vmem:[%s4515 + $0x90] sm:$0xff]
    %v4535 = vld [vmem:[%s4515 + $0x98] sm:$0xff]
    %v4536 = vld [vmem:[%s4515 + $0xa0] sm:$0xff]
    %v4537 = vld [vmem:[%s4515 + $0xa8] sm:$0xff]
    %v4538 = vld [vmem:[%s4515 + $0xb0] sm:$0xff]
    %v4539 = vld [vmem:[%s4515 + $0xb8] sm:$0xff]
    %v4540 = vld [vmem:[%s4515 + $0xc0] sm:$0xff]
    %v4541 = vld [vmem:[%s4515 + $0xc8] sm:$0xff]
    %v4542 = vld [vmem:[%s4515 + $0xd0] sm:$0xff]
    %v4543 = vld [vmem:[%s4515 + $0xd8] sm:$0xff]
    %v4544 = vld [vmem:[%s4515 + $0xe0] sm:$0xff]
    %v4545 = vld [vmem:[%s4515 + $0xe8] sm:$0xff]
    %v4546 = vld [vmem:[%s4515 + $0xf0] sm:$0xff]
    %v4547 = vld [vmem:[%s4515 + $0xf8] sm:$0xff]
    %v4548 = vld [vmem:[%s4515 + $0x100] sm:$0xff]
    %v4549 = vld [vmem:[%s4515 + $0x108] sm:$0xff]
    %v4550 = vld [vmem:[%s4515 + $0x110] sm:$0xff]
    %v4551 = vld [vmem:[%s4515 + $0x118] sm:$0xff]
    %v4552 = vld [vmem:[%s4515 + $0x120] sm:$0xff]
    %v4553 = vld [vmem:[%s4515 + $0x128] sm:$0xff]
    %v4554 = vld [vmem:[%s4515 + $0x130] sm:$0xff]
    %v4555 = vld [vmem:[%s4515 + $0x138] sm:$0xff]
    %v4556 = vld [vmem:[%s4515 + $0x140] sm:$0xff]
    %v4557 = vld [vmem:[%s4515 + $0x148] sm:$0xff]
    %v4558 = vld [vmem:[%s4515 + $0x150] sm:$0xff]
    %v4559 = vld [vmem:[%s4515 + $0x158] sm:$0xff]
    %v4560 = vld [vmem:[%s4515 + $0x160] sm:$0xff]
    %v4561 = vld [vmem:[%s4515 + $0x168] sm:$0xff]
    %v4562 = vld [vmem:[%s4515 + $0x170] sm:$0xff]
    %v4563 = vld [vmem:[%s4515 + $0x178] sm:$0xff]
    %v4564 = vld [vmem:[%s4515 + $0x180] sm:$0xff]
    %v4565 = vld [vmem:[%s4515 + $0x188] sm:$0xff]
    %v4566 = vld [vmem:[%s4515 + $0x190] sm:$0xff]
    %v4567 = vld [vmem:[%s4515 + $0x198] sm:$0xff]
    %v4568 = vld [vmem:[%s4515 + $0x1a0] sm:$0xff]
    %v4569 = vld [vmem:[%s4515 + $0x1a8] sm:$0xff]
    %v4570 = vld [vmem:[%s4515 + $0x1b0] sm:$0xff]
    %v4571 = vld [vmem:[%s4515 + $0x1b8] sm:$0xff]
    %v4572 = vld [vmem:[%s4515 + $0x1c0] sm:$0xff]
    %v4573 = vld [vmem:[%s4515 + $0x1c8] sm:$0xff]
    %v4574 = vld [vmem:[%s4515 + $0x1d0] sm:$0xff]
    %v4575 = vld [vmem:[%s4515 + $0x1d8] sm:$0xff]
    %v4576 = vld [vmem:[%s4515 + $0x1e0] sm:$0xff]
    %v4577 = vld [vmem:[%s4515 + $0x1e8] sm:$0xff]
    %v4578 = vld [vmem:[%s4515 + $0x1f0] sm:$0xff]
    %v4579 = vld [vmem:[%s4515 + $0x1f8] sm:$0xff]
    %v4644 = vunpack.c.l.b16 %v4516
    %v4645 = vunpack.c.h.b16 %v4516
    %v4646 = vunpack.c.l.b16 %v4517
    %v4647 = vunpack.c.h.b16 %v4517
    %v4648 = vunpack.c.l.b16 %v4518
    %v4649 = vunpack.c.h.b16 %v4518
    %v4650 = vunpack.c.l.b16 %v4519
    %v4651 = vunpack.c.h.b16 %v4519
    %v4652 = vunpack.c.l.b16 %v4520
    %v4653 = vunpack.c.h.b16 %v4520
    %v4654 = vunpack.c.l.b16 %v4521
    %v4655 = vunpack.c.h.b16 %v4521
    %v4656 = vunpack.c.l.b16 %v4522
    %v4657 = vunpack.c.h.b16 %v4522
    %v4658 = vunpack.c.l.b16 %v4523
    %v4659 = vunpack.c.h.b16 %v4523
    %v4660 = vunpack.c.l.b16 %v4524
    %v4661 = vunpack.c.h.b16 %v4524
    %v4662 = vunpack.c.l.b16 %v4525
    %v4663 = vunpack.c.h.b16 %v4525
    %v4664 = vunpack.c.l.b16 %v4526
    %v4665 = vunpack.c.h.b16 %v4526
    %v4666 = vunpack.c.l.b16 %v4527
    %v4667 = vunpack.c.h.b16 %v4527
    %v4668 = vunpack.c.l.b16 %v4528
    %v4669 = vunpack.c.h.b16 %v4528
    %v4670 = vunpack.c.l.b16 %v4529
    %v4671 = vunpack.c.h.b16 %v4529
    %v4672 = vunpack.c.l.b16 %v4530
    %v4673 = vunpack.c.h.b16 %v4530
    %v4674 = vunpack.c.l.b16 %v4531
    %v4675 = vunpack.c.h.b16 %v4531
    %v4676 = vunpack.c.l.b16 %v4532
    %v4677 = vunpack.c.h.b16 %v4532
    %v4678 = vunpack.c.l.b16 %v4533
    %v4679 = vunpack.c.h.b16 %v4533
    %v4680 = vunpack.c.l.b16 %v4534
    %v4681 = vunpack.c.h.b16 %v4534
    %v4682 = vunpack.c.l.b16 %v4535
    %v4683 = vunpack.c.h.b16 %v4535
    %v4684 = vunpack.c.l.b16 %v4536
    %v4685 = vunpack.c.h.b16 %v4536
    %v4686 = vunpack.c.l.b16 %v4537
    %v4687 = vunpack.c.h.b16 %v4537
    %v4688 = vunpack.c.l.b16 %v4538
    %v4689 = vunpack.c.h.b16 %v4538
    %v4690 = vunpack.c.l.b16 %v4539
    %v4691 = vunpack.c.h.b16 %v4539
    %v4692 = vunpack.c.l.b16 %v4540
    %v4693 = vunpack.c.h.b16 %v4540
    %v4694 = vunpack.c.l.b16 %v4541
    %v4695 = vunpack.c.h.b16 %v4541
    %v4696 = vunpack.c.l.b16 %v4542
    %v4697 = vunpack.c.h.b16 %v4542
    %v4698 = vunpack.c.l.b16 %v4543
    %v4699 = vunpack.c.h.b16 %v4543
    %v4700 = vunpack.c.l.b16 %v4544
    %v4701 = vunpack.c.h.b16 %v4544
    %v4702 = vunpack.c.l.b16 %v4545
    %v4703 = vunpack.c.h.b16 %v4545
    %v4704 = vunpack.c.l.b16 %v4546
    %v4705 = vunpack.c.h.b16 %v4546
    %v4706 = vunpack.c.l.b16 %v4547
    %v4707 = vunpack.c.h.b16 %v4547
    %v4708 = vunpack.c.l.b16 %v4548
    %v4709 = vunpack.c.h.b16 %v4548
    %v4710 = vunpack.c.l.b16 %v4549
    %v4711 = vunpack.c.h.b16 %v4549
    %v4712 = vunpack.c.l.b16 %v4550
    %v4713 = vunpack.c.h.b16 %v4550
    %v4714 = vunpack.c.l.b16 %v4551
    %v4715 = vunpack.c.h.b16 %v4551
    %v4716 = vunpack.c.l.b16 %v4552
    %v4717 = vunpack.c.h.b16 %v4552
    %v4718 = vunpack.c.l.b16 %v4553
    %v4719 = vunpack.c.h.b16 %v4553
    %v4720 = vunpack.c.l.b16 %v4554
    %v4721 = vunpack.c.h.b16 %v4554
    %v4722 = vunpack.c.l.b16 %v4555
    %v4723 = vunpack.c.h.b16 %v4555
    %v4724 = vunpack.c.l.b16 %v4556
    %v4725 = vunpack.c.h.b16 %v4556
    %v4726 = vunpack.c.l.b16 %v4557
    %v4727 = vunpack.c.h.b16 %v4557
    %v4728 = vunpack.c.l.b16 %v4558
    %v4729 = vunpack.c.h.b16 %v4558
    %v4730 = vunpack.c.l.b16 %v4559
    %v4731 = vunpack.c.h.b16 %v4559
    %v4732 = vunpack.c.l.b16 %v4560
    %v4733 = vunpack.c.h.b16 %v4560
    %v4734 = vunpack.c.l.b16 %v4561
    %v4735 = vunpack.c.h.b16 %v4561
    %v4736 = vunpack.c.l.b16 %v4562
    %v4737 = vunpack.c.h.b16 %v4562
    %v4738 = vunpack.c.l.b16 %v4563
    %v4739 = vunpack.c.h.b16 %v4563
    %v4740 = vunpack.c.l.b16 %v4564
    %v4741 = vunpack.c.h.b16 %v4564
    %v4742 = vunpack.c.l.b16 %v4565
    %v4743 = vunpack.c.h.b16 %v4565
    %v4744 = vunpack.c.l.b16 %v4566
    %v4745 = vunpack.c.h.b16 %v4566
    %v4746 = vunpack.c.l.b16 %v4567
    %v4747 = vunpack.c.h.b16 %v4567
    %v4748 = vunpack.c.l.b16 %v4568
    %v4749 = vunpack.c.h.b16 %v4568
    %v4750 = vunpack.c.l.b16 %v4569
    %v4751 = vunpack.c.h.b16 %v4569
    %v4752 = vunpack.c.l.b16 %v4570
    %v4753 = vunpack.c.h.b16 %v4570
    %v4754 = vunpack.c.l.b16 %v4571
    %v4755 = vunpack.c.h.b16 %v4571
    %v4756 = vunpack.c.l.b16 %v4572
    %v4757 = vunpack.c.h.b16 %v4572
    %v4758 = vunpack.c.l.b16 %v4573
    %v4759 = vunpack.c.h.b16 %v4573
    %v4760 = vunpack.c.l.b16 %v4574
    %v4761 = vunpack.c.h.b16 %v4574
    %v4762 = vunpack.c.l.b16 %v4575
    %v4763 = vunpack.c.h.b16 %v4575
    %v4764 = vunpack.c.l.b16 %v4576
    %v4765 = vunpack.c.h.b16 %v4576
    %v4766 = vunpack.c.l.b16 %v4577
    %v4767 = vunpack.c.h.b16 %v4577
    %v4768 = vunpack.c.l.b16 %v4578
    %v4769 = vunpack.c.h.b16 %v4578
    %v4770 = vunpack.c.l.b16 %v4579
    %v4771 = vunpack.c.h.b16 %v4579
    %v4772 = vpack.c.b16 %v4652, %v4644
    %v4773 = vpack.c.b16 %v4653, %v4645
    %v4774 = vpack.c.b16 %v4654, %v4646
    %v4775 = vpack.c.b16 %v4655, %v4647
    %v4776 = vpack.c.b16 %v4656, %v4648
    %v4777 = vpack.c.b16 %v4657, %v4649
    %v4778 = vpack.c.b16 %v4658, %v4650
    %v4779 = vpack.c.b16 %v4659, %v4651
    %v4780 = vpack.c.b16 %v4668, %v4660
    %v4781 = vpack.c.b16 %v4669, %v4661
    %v4782 = vpack.c.b16 %v4670, %v4662
    %v4783 = vpack.c.b16 %v4671, %v4663
    %v4784 = vpack.c.b16 %v4672, %v4664
    %v4785 = vpack.c.b16 %v4673, %v4665
    %v4786 = vpack.c.b16 %v4674, %v4666
    %v4787 = vpack.c.b16 %v4675, %v4667
    %v4788 = vpack.c.b16 %v4684, %v4676
    %v4789 = vpack.c.b16 %v4685, %v4677
    %v4790 = vpack.c.b16 %v4686, %v4678
    %v4791 = vpack.c.b16 %v4687, %v4679
    %v4792 = vpack.c.b16 %v4688, %v4680
    %v4793 = vpack.c.b16 %v4689, %v4681
    %v4794 = vpack.c.b16 %v4690, %v4682
    %v4795 = vpack.c.b16 %v4691, %v4683
    %v4796 = vpack.c.b16 %v4700, %v4692
    %v4797 = vpack.c.b16 %v4701, %v4693
    %v4798 = vpack.c.b16 %v4702, %v4694
    %v4799 = vpack.c.b16 %v4703, %v4695
    %v4800 = vpack.c.b16 %v4704, %v4696
    %v4801 = vpack.c.b16 %v4705, %v4697
    %v4802 = vpack.c.b16 %v4706, %v4698
    %v4803 = vpack.c.b16 %v4707, %v4699
    %v4804 = vpack.c.b16 %v4716, %v4708
    %v4805 = vpack.c.b16 %v4717, %v4709
    %v4806 = vpack.c.b16 %v4718, %v4710
    %v4807 = vpack.c.b16 %v4719, %v4711
    %v4808 = vpack.c.b16 %v4720, %v4712
    %v4809 = vpack.c.b16 %v4721, %v4713
    %v4810 = vpack.c.b16 %v4722, %v4714
    %v4811 = vpack.c.b16 %v4723, %v4715
    %v4812 = vpack.c.b16 %v4732, %v4724
    %v4813 = vpack.c.b16 %v4733, %v4725
    %v4814 = vpack.c.b16 %v4734, %v4726
    %v4815 = vpack.c.b16 %v4735, %v4727
    %v4816 = vpack.c.b16 %v4736, %v4728
    %v4817 = vpack.c.b16 %v4737, %v4729
    %v4818 = vpack.c.b16 %v4738, %v4730
    %v4819 = vpack.c.b16 %v4739, %v4731
    %v4820 = vpack.c.b16 %v4748, %v4740
    %v4821 = vpack.c.b16 %v4749, %v4741
    %v4822 = vpack.c.b16 %v4750, %v4742
    %v4823 = vpack.c.b16 %v4751, %v4743
    %v4824 = vpack.c.b16 %v4752, %v4744
    %v4825 = vpack.c.b16 %v4753, %v4745
    %v4826 = vpack.c.b16 %v4754, %v4746
    %v4827 = vpack.c.b16 %v4755, %v4747
    %v4828 = vpack.c.b16 %v4764, %v4756
    %v4829 = vpack.c.b16 %v4765, %v4757
    %v4830 = vpack.c.b16 %v4766, %v4758
    %v4831 = vpack.c.b16 %v4767, %v4759
    %v4832 = vpack.c.b16 %v4768, %v4760
    %v4833 = vpack.c.b16 %v4769, %v4761
    %v4834 = vpack.c.b16 %v4770, %v4762
    %v4835 = vpack.c.b16 %v4771, %v4763
    %4900 = vmatprep.subr.bf16.mxu0 %v4829
    %4901 = vmatpush1.bf16.msra.mxu0 %v4828
    %4902 = vmatprep.subr.bf16.mxu0 %v4821
    %4903 = vmatpush1.bf16.msra.mxu0 %v4820
    %4904 = vmatprep.subr.bf16.mxu0 %v4813
    %4905 = vmatpush1.bf16.msra.mxu0 %v4812
    %4906 = vmatprep.subr.bf16.mxu0 %v4805
    %4907 = vmatpush1.bf16.msra.mxu0 %v4804
    %4908 = vmatprep.subr.bf16.mxu0 %v4797
    %4909 = vmatpush1.bf16.msra.mxu0 %v4796
    %4910 = vmatprep.subr.bf16.mxu0 %v4789
    %4911 = vmatpush1.bf16.msra.mxu0 %v4788
    %4912 = vmatprep.subr.bf16.mxu0 %v4781
    %4913 = vmatpush1.bf16.msra.mxu0 %v4780
    %4914 = vmatprep.subr.bf16.mxu0 %v4773
    %4915 = vmatpush1.bf16.msra.mxu0 %v4772
    %4916 = vmatprep.subr.bf16.mxu0 0
    %4917 = vmatpush2.bf16.msra.mxu0 0
    %4918 = vmatprep.subr.bf16.mxu0 0
    %4919 = vmatpush2.bf16.msra.mxu0 0
    %4920 = vmatprep.subr.bf16.mxu0 0
    %4921 = vmatpush2.bf16.msra.mxu0 0
    %4922 = vmatprep.subr.bf16.mxu0 0
    %4923 = vmatpush2.bf16.msra.mxu0 0
    %4924 = vmatprep.subr.bf16.mxu0 0
    %4925 = vmatpush2.bf16.msra.mxu0 0
    %4926 = vmatprep.subr.bf16.mxu0 0
    %4927 = vmatpush2.bf16.msra.mxu0 0
    %4928 = vmatprep.subr.bf16.mxu0 0
    %4929 = vmatpush2.bf16.msra.mxu0 0
    %4930 = vmatprep.subr.bf16.mxu0 0
    %4931 = vmatpush2.bf16.msra.mxu0 0
    %4932 = vmatprep.mubr.bf16.mxu0 0
    %4933 = vmatmul.mubr.bf16.gmra.mxu0 %v4514
    %v4934 = vpop.f32.mrf.mxu0
    %v4935 = vadd.f32 0.0, %v4934
    %v4936 = vpop.f32.mrf.mxu0
    %v4937 = vadd.f32 0.0, %v4936
    %v4938 = vpop.f32.mrf.mxu0
    %v4939 = vpop.f32.mrf.mxu0
    %4940 = vdwg.mxu0
    %4941 = vmatprep.subr.bf16.mxu0 %v4831
    %4942 = vmatpush1.bf16.msra.mxu0 %v4830
    %4943 = vmatprep.subr.bf16.mxu0 %v4823
    %4944 = vmatpush1.bf16.msra.mxu0 %v4822
    %4945 = vmatprep.subr.bf16.mxu0 %v4815
    %4946 = vmatpush1.bf16.msra.mxu0 %v4814
    %4947 = vmatprep.subr.bf16.mxu0 %v4807
    %4948 = vmatpush1.bf16.msra.mxu0 %v4806
    %4949 = vmatprep.subr.bf16.mxu0 %v4799
    %4950 = vmatpush1.bf16.msra.mxu0 %v4798
    %4951 = vmatprep.subr.bf16.mxu0 %v4791
    %4952 = vmatpush1.bf16.msra.mxu0 %v4790
    %4953 = vmatprep.subr.bf16.mxu0 %v4783
    %4954 = vmatpush1.bf16.msra.mxu0 %v4782
    %4955 = vmatprep.subr.bf16.mxu0 %v4775
    %4956 = vmatpush1.bf16.msra.mxu0 %v4774
    %4957 = vmatprep.subr.bf16.mxu0 0
    %4958 = vmatpush2.bf16.msra.mxu0 0
    %4959 = vmatprep.subr.bf16.mxu0 0
    %4960 = vmatpush2.bf16.msra.mxu0 0
    %4961 = vmatprep.subr.bf16.mxu0 0
    %4962 = vmatpush2.bf16.msra.mxu0 0
    %4963 = vmatprep.subr.bf16.mxu0 0
    %4964 = vmatpush2.bf16.msra.mxu0 0
    %4965 = vmatprep.subr.bf16.mxu0 0
    %4966 = vmatpush2.bf16.msra.mxu0 0
    %4967 = vmatprep.subr.bf16.mxu0 0
    %4968 = vmatpush2.bf16.msra.mxu0 0
    %4969 = vmatprep.subr.bf16.mxu0 0
    %4970 = vmatpush2.bf16.msra.mxu0 0
    %4971 = vmatprep.subr.bf16.mxu0 0
    %4972 = vmatpush2.bf16.msra.mxu0 0
    %4973 = vmatprep.mubr.bf16.mxu0 0
    %4974 = vmatmul.mubr.bf16.gmra.mxu0 %v4514
    %v4975 = vpop.f32.mrf.mxu0
    %v4976 = vadd.f32 0.0, %v4975
    %v4977 = vpop.f32.mrf.mxu0
    %v4978 = vadd.f32 0.0, %v4977
    %v4979 = vpop.f32.mrf.mxu0
    %v4980 = vpop.f32.mrf.mxu0
    %4981 = vdwg.mxu0
    %4982 = vmatprep.subr.bf16.mxu0 %v4833
    %4983 = vmatpush1.bf16.msra.mxu0 %v4832
    %4984 = vmatprep.subr.bf16.mxu0 %v4825
    %4985 = vmatpush1.bf16.msra.mxu0 %v4824
    %4986 = vmatprep.subr.bf16.mxu0 %v4817
    %4987 = vmatpush1.bf16.msra.mxu0 %v4816
    %4988 = vmatprep.subr.bf16.mxu0 %v4809
    %4989 = vmatpush1.bf16.msra.mxu0 %v4808
    %4990 = vmatprep.subr.bf16.mxu0 %v4801
    %4991 = vmatpush1.bf16.msra.mxu0 %v4800
    %4992 = vmatprep.subr.bf16.mxu0 %v4793
    %4993 = vmatpush1.bf16.msra.mxu0 %v4792
    %4994 = vmatprep.subr.bf16.mxu0 %v4785
    %4995 = vmatpush1.bf16.msra.mxu0 %v4784
    %4996 = vmatprep.subr.bf16.mxu0 %v4777
    %4997 = vmatpush1.bf16.msra.mxu0 %v4776
    %4998 = vmatprep.subr.bf16.mxu0 0
    %4999 = vmatpush2.bf16.msra.mxu0 0
    %5000 = vmatprep.subr.bf16.mxu0 0
    %5001 = vmatpush2.bf16.msra.mxu0 0
    %5002 = vmatprep.subr.bf16.mxu0 0
    %5003 = vmatpush2.bf16.msra.mxu0 0
    %5004 = vmatprep.subr.bf16.mxu0 0
    %5005 = vmatpush2.bf16.msra.mxu0 0
    %5006 = vmatprep.subr.bf16.mxu0 0
    %5007 = vmatpush2.bf16.msra.mxu0 0
    %5008 = vmatprep.subr.bf16.mxu0 0
    %5009 = vmatpush2.bf16.msra.mxu0 0
    %5010 = vmatprep.subr.bf16.mxu0 0
    %5011 = vmatpush2.bf16.msra.mxu0 0
    %5012 = vmatprep.subr.bf16.mxu0 0
    %5013 = vmatpush2.bf16.msra.mxu0 0
    %5014 = vmatprep.mubr.bf16.mxu0 0
    %5015 = vmatmul.mubr.bf16.gmra.mxu0 %v4514
    %v5016 = vpop.f32.mrf.mxu0
    %v5017 = vadd.f32 0.0, %v5016
    %v5018 = vpop.f32.mrf.mxu0
    %v5019 = vadd.f32 0.0, %v5018
    %v5020 = vpop.f32.mrf.mxu0
    %v5021 = vpop.f32.mrf.mxu0
    %5022 = vdwg.mxu0
    %5023 = vmatprep.subr.bf16.mxu0 %v4835
    %5024 = vmatpush1.bf16.msra.mxu0 %v4834
    %5025 = vmatprep.subr.bf16.mxu0 %v4827
    %5026 = vmatpush1.bf16.msra.mxu0 %v4826
    %5027 = vmatprep.subr.bf16.mxu0 %v4819
    %5028 = vmatpush1.bf16.msra.mxu0 %v4818
    %5029 = vmatprep.subr.bf16.mxu0 %v4811
    %5030 = vmatpush1.bf16.msra.mxu0 %v4810
    %5031 = vmatprep.subr.bf16.mxu0 %v4803
    %5032 = vmatpush1.bf16.msra.mxu0 %v4802
    %5033 = vmatprep.subr.bf16.mxu0 %v4795
    %5034 = vmatpush1.bf16.msra.mxu0 %v4794
    %5035 = vmatprep.subr.bf16.mxu0 %v4787
    %5036 = vmatpush1.bf16.msra.mxu0 %v4786
    %5037 = vmatprep.subr.bf16.mxu0 %v4779
    %5038 = vmatpush1.bf16.msra.mxu0 %v4778
    %5039 = vmatprep.subr.bf16.mxu0 0
    %5040 = vmatpush2.bf16.msra.mxu0 0
    %5041 = vmatprep.subr.bf16.mxu0 0
    %5042 = vmatpush2.bf16.msra.mxu0 0
    %5043 = vmatprep.subr.bf16.mxu0 0
    %5044 = vmatpush2.bf16.msra.mxu0 0
    %5045 = vmatprep.subr.bf16.mxu0 0
    %5046 = vmatpush2.bf16.msra.mxu0 0
    %5047 = vmatprep.subr.bf16.mxu0 0
    %5048 = vmatpush2.bf16.msra.mxu0 0
    %5049 = vmatprep.subr.bf16.mxu0 0
    %5050 = vmatpush2.bf16.msra.mxu0 0
    %5051 = vmatprep.subr.bf16.mxu0 0
    %5052 = vmatpush2.bf16.msra.mxu0 0
    %5053 = vmatprep.subr.bf16.mxu0 0
    %5054 = vmatpush2.bf16.msra.mxu0 0
    %5055 = vmatprep.mubr.bf16.mxu0 0
    %5056 = vmatmul.mubr.bf16.gmra.mxu0 %v4514
    %v5057 = vpop.f32.mrf.mxu0
    %v5058 = vadd.f32 0.0, %v5057
    %v5059 = vpop.f32.mrf.mxu0
    %v5060 = vadd.f32 0.0, %v5059
    %v5061 = vpop.f32.mrf.mxu0
    %v5062 = vpop.f32.mrf.mxu0
    %5063 = vdwg.mxu0
    %v5064 = vadd.f32 %v4501, %v4935
    %v5065 = vadd.f32 %v4502, %v4937
    %v5066 = vadd.f32 %v4503, %v4976
    %v5067 = vadd.f32 %v4504, %v4978
    %v5068 = vadd.f32 %v4505, %v5017
    %v5069 = vadd.f32 %v4506, %v5019
    %v5070 = vadd.f32 %v4507, %v5058
    %v5071 = vadd.f32 %v4508, %v5060
    %v5073 = vrot.slane %v585, 7
    %v5075 = vsel %vm589, %v327, %v5073
    %v5076 = vpack.c.bf16 %v5075, %v5075
    %s5077 = scalar_lea.vmem [#allocation8], 4096
    %v5078 = vld [vmem:[%s5077] sm:$0xff]
    %v5079 = vld [vmem:[%s5077 + $0x8] sm:$0xff]
    %v5080 = vld [vmem:[%s5077 + $0x10] sm:$0xff]
    %v5081 = vld [vmem:[%s5077 + $0x18] sm:$0xff]
    %v5082 = vld [vmem:[%s5077 + $0x20] sm:$0xff]
    %v5083 = vld [vmem:[%s5077 + $0x28] sm:$0xff]
    %v5084 = vld [vmem:[%s5077 + $0x30] sm:$0xff]
    %v5085 = vld [vmem:[%s5077 + $0x38] sm:$0xff]
    %v5086 = vld [vmem:[%s5077 + $0x40] sm:$0xff]
    %v5087 = vld [vmem:[%s5077 + $0x48] sm:$0xff]
    %v5088 = vld [vmem:[%s5077 + $0x50] sm:$0xff]
    %v5089 = vld [vmem:[%s5077 + $0x58] sm:$0xff]
    %v5090 = vld [vmem:[%s5077 + $0x60] sm:$0xff]
    %v5091 = vld [vmem:[%s5077 + $0x68] sm:$0xff]
    %v5092 = vld [vmem:[%s5077 + $0x70] sm:$0xff]
    %v5093 = vld [vmem:[%s5077 + $0x78] sm:$0xff]
    %v5094 = vld [vmem:[%s5077 + $0x80] sm:$0xff]
    %v5095 = vld [vmem:[%s5077 + $0x88] sm:$0xff]
    %v5096 = vld [vmem:[%s5077 + $0x90] sm:$0xff]
    %v5097 = vld [vmem:[%s5077 + $0x98] sm:$0xff]
    %v5098 = vld [vmem:[%s5077 + $0xa0] sm:$0xff]
    %v5099 = vld [vmem:[%s5077 + $0xa8] sm:$0xff]
    %v5100 = vld [vmem:[%s5077 + $0xb0] sm:$0xff]
    %v5101 = vld [vmem:[%s5077 + $0xb8] sm:$0xff]
    %v5102 = vld [vmem:[%s5077 + $0xc0] sm:$0xff]
    %v5103 = vld [vmem:[%s5077 + $0xc8] sm:$0xff]
    %v5104 = vld [vmem:[%s5077 + $0xd0] sm:$0xff]
    %v5105 = vld [vmem:[%s5077 + $0xd8] sm:$0xff]
    %v5106 = vld [vmem:[%s5077 + $0xe0] sm:$0xff]
    %v5107 = vld [vmem:[%s5077 + $0xe8] sm:$0xff]
    %v5108 = vld [vmem:[%s5077 + $0xf0] sm:$0xff]
    %v5109 = vld [vmem:[%s5077 + $0xf8] sm:$0xff]
    %v5110 = vld [vmem:[%s5077 + $0x100] sm:$0xff]
    %v5111 = vld [vmem:[%s5077 + $0x108] sm:$0xff]
    %v5112 = vld [vmem:[%s5077 + $0x110] sm:$0xff]
    %v5113 = vld [vmem:[%s5077 + $0x118] sm:$0xff]
    %v5114 = vld [vmem:[%s5077 + $0x120] sm:$0xff]
    %v5115 = vld [vmem:[%s5077 + $0x128] sm:$0xff]
    %v5116 = vld [vmem:[%s5077 + $0x130] sm:$0xff]
    %v5117 = vld [vmem:[%s5077 + $0x138] sm:$0xff]
    %v5118 = vld [vmem:[%s5077 + $0x140] sm:$0xff]
    %v5119 = vld [vmem:[%s5077 + $0x148] sm:$0xff]
    %v5120 = vld [vmem:[%s5077 + $0x150] sm:$0xff]
    %v5121 = vld [vmem:[%s5077 + $0x158] sm:$0xff]
    %v5122 = vld [vmem:[%s5077 + $0x160] sm:$0xff]
    %v5123 = vld [vmem:[%s5077 + $0x168] sm:$0xff]
    %v5124 = vld [vmem:[%s5077 + $0x170] sm:$0xff]
    %v5125 = vld [vmem:[%s5077 + $0x178] sm:$0xff]
    %v5126 = vld [vmem:[%s5077 + $0x180] sm:$0xff]
    %v5127 = vld [vmem:[%s5077 + $0x188] sm:$0xff]
    %v5128 = vld [vmem:[%s5077 + $0x190] sm:$0xff]
    %v5129 = vld [vmem:[%s5077 + $0x198] sm:$0xff]
    %v5130 = vld [vmem:[%s5077 + $0x1a0] sm:$0xff]
    %v5131 = vld [vmem:[%s5077 + $0x1a8] sm:$0xff]
    %v5132 = vld [vmem:[%s5077 + $0x1b0] sm:$0xff]
    %v5133 = vld [vmem:[%s5077 + $0x1b8] sm:$0xff]
    %v5134 = vld [vmem:[%s5077 + $0x1c0] sm:$0xff]
    %v5135 = vld [vmem:[%s5077 + $0x1c8] sm:$0xff]
    %v5136 = vld [vmem:[%s5077 + $0x1d0] sm:$0xff]
    %v5137 = vld [vmem:[%s5077 + $0x1d8] sm:$0xff]
    %v5138 = vld [vmem:[%s5077 + $0x1e0] sm:$0xff]
    %v5139 = vld [vmem:[%s5077 + $0x1e8] sm:$0xff]
    %v5140 = vld [vmem:[%s5077 + $0x1f0] sm:$0xff]
    %v5141 = vld [vmem:[%s5077 + $0x1f8] sm:$0xff]
    %v5206 = vunpack.c.l.b16 %v5078
    %v5207 = vunpack.c.h.b16 %v5078
    %v5208 = vunpack.c.l.b16 %v5079
    %v5209 = vunpack.c.h.b16 %v5079
    %v5210 = vunpack.c.l.b16 %v5080
    %v5211 = vunpack.c.h.b16 %v5080
    %v5212 = vunpack.c.l.b16 %v5081
    %v5213 = vunpack.c.h.b16 %v5081
    %v5214 = vunpack.c.l.b16 %v5082
    %v5215 = vunpack.c.h.b16 %v5082
    %v5216 = vunpack.c.l.b16 %v5083
    %v5217 = vunpack.c.h.b16 %v5083
    %v5218 = vunpack.c.l.b16 %v5084
    %v5219 = vunpack.c.h.b16 %v5084
    %v5220 = vunpack.c.l.b16 %v5085
    %v5221 = vunpack.c.h.b16 %v5085
    %v5222 = vunpack.c.l.b16 %v5086
    %v5223 = vunpack.c.h.b16 %v5086
    %v5224 = vunpack.c.l.b16 %v5087
    %v5225 = vunpack.c.h.b16 %v5087
    %v5226 = vunpack.c.l.b16 %v5088
    %v5227 = vunpack.c.h.b16 %v5088
    %v5228 = vunpack.c.l.b16 %v5089
    %v5229 = vunpack.c.h.b16 %v5089
    %v5230 = vunpack.c.l.b16 %v5090
    %v5231 = vunpack.c.h.b16 %v5090
    %v5232 = vunpack.c.l.b16 %v5091
    %v5233 = vunpack.c.h.b16 %v5091
    %v5234 = vunpack.c.l.b16 %v5092
    %v5235 = vunpack.c.h.b16 %v5092
    %v5236 = vunpack.c.l.b16 %v5093
    %v5237 = vunpack.c.h.b16 %v5093
    %v5238 = vunpack.c.l.b16 %v5094
    %v5239 = vunpack.c.h.b16 %v5094
    %v5240 = vunpack.c.l.b16 %v5095
    %v5241 = vunpack.c.h.b16 %v5095
    %v5242 = vunpack.c.l.b16 %v5096
    %v5243 = vunpack.c.h.b16 %v5096
    %v5244 = vunpack.c.l.b16 %v5097
    %v5245 = vunpack.c.h.b16 %v5097
    %v5246 = vunpack.c.l.b16 %v5098
    %v5247 = vunpack.c.h.b16 %v5098
    %v5248 = vunpack.c.l.b16 %v5099
    %v5249 = vunpack.c.h.b16 %v5099
    %v5250 = vunpack.c.l.b16 %v5100
    %v5251 = vunpack.c.h.b16 %v5100
    %v5252 = vunpack.c.l.b16 %v5101
    %v5253 = vunpack.c.h.b16 %v5101
    %v5254 = vunpack.c.l.b16 %v5102
    %v5255 = vunpack.c.h.b16 %v5102
    %v5256 = vunpack.c.l.b16 %v5103
    %v5257 = vunpack.c.h.b16 %v5103
    %v5258 = vunpack.c.l.b16 %v5104
    %v5259 = vunpack.c.h.b16 %v5104
    %v5260 = vunpack.c.l.b16 %v5105
    %v5261 = vunpack.c.h.b16 %v5105
    %v5262 = vunpack.c.l.b16 %v5106
    %v5263 = vunpack.c.h.b16 %v5106
    %v5264 = vunpack.c.l.b16 %v5107
    %v5265 = vunpack.c.h.b16 %v5107
    %v5266 = vunpack.c.l.b16 %v5108
    %v5267 = vunpack.c.h.b16 %v5108
    %v5268 = vunpack.c.l.b16 %v5109
    %v5269 = vunpack.c.h.b16 %v5109
    %v5270 = vunpack.c.l.b16 %v5110
    %v5271 = vunpack.c.h.b16 %v5110
    %v5272 = vunpack.c.l.b16 %v5111
    %v5273 = vunpack.c.h.b16 %v5111
    %v5274 = vunpack.c.l.b16 %v5112
    %v5275 = vunpack.c.h.b16 %v5112
    %v5276 = vunpack.c.l.b16 %v5113
    %v5277 = vunpack.c.h.b16 %v5113
    %v5278 = vunpack.c.l.b16 %v5114
    %v5279 = vunpack.c.h.b16 %v5114
    %v5280 = vunpack.c.l.b16 %v5115
    %v5281 = vunpack.c.h.b16 %v5115
    %v5282 = vunpack.c.l.b16 %v5116
    %v5283 = vunpack.c.h.b16 %v5116
    %v5284 = vunpack.c.l.b16 %v5117
    %v5285 = vunpack.c.h.b16 %v5117
    %v5286 = vunpack.c.l.b16 %v5118
    %v5287 = vunpack.c.h.b16 %v5118
    %v5288 = vunpack.c.l.b16 %v5119
    %v5289 = vunpack.c.h.b16 %v5119
    %v5290 = vunpack.c.l.b16 %v5120
    %v5291 = vunpack.c.h.b16 %v5120
    %v5292 = vunpack.c.l.b16 %v5121
    %v5293 = vunpack.c.h.b16 %v5121
    %v5294 = vunpack.c.l.b16 %v5122
    %v5295 = vunpack.c.h.b16 %v5122
    %v5296 = vunpack.c.l.b16 %v5123
    %v5297 = vunpack.c.h.b16 %v5123
    %v5298 = vunpack.c.l.b16 %v5124
    %v5299 = vunpack.c.h.b16 %v5124
    %v5300 = vunpack.c.l.b16 %v5125
    %v5301 = vunpack.c.h.b16 %v5125
    %v5302 = vunpack.c.l.b16 %v5126
    %v5303 = vunpack.c.h.b16 %v5126
    %v5304 = vunpack.c.l.b16 %v5127
    %v5305 = vunpack.c.h.b16 %v5127
    %v5306 = vunpack.c.l.b16 %v5128
    %v5307 = vunpack.c.h.b16 %v5128
    %v5308 = vunpack.c.l.b16 %v5129
    %v5309 = vunpack.c.h.b16 %v5129
    %v5310 = vunpack.c.l.b16 %v5130
    %v5311 = vunpack.c.h.b16 %v5130
    %v5312 = vunpack.c.l.b16 %v5131
    %v5313 = vunpack.c.h.b16 %v5131
    %v5314 = vunpack.c.l.b16 %v5132
    %v5315 = vunpack.c.h.b16 %v5132
    %v5316 = vunpack.c.l.b16 %v5133
    %v5317 = vunpack.c.h.b16 %v5133
    %v5318 = vunpack.c.l.b16 %v5134
    %v5319 = vunpack.c.h.b16 %v5134
    %v5320 = vunpack.c.l.b16 %v5135
    %v5321 = vunpack.c.h.b16 %v5135
    %v5322 = vunpack.c.l.b16 %v5136
    %v5323 = vunpack.c.h.b16 %v5136
    %v5324 = vunpack.c.l.b16 %v5137
    %v5325 = vunpack.c.h.b16 %v5137
    %v5326 = vunpack.c.l.b16 %v5138
    %v5327 = vunpack.c.h.b16 %v5138
    %v5328 = vunpack.c.l.b16 %v5139
    %v5329 = vunpack.c.h.b16 %v5139
    %v5330 = vunpack.c.l.b16 %v5140
    %v5331 = vunpack.c.h.b16 %v5140
    %v5332 = vunpack.c.l.b16 %v5141
    %v5333 = vunpack.c.h.b16 %v5141
    %v5334 = vpack.c.b16 %v5214, %v5206
    %v5335 = vpack.c.b16 %v5215, %v5207
    %v5336 = vpack.c.b16 %v5216, %v5208
    %v5337 = vpack.c.b16 %v5217, %v5209
    %v5338 = vpack.c.b16 %v5218, %v5210
    %v5339 = vpack.c.b16 %v5219, %v5211
    %v5340 = vpack.c.b16 %v5220, %v5212
    %v5341 = vpack.c.b16 %v5221, %v5213
    %v5342 = vpack.c.b16 %v5230, %v5222
    %v5343 = vpack.c.b16 %v5231, %v5223
    %v5344 = vpack.c.b16 %v5232, %v5224
    %v5345 = vpack.c.b16 %v5233, %v5225
    %v5346 = vpack.c.b16 %v5234, %v5226
    %v5347 = vpack.c.b16 %v5235, %v5227
    %v5348 = vpack.c.b16 %v5236, %v5228
    %v5349 = vpack.c.b16 %v5237, %v5229
    %v5350 = vpack.c.b16 %v5246, %v5238
    %v5351 = vpack.c.b16 %v5247, %v5239
    %v5352 = vpack.c.b16 %v5248, %v5240
    %v5353 = vpack.c.b16 %v5249, %v5241
    %v5354 = vpack.c.b16 %v5250, %v5242
    %v5355 = vpack.c.b16 %v5251, %v5243
    %v5356 = vpack.c.b16 %v5252, %v5244
    %v5357 = vpack.c.b16 %v5253, %v5245
    %v5358 = vpack.c.b16 %v5262, %v5254
    %v5359 = vpack.c.b16 %v5263, %v5255
    %v5360 = vpack.c.b16 %v5264, %v5256
    %v5361 = vpack.c.b16 %v5265, %v5257
    %v5362 = vpack.c.b16 %v5266, %v5258
    %v5363 = vpack.c.b16 %v5267, %v5259
    %v5364 = vpack.c.b16 %v5268, %v5260
    %v5365 = vpack.c.b16 %v5269, %v5261
    %v5366 = vpack.c.b16 %v5278, %v5270
    %v5367 = vpack.c.b16 %v5279, %v5271
    %v5368 = vpack.c.b16 %v5280, %v5272
    %v5369 = vpack.c.b16 %v5281, %v5273
    %v5370 = vpack.c.b16 %v5282, %v5274
    %v5371 = vpack.c.b16 %v5283, %v5275
    %v5372 = vpack.c.b16 %v5284, %v5276
    %v5373 = vpack.c.b16 %v5285, %v5277
    %v5374 = vpack.c.b16 %v5294, %v5286
    %v5375 = vpack.c.b16 %v5295, %v5287
    %v5376 = vpack.c.b16 %v5296, %v5288
    %v5377 = vpack.c.b16 %v5297, %v5289
    %v5378 = vpack.c.b16 %v5298, %v5290
    %v5379 = vpack.c.b16 %v5299, %v5291
    %v5380 = vpack.c.b16 %v5300, %v5292
    %v5381 = vpack.c.b16 %v5301, %v5293
    %v5382 = vpack.c.b16 %v5310, %v5302
    %v5383 = vpack.c.b16 %v5311, %v5303
    %v5384 = vpack.c.b16 %v5312, %v5304
    %v5385 = vpack.c.b16 %v5313, %v5305
    %v5386 = vpack.c.b16 %v5314, %v5306
    %v5387 = vpack.c.b16 %v5315, %v5307
    %v5388 = vpack.c.b16 %v5316, %v5308
    %v5389 = vpack.c.b16 %v5317, %v5309
    %v5390 = vpack.c.b16 %v5326, %v5318
    %v5391 = vpack.c.b16 %v5327, %v5319
    %v5392 = vpack.c.b16 %v5328, %v5320
    %v5393 = vpack.c.b16 %v5329, %v5321
    %v5394 = vpack.c.b16 %v5330, %v5322
    %v5395 = vpack.c.b16 %v5331, %v5323
    %v5396 = vpack.c.b16 %v5332, %v5324
    %v5397 = vpack.c.b16 %v5333, %v5325
    %5462 = vmatprep.subr.bf16.mxu0 %v5391
    %5463 = vmatpush1.bf16.msra.mxu0 %v5390
    %5464 = vmatprep.subr.bf16.mxu0 %v5383
    %5465 = vmatpush1.bf16.msra.mxu0 %v5382
    %5466 = vmatprep.subr.bf16.mxu0 %v5375
    %5467 = vmatpush1.bf16.msra.mxu0 %v5374
    %5468 = vmatprep.subr.bf16.mxu0 %v5367
    %5469 = vmatpush1.bf16.msra.mxu0 %v5366
    %5470 = vmatprep.subr.bf16.mxu0 %v5359
    %5471 = vmatpush1.bf16.msra.mxu0 %v5358
    %5472 = vmatprep.subr.bf16.mxu0 %v5351
    %5473 = vmatpush1.bf16.msra.mxu0 %v5350
    %5474 = vmatprep.subr.bf16.mxu0 %v5343
    %5475 = vmatpush1.bf16.msra.mxu0 %v5342
    %5476 = vmatprep.subr.bf16.mxu0 %v5335
    %5477 = vmatpush1.bf16.msra.mxu0 %v5334
    %5478 = vmatprep.subr.bf16.mxu0 0
    %5479 = vmatpush2.bf16.msra.mxu0 0
    %5480 = vmatprep.subr.bf16.mxu0 0
    %5481 = vmatpush2.bf16.msra.mxu0 0
    %5482 = vmatprep.subr.bf16.mxu0 0
    %5483 = vmatpush2.bf16.msra.mxu0 0
    %5484 = vmatprep.subr.bf16.mxu0 0
    %5485 = vmatpush2.bf16.msra.mxu0 0
    %5486 = vmatprep.subr.bf16.mxu0 0
    %5487 = vmatpush2.bf16.msra.mxu0 0
    %5488 = vmatprep.subr.bf16.mxu0 0
    %5489 = vmatpush2.bf16.msra.mxu0 0
    %5490 = vmatprep.subr.bf16.mxu0 0
    %5491 = vmatpush2.bf16.msra.mxu0 0
    %5492 = vmatprep.subr.bf16.mxu0 0
    %5493 = vmatpush2.bf16.msra.mxu0 0
    %5494 = vmatprep.mubr.bf16.mxu0 0
    %5495 = vmatmul.mubr.bf16.gmra.mxu0 %v5076
    %v5496 = vpop.f32.mrf.mxu0
    %v5497 = vadd.f32 0.0, %v5496
    %v5498 = vpop.f32.mrf.mxu0
    %v5499 = vadd.f32 0.0, %v5498
    %v5500 = vpop.f32.mrf.mxu0
    %v5501 = vpop.f32.mrf.mxu0
    %5502 = vdwg.mxu0
    %5503 = vmatprep.subr.bf16.mxu0 %v5393
    %5504 = vmatpush1.bf16.msra.mxu0 %v5392
    %5505 = vmatprep.subr.bf16.mxu0 %v5385
    %5506 = vmatpush1.bf16.msra.mxu0 %v5384
    %5507 = vmatprep.subr.bf16.mxu0 %v5377
    %5508 = vmatpush1.bf16.msra.mxu0 %v5376
    %5509 = vmatprep.subr.bf16.mxu0 %v5369
    %5510 = vmatpush1.bf16.msra.mxu0 %v5368
    %5511 = vmatprep.subr.bf16.mxu0 %v5361
    %5512 = vmatpush1.bf16.msra.mxu0 %v5360
    %5513 = vmatprep.subr.bf16.mxu0 %v5353
    %5514 = vmatpush1.bf16.msra.mxu0 %v5352
    %5515 = vmatprep.subr.bf16.mxu0 %v5345
    %5516 = vmatpush1.bf16.msra.mxu0 %v5344
    %5517 = vmatprep.subr.bf16.mxu0 %v5337
    %5518 = vmatpush1.bf16.msra.mxu0 %v5336
    %5519 = vmatprep.subr.bf16.mxu0 0
    %5520 = vmatpush2.bf16.msra.mxu0 0
    %5521 = vmatprep.subr.bf16.mxu0 0
    %5522 = vmatpush2.bf16.msra.mxu0 0
    %5523 = vmatprep.subr.bf16.mxu0 0
    %5524 = vmatpush2.bf16.msra.mxu0 0
    %5525 = vmatprep.subr.bf16.mxu0 0
    %5526 = vmatpush2.bf16.msra.mxu0 0
    %5527 = vmatprep.subr.bf16.mxu0 0
    %5528 = vmatpush2.bf16.msra.mxu0 0
    %5529 = vmatprep.subr.bf16.mxu0 0
    %5530 = vmatpush2.bf16.msra.mxu0 0
    %5531 = vmatprep.subr.bf16.mxu0 0
    %5532 = vmatpush2.bf16.msra.mxu0 0
    %5533 = vmatprep.subr.bf16.mxu0 0
    %5534 = vmatpush2.bf16.msra.mxu0 0
    %5535 = vmatprep.mubr.bf16.mxu0 0
    %5536 = vmatmul.mubr.bf16.gmra.mxu0 %v5076
    %v5537 = vpop.f32.mrf.mxu0
    %v5538 = vadd.f32 0.0, %v5537
    %v5539 = vpop.f32.mrf.mxu0
    %v5540 = vadd.f32 0.0, %v5539
    %v5541 = vpop.f32.mrf.mxu0
    %v5542 = vpop.f32.mrf.mxu0
    %5543 = vdwg.mxu0
    %5544 = vmatprep.subr.bf16.mxu0 %v5395
    %5545 = vmatpush1.bf16.msra.mxu0 %v5394
    %5546 = vmatprep.subr.bf16.mxu0 %v5387
    %5547 = vmatpush1.bf16.msra.mxu0 %v5386
    %5548 = vmatprep.subr.bf16.mxu0 %v5379
    %5549 = vmatpush1.bf16.msra.mxu0 %v5378
    %5550 = vmatprep.subr.bf16.mxu0 %v5371
    %5551 = vmatpush1.bf16.msra.mxu0 %v5370
    %5552 = vmatprep.subr.bf16.mxu0 %v5363
    %5553 = vmatpush1.bf16.msra.mxu0 %v5362
    %5554 = vmatprep.subr.bf16.mxu0 %v5355
    %5555 = vmatpush1.bf16.msra.mxu0 %v5354
    %5556 = vmatprep.subr.bf16.mxu0 %v5347
    %5557 = vmatpush1.bf16.msra.mxu0 %v5346
    %5558 = vmatprep.subr.bf16.mxu0 %v5339
    %5559 = vmatpush1.bf16.msra.mxu0 %v5338
    %5560 = vmatprep.subr.bf16.mxu0 0
    %5561 = vmatpush2.bf16.msra.mxu0 0
    %5562 = vmatprep.subr.bf16.mxu0 0
    %5563 = vmatpush2.bf16.msra.mxu0 0
    %5564 = vmatprep.subr.bf16.mxu0 0
    %5565 = vmatpush2.bf16.msra.mxu0 0
    %5566 = vmatprep.subr.bf16.mxu0 0
    %5567 = vmatpush2.bf16.msra.mxu0 0
    %5568 = vmatprep.subr.bf16.mxu0 0
    %5569 = vmatpush2.bf16.msra.mxu0 0
    %5570 = vmatprep.subr.bf16.mxu0 0
    %5571 = vmatpush2.bf16.msra.mxu0 0
    %5572 = vmatprep.subr.bf16.mxu0 0
    %5573 = vmatpush2.bf16.msra.mxu0 0
    %5574 = vmatprep.subr.bf16.mxu0 0
    %5575 = vmatpush2.bf16.msra.mxu0 0
    %5576 = vmatprep.mubr.bf16.mxu0 0
    %5577 = vmatmul.mubr.bf16.gmra.mxu0 %v5076
    %v5578 = vpop.f32.mrf.mxu0
    %v5579 = vadd.f32 0.0, %v5578
    %v5580 = vpop.f32.mrf.mxu0
    %v5581 = vadd.f32 0.0, %v5580
    %v5582 = vpop.f32.mrf.mxu0
    %v5583 = vpop.f32.mrf.mxu0
    %5584 = vdwg.mxu0
    %5585 = vmatprep.subr.bf16.mxu0 %v5397
    %5586 = vmatpush1.bf16.msra.mxu0 %v5396
    %5587 = vmatprep.subr.bf16.mxu0 %v5389
    %5588 = vmatpush1.bf16.msra.mxu0 %v5388
    %5589 = vmatprep.subr.bf16.mxu0 %v5381
    %5590 = vmatpush1.bf16.msra.mxu0 %v5380
    %5591 = vmatprep.subr.bf16.mxu0 %v5373
    %5592 = vmatpush1.bf16.msra.mxu0 %v5372
    %5593 = vmatprep.subr.bf16.mxu0 %v5365
    %5594 = vmatpush1.bf16.msra.mxu0 %v5364
    %5595 = vmatprep.subr.bf16.mxu0 %v5357
    %5596 = vmatpush1.bf16.msra.mxu0 %v5356
    %5597 = vmatprep.subr.bf16.mxu0 %v5349
    %5598 = vmatpush1.bf16.msra.mxu0 %v5348
    %5599 = vmatprep.subr.bf16.mxu0 %v5341
    %5600 = vmatpush1.bf16.msra.mxu0 %v5340
    %5601 = vmatprep.subr.bf16.mxu0 0
    %5602 = vmatpush2.bf16.msra.mxu0 0
    %5603 = vmatprep.subr.bf16.mxu0 0
    %5604 = vmatpush2.bf16.msra.mxu0 0
    %5605 = vmatprep.subr.bf16.mxu0 0
    %5606 = vmatpush2.bf16.msra.mxu0 0
    %5607 = vmatprep.subr.bf16.mxu0 0
    %5608 = vmatpush2.bf16.msra.mxu0 0
    %5609 = vmatprep.subr.bf16.mxu0 0
    %5610 = vmatpush2.bf16.msra.mxu0 0
    %5611 = vmatprep.subr.bf16.mxu0 0
    %5612 = vmatpush2.bf16.msra.mxu0 0
    %5613 = vmatprep.subr.bf16.mxu0 0
    %5614 = vmatpush2.bf16.msra.mxu0 0
    %5615 = vmatprep.subr.bf16.mxu0 0
    %5616 = vmatpush2.bf16.msra.mxu0 0
    %5617 = vmatprep.mubr.bf16.mxu0 0
    %5618 = vmatmul.mubr.bf16.gmra.mxu0 %v5076
    %v5619 = vpop.f32.mrf.mxu0
    %v5620 = vadd.f32 0.0, %v5619
    %v5621 = vpop.f32.mrf.mxu0
    %v5622 = vadd.f32 0.0, %v5621
    %v5623 = vpop.f32.mrf.mxu0
    %v5624 = vpop.f32.mrf.mxu0
    %5625 = vdwg.mxu0
    %v5626 = vadd.f32 %v5064, %v5497
    %v5627 = vadd.f32 %v5065, %v5499
    %v5628 = vadd.f32 %v5066, %v5538
    %v5629 = vadd.f32 %v5067, %v5540
    %v5630 = vadd.f32 %v5068, %v5579
    %v5631 = vadd.f32 %v5069, %v5581
    %v5632 = vadd.f32 %v5070, %v5620
    %v5633 = vadd.f32 %v5071, %v5622
    %v5635 = vrot.slane %v327, 1
    %v5637 = vsel %vm589, %v5635, %v585
    %v5638 = vpack.c.bf16 %v5637, %v5637
    %s5639 = scalar_lea.vmem [#allocation8], 4608
    %v5640 = vld [vmem:[%s5639] sm:$0xff]
    %v5641 = vld [vmem:[%s5639 + $0x8] sm:$0xff]
    %v5642 = vld [vmem:[%s5639 + $0x10] sm:$0xff]
    %v5643 = vld [vmem:[%s5639 + $0x18] sm:$0xff]
    %v5644 = vld [vmem:[%s5639 + $0x20] sm:$0xff]
    %v5645 = vld [vmem:[%s5639 + $0x28] sm:$0xff]
    %v5646 = vld [vmem:[%s5639 + $0x30] sm:$0xff]
    %v5647 = vld [vmem:[%s5639 + $0x38] sm:$0xff]
    %v5648 = vld [vmem:[%s5639 + $0x40] sm:$0xff]
    %v5649 = vld [vmem:[%s5639 + $0x48] sm:$0xff]
    %v5650 = vld [vmem:[%s5639 + $0x50] sm:$0xff]
    %v5651 = vld [vmem:[%s5639 + $0x58] sm:$0xff]
    %v5652 = vld [vmem:[%s5639 + $0x60] sm:$0xff]
    %v5653 = vld [vmem:[%s5639 + $0x68] sm:$0xff]
    %v5654 = vld [vmem:[%s5639 + $0x70] sm:$0xff]
    %v5655 = vld [vmem:[%s5639 + $0x78] sm:$0xff]
    %v5656 = vld [vmem:[%s5639 + $0x80] sm:$0xff]
    %v5657 = vld [vmem:[%s5639 + $0x88] sm:$0xff]
    %v5658 = vld [vmem:[%s5639 + $0x90] sm:$0xff]
    %v5659 = vld [vmem:[%s5639 + $0x98] sm:$0xff]
    %v5660 = vld [vmem:[%s5639 + $0xa0] sm:$0xff]
    %v5661 = vld [vmem:[%s5639 + $0xa8] sm:$0xff]
    %v5662 = vld [vmem:[%s5639 + $0xb0] sm:$0xff]
    %v5663 = vld [vmem:[%s5639 + $0xb8] sm:$0xff]
    %v5664 = vld [vmem:[%s5639 + $0xc0] sm:$0xff]
    %v5665 = vld [vmem:[%s5639 + $0xc8] sm:$0xff]
    %v5666 = vld [vmem:[%s5639 + $0xd0] sm:$0xff]
    %v5667 = vld [vmem:[%s5639 + $0xd8] sm:$0xff]
    %v5668 = vld [vmem:[%s5639 + $0xe0] sm:$0xff]
    %v5669 = vld [vmem:[%s5639 + $0xe8] sm:$0xff]
    %v5670 = vld [vmem:[%s5639 + $0xf0] sm:$0xff]
    %v5671 = vld [vmem:[%s5639 + $0xf8] sm:$0xff]
    %v5672 = vld [vmem:[%s5639 + $0x100] sm:$0xff]
    %v5673 = vld [vmem:[%s5639 + $0x108] sm:$0xff]
    %v5674 = vld [vmem:[%s5639 + $0x110] sm:$0xff]
    %v5675 = vld [vmem:[%s5639 + $0x118] sm:$0xff]
    %v5676 = vld [vmem:[%s5639 + $0x120] sm:$0xff]
    %v5677 = vld [vmem:[%s5639 + $0x128] sm:$0xff]
    %v5678 = vld [vmem:[%s5639 + $0x130] sm:$0xff]
    %v5679 = vld [vmem:[%s5639 + $0x138] sm:$0xff]
    %v5680 = vld [vmem:[%s5639 + $0x140] sm:$0xff]
    %v5681 = vld [vmem:[%s5639 + $0x148] sm:$0xff]
    %v5682 = vld [vmem:[%s5639 + $0x150] sm:$0xff]
    %v5683 = vld [vmem:[%s5639 + $0x158] sm:$0xff]
    %v5684 = vld [vmem:[%s5639 + $0x160] sm:$0xff]
    %v5685 = vld [vmem:[%s5639 + $0x168] sm:$0xff]
    %v5686 = vld [vmem:[%s5639 + $0x170] sm:$0xff]
    %v5687 = vld [vmem:[%s5639 + $0x178] sm:$0xff]
    %v5688 = vld [vmem:[%s5639 + $0x180] sm:$0xff]
    %v5689 = vld [vmem:[%s5639 + $0x188] sm:$0xff]
    %v5690 = vld [vmem:[%s5639 + $0x190] sm:$0xff]
    %v5691 = vld [vmem:[%s5639 + $0x198] sm:$0xff]
    %v5692 = vld [vmem:[%s5639 + $0x1a0] sm:$0xff]
    %v5693 = vld [vmem:[%s5639 + $0x1a8] sm:$0xff]
    %v5694 = vld [vmem:[%s5639 + $0x1b0] sm:$0xff]
    %v5695 = vld [vmem:[%s5639 + $0x1b8] sm:$0xff]
    %v5696 = vld [vmem:[%s5639 + $0x1c0] sm:$0xff]
    %v5697 = vld [vmem:[%s5639 + $0x1c8] sm:$0xff]
    %v5698 = vld [vmem:[%s5639 + $0x1d0] sm:$0xff]
    %v5699 = vld [vmem:[%s5639 + $0x1d8] sm:$0xff]
    %v5700 = vld [vmem:[%s5639 + $0x1e0] sm:$0xff]
    %v5701 = vld [vmem:[%s5639 + $0x1e8] sm:$0xff]
    %v5702 = vld [vmem:[%s5639 + $0x1f0] sm:$0xff]
    %v5703 = vld [vmem:[%s5639 + $0x1f8] sm:$0xff]
    %v5768 = vunpack.c.l.b16 %v5640
    %v5769 = vunpack.c.h.b16 %v5640
    %v5770 = vunpack.c.l.b16 %v5641
    %v5771 = vunpack.c.h.b16 %v5641
    %v5772 = vunpack.c.l.b16 %v5642
    %v5773 = vunpack.c.h.b16 %v5642
    %v5774 = vunpack.c.l.b16 %v5643
    %v5775 = vunpack.c.h.b16 %v5643
    %v5776 = vunpack.c.l.b16 %v5644
    %v5777 = vunpack.c.h.b16 %v5644
    %v5778 = vunpack.c.l.b16 %v5645
    %v5779 = vunpack.c.h.b16 %v5645
    %v5780 = vunpack.c.l.b16 %v5646
    %v5781 = vunpack.c.h.b16 %v5646
    %v5782 = vunpack.c.l.b16 %v5647
    %v5783 = vunpack.c.h.b16 %v5647
    %v5784 = vunpack.c.l.b16 %v5648
    %v5785 = vunpack.c.h.b16 %v5648
    %v5786 = vunpack.c.l.b16 %v5649
    %v5787 = vunpack.c.h.b16 %v5649
    %v5788 = vunpack.c.l.b16 %v5650
    %v5789 = vunpack.c.h.b16 %v5650
    %v5790 = vunpack.c.l.b16 %v5651
    %v5791 = vunpack.c.h.b16 %v5651
    %v5792 = vunpack.c.l.b16 %v5652
    %v5793 = vunpack.c.h.b16 %v5652
    %v5794 = vunpack.c.l.b16 %v5653
    %v5795 = vunpack.c.h.b16 %v5653
    %v5796 = vunpack.c.l.b16 %v5654
    %v5797 = vunpack.c.h.b16 %v5654
    %v5798 = vunpack.c.l.b16 %v5655
    %v5799 = vunpack.c.h.b16 %v5655
    %v5800 = vunpack.c.l.b16 %v5656
    %v5801 = vunpack.c.h.b16 %v5656
    %v5802 = vunpack.c.l.b16 %v5657
    %v5803 = vunpack.c.h.b16 %v5657
    %v5804 = vunpack.c.l.b16 %v5658
    %v5805 = vunpack.c.h.b16 %v5658
    %v5806 = vunpack.c.l.b16 %v5659
    %v5807 = vunpack.c.h.b16 %v5659
    %v5808 = vunpack.c.l.b16 %v5660
    %v5809 = vunpack.c.h.b16 %v5660
    %v5810 = vunpack.c.l.b16 %v5661
    %v5811 = vunpack.c.h.b16 %v5661
    %v5812 = vunpack.c.l.b16 %v5662
    %v5813 = vunpack.c.h.b16 %v5662
    %v5814 = vunpack.c.l.b16 %v5663
    %v5815 = vunpack.c.h.b16 %v5663
    %v5816 = vunpack.c.l.b16 %v5664
    %v5817 = vunpack.c.h.b16 %v5664
    %v5818 = vunpack.c.l.b16 %v5665
    %v5819 = vunpack.c.h.b16 %v5665
    %v5820 = vunpack.c.l.b16 %v5666
    %v5821 = vunpack.c.h.b16 %v5666
    %v5822 = vunpack.c.l.b16 %v5667
    %v5823 = vunpack.c.h.b16 %v5667
    %v5824 = vunpack.c.l.b16 %v5668
    %v5825 = vunpack.c.h.b16 %v5668
    %v5826 = vunpack.c.l.b16 %v5669
    %v5827 = vunpack.c.h.b16 %v5669
    %v5828 = vunpack.c.l.b16 %v5670
    %v5829 = vunpack.c.h.b16 %v5670
    %v5830 = vunpack.c.l.b16 %v5671
    %v5831 = vunpack.c.h.b16 %v5671
    %v5832 = vunpack.c.l.b16 %v5672
    %v5833 = vunpack.c.h.b16 %v5672
    %v5834 = vunpack.c.l.b16 %v5673
    %v5835 = vunpack.c.h.b16 %v5673
    %v5836 = vunpack.c.l.b16 %v5674
    %v5837 = vunpack.c.h.b16 %v5674
    %v5838 = vunpack.c.l.b16 %v5675
    %v5839 = vunpack.c.h.b16 %v5675
    %v5840 = vunpack.c.l.b16 %v5676
    %v5841 = vunpack.c.h.b16 %v5676
    %v5842 = vunpack.c.l.b16 %v5677
    %v5843 = vunpack.c.h.b16 %v5677
    %v5844 = vunpack.c.l.b16 %v5678
    %v5845 = vunpack.c.h.b16 %v5678
    %v5846 = vunpack.c.l.b16 %v5679
    %v5847 = vunpack.c.h.b16 %v5679
    %v5848 = vunpack.c.l.b16 %v5680
    %v5849 = vunpack.c.h.b16 %v5680
    %v5850 = vunpack.c.l.b16 %v5681
    %v5851 = vunpack.c.h.b16 %v5681
    %v5852 = vunpack.c.l.b16 %v5682
    %v5853 = vunpack.c.h.b16 %v5682
    %v5854 = vunpack.c.l.b16 %v5683
    %v5855 = vunpack.c.h.b16 %v5683
    %v5856 = vunpack.c.l.b16 %v5684
    %v5857 = vunpack.c.h.b16 %v5684
    %v5858 = vunpack.c.l.b16 %v5685
    %v5859 = vunpack.c.h.b16 %v5685
    %v5860 = vunpack.c.l.b16 %v5686
    %v5861 = vunpack.c.h.b16 %v5686
    %v5862 = vunpack.c.l.b16 %v5687
    %v5863 = vunpack.c.h.b16 %v5687
    %v5864 = vunpack.c.l.b16 %v5688
    %v5865 = vunpack.c.h.b16 %v5688
    %v5866 = vunpack.c.l.b16 %v5689
    %v5867 = vunpack.c.h.b16 %v5689
    %v5868 = vunpack.c.l.b16 %v5690
    %v5869 = vunpack.c.h.b16 %v5690
    %v5870 = vunpack.c.l.b16 %v5691
    %v5871 = vunpack.c.h.b16 %v5691
    %v5872 = vunpack.c.l.b16 %v5692
    %v5873 = vunpack.c.h.b16 %v5692
    %v5874 = vunpack.c.l.b16 %v5693
    %v5875 = vunpack.c.h.b16 %v5693
    %v5876 = vunpack.c.l.b16 %v5694
    %v5877 = vunpack.c.h.b16 %v5694
    %v5878 = vunpack.c.l.b16 %v5695
    %v5879 = vunpack.c.h.b16 %v5695
    %v5880 = vunpack.c.l.b16 %v5696
    %v5881 = vunpack.c.h.b16 %v5696
    %v5882 = vunpack.c.l.b16 %v5697
    %v5883 = vunpack.c.h.b16 %v5697
    %v5884 = vunpack.c.l.b16 %v5698
    %v5885 = vunpack.c.h.b16 %v5698
    %v5886 = vunpack.c.l.b16 %v5699
    %v5887 = vunpack.c.h.b16 %v5699
    %v5888 = vunpack.c.l.b16 %v5700
    %v5889 = vunpack.c.h.b16 %v5700
    %v5890 = vunpack.c.l.b16 %v5701
    %v5891 = vunpack.c.h.b16 %v5701
    %v5892 = vunpack.c.l.b16 %v5702
    %v5893 = vunpack.c.h.b16 %v5702
    %v5894 = vunpack.c.l.b16 %v5703
    %v5895 = vunpack.c.h.b16 %v5703
    %v5896 = vpack.c.b16 %v5776, %v5768
    %v5897 = vpack.c.b16 %v5777, %v5769
    %v5898 = vpack.c.b16 %v5778, %v5770
    %v5899 = vpack.c.b16 %v5779, %v5771
    %v5900 = vpack.c.b16 %v5780, %v5772
    %v5901 = vpack.c.b16 %v5781, %v5773
    %v5902 = vpack.c.b16 %v5782, %v5774
    %v5903 = vpack.c.b16 %v5783, %v5775
    %v5904 = vpack.c.b16 %v5792, %v5784
    %v5905 = vpack.c.b16 %v5793, %v5785
    %v5906 = vpack.c.b16 %v5794, %v5786
    %v5907 = vpack.c.b16 %v5795, %v5787
    %v5908 = vpack.c.b16 %v5796, %v5788
    %v5909 = vpack.c.b16 %v5797, %v5789
    %v5910 = vpack.c.b16 %v5798, %v5790
    %v5911 = vpack.c.b16 %v5799, %v5791
    %v5912 = vpack.c.b16 %v5808, %v5800
    %v5913 = vpack.c.b16 %v5809, %v5801
    %v5914 = vpack.c.b16 %v5810, %v5802
    %v5915 = vpack.c.b16 %v5811, %v5803
    %v5916 = vpack.c.b16 %v5812, %v5804
    %v5917 = vpack.c.b16 %v5813, %v5805
    %v5918 = vpack.c.b16 %v5814, %v5806
    %v5919 = vpack.c.b16 %v5815, %v5807
    %v5920 = vpack.c.b16 %v5824, %v5816
    %v5921 = vpack.c.b16 %v5825, %v5817
    %v5922 = vpack.c.b16 %v5826, %v5818
    %v5923 = vpack.c.b16 %v5827, %v5819
    %v5924 = vpack.c.b16 %v5828, %v5820
    %v5925 = vpack.c.b16 %v5829, %v5821
    %v5926 = vpack.c.b16 %v5830, %v5822
    %v5927 = vpack.c.b16 %v5831, %v5823
    %v5928 = vpack.c.b16 %v5840, %v5832
    %v5929 = vpack.c.b16 %v5841, %v5833
    %v5930 = vpack.c.b16 %v5842, %v5834
    %v5931 = vpack.c.b16 %v5843, %v5835
    %v5932 = vpack.c.b16 %v5844, %v5836
    %v5933 = vpack.c.b16 %v5845, %v5837
    %v5934 = vpack.c.b16 %v5846, %v5838
    %v5935 = vpack.c.b16 %v5847, %v5839
    %v5936 = vpack.c.b16 %v5856, %v5848
    %v5937 = vpack.c.b16 %v5857, %v5849
    %v5938 = vpack.c.b16 %v5858, %v5850
    %v5939 = vpack.c.b16 %v5859, %v5851
    %v5940 = vpack.c.b16 %v5860, %v5852
    %v5941 = vpack.c.b16 %v5861, %v5853
    %v5942 = vpack.c.b16 %v5862, %v5854
    %v5943 = vpack.c.b16 %v5863, %v5855
    %v5944 = vpack.c.b16 %v5872, %v5864
    %v5945 = vpack.c.b16 %v5873, %v5865
    %v5946 = vpack.c.b16 %v5874, %v5866
    %v5947 = vpack.c.b16 %v5875, %v5867
    %v5948 = vpack.c.b16 %v5876, %v5868
    %v5949 = vpack.c.b16 %v5877, %v5869
    %v5950 = vpack.c.b16 %v5878, %v5870
    %v5951 = vpack.c.b16 %v5879, %v5871
    %v5952 = vpack.c.b16 %v5888, %v5880
    %v5953 = vpack.c.b16 %v5889, %v5881
    %v5954 = vpack.c.b16 %v5890, %v5882
    %v5955 = vpack.c.b16 %v5891, %v5883
    %v5956 = vpack.c.b16 %v5892, %v5884
    %v5957 = vpack.c.b16 %v5893, %v5885
    %v5958 = vpack.c.b16 %v5894, %v5886
    %v5959 = vpack.c.b16 %v5895, %v5887
    %6024 = vmatprep.subr.bf16.mxu0 %v5953
    %6025 = vmatpush1.bf16.msra.mxu0 %v5952
    %6026 = vmatprep.subr.bf16.mxu0 %v5945
    %6027 = vmatpush1.bf16.msra.mxu0 %v5944
    %6028 = vmatprep.subr.bf16.mxu0 %v5937
    %6029 = vmatpush1.bf16.msra.mxu0 %v5936
    %6030 = vmatprep.subr.bf16.mxu0 %v5929
    %6031 = vmatpush1.bf16.msra.mxu0 %v5928
    %6032 = vmatprep.subr.bf16.mxu0 %v5921
    %6033 = vmatpush1.bf16.msra.mxu0 %v5920
    %6034 = vmatprep.subr.bf16.mxu0 %v5913
    %6035 = vmatpush1.bf16.msra.mxu0 %v5912
    %6036 = vmatprep.subr.bf16.mxu0 %v5905
    %6037 = vmatpush1.bf16.msra.mxu0 %v5904
    %6038 = vmatprep.subr.bf16.mxu0 %v5897
    %6039 = vmatpush1.bf16.msra.mxu0 %v5896
    %6040 = vmatprep.subr.bf16.mxu0 0
    %6041 = vmatpush2.bf16.msra.mxu0 0
    %6042 = vmatprep.subr.bf16.mxu0 0
    %6043 = vmatpush2.bf16.msra.mxu0 0
    %6044 = vmatprep.subr.bf16.mxu0 0
    %6045 = vmatpush2.bf16.msra.mxu0 0
    %6046 = vmatprep.subr.bf16.mxu0 0
    %6047 = vmatpush2.bf16.msra.mxu0 0
    %6048 = vmatprep.subr.bf16.mxu0 0
    %6049 = vmatpush2.bf16.msra.mxu0 0
    %6050 = vmatprep.subr.bf16.mxu0 0
    %6051 = vmatpush2.bf16.msra.mxu0 0
    %6052 = vmatprep.subr.bf16.mxu0 0
    %6053 = vmatpush2.bf16.msra.mxu0 0
    %6054 = vmatprep.subr.bf16.mxu0 0
    %6055 = vmatpush2.bf16.msra.mxu0 0
    %6056 = vmatprep.mubr.bf16.mxu0 0
    %6057 = vmatmul.mubr.bf16.gmra.mxu0 %v5638
    %v6058 = vpop.f32.mrf.mxu0
    %v6059 = vadd.f32 0.0, %v6058
    %v6060 = vpop.f32.mrf.mxu0
    %v6061 = vadd.f32 0.0, %v6060
    %v6062 = vpop.f32.mrf.mxu0
    %v6063 = vpop.f32.mrf.mxu0
    %6064 = vdwg.mxu0
    %6065 = vmatprep.subr.bf16.mxu0 %v5955
    %6066 = vmatpush1.bf16.msra.mxu0 %v5954
    %6067 = vmatprep.subr.bf16.mxu0 %v5947
    %6068 = vmatpush1.bf16.msra.mxu0 %v5946
    %6069 = vmatprep.subr.bf16.mxu0 %v5939
    %6070 = vmatpush1.bf16.msra.mxu0 %v5938
    %6071 = vmatprep.subr.bf16.mxu0 %v5931
    %6072 = vmatpush1.bf16.msra.mxu0 %v5930
    %6073 = vmatprep.subr.bf16.mxu0 %v5923
    %6074 = vmatpush1.bf16.msra.mxu0 %v5922
    %6075 = vmatprep.subr.bf16.mxu0 %v5915
    %6076 = vmatpush1.bf16.msra.mxu0 %v5914
    %6077 = vmatprep.subr.bf16.mxu0 %v5907
    %6078 = vmatpush1.bf16.msra.mxu0 %v5906
    %6079 = vmatprep.subr.bf16.mxu0 %v5899
    %6080 = vmatpush1.bf16.msra.mxu0 %v5898
    %6081 = vmatprep.subr.bf16.mxu0 0
    %6082 = vmatpush2.bf16.msra.mxu0 0
    %6083 = vmatprep.subr.bf16.mxu0 0
    %6084 = vmatpush2.bf16.msra.mxu0 0
    %6085 = vmatprep.subr.bf16.mxu0 0
    %6086 = vmatpush2.bf16.msra.mxu0 0
    %6087 = vmatprep.subr.bf16.mxu0 0
    %6088 = vmatpush2.bf16.msra.mxu0 0
    %6089 = vmatprep.subr.bf16.mxu0 0
    %6090 = vmatpush2.bf16.msra.mxu0 0
    %6091 = vmatprep.subr.bf16.mxu0 0
    %6092 = vmatpush2.bf16.msra.mxu0 0
    %6093 = vmatprep.subr.bf16.mxu0 0
    %6094 = vmatpush2.bf16.msra.mxu0 0
    %6095 = vmatprep.subr.bf16.mxu0 0
    %6096 = vmatpush2.bf16.msra.mxu0 0
    %6097 = vmatprep.mubr.bf16.mxu0 0
    %6098 = vmatmul.mubr.bf16.gmra.mxu0 %v5638
    %v6099 = vpop.f32.mrf.mxu0
    %v6100 = vadd.f32 0.0, %v6099
    %v6101 = vpop.f32.mrf.mxu0
    %v6102 = vadd.f32 0.0, %v6101
    %v6103 = vpop.f32.mrf.mxu0
    %v6104 = vpop.f32.mrf.mxu0
    %6105 = vdwg.mxu0
    %6106 = vmatprep.subr.bf16.mxu0 %v5957
    %6107 = vmatpush1.bf16.msra.mxu0 %v5956
    %6108 = vmatprep.subr.bf16.mxu0 %v5949
    %6109 = vmatpush1.bf16.msra.mxu0 %v5948
    %6110 = vmatprep.subr.bf16.mxu0 %v5941
    %6111 = vmatpush1.bf16.msra.mxu0 %v5940
    %6112 = vmatprep.subr.bf16.mxu0 %v5933
    %6113 = vmatpush1.bf16.msra.mxu0 %v5932
    %6114 = vmatprep.subr.bf16.mxu0 %v5925
    %6115 = vmatpush1.bf16.msra.mxu0 %v5924
    %6116 = vmatprep.subr.bf16.mxu0 %v5917
    %6117 = vmatpush1.bf16.msra.mxu0 %v5916
    %6118 = vmatprep.subr.bf16.mxu0 %v5909
    %6119 = vmatpush1.bf16.msra.mxu0 %v5908
    %6120 = vmatprep.subr.bf16.mxu0 %v5901
    %6121 = vmatpush1.bf16.msra.mxu0 %v5900
    %6122 = vmatprep.subr.bf16.mxu0 0
    %6123 = vmatpush2.bf16.msra.mxu0 0
    %6124 = vmatprep.subr.bf16.mxu0 0
    %6125 = vmatpush2.bf16.msra.mxu0 0
    %6126 = vmatprep.subr.bf16.mxu0 0
    %6127 = vmatpush2.bf16.msra.mxu0 0
    %6128 = vmatprep.subr.bf16.mxu0 0
    %6129 = vmatpush2.bf16.msra.mxu0 0
    %6130 = vmatprep.subr.bf16.mxu0 0
    %6131 = vmatpush2.bf16.msra.mxu0 0
    %6132 = vmatprep.subr.bf16.mxu0 0
    %6133 = vmatpush2.bf16.msra.mxu0 0
    %6134 = vmatprep.subr.bf16.mxu0 0
    %6135 = vmatpush2.bf16.msra.mxu0 0
    %6136 = vmatprep.subr.bf16.mxu0 0
    %6137 = vmatpush2.bf16.msra.mxu0 0
    %6138 = vmatprep.mubr.bf16.mxu0 0
    %6139 = vmatmul.mubr.bf16.gmra.mxu0 %v5638
    %v6140 = vpop.f32.mrf.mxu0
    %v6141 = vadd.f32 0.0, %v6140
    %v6142 = vpop.f32.mrf.mxu0
    %v6143 = vadd.f32 0.0, %v6142
    %v6144 = vpop.f32.mrf.mxu0
    %v6145 = vpop.f32.mrf.mxu0
    %6146 = vdwg.mxu0
    %6147 = vmatprep.subr.bf16.mxu0 %v5959
    %6148 = vmatpush1.bf16.msra.mxu0 %v5958
    %6149 = vmatprep.subr.bf16.mxu0 %v5951
    %6150 = vmatpush1.bf16.msra.mxu0 %v5950
    %6151 = vmatprep.subr.bf16.mxu0 %v5943
    %6152 = vmatpush1.bf16.msra.mxu0 %v5942
    %6153 = vmatprep.subr.bf16.mxu0 %v5935
    %6154 = vmatpush1.bf16.msra.mxu0 %v5934
    %6155 = vmatprep.subr.bf16.mxu0 %v5927
    %6156 = vmatpush1.bf16.msra.mxu0 %v5926
    %6157 = vmatprep.subr.bf16.mxu0 %v5919
    %6158 = vmatpush1.bf16.msra.mxu0 %v5918
    %6159 = vmatprep.subr.bf16.mxu0 %v5911
    %6160 = vmatpush1.bf16.msra.mxu0 %v5910
    %6161 = vmatprep.subr.bf16.mxu0 %v5903
    %6162 = vmatpush1.bf16.msra.mxu0 %v5902
    %6163 = vmatprep.subr.bf16.mxu0 0
    %6164 = vmatpush2.bf16.msra.mxu0 0
    %6165 = vmatprep.subr.bf16.mxu0 0
    %6166 = vmatpush2.bf16.msra.mxu0 0
    %6167 = vmatprep.subr.bf16.mxu0 0
    %6168 = vmatpush2.bf16.msra.mxu0 0
    %6169 = vmatprep.subr.bf16.mxu0 0
    %6170 = vmatpush2.bf16.msra.mxu0 0
    %6171 = vmatprep.subr.bf16.mxu0 0
    %6172 = vmatpush2.bf16.msra.mxu0 0
    %6173 = vmatprep.subr.bf16.mxu0 0
    %6174 = vmatpush2.bf16.msra.mxu0 0
    %6175 = vmatprep.subr.bf16.mxu0 0
    %6176 = vmatpush2.bf16.msra.mxu0 0
    %6177 = vmatprep.subr.bf16.mxu0 0
    %6178 = vmatpush2.bf16.msra.mxu0 0
    %6179 = vmatprep.mubr.bf16.mxu0 0
    %6180 = vmatmul.mubr.bf16.gmra.mxu0 %v5638
    %v6181 = vpop.f32.mrf.mxu0
    %v6182 = vadd.f32 0.0, %v6181
    %v6183 = vpop.f32.mrf.mxu0
    %v6184 = vadd.f32 0.0, %v6183
    %v6185 = vpop.f32.mrf.mxu0
    %v6186 = vpop.f32.mrf.mxu0
    %6187 = vdwg.mxu0
    %v6188 = vadd.f32 %v5626, %v6059
    %v6189 = vadd.f32 %v5627, %v6061
    %v6190 = vadd.f32 %v5628, %v6100
    %v6191 = vadd.f32 %v5629, %v6102
    %v6192 = vadd.f32 %v5630, %v6141
    %v6193 = vadd.f32 %v5631, %v6143
    %v6194 = vadd.f32 %v5632, %v6182
    %v6195 = vadd.f32 %v5633, %v6184
    %v6196 = vrot.slane %v327, 2
    %v6198 = vrot.slane %v585, 1
    %v6200 = vsel %vm589, %v6196, %v6198
    %v6201 = vpack.c.bf16 %v6200, %v6200
    %s6202 = scalar_lea.vmem [#allocation8], 5120
    %v6203 = vld [vmem:[%s6202] sm:$0xff]
    %v6204 = vld [vmem:[%s6202 + $0x8] sm:$0xff]
    %v6205 = vld [vmem:[%s6202 + $0x10] sm:$0xff]
    %v6206 = vld [vmem:[%s6202 + $0x18] sm:$0xff]
    %v6207 = vld [vmem:[%s6202 + $0x20] sm:$0xff]
    %v6208 = vld [vmem:[%s6202 + $0x28] sm:$0xff]
    %v6209 = vld [vmem:[%s6202 + $0x30] sm:$0xff]
    %v6210 = vld [vmem:[%s6202 + $0x38] sm:$0xff]
    %v6211 = vld [vmem:[%s6202 + $0x40] sm:$0xff]
    %v6212 = vld [vmem:[%s6202 + $0x48] sm:$0xff]
    %v6213 = vld [vmem:[%s6202 + $0x50] sm:$0xff]
    %v6214 = vld [vmem:[%s6202 + $0x58] sm:$0xff]
    %v6215 = vld [vmem:[%s6202 + $0x60] sm:$0xff]
    %v6216 = vld [vmem:[%s6202 + $0x68] sm:$0xff]
    %v6217 = vld [vmem:[%s6202 + $0x70] sm:$0xff]
    %v6218 = vld [vmem:[%s6202 + $0x78] sm:$0xff]
    %v6219 = vld [vmem:[%s6202 + $0x80] sm:$0xff]
    %v6220 = vld [vmem:[%s6202 + $0x88] sm:$0xff]
    %v6221 = vld [vmem:[%s6202 + $0x90] sm:$0xff]
    %v6222 = vld [vmem:[%s6202 + $0x98] sm:$0xff]
    %v6223 = vld [vmem:[%s6202 + $0xa0] sm:$0xff]
    %v6224 = vld [vmem:[%s6202 + $0xa8] sm:$0xff]
    %v6225 = vld [vmem:[%s6202 + $0xb0] sm:$0xff]
    %v6226 = vld [vmem:[%s6202 + $0xb8] sm:$0xff]
    %v6227 = vld [vmem:[%s6202 + $0xc0] sm:$0xff]
    %v6228 = vld [vmem:[%s6202 + $0xc8] sm:$0xff]
    %v6229 = vld [vmem:[%s6202 + $0xd0] sm:$0xff]
    %v6230 = vld [vmem:[%s6202 + $0xd8] sm:$0xff]
    %v6231 = vld [vmem:[%s6202 + $0xe0] sm:$0xff]
    %v6232 = vld [vmem:[%s6202 + $0xe8] sm:$0xff]
    %v6233 = vld [vmem:[%s6202 + $0xf0] sm:$0xff]
    %v6234 = vld [vmem:[%s6202 + $0xf8] sm:$0xff]
    %v6235 = vld [vmem:[%s6202 + $0x100] sm:$0xff]
    %v6236 = vld [vmem:[%s6202 + $0x108] sm:$0xff]
    %v6237 = vld [vmem:[%s6202 + $0x110] sm:$0xff]
    %v6238 = vld [vmem:[%s6202 + $0x118] sm:$0xff]
    %v6239 = vld [vmem:[%s6202 + $0x120] sm:$0xff]
    %v6240 = vld [vmem:[%s6202 + $0x128] sm:$0xff]
    %v6241 = vld [vmem:[%s6202 + $0x130] sm:$0xff]
    %v6242 = vld [vmem:[%s6202 + $0x138] sm:$0xff]
    %v6243 = vld [vmem:[%s6202 + $0x140] sm:$0xff]
    %v6244 = vld [vmem:[%s6202 + $0x148] sm:$0xff]
    %v6245 = vld [vmem:[%s6202 + $0x150] sm:$0xff]
    %v6246 = vld [vmem:[%s6202 + $0x158] sm:$0xff]
    %v6247 = vld [vmem:[%s6202 + $0x160] sm:$0xff]
    %v6248 = vld [vmem:[%s6202 + $0x168] sm:$0xff]
    %v6249 = vld [vmem:[%s6202 + $0x170] sm:$0xff]
    %v6250 = vld [vmem:[%s6202 + $0x178] sm:$0xff]
    %v6251 = vld [vmem:[%s6202 + $0x180] sm:$0xff]
    %v6252 = vld [vmem:[%s6202 + $0x188] sm:$0xff]
    %v6253 = vld [vmem:[%s6202 + $0x190] sm:$0xff]
    %v6254 = vld [vmem:[%s6202 + $0x198] sm:$0xff]
    %v6255 = vld [vmem:[%s6202 + $0x1a0] sm:$0xff]
    %v6256 = vld [vmem:[%s6202 + $0x1a8] sm:$0xff]
    %v6257 = vld [vmem:[%s6202 + $0x1b0] sm:$0xff]
    %v6258 = vld [vmem:[%s6202 + $0x1b8] sm:$0xff]
    %v6259 = vld [vmem:[%s6202 + $0x1c0] sm:$0xff]
    %v6260 = vld [vmem:[%s6202 + $0x1c8] sm:$0xff]
    %v6261 = vld [vmem:[%s6202 + $0x1d0] sm:$0xff]
    %v6262 = vld [vmem:[%s6202 + $0x1d8] sm:$0xff]
    %v6263 = vld [vmem:[%s6202 + $0x1e0] sm:$0xff]
    %v6264 = vld [vmem:[%s6202 + $0x1e8] sm:$0xff]
    %v6265 = vld [vmem:[%s6202 + $0x1f0] sm:$0xff]
    %v6266 = vld [vmem:[%s6202 + $0x1f8] sm:$0xff]
    %v6331 = vunpack.c.l.b16 %v6203
    %v6332 = vunpack.c.h.b16 %v6203
    %v6333 = vunpack.c.l.b16 %v6204
    %v6334 = vunpack.c.h.b16 %v6204
    %v6335 = vunpack.c.l.b16 %v6205
    %v6336 = vunpack.c.h.b16 %v6205
    %v6337 = vunpack.c.l.b16 %v6206
    %v6338 = vunpack.c.h.b16 %v6206
    %v6339 = vunpack.c.l.b16 %v6207
    %v6340 = vunpack.c.h.b16 %v6207
    %v6341 = vunpack.c.l.b16 %v6208
    %v6342 = vunpack.c.h.b16 %v6208
    %v6343 = vunpack.c.l.b16 %v6209
    %v6344 = vunpack.c.h.b16 %v6209
    %v6345 = vunpack.c.l.b16 %v6210
    %v6346 = vunpack.c.h.b16 %v6210
    %v6347 = vunpack.c.l.b16 %v6211
    %v6348 = vunpack.c.h.b16 %v6211
    %v6349 = vunpack.c.l.b16 %v6212
    %v6350 = vunpack.c.h.b16 %v6212
    %v6351 = vunpack.c.l.b16 %v6213
    %v6352 = vunpack.c.h.b16 %v6213
    %v6353 = vunpack.c.l.b16 %v6214
    %v6354 = vunpack.c.h.b16 %v6214
    %v6355 = vunpack.c.l.b16 %v6215
    %v6356 = vunpack.c.h.b16 %v6215
    %v6357 = vunpack.c.l.b16 %v6216
    %v6358 = vunpack.c.h.b16 %v6216
    %v6359 = vunpack.c.l.b16 %v6217
    %v6360 = vunpack.c.h.b16 %v6217
    %v6361 = vunpack.c.l.b16 %v6218
    %v6362 = vunpack.c.h.b16 %v6218
    %v6363 = vunpack.c.l.b16 %v6219
    %v6364 = vunpack.c.h.b16 %v6219
    %v6365 = vunpack.c.l.b16 %v6220
    %v6366 = vunpack.c.h.b16 %v6220
    %v6367 = vunpack.c.l.b16 %v6221
    %v6368 = vunpack.c.h.b16 %v6221
    %v6369 = vunpack.c.l.b16 %v6222
    %v6370 = vunpack.c.h.b16 %v6222
    %v6371 = vunpack.c.l.b16 %v6223
    %v6372 = vunpack.c.h.b16 %v6223
    %v6373 = vunpack.c.l.b16 %v6224
    %v6374 = vunpack.c.h.b16 %v6224
    %v6375 = vunpack.c.l.b16 %v6225
    %v6376 = vunpack.c.h.b16 %v6225
    %v6377 = vunpack.c.l.b16 %v6226
    %v6378 = vunpack.c.h.b16 %v6226
    %v6379 = vunpack.c.l.b16 %v6227
    %v6380 = vunpack.c.h.b16 %v6227
    %v6381 = vunpack.c.l.b16 %v6228
    %v6382 = vunpack.c.h.b16 %v6228
    %v6383 = vunpack.c.l.b16 %v6229
    %v6384 = vunpack.c.h.b16 %v6229
    %v6385 = vunpack.c.l.b16 %v6230
    %v6386 = vunpack.c.h.b16 %v6230
    %v6387 = vunpack.c.l.b16 %v6231
    %v6388 = vunpack.c.h.b16 %v6231
    %v6389 = vunpack.c.l.b16 %v6232
    %v6390 = vunpack.c.h.b16 %v6232
    %v6391 = vunpack.c.l.b16 %v6233
    %v6392 = vunpack.c.h.b16 %v6233
    %v6393 = vunpack.c.l.b16 %v6234
    %v6394 = vunpack.c.h.b16 %v6234
    %v6395 = vunpack.c.l.b16 %v6235
    %v6396 = vunpack.c.h.b16 %v6235
    %v6397 = vunpack.c.l.b16 %v6236
    %v6398 = vunpack.c.h.b16 %v6236
    %v6399 = vunpack.c.l.b16 %v6237
    %v6400 = vunpack.c.h.b16 %v6237
    %v6401 = vunpack.c.l.b16 %v6238
    %v6402 = vunpack.c.h.b16 %v6238
    %v6403 = vunpack.c.l.b16 %v6239
    %v6404 = vunpack.c.h.b16 %v6239
    %v6405 = vunpack.c.l.b16 %v6240
    %v6406 = vunpack.c.h.b16 %v6240
    %v6407 = vunpack.c.l.b16 %v6241
    %v6408 = vunpack.c.h.b16 %v6241
    %v6409 = vunpack.c.l.b16 %v6242
    %v6410 = vunpack.c.h.b16 %v6242
    %v6411 = vunpack.c.l.b16 %v6243
    %v6412 = vunpack.c.h.b16 %v6243
    %v6413 = vunpack.c.l.b16 %v6244
    %v6414 = vunpack.c.h.b16 %v6244
    %v6415 = vunpack.c.l.b16 %v6245
    %v6416 = vunpack.c.h.b16 %v6245
    %v6417 = vunpack.c.l.b16 %v6246
    %v6418 = vunpack.c.h.b16 %v6246
    %v6419 = vunpack.c.l.b16 %v6247
    %v6420 = vunpack.c.h.b16 %v6247
    %v6421 = vunpack.c.l.b16 %v6248
    %v6422 = vunpack.c.h.b16 %v6248
    %v6423 = vunpack.c.l.b16 %v6249
    %v6424 = vunpack.c.h.b16 %v6249
    %v6425 = vunpack.c.l.b16 %v6250
    %v6426 = vunpack.c.h.b16 %v6250
    %v6427 = vunpack.c.l.b16 %v6251
    %v6428 = vunpack.c.h.b16 %v6251
    %v6429 = vunpack.c.l.b16 %v6252
    %v6430 = vunpack.c.h.b16 %v6252
    %v6431 = vunpack.c.l.b16 %v6253
    %v6432 = vunpack.c.h.b16 %v6253
    %v6433 = vunpack.c.l.b16 %v6254
    %v6434 = vunpack.c.h.b16 %v6254
    %v6435 = vunpack.c.l.b16 %v6255
    %v6436 = vunpack.c.h.b16 %v6255
    %v6437 = vunpack.c.l.b16 %v6256
    %v6438 = vunpack.c.h.b16 %v6256
    %v6439 = vunpack.c.l.b16 %v6257
    %v6440 = vunpack.c.h.b16 %v6257
    %v6441 = vunpack.c.l.b16 %v6258
    %v6442 = vunpack.c.h.b16 %v6258
    %v6443 = vunpack.c.l.b16 %v6259
    %v6444 = vunpack.c.h.b16 %v6259
    %v6445 = vunpack.c.l.b16 %v6260
    %v6446 = vunpack.c.h.b16 %v6260
    %v6447 = vunpack.c.l.b16 %v6261
    %v6448 = vunpack.c.h.b16 %v6261
    %v6449 = vunpack.c.l.b16 %v6262
    %v6450 = vunpack.c.h.b16 %v6262
    %v6451 = vunpack.c.l.b16 %v6263
    %v6452 = vunpack.c.h.b16 %v6263
    %v6453 = vunpack.c.l.b16 %v6264
    %v6454 = vunpack.c.h.b16 %v6264
    %v6455 = vunpack.c.l.b16 %v6265
    %v6456 = vunpack.c.h.b16 %v6265
    %v6457 = vunpack.c.l.b16 %v6266
    %v6458 = vunpack.c.h.b16 %v6266
    %v6459 = vpack.c.b16 %v6339, %v6331
    %v6460 = vpack.c.b16 %v6340, %v6332
    %v6461 = vpack.c.b16 %v6341, %v6333
    %v6462 = vpack.c.b16 %v6342, %v6334
    %v6463 = vpack.c.b16 %v6343, %v6335
    %v6464 = vpack.c.b16 %v6344, %v6336
    %v6465 = vpack.c.b16 %v6345, %v6337
    %v6466 = vpack.c.b16 %v6346, %v6338
    %v6467 = vpack.c.b16 %v6355, %v6347
    %v6468 = vpack.c.b16 %v6356, %v6348
    %v6469 = vpack.c.b16 %v6357, %v6349
    %v6470 = vpack.c.b16 %v6358, %v6350
    %v6471 = vpack.c.b16 %v6359, %v6351
    %v6472 = vpack.c.b16 %v6360, %v6352
    %v6473 = vpack.c.b16 %v6361, %v6353
    %v6474 = vpack.c.b16 %v6362, %v6354
    %v6475 = vpack.c.b16 %v6371, %v6363
    %v6476 = vpack.c.b16 %v6372, %v6364
    %v6477 = vpack.c.b16 %v6373, %v6365
    %v6478 = vpack.c.b16 %v6374, %v6366
    %v6479 = vpack.c.b16 %v6375, %v6367
    %v6480 = vpack.c.b16 %v6376, %v6368
    %v6481 = vpack.c.b16 %v6377, %v6369
    %v6482 = vpack.c.b16 %v6378, %v6370
    %v6483 = vpack.c.b16 %v6387, %v6379
    %v6484 = vpack.c.b16 %v6388, %v6380
    %v6485 = vpack.c.b16 %v6389, %v6381
    %v6486 = vpack.c.b16 %v6390, %v6382
    %v6487 = vpack.c.b16 %v6391, %v6383
    %v6488 = vpack.c.b16 %v6392, %v6384
    %v6489 = vpack.c.b16 %v6393, %v6385
    %v6490 = vpack.c.b16 %v6394, %v6386
    %v6491 = vpack.c.b16 %v6403, %v6395
    %v6492 = vpack.c.b16 %v6404, %v6396
    %v6493 = vpack.c.b16 %v6405, %v6397
    %v6494 = vpack.c.b16 %v6406, %v6398
    %v6495 = vpack.c.b16 %v6407, %v6399
    %v6496 = vpack.c.b16 %v6408, %v6400
    %v6497 = vpack.c.b16 %v6409, %v6401
    %v6498 = vpack.c.b16 %v6410, %v6402
    %v6499 = vpack.c.b16 %v6419, %v6411
    %v6500 = vpack.c.b16 %v6420, %v6412
    %v6501 = vpack.c.b16 %v6421, %v6413
    %v6502 = vpack.c.b16 %v6422, %v6414
    %v6503 = vpack.c.b16 %v6423, %v6415
    %v6504 = vpack.c.b16 %v6424, %v6416
    %v6505 = vpack.c.b16 %v6425, %v6417
    %v6506 = vpack.c.b16 %v6426, %v6418
    %v6507 = vpack.c.b16 %v6435, %v6427
    %v6508 = vpack.c.b16 %v6436, %v6428
    %v6509 = vpack.c.b16 %v6437, %v6429
    %v6510 = vpack.c.b16 %v6438, %v6430
    %v6511 = vpack.c.b16 %v6439, %v6431
    %v6512 = vpack.c.b16 %v6440, %v6432
    %v6513 = vpack.c.b16 %v6441, %v6433
    %v6514 = vpack.c.b16 %v6442, %v6434
    %v6515 = vpack.c.b16 %v6451, %v6443
    %v6516 = vpack.c.b16 %v6452, %v6444
    %v6517 = vpack.c.b16 %v6453, %v6445
    %v6518 = vpack.c.b16 %v6454, %v6446
    %v6519 = vpack.c.b16 %v6455, %v6447
    %v6520 = vpack.c.b16 %v6456, %v6448
    %v6521 = vpack.c.b16 %v6457, %v6449
    %v6522 = vpack.c.b16 %v6458, %v6450
    %6587 = vmatprep.subr.bf16.mxu0 %v6516
    %6588 = vmatpush1.bf16.msra.mxu0 %v6515
    %6589 = vmatprep.subr.bf16.mxu0 %v6508
    %6590 = vmatpush1.bf16.msra.mxu0 %v6507
    %6591 = vmatprep.subr.bf16.mxu0 %v6500
    %6592 = vmatpush1.bf16.msra.mxu0 %v6499
    %6593 = vmatprep.subr.bf16.mxu0 %v6492
    %6594 = vmatpush1.bf16.msra.mxu0 %v6491
    %6595 = vmatprep.subr.bf16.mxu0 %v6484
    %6596 = vmatpush1.bf16.msra.mxu0 %v6483
    %6597 = vmatprep.subr.bf16.mxu0 %v6476
    %6598 = vmatpush1.bf16.msra.mxu0 %v6475
    %6599 = vmatprep.subr.bf16.mxu0 %v6468
    %6600 = vmatpush1.bf16.msra.mxu0 %v6467
    %6601 = vmatprep.subr.bf16.mxu0 %v6460
    %6602 = vmatpush1.bf16.msra.mxu0 %v6459
    %6603 = vmatprep.subr.bf16.mxu0 0
    %6604 = vmatpush2.bf16.msra.mxu0 0
    %6605 = vmatprep.subr.bf16.mxu0 0
    %6606 = vmatpush2.bf16.msra.mxu0 0
    %6607 = vmatprep.subr.bf16.mxu0 0
    %6608 = vmatpush2.bf16.msra.mxu0 0
    %6609 = vmatprep.subr.bf16.mxu0 0
    %6610 = vmatpush2.bf16.msra.mxu0 0
    %6611 = vmatprep.subr.bf16.mxu0 0
    %6612 = vmatpush2.bf16.msra.mxu0 0
    %6613 = vmatprep.subr.bf16.mxu0 0
    %6614 = vmatpush2.bf16.msra.mxu0 0
    %6615 = vmatprep.subr.bf16.mxu0 0
    %6616 = vmatpush2.bf16.msra.mxu0 0
    %6617 = vmatprep.subr.bf16.mxu0 0
    %6618 = vmatpush2.bf16.msra.mxu0 0
    %6619 = vmatprep.mubr.bf16.mxu0 0
    %6620 = vmatmul.mubr.bf16.gmra.mxu0 %v6201
    %v6621 = vpop.f32.mrf.mxu0
    %v6622 = vadd.f32 0.0, %v6621
    %v6623 = vpop.f32.mrf.mxu0
    %v6624 = vadd.f32 0.0, %v6623
    %v6625 = vpop.f32.mrf.mxu0
    %v6626 = vpop.f32.mrf.mxu0
    %6627 = vdwg.mxu0
    %6628 = vmatprep.subr.bf16.mxu0 %v6518
    %6629 = vmatpush1.bf16.msra.mxu0 %v6517
    %6630 = vmatprep.subr.bf16.mxu0 %v6510
    %6631 = vmatpush1.bf16.msra.mxu0 %v6509
    %6632 = vmatprep.subr.bf16.mxu0 %v6502
    %6633 = vmatpush1.bf16.msra.mxu0 %v6501
    %6634 = vmatprep.subr.bf16.mxu0 %v6494
    %6635 = vmatpush1.bf16.msra.mxu0 %v6493
    %6636 = vmatprep.subr.bf16.mxu0 %v6486
    %6637 = vmatpush1.bf16.msra.mxu0 %v6485
    %6638 = vmatprep.subr.bf16.mxu0 %v6478
    %6639 = vmatpush1.bf16.msra.mxu0 %v6477
    %6640 = vmatprep.subr.bf16.mxu0 %v6470
    %6641 = vmatpush1.bf16.msra.mxu0 %v6469
    %6642 = vmatprep.subr.bf16.mxu0 %v6462
    %6643 = vmatpush1.bf16.msra.mxu0 %v6461
    %6644 = vmatprep.subr.bf16.mxu0 0
    %6645 = vmatpush2.bf16.msra.mxu0 0
    %6646 = vmatprep.subr.bf16.mxu0 0
    %6647 = vmatpush2.bf16.msra.mxu0 0
    %6648 = vmatprep.subr.bf16.mxu0 0
    %6649 = vmatpush2.bf16.msra.mxu0 0
    %6650 = vmatprep.subr.bf16.mxu0 0
    %6651 = vmatpush2.bf16.msra.mxu0 0
    %6652 = vmatprep.subr.bf16.mxu0 0
    %6653 = vmatpush2.bf16.msra.mxu0 0
    %6654 = vmatprep.subr.bf16.mxu0 0
    %6655 = vmatpush2.bf16.msra.mxu0 0
    %6656 = vmatprep.subr.bf16.mxu0 0
    %6657 = vmatpush2.bf16.msra.mxu0 0
    %6658 = vmatprep.subr.bf16.mxu0 0
    %6659 = vmatpush2.bf16.msra.mxu0 0
    %6660 = vmatprep.mubr.bf16.mxu0 0
    %6661 = vmatmul.mubr.bf16.gmra.mxu0 %v6201
    %v6662 = vpop.f32.mrf.mxu0
    %v6663 = vadd.f32 0.0, %v6662
    %v6664 = vpop.f32.mrf.mxu0
    %v6665 = vadd.f32 0.0, %v6664
    %v6666 = vpop.f32.mrf.mxu0
    %v6667 = vpop.f32.mrf.mxu0
    %6668 = vdwg.mxu0
    %6669 = vmatprep.subr.bf16.mxu0 %v6520
    %6670 = vmatpush1.bf16.msra.mxu0 %v6519
    %6671 = vmatprep.subr.bf16.mxu0 %v6512
    %6672 = vmatpush1.bf16.msra.mxu0 %v6511
    %6673 = vmatprep.subr.bf16.mxu0 %v6504
    %6674 = vmatpush1.bf16.msra.mxu0 %v6503
    %6675 = vmatprep.subr.bf16.mxu0 %v6496
    %6676 = vmatpush1.bf16.msra.mxu0 %v6495
    %6677 = vmatprep.subr.bf16.mxu0 %v6488
    %6678 = vmatpush1.bf16.msra.mxu0 %v6487
    %6679 = vmatprep.subr.bf16.mxu0 %v6480
    %6680 = vmatpush1.bf16.msra.mxu0 %v6479
    %6681 = vmatprep.subr.bf16.mxu0 %v6472
    %6682 = vmatpush1.bf16.msra.mxu0 %v6471
    %6683 = vmatprep.subr.bf16.mxu0 %v6464
    %6684 = vmatpush1.bf16.msra.mxu0 %v6463
    %6685 = vmatprep.subr.bf16.mxu0 0
    %6686 = vmatpush2.bf16.msra.mxu0 0
    %6687 = vmatprep.subr.bf16.mxu0 0
    %6688 = vmatpush2.bf16.msra.mxu0 0
    %6689 = vmatprep.subr.bf16.mxu0 0
    %6690 = vmatpush2.bf16.msra.mxu0 0
    %6691 = vmatprep.subr.bf16.mxu0 0
    %6692 = vmatpush2.bf16.msra.mxu0 0
    %6693 = vmatprep.subr.bf16.mxu0 0
    %6694 = vmatpush2.bf16.msra.mxu0 0
    %6695 = vmatprep.subr.bf16.mxu0 0
    %6696 = vmatpush2.bf16.msra.mxu0 0
    %6697 = vmatprep.subr.bf16.mxu0 0
    %6698 = vmatpush2.bf16.msra.mxu0 0
    %6699 = vmatprep.subr.bf16.mxu0 0
    %6700 = vmatpush2.bf16.msra.mxu0 0
    %6701 = vmatprep.mubr.bf16.mxu0 0
    %6702 = vmatmul.mubr.bf16.gmra.mxu0 %v6201
    %v6703 = vpop.f32.mrf.mxu0
    %v6704 = vadd.f32 0.0, %v6703
    %v6705 = vpop.f32.mrf.mxu0
    %v6706 = vadd.f32 0.0, %v6705
    %v6707 = vpop.f32.mrf.mxu0
    %v6708 = vpop.f32.mrf.mxu0
    %6709 = vdwg.mxu0
    %6710 = vmatprep.subr.bf16.mxu0 %v6522
    %6711 = vmatpush1.bf16.msra.mxu0 %v6521
    %6712 = vmatprep.subr.bf16.mxu0 %v6514
    %6713 = vmatpush1.bf16.msra.mxu0 %v6513
    %6714 = vmatprep.subr.bf16.mxu0 %v6506
    %6715 = vmatpush1.bf16.msra.mxu0 %v6505
    %6716 = vmatprep.subr.bf16.mxu0 %v6498
    %6717 = vmatpush1.bf16.msra.mxu0 %v6497
    %6718 = vmatprep.subr.bf16.mxu0 %v6490
    %6719 = vmatpush1.bf16.msra.mxu0 %v6489
    %6720 = vmatprep.subr.bf16.mxu0 %v6482
    %6721 = vmatpush1.bf16.msra.mxu0 %v6481
    %6722 = vmatprep.subr.bf16.mxu0 %v6474
    %6723 = vmatpush1.bf16.msra.mxu0 %v6473
    %6724 = vmatprep.subr.bf16.mxu0 %v6466
    %6725 = vmatpush1.bf16.msra.mxu0 %v6465
    %6726 = vmatprep.subr.bf16.mxu0 0
    %6727 = vmatpush2.bf16.msra.mxu0 0
    %6728 = vmatprep.subr.bf16.mxu0 0
    %6729 = vmatpush2.bf16.msra.mxu0 0
    %6730 = vmatprep.subr.bf16.mxu0 0
    %6731 = vmatpush2.bf16.msra.mxu0 0
    %6732 = vmatprep.subr.bf16.mxu0 0
    %6733 = vmatpush2.bf16.msra.mxu0 0
    %6734 = vmatprep.subr.bf16.mxu0 0
    %6735 = vmatpush2.bf16.msra.mxu0 0
    %6736 = vmatprep.subr.bf16.mxu0 0
    %6737 = vmatpush2.bf16.msra.mxu0 0
    %6738 = vmatprep.subr.bf16.mxu0 0
    %6739 = vmatpush2.bf16.msra.mxu0 0
    %6740 = vmatprep.subr.bf16.mxu0 0
    %6741 = vmatpush2.bf16.msra.mxu0 0
    %6742 = vmatprep.mubr.bf16.mxu0 0
    %6743 = vmatmul.mubr.bf16.gmra.mxu0 %v6201
    %v6744 = vpop.f32.mrf.mxu0
    %v6745 = vadd.f32 0.0, %v6744
    %v6746 = vpop.f32.mrf.mxu0
    %v6747 = vadd.f32 0.0, %v6746
    %v6748 = vpop.f32.mrf.mxu0
    %v6749 = vpop.f32.mrf.mxu0
    %6750 = vdwg.mxu0
    %v6751 = vadd.f32 %v6188, %v6622
    %v6752 = vadd.f32 %v6189, %v6624
    %v6753 = vadd.f32 %v6190, %v6663
    %v6754 = vadd.f32 %v6191, %v6665
    %v6755 = vadd.f32 %v6192, %v6704
    %v6756 = vadd.f32 %v6193, %v6706
    %v6757 = vadd.f32 %v6194, %v6745
    %v6758 = vadd.f32 %v6195, %v6747
    %v6759 = vrot.slane %v327, 3
    %v6761 = vrot.slane %v585, 2
    %v6763 = vsel %vm589, %v6759, %v6761
    %v6764 = vpack.c.bf16 %v6763, %v6763
    %s6765 = scalar_lea.vmem [#allocation8], 5632
    %v6766 = vld [vmem:[%s6765] sm:$0xff]
    %v6767 = vld [vmem:[%s6765 + $0x8] sm:$0xff]
    %v6768 = vld [vmem:[%s6765 + $0x10] sm:$0xff]
    %v6769 = vld [vmem:[%s6765 + $0x18] sm:$0xff]
    %v6770 = vld [vmem:[%s6765 + $0x20] sm:$0xff]
    %v6771 = vld [vmem:[%s6765 + $0x28] sm:$0xff]
    %v6772 = vld [vmem:[%s6765 + $0x30] sm:$0xff]
    %v6773 = vld [vmem:[%s6765 + $0x38] sm:$0xff]
    %v6774 = vld [vmem:[%s6765 + $0x40] sm:$0xff]
    %v6775 = vld [vmem:[%s6765 + $0x48] sm:$0xff]
    %v6776 = vld [vmem:[%s6765 + $0x50] sm:$0xff]
    %v6777 = vld [vmem:[%s6765 + $0x58] sm:$0xff]
    %v6778 = vld [vmem:[%s6765 + $0x60] sm:$0xff]
    %v6779 = vld [vmem:[%s6765 + $0x68] sm:$0xff]
    %v6780 = vld [vmem:[%s6765 + $0x70] sm:$0xff]
    %v6781 = vld [vmem:[%s6765 + $0x78] sm:$0xff]
    %v6782 = vld [vmem:[%s6765 + $0x80] sm:$0xff]
    %v6783 = vld [vmem:[%s6765 + $0x88] sm:$0xff]
    %v6784 = vld [vmem:[%s6765 + $0x90] sm:$0xff]
    %v6785 = vld [vmem:[%s6765 + $0x98] sm:$0xff]
    %v6786 = vld [vmem:[%s6765 + $0xa0] sm:$0xff]
    %v6787 = vld [vmem:[%s6765 + $0xa8] sm:$0xff]
    %v6788 = vld [vmem:[%s6765 + $0xb0] sm:$0xff]
    %v6789 = vld [vmem:[%s6765 + $0xb8] sm:$0xff]
    %v6790 = vld [vmem:[%s6765 + $0xc0] sm:$0xff]
    %v6791 = vld [vmem:[%s6765 + $0xc8] sm:$0xff]
    %v6792 = vld [vmem:[%s6765 + $0xd0] sm:$0xff]
    %v6793 = vld [vmem:[%s6765 + $0xd8] sm:$0xff]
    %v6794 = vld [vmem:[%s6765 + $0xe0] sm:$0xff]
    %v6795 = vld [vmem:[%s6765 + $0xe8] sm:$0xff]
    %v6796 = vld [vmem:[%s6765 + $0xf0] sm:$0xff]
    %v6797 = vld [vmem:[%s6765 + $0xf8] sm:$0xff]
    %v6798 = vld [vmem:[%s6765 + $0x100] sm:$0xff]
    %v6799 = vld [vmem:[%s6765 + $0x108] sm:$0xff]
    %v6800 = vld [vmem:[%s6765 + $0x110] sm:$0xff]
    %v6801 = vld [vmem:[%s6765 + $0x118] sm:$0xff]
    %v6802 = vld [vmem:[%s6765 + $0x120] sm:$0xff]
    %v6803 = vld [vmem:[%s6765 + $0x128] sm:$0xff]
    %v6804 = vld [vmem:[%s6765 + $0x130] sm:$0xff]
    %v6805 = vld [vmem:[%s6765 + $0x138] sm:$0xff]
    %v6806 = vld [vmem:[%s6765 + $0x140] sm:$0xff]
    %v6807 = vld [vmem:[%s6765 + $0x148] sm:$0xff]
    %v6808 = vld [vmem:[%s6765 + $0x150] sm:$0xff]
    %v6809 = vld [vmem:[%s6765 + $0x158] sm:$0xff]
    %v6810 = vld [vmem:[%s6765 + $0x160] sm:$0xff]
    %v6811 = vld [vmem:[%s6765 + $0x168] sm:$0xff]
    %v6812 = vld [vmem:[%s6765 + $0x170] sm:$0xff]
    %v6813 = vld [vmem:[%s6765 + $0x178] sm:$0xff]
    %v6814 = vld [vmem:[%s6765 + $0x180] sm:$0xff]
    %v6815 = vld [vmem:[%s6765 + $0x188] sm:$0xff]
    %v6816 = vld [vmem:[%s6765 + $0x190] sm:$0xff]
    %v6817 = vld [vmem:[%s6765 + $0x198] sm:$0xff]
    %v6818 = vld [vmem:[%s6765 + $0x1a0] sm:$0xff]
    %v6819 = vld [vmem:[%s6765 + $0x1a8] sm:$0xff]
    %v6820 = vld [vmem:[%s6765 + $0x1b0] sm:$0xff]
    %v6821 = vld [vmem:[%s6765 + $0x1b8] sm:$0xff]
    %v6822 = vld [vmem:[%s6765 + $0x1c0] sm:$0xff]
    %v6823 = vld [vmem:[%s6765 + $0x1c8] sm:$0xff]
    %v6824 = vld [vmem:[%s6765 + $0x1d0] sm:$0xff]
    %v6825 = vld [vmem:[%s6765 + $0x1d8] sm:$0xff]
    %v6826 = vld [vmem:[%s6765 + $0x1e0] sm:$0xff]
    %v6827 = vld [vmem:[%s6765 + $0x1e8] sm:$0xff]
    %v6828 = vld [vmem:[%s6765 + $0x1f0] sm:$0xff]
    %v6829 = vld [vmem:[%s6765 + $0x1f8] sm:$0xff]
    %v6894 = vunpack.c.l.b16 %v6766
    %v6895 = vunpack.c.h.b16 %v6766
    %v6896 = vunpack.c.l.b16 %v6767
    %v6897 = vunpack.c.h.b16 %v6767
    %v6898 = vunpack.c.l.b16 %v6768
    %v6899 = vunpack.c.h.b16 %v6768
    %v6900 = vunpack.c.l.b16 %v6769
    %v6901 = vunpack.c.h.b16 %v6769
    %v6902 = vunpack.c.l.b16 %v6770
    %v6903 = vunpack.c.h.b16 %v6770
    %v6904 = vunpack.c.l.b16 %v6771
    %v6905 = vunpack.c.h.b16 %v6771
    %v6906 = vunpack.c.l.b16 %v6772
    %v6907 = vunpack.c.h.b16 %v6772
    %v6908 = vunpack.c.l.b16 %v6773
    %v6909 = vunpack.c.h.b16 %v6773
    %v6910 = vunpack.c.l.b16 %v6774
    %v6911 = vunpack.c.h.b16 %v6774
    %v6912 = vunpack.c.l.b16 %v6775
    %v6913 = vunpack.c.h.b16 %v6775
    %v6914 = vunpack.c.l.b16 %v6776
    %v6915 = vunpack.c.h.b16 %v6776
    %v6916 = vunpack.c.l.b16 %v6777
    %v6917 = vunpack.c.h.b16 %v6777
    %v6918 = vunpack.c.l.b16 %v6778
    %v6919 = vunpack.c.h.b16 %v6778
    %v6920 = vunpack.c.l.b16 %v6779
    %v6921 = vunpack.c.h.b16 %v6779
    %v6922 = vunpack.c.l.b16 %v6780
    %v6923 = vunpack.c.h.b16 %v6780
    %v6924 = vunpack.c.l.b16 %v6781
    %v6925 = vunpack.c.h.b16 %v6781
    %v6926 = vunpack.c.l.b16 %v6782
    %v6927 = vunpack.c.h.b16 %v6782
    %v6928 = vunpack.c.l.b16 %v6783
    %v6929 = vunpack.c.h.b16 %v6783
    %v6930 = vunpack.c.l.b16 %v6784
    %v6931 = vunpack.c.h.b16 %v6784
    %v6932 = vunpack.c.l.b16 %v6785
    %v6933 = vunpack.c.h.b16 %v6785
    %v6934 = vunpack.c.l.b16 %v6786
    %v6935 = vunpack.c.h.b16 %v6786
    %v6936 = vunpack.c.l.b16 %v6787
    %v6937 = vunpack.c.h.b16 %v6787
    %v6938 = vunpack.c.l.b16 %v6788
    %v6939 = vunpack.c.h.b16 %v6788
    %v6940 = vunpack.c.l.b16 %v6789
    %v6941 = vunpack.c.h.b16 %v6789
    %v6942 = vunpack.c.l.b16 %v6790
    %v6943 = vunpack.c.h.b16 %v6790
    %v6944 = vunpack.c.l.b16 %v6791
    %v6945 = vunpack.c.h.b16 %v6791
    %v6946 = vunpack.c.l.b16 %v6792
    %v6947 = vunpack.c.h.b16 %v6792
    %v6948 = vunpack.c.l.b16 %v6793
    %v6949 = vunpack.c.h.b16 %v6793
    %v6950 = vunpack.c.l.b16 %v6794
    %v6951 = vunpack.c.h.b16 %v6794
    %v6952 = vunpack.c.l.b16 %v6795
    %v6953 = vunpack.c.h.b16 %v6795
    %v6954 = vunpack.c.l.b16 %v6796
    %v6955 = vunpack.c.h.b16 %v6796
    %v6956 = vunpack.c.l.b16 %v6797
    %v6957 = vunpack.c.h.b16 %v6797
    %v6958 = vunpack.c.l.b16 %v6798
    %v6959 = vunpack.c.h.b16 %v6798
    %v6960 = vunpack.c.l.b16 %v6799
    %v6961 = vunpack.c.h.b16 %v6799
    %v6962 = vunpack.c.l.b16 %v6800
    %v6963 = vunpack.c.h.b16 %v6800
    %v6964 = vunpack.c.l.b16 %v6801
    %v6965 = vunpack.c.h.b16 %v6801
    %v6966 = vunpack.c.l.b16 %v6802
    %v6967 = vunpack.c.h.b16 %v6802
    %v6968 = vunpack.c.l.b16 %v6803
    %v6969 = vunpack.c.h.b16 %v6803
    %v6970 = vunpack.c.l.b16 %v6804
    %v6971 = vunpack.c.h.b16 %v6804
    %v6972 = vunpack.c.l.b16 %v6805
    %v6973 = vunpack.c.h.b16 %v6805
    %v6974 = vunpack.c.l.b16 %v6806
    %v6975 = vunpack.c.h.b16 %v6806
    %v6976 = vunpack.c.l.b16 %v6807
    %v6977 = vunpack.c.h.b16 %v6807
    %v6978 = vunpack.c.l.b16 %v6808
    %v6979 = vunpack.c.h.b16 %v6808
    %v6980 = vunpack.c.l.b16 %v6809
    %v6981 = vunpack.c.h.b16 %v6809
    %v6982 = vunpack.c.l.b16 %v6810
    %v6983 = vunpack.c.h.b16 %v6810
    %v6984 = vunpack.c.l.b16 %v6811
    %v6985 = vunpack.c.h.b16 %v6811
    %v6986 = vunpack.c.l.b16 %v6812
    %v6987 = vunpack.c.h.b16 %v6812
    %v6988 = vunpack.c.l.b16 %v6813
    %v6989 = vunpack.c.h.b16 %v6813
    %v6990 = vunpack.c.l.b16 %v6814
    %v6991 = vunpack.c.h.b16 %v6814
    %v6992 = vunpack.c.l.b16 %v6815
    %v6993 = vunpack.c.h.b16 %v6815
    %v6994 = vunpack.c.l.b16 %v6816
    %v6995 = vunpack.c.h.b16 %v6816
    %v6996 = vunpack.c.l.b16 %v6817
    %v6997 = vunpack.c.h.b16 %v6817
    %v6998 = vunpack.c.l.b16 %v6818
    %v6999 = vunpack.c.h.b16 %v6818
    %v7000 = vunpack.c.l.b16 %v6819
    %v7001 = vunpack.c.h.b16 %v6819
    %v7002 = vunpack.c.l.b16 %v6820
    %v7003 = vunpack.c.h.b16 %v6820
    %v7004 = vunpack.c.l.b16 %v6821
    %v7005 = vunpack.c.h.b16 %v6821
    %v7006 = vunpack.c.l.b16 %v6822
    %v7007 = vunpack.c.h.b16 %v6822
    %v7008 = vunpack.c.l.b16 %v6823
    %v7009 = vunpack.c.h.b16 %v6823
    %v7010 = vunpack.c.l.b16 %v6824
    %v7011 = vunpack.c.h.b16 %v6824
    %v7012 = vunpack.c.l.b16 %v6825
    %v7013 = vunpack.c.h.b16 %v6825
    %v7014 = vunpack.c.l.b16 %v6826
    %v7015 = vunpack.c.h.b16 %v6826
    %v7016 = vunpack.c.l.b16 %v6827
    %v7017 = vunpack.c.h.b16 %v6827
    %v7018 = vunpack.c.l.b16 %v6828
    %v7019 = vunpack.c.h.b16 %v6828
    %v7020 = vunpack.c.l.b16 %v6829
    %v7021 = vunpack.c.h.b16 %v6829
    %v7022 = vpack.c.b16 %v6902, %v6894
    %v7023 = vpack.c.b16 %v6903, %v6895
    %v7024 = vpack.c.b16 %v6904, %v6896
    %v7025 = vpack.c.b16 %v6905, %v6897
    %v7026 = vpack.c.b16 %v6906, %v6898
    %v7027 = vpack.c.b16 %v6907, %v6899
    %v7028 = vpack.c.b16 %v6908, %v6900
    %v7029 = vpack.c.b16 %v6909, %v6901
    %v7030 = vpack.c.b16 %v6918, %v6910
    %v7031 = vpack.c.b16 %v6919, %v6911
    %v7032 = vpack.c.b16 %v6920, %v6912
    %v7033 = vpack.c.b16 %v6921, %v6913
    %v7034 = vpack.c.b16 %v6922, %v6914
    %v7035 = vpack.c.b16 %v6923, %v6915
    %v7036 = vpack.c.b16 %v6924, %v6916
    %v7037 = vpack.c.b16 %v6925, %v6917
    %v7038 = vpack.c.b16 %v6934, %v6926
    %v7039 = vpack.c.b16 %v6935, %v6927
    %v7040 = vpack.c.b16 %v6936, %v6928
    %v7041 = vpack.c.b16 %v6937, %v6929
    %v7042 = vpack.c.b16 %v6938, %v6930
    %v7043 = vpack.c.b16 %v6939, %v6931
    %v7044 = vpack.c.b16 %v6940, %v6932
    %v7045 = vpack.c.b16 %v6941, %v6933
    %v7046 = vpack.c.b16 %v6950, %v6942
    %v7047 = vpack.c.b16 %v6951, %v6943
    %v7048 = vpack.c.b16 %v6952, %v6944
    %v7049 = vpack.c.b16 %v6953, %v6945
    %v7050 = vpack.c.b16 %v6954, %v6946
    %v7051 = vpack.c.b16 %v6955, %v6947
    %v7052 = vpack.c.b16 %v6956, %v6948
    %v7053 = vpack.c.b16 %v6957, %v6949
    %v7054 = vpack.c.b16 %v6966, %v6958
    %v7055 = vpack.c.b16 %v6967, %v6959
    %v7056 = vpack.c.b16 %v6968, %v6960
    %v7057 = vpack.c.b16 %v6969, %v6961
    %v7058 = vpack.c.b16 %v6970, %v6962
    %v7059 = vpack.c.b16 %v6971, %v6963
    %v7060 = vpack.c.b16 %v6972, %v6964
    %v7061 = vpack.c.b16 %v6973, %v6965
    %v7062 = vpack.c.b16 %v6982, %v6974
    %v7063 = vpack.c.b16 %v6983, %v6975
    %v7064 = vpack.c.b16 %v6984, %v6976
    %v7065 = vpack.c.b16 %v6985, %v6977
    %v7066 = vpack.c.b16 %v6986, %v6978
    %v7067 = vpack.c.b16 %v6987, %v6979
    %v7068 = vpack.c.b16 %v6988, %v6980
    %v7069 = vpack.c.b16 %v6989, %v6981
    %v7070 = vpack.c.b16 %v6998, %v6990
    %v7071 = vpack.c.b16 %v6999, %v6991
    %v7072 = vpack.c.b16 %v7000, %v6992
    %v7073 = vpack.c.b16 %v7001, %v6993
    %v7074 = vpack.c.b16 %v7002, %v6994
    %v7075 = vpack.c.b16 %v7003, %v6995
    %v7076 = vpack.c.b16 %v7004, %v6996
    %v7077 = vpack.c.b16 %v7005, %v6997
    %v7078 = vpack.c.b16 %v7014, %v7006
    %v7079 = vpack.c.b16 %v7015, %v7007
    %v7080 = vpack.c.b16 %v7016, %v7008
    %v7081 = vpack.c.b16 %v7017, %v7009
    %v7082 = vpack.c.b16 %v7018, %v7010
    %v7083 = vpack.c.b16 %v7019, %v7011
    %v7084 = vpack.c.b16 %v7020, %v7012
    %v7085 = vpack.c.b16 %v7021, %v7013
    %7150 = vmatprep.subr.bf16.mxu0 %v7079
    %7151 = vmatpush1.bf16.msra.mxu0 %v7078
    %7152 = vmatprep.subr.bf16.mxu0 %v7071
    %7153 = vmatpush1.bf16.msra.mxu0 %v7070
    %7154 = vmatprep.subr.bf16.mxu0 %v7063
    %7155 = vmatpush1.bf16.msra.mxu0 %v7062
    %7156 = vmatprep.subr.bf16.mxu0 %v7055
    %7157 = vmatpush1.bf16.msra.mxu0 %v7054
    %7158 = vmatprep.subr.bf16.mxu0 %v7047
    %7159 = vmatpush1.bf16.msra.mxu0 %v7046
    %7160 = vmatprep.subr.bf16.mxu0 %v7039
    %7161 = vmatpush1.bf16.msra.mxu0 %v7038
    %7162 = vmatprep.subr.bf16.mxu0 %v7031
    %7163 = vmatpush1.bf16.msra.mxu0 %v7030
    %7164 = vmatprep.subr.bf16.mxu0 %v7023
    %7165 = vmatpush1.bf16.msra.mxu0 %v7022
    %7166 = vmatprep.subr.bf16.mxu0 0
    %7167 = vmatpush2.bf16.msra.mxu0 0
    %7168 = vmatprep.subr.bf16.mxu0 0
    %7169 = vmatpush2.bf16.msra.mxu0 0
    %7170 = vmatprep.subr.bf16.mxu0 0
    %7171 = vmatpush2.bf16.msra.mxu0 0
    %7172 = vmatprep.subr.bf16.mxu0 0
    %7173 = vmatpush2.bf16.msra.mxu0 0
    %7174 = vmatprep.subr.bf16.mxu0 0
    %7175 = vmatpush2.bf16.msra.mxu0 0
    %7176 = vmatprep.subr.bf16.mxu0 0
    %7177 = vmatpush2.bf16.msra.mxu0 0
    %7178 = vmatprep.subr.bf16.mxu0 0
    %7179 = vmatpush2.bf16.msra.mxu0 0
    %7180 = vmatprep.subr.bf16.mxu0 0
    %7181 = vmatpush2.bf16.msra.mxu0 0
    %7182 = vmatprep.mubr.bf16.mxu0 0
    %7183 = vmatmul.mubr.bf16.gmra.mxu0 %v6764
    %v7184 = vpop.f32.mrf.mxu0
    %v7185 = vadd.f32 0.0, %v7184
    %v7186 = vpop.f32.mrf.mxu0
    %v7187 = vadd.f32 0.0, %v7186
    %v7188 = vpop.f32.mrf.mxu0
    %v7189 = vpop.f32.mrf.mxu0
    %7190 = vdwg.mxu0
    %7191 = vmatprep.subr.bf16.mxu0 %v7081
    %7192 = vmatpush1.bf16.msra.mxu0 %v7080
    %7193 = vmatprep.subr.bf16.mxu0 %v7073
    %7194 = vmatpush1.bf16.msra.mxu0 %v7072
    %7195 = vmatprep.subr.bf16.mxu0 %v7065
    %7196 = vmatpush1.bf16.msra.mxu0 %v7064
    %7197 = vmatprep.subr.bf16.mxu0 %v7057
    %7198 = vmatpush1.bf16.msra.mxu0 %v7056
    %7199 = vmatprep.subr.bf16.mxu0 %v7049
    %7200 = vmatpush1.bf16.msra.mxu0 %v7048
    %7201 = vmatprep.subr.bf16.mxu0 %v7041
    %7202 = vmatpush1.bf16.msra.mxu0 %v7040
    %7203 = vmatprep.subr.bf16.mxu0 %v7033
    %7204 = vmatpush1.bf16.msra.mxu0 %v7032
    %7205 = vmatprep.subr.bf16.mxu0 %v7025
    %7206 = vmatpush1.bf16.msra.mxu0 %v7024
    %7207 = vmatprep.subr.bf16.mxu0 0
    %7208 = vmatpush2.bf16.msra.mxu0 0
    %7209 = vmatprep.subr.bf16.mxu0 0
    %7210 = vmatpush2.bf16.msra.mxu0 0
    %7211 = vmatprep.subr.bf16.mxu0 0
    %7212 = vmatpush2.bf16.msra.mxu0 0
    %7213 = vmatprep.subr.bf16.mxu0 0
    %7214 = vmatpush2.bf16.msra.mxu0 0
    %7215 = vmatprep.subr.bf16.mxu0 0
    %7216 = vmatpush2.bf16.msra.mxu0 0
    %7217 = vmatprep.subr.bf16.mxu0 0
    %7218 = vmatpush2.bf16.msra.mxu0 0
    %7219 = vmatprep.subr.bf16.mxu0 0
    %7220 = vmatpush2.bf16.msra.mxu0 0
    %7221 = vmatprep.subr.bf16.mxu0 0
    %7222 = vmatpush2.bf16.msra.mxu0 0
    %7223 = vmatprep.mubr.bf16.mxu0 0
    %7224 = vmatmul.mubr.bf16.gmra.mxu0 %v6764
    %v7225 = vpop.f32.mrf.mxu0
    %v7226 = vadd.f32 0.0, %v7225
    %v7227 = vpop.f32.mrf.mxu0
    %v7228 = vadd.f32 0.0, %v7227
    %v7229 = vpop.f32.mrf.mxu0
    %v7230 = vpop.f32.mrf.mxu0
    %7231 = vdwg.mxu0
    %7232 = vmatprep.subr.bf16.mxu0 %v7083
    %7233 = vmatpush1.bf16.msra.mxu0 %v7082
    %7234 = vmatprep.subr.bf16.mxu0 %v7075
    %7235 = vmatpush1.bf16.msra.mxu0 %v7074
    %7236 = vmatprep.subr.bf16.mxu0 %v7067
    %7237 = vmatpush1.bf16.msra.mxu0 %v7066
    %7238 = vmatprep.subr.bf16.mxu0 %v7059
    %7239 = vmatpush1.bf16.msra.mxu0 %v7058
    %7240 = vmatprep.subr.bf16.mxu0 %v7051
    %7241 = vmatpush1.bf16.msra.mxu0 %v7050
    %7242 = vmatprep.subr.bf16.mxu0 %v7043
    %7243 = vmatpush1.bf16.msra.mxu0 %v7042
    %7244 = vmatprep.subr.bf16.mxu0 %v7035
    %7245 = vmatpush1.bf16.msra.mxu0 %v7034
    %7246 = vmatprep.subr.bf16.mxu0 %v7027
    %7247 = vmatpush1.bf16.msra.mxu0 %v7026
    %7248 = vmatprep.subr.bf16.mxu0 0
    %7249 = vmatpush2.bf16.msra.mxu0 0
    %7250 = vmatprep.subr.bf16.mxu0 0
    %7251 = vmatpush2.bf16.msra.mxu0 0
    %7252 = vmatprep.subr.bf16.mxu0 0
    %7253 = vmatpush2.bf16.msra.mxu0 0
    %7254 = vmatprep.subr.bf16.mxu0 0
    %7255 = vmatpush2.bf16.msra.mxu0 0
    %7256 = vmatprep.subr.bf16.mxu0 0
    %7257 = vmatpush2.bf16.msra.mxu0 0
    %7258 = vmatprep.subr.bf16.mxu0 0
    %7259 = vmatpush2.bf16.msra.mxu0 0
    %7260 = vmatprep.subr.bf16.mxu0 0
    %7261 = vmatpush2.bf16.msra.mxu0 0
    %7262 = vmatprep.subr.bf16.mxu0 0
    %7263 = vmatpush2.bf16.msra.mxu0 0
    %7264 = vmatprep.mubr.bf16.mxu0 0
    %7265 = vmatmul.mubr.bf16.gmra.mxu0 %v6764
    %v7266 = vpop.f32.mrf.mxu0
    %v7267 = vadd.f32 0.0, %v7266
    %v7268 = vpop.f32.mrf.mxu0
    %v7269 = vadd.f32 0.0, %v7268
    %v7270 = vpop.f32.mrf.mxu0
    %v7271 = vpop.f32.mrf.mxu0
    %7272 = vdwg.mxu0
    %7273 = vmatprep.subr.bf16.mxu0 %v7085
    %7274 = vmatpush1.bf16.msra.mxu0 %v7084
    %7275 = vmatprep.subr.bf16.mxu0 %v7077
    %7276 = vmatpush1.bf16.msra.mxu0 %v7076
    %7277 = vmatprep.subr.bf16.mxu0 %v7069
    %7278 = vmatpush1.bf16.msra.mxu0 %v7068
    %7279 = vmatprep.subr.bf16.mxu0 %v7061
    %7280 = vmatpush1.bf16.msra.mxu0 %v7060
    %7281 = vmatprep.subr.bf16.mxu0 %v7053
    %7282 = vmatpush1.bf16.msra.mxu0 %v7052
    %7283 = vmatprep.subr.bf16.mxu0 %v7045
    %7284 = vmatpush1.bf16.msra.mxu0 %v7044
    %7285 = vmatprep.subr.bf16.mxu0 %v7037
    %7286 = vmatpush1.bf16.msra.mxu0 %v7036
    %7287 = vmatprep.subr.bf16.mxu0 %v7029
    %7288 = vmatpush1.bf16.msra.mxu0 %v7028
    %7289 = vmatprep.subr.bf16.mxu0 0
    %7290 = vmatpush2.bf16.msra.mxu0 0
    %7291 = vmatprep.subr.bf16.mxu0 0
    %7292 = vmatpush2.bf16.msra.mxu0 0
    %7293 = vmatprep.subr.bf16.mxu0 0
    %7294 = vmatpush2.bf16.msra.mxu0 0
    %7295 = vmatprep.subr.bf16.mxu0 0
    %7296 = vmatpush2.bf16.msra.mxu0 0
    %7297 = vmatprep.subr.bf16.mxu0 0
    %7298 = vmatpush2.bf16.msra.mxu0 0
    %7299 = vmatprep.subr.bf16.mxu0 0
    %7300 = vmatpush2.bf16.msra.mxu0 0
    %7301 = vmatprep.subr.bf16.mxu0 0
    %7302 = vmatpush2.bf16.msra.mxu0 0
    %7303 = vmatprep.subr.bf16.mxu0 0
    %7304 = vmatpush2.bf16.msra.mxu0 0
    %7305 = vmatprep.mubr.bf16.mxu0 0
    %7306 = vmatmul.mubr.bf16.gmra.mxu0 %v6764
    %v7307 = vpop.f32.mrf.mxu0
    %v7308 = vadd.f32 0.0, %v7307
    %v7309 = vpop.f32.mrf.mxu0
    %v7310 = vadd.f32 0.0, %v7309
    %v7311 = vpop.f32.mrf.mxu0
    %v7312 = vpop.f32.mrf.mxu0
    %7313 = vdwg.mxu0
    %v7314 = vadd.f32 %v6751, %v7185
    %v7315 = vadd.f32 %v6752, %v7187
    %v7316 = vadd.f32 %v6753, %v7226
    %v7317 = vadd.f32 %v6754, %v7228
    %v7318 = vadd.f32 %v6755, %v7267
    %v7319 = vadd.f32 %v6756, %v7269
    %v7320 = vadd.f32 %v6757, %v7308
    %v7321 = vadd.f32 %v6758, %v7310
    %v7322 = vrot.slane %v327, 4
    %v7324 = vrot.slane %v585, 3
    %v7326 = vsel %vm589, %v7322, %v7324
    %v7327 = vpack.c.bf16 %v7326, %v7326
    %s7328 = scalar_lea.vmem [#allocation8], 6144
    %v7329 = vld [vmem:[%s7328] sm:$0xff]
    %v7330 = vld [vmem:[%s7328 + $0x8] sm:$0xff]
    %v7331 = vld [vmem:[%s7328 + $0x10] sm:$0xff]
    %v7332 = vld [vmem:[%s7328 + $0x18] sm:$0xff]
    %v7333 = vld [vmem:[%s7328 + $0x20] sm:$0xff]
    %v7334 = vld [vmem:[%s7328 + $0x28] sm:$0xff]
    %v7335 = vld [vmem:[%s7328 + $0x30] sm:$0xff]
    %v7336 = vld [vmem:[%s7328 + $0x38] sm:$0xff]
    %v7337 = vld [vmem:[%s7328 + $0x40] sm:$0xff]
    %v7338 = vld [vmem:[%s7328 + $0x48] sm:$0xff]
    %v7339 = vld [vmem:[%s7328 + $0x50] sm:$0xff]
    %v7340 = vld [vmem:[%s7328 + $0x58] sm:$0xff]
    %v7341 = vld [vmem:[%s7328 + $0x60] sm:$0xff]
    %v7342 = vld [vmem:[%s7328 + $0x68] sm:$0xff]
    %v7343 = vld [vmem:[%s7328 + $0x70] sm:$0xff]
    %v7344 = vld [vmem:[%s7328 + $0x78] sm:$0xff]
    %v7345 = vld [vmem:[%s7328 + $0x80] sm:$0xff]
    %v7346 = vld [vmem:[%s7328 + $0x88] sm:$0xff]
    %v7347 = vld [vmem:[%s7328 + $0x90] sm:$0xff]
    %v7348 = vld [vmem:[%s7328 + $0x98] sm:$0xff]
    %v7349 = vld [vmem:[%s7328 + $0xa0] sm:$0xff]
    %v7350 = vld [vmem:[%s7328 + $0xa8] sm:$0xff]
    %v7351 = vld [vmem:[%s7328 + $0xb0] sm:$0xff]
    %v7352 = vld [vmem:[%s7328 + $0xb8] sm:$0xff]
    %v7353 = vld [vmem:[%s7328 + $0xc0] sm:$0xff]
    %v7354 = vld [vmem:[%s7328 + $0xc8] sm:$0xff]
    %v7355 = vld [vmem:[%s7328 + $0xd0] sm:$0xff]
    %v7356 = vld [vmem:[%s7328 + $0xd8] sm:$0xff]
    %v7357 = vld [vmem:[%s7328 + $0xe0] sm:$0xff]
    %v7358 = vld [vmem:[%s7328 + $0xe8] sm:$0xff]
    %v7359 = vld [vmem:[%s7328 + $0xf0] sm:$0xff]
    %v7360 = vld [vmem:[%s7328 + $0xf8] sm:$0xff]
    %v7361 = vld [vmem:[%s7328 + $0x100] sm:$0xff]
    %v7362 = vld [vmem:[%s7328 + $0x108] sm:$0xff]
    %v7363 = vld [vmem:[%s7328 + $0x110] sm:$0xff]
    %v7364 = vld [vmem:[%s7328 + $0x118] sm:$0xff]
    %v7365 = vld [vmem:[%s7328 + $0x120] sm:$0xff]
    %v7366 = vld [vmem:[%s7328 + $0x128] sm:$0xff]
    %v7367 = vld [vmem:[%s7328 + $0x130] sm:$0xff]
    %v7368 = vld [vmem:[%s7328 + $0x138] sm:$0xff]
    %v7369 = vld [vmem:[%s7328 + $0x140] sm:$0xff]
    %v7370 = vld [vmem:[%s7328 + $0x148] sm:$0xff]
    %v7371 = vld [vmem:[%s7328 + $0x150] sm:$0xff]
    %v7372 = vld [vmem:[%s7328 + $0x158] sm:$0xff]
    %v7373 = vld [vmem:[%s7328 + $0x160] sm:$0xff]
    %v7374 = vld [vmem:[%s7328 + $0x168] sm:$0xff]
    %v7375 = vld [vmem:[%s7328 + $0x170] sm:$0xff]
    %v7376 = vld [vmem:[%s7328 + $0x178] sm:$0xff]
    %v7377 = vld [vmem:[%s7328 + $0x180] sm:$0xff]
    %v7378 = vld [vmem:[%s7328 + $0x188] sm:$0xff]
    %v7379 = vld [vmem:[%s7328 + $0x190] sm:$0xff]
    %v7380 = vld [vmem:[%s7328 + $0x198] sm:$0xff]
    %v7381 = vld [vmem:[%s7328 + $0x1a0] sm:$0xff]
    %v7382 = vld [vmem:[%s7328 + $0x1a8] sm:$0xff]
    %v7383 = vld [vmem:[%s7328 + $0x1b0] sm:$0xff]
    %v7384 = vld [vmem:[%s7328 + $0x1b8] sm:$0xff]
    %v7385 = vld [vmem:[%s7328 + $0x1c0] sm:$0xff]
    %v7386 = vld [vmem:[%s7328 + $0x1c8] sm:$0xff]
    %v7387 = vld [vmem:[%s7328 + $0x1d0] sm:$0xff]
    %v7388 = vld [vmem:[%s7328 + $0x1d8] sm:$0xff]
    %v7389 = vld [vmem:[%s7328 + $0x1e0] sm:$0xff]
    %v7390 = vld [vmem:[%s7328 + $0x1e8] sm:$0xff]
    %v7391 = vld [vmem:[%s7328 + $0x1f0] sm:$0xff]
    %v7392 = vld [vmem:[%s7328 + $0x1f8] sm:$0xff]
    %v7457 = vunpack.c.l.b16 %v7329
    %v7458 = vunpack.c.h.b16 %v7329
    %v7459 = vunpack.c.l.b16 %v7330
    %v7460 = vunpack.c.h.b16 %v7330
    %v7461 = vunpack.c.l.b16 %v7331
    %v7462 = vunpack.c.h.b16 %v7331
    %v7463 = vunpack.c.l.b16 %v7332
    %v7464 = vunpack.c.h.b16 %v7332
    %v7465 = vunpack.c.l.b16 %v7333
    %v7466 = vunpack.c.h.b16 %v7333
    %v7467 = vunpack.c.l.b16 %v7334
    %v7468 = vunpack.c.h.b16 %v7334
    %v7469 = vunpack.c.l.b16 %v7335
    %v7470 = vunpack.c.h.b16 %v7335
    %v7471 = vunpack.c.l.b16 %v7336
    %v7472 = vunpack.c.h.b16 %v7336
    %v7473 = vunpack.c.l.b16 %v7337
    %v7474 = vunpack.c.h.b16 %v7337
    %v7475 = vunpack.c.l.b16 %v7338
    %v7476 = vunpack.c.h.b16 %v7338
    %v7477 = vunpack.c.l.b16 %v7339
    %v7478 = vunpack.c.h.b16 %v7339
    %v7479 = vunpack.c.l.b16 %v7340
    %v7480 = vunpack.c.h.b16 %v7340
    %v7481 = vunpack.c.l.b16 %v7341
    %v7482 = vunpack.c.h.b16 %v7341
    %v7483 = vunpack.c.l.b16 %v7342
    %v7484 = vunpack.c.h.b16 %v7342
    %v7485 = vunpack.c.l.b16 %v7343
    %v7486 = vunpack.c.h.b16 %v7343
    %v7487 = vunpack.c.l.b16 %v7344
    %v7488 = vunpack.c.h.b16 %v7344
    %v7489 = vunpack.c.l.b16 %v7345
    %v7490 = vunpack.c.h.b16 %v7345
    %v7491 = vunpack.c.l.b16 %v7346
    %v7492 = vunpack.c.h.b16 %v7346
    %v7493 = vunpack.c.l.b16 %v7347
    %v7494 = vunpack.c.h.b16 %v7347
    %v7495 = vunpack.c.l.b16 %v7348
    %v7496 = vunpack.c.h.b16 %v7348
    %v7497 = vunpack.c.l.b16 %v7349
    %v7498 = vunpack.c.h.b16 %v7349
    %v7499 = vunpack.c.l.b16 %v7350
    %v7500 = vunpack.c.h.b16 %v7350
    %v7501 = vunpack.c.l.b16 %v7351
    %v7502 = vunpack.c.h.b16 %v7351
    %v7503 = vunpack.c.l.b16 %v7352
    %v7504 = vunpack.c.h.b16 %v7352
    %v7505 = vunpack.c.l.b16 %v7353
    %v7506 = vunpack.c.h.b16 %v7353
    %v7507 = vunpack.c.l.b16 %v7354
    %v7508 = vunpack.c.h.b16 %v7354
    %v7509 = vunpack.c.l.b16 %v7355
    %v7510 = vunpack.c.h.b16 %v7355
    %v7511 = vunpack.c.l.b16 %v7356
    %v7512 = vunpack.c.h.b16 %v7356
    %v7513 = vunpack.c.l.b16 %v7357
    %v7514 = vunpack.c.h.b16 %v7357
    %v7515 = vunpack.c.l.b16 %v7358
    %v7516 = vunpack.c.h.b16 %v7358
    %v7517 = vunpack.c.l.b16 %v7359
    %v7518 = vunpack.c.h.b16 %v7359
    %v7519 = vunpack.c.l.b16 %v7360
    %v7520 = vunpack.c.h.b16 %v7360
    %v7521 = vunpack.c.l.b16 %v7361
    %v7522 = vunpack.c.h.b16 %v7361
    %v7523 = vunpack.c.l.b16 %v7362
    %v7524 = vunpack.c.h.b16 %v7362
    %v7525 = vunpack.c.l.b16 %v7363
    %v7526 = vunpack.c.h.b16 %v7363
    %v7527 = vunpack.c.l.b16 %v7364
    %v7528 = vunpack.c.h.b16 %v7364
    %v7529 = vunpack.c.l.b16 %v7365
    %v7530 = vunpack.c.h.b16 %v7365
    %v7531 = vunpack.c.l.b16 %v7366
    %v7532 = vunpack.c.h.b16 %v7366
    %v7533 = vunpack.c.l.b16 %v7367
    %v7534 = vunpack.c.h.b16 %v7367
    %v7535 = vunpack.c.l.b16 %v7368
    %v7536 = vunpack.c.h.b16 %v7368
    %v7537 = vunpack.c.l.b16 %v7369
    %v7538 = vunpack.c.h.b16 %v7369
    %v7539 = vunpack.c.l.b16 %v7370
    %v7540 = vunpack.c.h.b16 %v7370
    %v7541 = vunpack.c.l.b16 %v7371
    %v7542 = vunpack.c.h.b16 %v7371
    %v7543 = vunpack.c.l.b16 %v7372
    %v7544 = vunpack.c.h.b16 %v7372
    %v7545 = vunpack.c.l.b16 %v7373
    %v7546 = vunpack.c.h.b16 %v7373
    %v7547 = vunpack.c.l.b16 %v7374
    %v7548 = vunpack.c.h.b16 %v7374
    %v7549 = vunpack.c.l.b16 %v7375
    %v7550 = vunpack.c.h.b16 %v7375
    %v7551 = vunpack.c.l.b16 %v7376
    %v7552 = vunpack.c.h.b16 %v7376
    %v7553 = vunpack.c.l.b16 %v7377
    %v7554 = vunpack.c.h.b16 %v7377
    %v7555 = vunpack.c.l.b16 %v7378
    %v7556 = vunpack.c.h.b16 %v7378
    %v7557 = vunpack.c.l.b16 %v7379
    %v7558 = vunpack.c.h.b16 %v7379
    %v7559 = vunpack.c.l.b16 %v7380
    %v7560 = vunpack.c.h.b16 %v7380
    %v7561 = vunpack.c.l.b16 %v7381
    %v7562 = vunpack.c.h.b16 %v7381
    %v7563 = vunpack.c.l.b16 %v7382
    %v7564 = vunpack.c.h.b16 %v7382
    %v7565 = vunpack.c.l.b16 %v7383
    %v7566 = vunpack.c.h.b16 %v7383
    %v7567 = vunpack.c.l.b16 %v7384
    %v7568 = vunpack.c.h.b16 %v7384
    %v7569 = vunpack.c.l.b16 %v7385
    %v7570 = vunpack.c.h.b16 %v7385
    %v7571 = vunpack.c.l.b16 %v7386
    %v7572 = vunpack.c.h.b16 %v7386
    %v7573 = vunpack.c.l.b16 %v7387
    %v7574 = vunpack.c.h.b16 %v7387
    %v7575 = vunpack.c.l.b16 %v7388
    %v7576 = vunpack.c.h.b16 %v7388
    %v7577 = vunpack.c.l.b16 %v7389
    %v7578 = vunpack.c.h.b16 %v7389
    %v7579 = vunpack.c.l.b16 %v7390
    %v7580 = vunpack.c.h.b16 %v7390
    %v7581 = vunpack.c.l.b16 %v7391
    %v7582 = vunpack.c.h.b16 %v7391
    %v7583 = vunpack.c.l.b16 %v7392
    %v7584 = vunpack.c.h.b16 %v7392
    %v7585 = vpack.c.b16 %v7465, %v7457
    %v7586 = vpack.c.b16 %v7466, %v7458
    %v7587 = vpack.c.b16 %v7467, %v7459
    %v7588 = vpack.c.b16 %v7468, %v7460
    %v7589 = vpack.c.b16 %v7469, %v7461
    %v7590 = vpack.c.b16 %v7470, %v7462
    %v7591 = vpack.c.b16 %v7471, %v7463
    %v7592 = vpack.c.b16 %v7472, %v7464
    %v7593 = vpack.c.b16 %v7481, %v7473
    %v7594 = vpack.c.b16 %v7482, %v7474
    %v7595 = vpack.c.b16 %v7483, %v7475
    %v7596 = vpack.c.b16 %v7484, %v7476
    %v7597 = vpack.c.b16 %v7485, %v7477
    %v7598 = vpack.c.b16 %v7486, %v7478
    %v7599 = vpack.c.b16 %v7487, %v7479
    %v7600 = vpack.c.b16 %v7488, %v7480
    %v7601 = vpack.c.b16 %v7497, %v7489
    %v7602 = vpack.c.b16 %v7498, %v7490
    %v7603 = vpack.c.b16 %v7499, %v7491
    %v7604 = vpack.c.b16 %v7500, %v7492
    %v7605 = vpack.c.b16 %v7501, %v7493
    %v7606 = vpack.c.b16 %v7502, %v7494
    %v7607 = vpack.c.b16 %v7503, %v7495
    %v7608 = vpack.c.b16 %v7504, %v7496
    %v7609 = vpack.c.b16 %v7513, %v7505
    %v7610 = vpack.c.b16 %v7514, %v7506
    %v7611 = vpack.c.b16 %v7515, %v7507
    %v7612 = vpack.c.b16 %v7516, %v7508
    %v7613 = vpack.c.b16 %v7517, %v7509
    %v7614 = vpack.c.b16 %v7518, %v7510
    %v7615 = vpack.c.b16 %v7519, %v7511
    %v7616 = vpack.c.b16 %v7520, %v7512
    %v7617 = vpack.c.b16 %v7529, %v7521
    %v7618 = vpack.c.b16 %v7530, %v7522
    %v7619 = vpack.c.b16 %v7531, %v7523
    %v7620 = vpack.c.b16 %v7532, %v7524
    %v7621 = vpack.c.b16 %v7533, %v7525
    %v7622 = vpack.c.b16 %v7534, %v7526
    %v7623 = vpack.c.b16 %v7535, %v7527
    %v7624 = vpack.c.b16 %v7536, %v7528
    %v7625 = vpack.c.b16 %v7545, %v7537
    %v7626 = vpack.c.b16 %v7546, %v7538
    %v7627 = vpack.c.b16 %v7547, %v7539
    %v7628 = vpack.c.b16 %v7548, %v7540
    %v7629 = vpack.c.b16 %v7549, %v7541
    %v7630 = vpack.c.b16 %v7550, %v7542
    %v7631 = vpack.c.b16 %v7551, %v7543
    %v7632 = vpack.c.b16 %v7552, %v7544
    %v7633 = vpack.c.b16 %v7561, %v7553
    %v7634 = vpack.c.b16 %v7562, %v7554
    %v7635 = vpack.c.b16 %v7563, %v7555
    %v7636 = vpack.c.b16 %v7564, %v7556
    %v7637 = vpack.c.b16 %v7565, %v7557
    %v7638 = vpack.c.b16 %v7566, %v7558
    %v7639 = vpack.c.b16 %v7567, %v7559
    %v7640 = vpack.c.b16 %v7568, %v7560
    %v7641 = vpack.c.b16 %v7577, %v7569
    %v7642 = vpack.c.b16 %v7578, %v7570
    %v7643 = vpack.c.b16 %v7579, %v7571
    %v7644 = vpack.c.b16 %v7580, %v7572
    %v7645 = vpack.c.b16 %v7581, %v7573
    %v7646 = vpack.c.b16 %v7582, %v7574
    %v7647 = vpack.c.b16 %v7583, %v7575
    %v7648 = vpack.c.b16 %v7584, %v7576
    %7713 = vmatprep.subr.bf16.mxu0 %v7642
    %7714 = vmatpush1.bf16.msra.mxu0 %v7641
    %7715 = vmatprep.subr.bf16.mxu0 %v7634
    %7716 = vmatpush1.bf16.msra.mxu0 %v7633
    %7717 = vmatprep.subr.bf16.mxu0 %v7626
    %7718 = vmatpush1.bf16.msra.mxu0 %v7625
    %7719 = vmatprep.subr.bf16.mxu0 %v7618
    %7720 = vmatpush1.bf16.msra.mxu0 %v7617
    %7721 = vmatprep.subr.bf16.mxu0 %v7610
    %7722 = vmatpush1.bf16.msra.mxu0 %v7609
    %7723 = vmatprep.subr.bf16.mxu0 %v7602
    %7724 = vmatpush1.bf16.msra.mxu0 %v7601
    %7725 = vmatprep.subr.bf16.mxu0 %v7594
    %7726 = vmatpush1.bf16.msra.mxu0 %v7593
    %7727 = vmatprep.subr.bf16.mxu0 %v7586
    %7728 = vmatpush1.bf16.msra.mxu0 %v7585
    %7729 = vmatprep.subr.bf16.mxu0 0
    %7730 = vmatpush2.bf16.msra.mxu0 0
    %7731 = vmatprep.subr.bf16.mxu0 0
    %7732 = vmatpush2.bf16.msra.mxu0 0
    %7733 = vmatprep.subr.bf16.mxu0 0
    %7734 = vmatpush2.bf16.msra.mxu0 0
    %7735 = vmatprep.subr.bf16.mxu0 0
    %7736 = vmatpush2.bf16.msra.mxu0 0
    %7737 = vmatprep.subr.bf16.mxu0 0
    %7738 = vmatpush2.bf16.msra.mxu0 0
    %7739 = vmatprep.subr.bf16.mxu0 0
    %7740 = vmatpush2.bf16.msra.mxu0 0
    %7741 = vmatprep.subr.bf16.mxu0 0
    %7742 = vmatpush2.bf16.msra.mxu0 0
    %7743 = vmatprep.subr.bf16.mxu0 0
    %7744 = vmatpush2.bf16.msra.mxu0 0
    %7745 = vmatprep.mubr.bf16.mxu0 0
    %7746 = vmatmul.mubr.bf16.gmra.mxu0 %v7327
    %v7747 = vpop.f32.mrf.mxu0
    %v7748 = vadd.f32 0.0, %v7747
    %v7749 = vpop.f32.mrf.mxu0
    %v7750 = vadd.f32 0.0, %v7749
    %v7751 = vpop.f32.mrf.mxu0
    %v7752 = vpop.f32.mrf.mxu0
    %7753 = vdwg.mxu0
    %7754 = vmatprep.subr.bf16.mxu0 %v7644
    %7755 = vmatpush1.bf16.msra.mxu0 %v7643
    %7756 = vmatprep.subr.bf16.mxu0 %v7636
    %7757 = vmatpush1.bf16.msra.mxu0 %v7635
    %7758 = vmatprep.subr.bf16.mxu0 %v7628
    %7759 = vmatpush1.bf16.msra.mxu0 %v7627
    %7760 = vmatprep.subr.bf16.mxu0 %v7620
    %7761 = vmatpush1.bf16.msra.mxu0 %v7619
    %7762 = vmatprep.subr.bf16.mxu0 %v7612
    %7763 = vmatpush1.bf16.msra.mxu0 %v7611
    %7764 = vmatprep.subr.bf16.mxu0 %v7604
    %7765 = vmatpush1.bf16.msra.mxu0 %v7603
    %7766 = vmatprep.subr.bf16.mxu0 %v7596
    %7767 = vmatpush1.bf16.msra.mxu0 %v7595
    %7768 = vmatprep.subr.bf16.mxu0 %v7588
    %7769 = vmatpush1.bf16.msra.mxu0 %v7587
    %7770 = vmatprep.subr.bf16.mxu0 0
    %7771 = vmatpush2.bf16.msra.mxu0 0
    %7772 = vmatprep.subr.bf16.mxu0 0
    %7773 = vmatpush2.bf16.msra.mxu0 0
    %7774 = vmatprep.subr.bf16.mxu0 0
    %7775 = vmatpush2.bf16.msra.mxu0 0
    %7776 = vmatprep.subr.bf16.mxu0 0
    %7777 = vmatpush2.bf16.msra.mxu0 0
    %7778 = vmatprep.subr.bf16.mxu0 0
    %7779 = vmatpush2.bf16.msra.mxu0 0
    %7780 = vmatprep.subr.bf16.mxu0 0
    %7781 = vmatpush2.bf16.msra.mxu0 0
    %7782 = vmatprep.subr.bf16.mxu0 0
    %7783 = vmatpush2.bf16.msra.mxu0 0
    %7784 = vmatprep.subr.bf16.mxu0 0
    %7785 = vmatpush2.bf16.msra.mxu0 0
    %7786 = vmatprep.mubr.bf16.mxu0 0
    %7787 = vmatmul.mubr.bf16.gmra.mxu0 %v7327
    %v7788 = vpop.f32.mrf.mxu0
    %v7789 = vadd.f32 0.0, %v7788
    %v7790 = vpop.f32.mrf.mxu0
    %v7791 = vadd.f32 0.0, %v7790
    %v7792 = vpop.f32.mrf.mxu0
    %v7793 = vpop.f32.mrf.mxu0
    %7794 = vdwg.mxu0
    %7795 = vmatprep.subr.bf16.mxu0 %v7646
    %7796 = vmatpush1.bf16.msra.mxu0 %v7645
    %7797 = vmatprep.subr.bf16.mxu0 %v7638
    %7798 = vmatpush1.bf16.msra.mxu0 %v7637
    %7799 = vmatprep.subr.bf16.mxu0 %v7630
    %7800 = vmatpush1.bf16.msra.mxu0 %v7629
    %7801 = vmatprep.subr.bf16.mxu0 %v7622
    %7802 = vmatpush1.bf16.msra.mxu0 %v7621
    %7803 = vmatprep.subr.bf16.mxu0 %v7614
    %7804 = vmatpush1.bf16.msra.mxu0 %v7613
    %7805 = vmatprep.subr.bf16.mxu0 %v7606
    %7806 = vmatpush1.bf16.msra.mxu0 %v7605
    %7807 = vmatprep.subr.bf16.mxu0 %v7598
    %7808 = vmatpush1.bf16.msra.mxu0 %v7597
    %7809 = vmatprep.subr.bf16.mxu0 %v7590
    %7810 = vmatpush1.bf16.msra.mxu0 %v7589
    %7811 = vmatprep.subr.bf16.mxu0 0
    %7812 = vmatpush2.bf16.msra.mxu0 0
    %7813 = vmatprep.subr.bf16.mxu0 0
    %7814 = vmatpush2.bf16.msra.mxu0 0
    %7815 = vmatprep.subr.bf16.mxu0 0
    %7816 = vmatpush2.bf16.msra.mxu0 0
    %7817 = vmatprep.subr.bf16.mxu0 0
    %7818 = vmatpush2.bf16.msra.mxu0 0
    %7819 = vmatprep.subr.bf16.mxu0 0
    %7820 = vmatpush2.bf16.msra.mxu0 0
    %7821 = vmatprep.subr.bf16.mxu0 0
    %7822 = vmatpush2.bf16.msra.mxu0 0
    %7823 = vmatprep.subr.bf16.mxu0 0
    %7824 = vmatpush2.bf16.msra.mxu0 0
    %7825 = vmatprep.subr.bf16.mxu0 0
    %7826 = vmatpush2.bf16.msra.mxu0 0
    %7827 = vmatprep.mubr.bf16.mxu0 0
    %7828 = vmatmul.mubr.bf16.gmra.mxu0 %v7327
    %v7829 = vpop.f32.mrf.mxu0
    %v7830 = vadd.f32 0.0, %v7829
    %v7831 = vpop.f32.mrf.mxu0
    %v7832 = vadd.f32 0.0, %v7831
    %v7833 = vpop.f32.mrf.mxu0
    %v7834 = vpop.f32.mrf.mxu0
    %7835 = vdwg.mxu0
    %7836 = vmatprep.subr.bf16.mxu0 %v7648
    %7837 = vmatpush1.bf16.msra.mxu0 %v7647
    %7838 = vmatprep.subr.bf16.mxu0 %v7640
    %7839 = vmatpush1.bf16.msra.mxu0 %v7639
    %7840 = vmatprep.subr.bf16.mxu0 %v7632
    %7841 = vmatpush1.bf16.msra.mxu0 %v7631
    %7842 = vmatprep.subr.bf16.mxu0 %v7624
    %7843 = vmatpush1.bf16.msra.mxu0 %v7623
    %7844 = vmatprep.subr.bf16.mxu0 %v7616
    %7845 = vmatpush1.bf16.msra.mxu0 %v7615
    %7846 = vmatprep.subr.bf16.mxu0 %v7608
    %7847 = vmatpush1.bf16.msra.mxu0 %v7607
    %7848 = vmatprep.subr.bf16.mxu0 %v7600
    %7849 = vmatpush1.bf16.msra.mxu0 %v7599
    %7850 = vmatprep.subr.bf16.mxu0 %v7592
    %7851 = vmatpush1.bf16.msra.mxu0 %v7591
    %7852 = vmatprep.subr.bf16.mxu0 0
    %7853 = vmatpush2.bf16.msra.mxu0 0
    %7854 = vmatprep.subr.bf16.mxu0 0
    %7855 = vmatpush2.bf16.msra.mxu0 0
    %7856 = vmatprep.subr.bf16.mxu0 0
    %7857 = vmatpush2.bf16.msra.mxu0 0
    %7858 = vmatprep.subr.bf16.mxu0 0
    %7859 = vmatpush2.bf16.msra.mxu0 0
    %7860 = vmatprep.subr.bf16.mxu0 0
    %7861 = vmatpush2.bf16.msra.mxu0 0
    %7862 = vmatprep.subr.bf16.mxu0 0
    %7863 = vmatpush2.bf16.msra.mxu0 0
    %7864 = vmatprep.subr.bf16.mxu0 0
    %7865 = vmatpush2.bf16.msra.mxu0 0
    %7866 = vmatprep.subr.bf16.mxu0 0
    %7867 = vmatpush2.bf16.msra.mxu0 0
    %7868 = vmatprep.mubr.bf16.mxu0 0
    %7869 = vmatmul.mubr.bf16.gmra.mxu0 %v7327
    %v7870 = vpop.f32.mrf.mxu0
    %v7871 = vadd.f32 0.0, %v7870
    %v7872 = vpop.f32.mrf.mxu0
    %v7873 = vadd.f32 0.0, %v7872
    %v7874 = vpop.f32.mrf.mxu0
    %v7875 = vpop.f32.mrf.mxu0
    %7876 = vdwg.mxu0
    %v7877 = vadd.f32 %v7314, %v7748
    %v7878 = vadd.f32 %v7315, %v7750
    %v7879 = vadd.f32 %v7316, %v7789
    %v7880 = vadd.f32 %v7317, %v7791
    %v7881 = vadd.f32 %v7318, %v7830
    %v7882 = vadd.f32 %v7319, %v7832
    %v7883 = vadd.f32 %v7320, %v7871
    %v7884 = vadd.f32 %v7321, %v7873
    %v7885 = vrot.slane %v327, 5
    %v7887 = vrot.slane %v585, 4
    %v7889 = vsel %vm589, %v7885, %v7887
    %v7890 = vpack.c.bf16 %v7889, %v7889
    %s7891 = scalar_lea.vmem [#allocation8], 6656
    %v7892 = vld [vmem:[%s7891] sm:$0xff]
    %v7893 = vld [vmem:[%s7891 + $0x8] sm:$0xff]
    %v7894 = vld [vmem:[%s7891 + $0x10] sm:$0xff]
    %v7895 = vld [vmem:[%s7891 + $0x18] sm:$0xff]
    %v7896 = vld [vmem:[%s7891 + $0x20] sm:$0xff]
    %v7897 = vld [vmem:[%s7891 + $0x28] sm:$0xff]
    %v7898 = vld [vmem:[%s7891 + $0x30] sm:$0xff]
    %v7899 = vld [vmem:[%s7891 + $0x38] sm:$0xff]
    %v7900 = vld [vmem:[%s7891 + $0x40] sm:$0xff]
    %v7901 = vld [vmem:[%s7891 + $0x48] sm:$0xff]
    %v7902 = vld [vmem:[%s7891 + $0x50] sm:$0xff]
    %v7903 = vld [vmem:[%s7891 + $0x58] sm:$0xff]
    %v7904 = vld [vmem:[%s7891 + $0x60] sm:$0xff]
    %v7905 = vld [vmem:[%s7891 + $0x68] sm:$0xff]
    %v7906 = vld [vmem:[%s7891 + $0x70] sm:$0xff]
    %v7907 = vld [vmem:[%s7891 + $0x78] sm:$0xff]
    %v7908 = vld [vmem:[%s7891 + $0x80] sm:$0xff]
    %v7909 = vld [vmem:[%s7891 + $0x88] sm:$0xff]
    %v7910 = vld [vmem:[%s7891 + $0x90] sm:$0xff]
    %v7911 = vld [vmem:[%s7891 + $0x98] sm:$0xff]
    %v7912 = vld [vmem:[%s7891 + $0xa0] sm:$0xff]
    %v7913 = vld [vmem:[%s7891 + $0xa8] sm:$0xff]
    %v7914 = vld [vmem:[%s7891 + $0xb0] sm:$0xff]
    %v7915 = vld [vmem:[%s7891 + $0xb8] sm:$0xff]
    %v7916 = vld [vmem:[%s7891 + $0xc0] sm:$0xff]
    %v7917 = vld [vmem:[%s7891 + $0xc8] sm:$0xff]
    %v7918 = vld [vmem:[%s7891 + $0xd0] sm:$0xff]
    %v7919 = vld [vmem:[%s7891 + $0xd8] sm:$0xff]
    %v7920 = vld [vmem:[%s7891 + $0xe0] sm:$0xff]
    %v7921 = vld [vmem:[%s7891 + $0xe8] sm:$0xff]
    %v7922 = vld [vmem:[%s7891 + $0xf0] sm:$0xff]
    %v7923 = vld [vmem:[%s7891 + $0xf8] sm:$0xff]
    %v7924 = vld [vmem:[%s7891 + $0x100] sm:$0xff]
    %v7925 = vld [vmem:[%s7891 + $0x108] sm:$0xff]
    %v7926 = vld [vmem:[%s7891 + $0x110] sm:$0xff]
    %v7927 = vld [vmem:[%s7891 + $0x118] sm:$0xff]
    %v7928 = vld [vmem:[%s7891 + $0x120] sm:$0xff]
    %v7929 = vld [vmem:[%s7891 + $0x128] sm:$0xff]
    %v7930 = vld [vmem:[%s7891 + $0x130] sm:$0xff]
    %v7931 = vld [vmem:[%s7891 + $0x138] sm:$0xff]
    %v7932 = vld [vmem:[%s7891 + $0x140] sm:$0xff]
    %v7933 = vld [vmem:[%s7891 + $0x148] sm:$0xff]
    %v7934 = vld [vmem:[%s7891 + $0x150] sm:$0xff]
    %v7935 = vld [vmem:[%s7891 + $0x158] sm:$0xff]
    %v7936 = vld [vmem:[%s7891 + $0x160] sm:$0xff]
    %v7937 = vld [vmem:[%s7891 + $0x168] sm:$0xff]
    %v7938 = vld [vmem:[%s7891 + $0x170] sm:$0xff]
    %v7939 = vld [vmem:[%s7891 + $0x178] sm:$0xff]
    %v7940 = vld [vmem:[%s7891 + $0x180] sm:$0xff]
    %v7941 = vld [vmem:[%s7891 + $0x188] sm:$0xff]
    %v7942 = vld [vmem:[%s7891 + $0x190] sm:$0xff]
    %v7943 = vld [vmem:[%s7891 + $0x198] sm:$0xff]
    %v7944 = vld [vmem:[%s7891 + $0x1a0] sm:$0xff]
    %v7945 = vld [vmem:[%s7891 + $0x1a8] sm:$0xff]
    %v7946 = vld [vmem:[%s7891 + $0x1b0] sm:$0xff]
    %v7947 = vld [vmem:[%s7891 + $0x1b8] sm:$0xff]
    %v7948 = vld [vmem:[%s7891 + $0x1c0] sm:$0xff]
    %v7949 = vld [vmem:[%s7891 + $0x1c8] sm:$0xff]
    %v7950 = vld [vmem:[%s7891 + $0x1d0] sm:$0xff]
    %v7951 = vld [vmem:[%s7891 + $0x1d8] sm:$0xff]
    %v7952 = vld [vmem:[%s7891 + $0x1e0] sm:$0xff]
    %v7953 = vld [vmem:[%s7891 + $0x1e8] sm:$0xff]
    %v7954 = vld [vmem:[%s7891 + $0x1f0] sm:$0xff]
    %v7955 = vld [vmem:[%s7891 + $0x1f8] sm:$0xff]
    %v8020 = vunpack.c.l.b16 %v7892
    %v8021 = vunpack.c.h.b16 %v7892
    %v8022 = vunpack.c.l.b16 %v7893
    %v8023 = vunpack.c.h.b16 %v7893
    %v8024 = vunpack.c.l.b16 %v7894
    %v8025 = vunpack.c.h.b16 %v7894
    %v8026 = vunpack.c.l.b16 %v7895
    %v8027 = vunpack.c.h.b16 %v7895
    %v8028 = vunpack.c.l.b16 %v7896
    %v8029 = vunpack.c.h.b16 %v7896
    %v8030 = vunpack.c.l.b16 %v7897
    %v8031 = vunpack.c.h.b16 %v7897
    %v8032 = vunpack.c.l.b16 %v7898
    %v8033 = vunpack.c.h.b16 %v7898
    %v8034 = vunpack.c.l.b16 %v7899
    %v8035 = vunpack.c.h.b16 %v7899
    %v8036 = vunpack.c.l.b16 %v7900
    %v8037 = vunpack.c.h.b16 %v7900
    %v8038 = vunpack.c.l.b16 %v7901
    %v8039 = vunpack.c.h.b16 %v7901
    %v8040 = vunpack.c.l.b16 %v7902
    %v8041 = vunpack.c.h.b16 %v7902
    %v8042 = vunpack.c.l.b16 %v7903
    %v8043 = vunpack.c.h.b16 %v7903
    %v8044 = vunpack.c.l.b16 %v7904
    %v8045 = vunpack.c.h.b16 %v7904
    %v8046 = vunpack.c.l.b16 %v7905
    %v8047 = vunpack.c.h.b16 %v7905
    %v8048 = vunpack.c.l.b16 %v7906
    %v8049 = vunpack.c.h.b16 %v7906
    %v8050 = vunpack.c.l.b16 %v7907
    %v8051 = vunpack.c.h.b16 %v7907
    %v8052 = vunpack.c.l.b16 %v7908
    %v8053 = vunpack.c.h.b16 %v7908
    %v8054 = vunpack.c.l.b16 %v7909
    %v8055 = vunpack.c.h.b16 %v7909
    %v8056 = vunpack.c.l.b16 %v7910
    %v8057 = vunpack.c.h.b16 %v7910
    %v8058 = vunpack.c.l.b16 %v7911
    %v8059 = vunpack.c.h.b16 %v7911
    %v8060 = vunpack.c.l.b16 %v7912
    %v8061 = vunpack.c.h.b16 %v7912
    %v8062 = vunpack.c.l.b16 %v7913
    %v8063 = vunpack.c.h.b16 %v7913
    %v8064 = vunpack.c.l.b16 %v7914
    %v8065 = vunpack.c.h.b16 %v7914
    %v8066 = vunpack.c.l.b16 %v7915
    %v8067 = vunpack.c.h.b16 %v7915
    %v8068 = vunpack.c.l.b16 %v7916
    %v8069 = vunpack.c.h.b16 %v7916
    %v8070 = vunpack.c.l.b16 %v7917
    %v8071 = vunpack.c.h.b16 %v7917
    %v8072 = vunpack.c.l.b16 %v7918
    %v8073 = vunpack.c.h.b16 %v7918
    %v8074 = vunpack.c.l.b16 %v7919
    %v8075 = vunpack.c.h.b16 %v7919
    %v8076 = vunpack.c.l.b16 %v7920
    %v8077 = vunpack.c.h.b16 %v7920
    %v8078 = vunpack.c.l.b16 %v7921
    %v8079 = vunpack.c.h.b16 %v7921
    %v8080 = vunpack.c.l.b16 %v7922
    %v8081 = vunpack.c.h.b16 %v7922
    %v8082 = vunpack.c.l.b16 %v7923
    %v8083 = vunpack.c.h.b16 %v7923
    %v8084 = vunpack.c.l.b16 %v7924
    %v8085 = vunpack.c.h.b16 %v7924
    %v8086 = vunpack.c.l.b16 %v7925
    %v8087 = vunpack.c.h.b16 %v7925
    %v8088 = vunpack.c.l.b16 %v7926
    %v8089 = vunpack.c.h.b16 %v7926
    %v8090 = vunpack.c.l.b16 %v7927
    %v8091 = vunpack.c.h.b16 %v7927
    %v8092 = vunpack.c.l.b16 %v7928
    %v8093 = vunpack.c.h.b16 %v7928
    %v8094 = vunpack.c.l.b16 %v7929
    %v8095 = vunpack.c.h.b16 %v7929
    %v8096 = vunpack.c.l.b16 %v7930
    %v8097 = vunpack.c.h.b16 %v7930
    %v8098 = vunpack.c.l.b16 %v7931
    %v8099 = vunpack.c.h.b16 %v7931
    %v8100 = vunpack.c.l.b16 %v7932
    %v8101 = vunpack.c.h.b16 %v7932
    %v8102 = vunpack.c.l.b16 %v7933
    %v8103 = vunpack.c.h.b16 %v7933
    %v8104 = vunpack.c.l.b16 %v7934
    %v8105 = vunpack.c.h.b16 %v7934
    %v8106 = vunpack.c.l.b16 %v7935
    %v8107 = vunpack.c.h.b16 %v7935
    %v8108 = vunpack.c.l.b16 %v7936
    %v8109 = vunpack.c.h.b16 %v7936
    %v8110 = vunpack.c.l.b16 %v7937
    %v8111 = vunpack.c.h.b16 %v7937
    %v8112 = vunpack.c.l.b16 %v7938
    %v8113 = vunpack.c.h.b16 %v7938
    %v8114 = vunpack.c.l.b16 %v7939
    %v8115 = vunpack.c.h.b16 %v7939
    %v8116 = vunpack.c.l.b16 %v7940
    %v8117 = vunpack.c.h.b16 %v7940
    %v8118 = vunpack.c.l.b16 %v7941
    %v8119 = vunpack.c.h.b16 %v7941
    %v8120 = vunpack.c.l.b16 %v7942
    %v8121 = vunpack.c.h.b16 %v7942
    %v8122 = vunpack.c.l.b16 %v7943
    %v8123 = vunpack.c.h.b16 %v7943
    %v8124 = vunpack.c.l.b16 %v7944
    %v8125 = vunpack.c.h.b16 %v7944
    %v8126 = vunpack.c.l.b16 %v7945
    %v8127 = vunpack.c.h.b16 %v7945
    %v8128 = vunpack.c.l.b16 %v7946
    %v8129 = vunpack.c.h.b16 %v7946
    %v8130 = vunpack.c.l.b16 %v7947
    %v8131 = vunpack.c.h.b16 %v7947
    %v8132 = vunpack.c.l.b16 %v7948
    %v8133 = vunpack.c.h.b16 %v7948
    %v8134 = vunpack.c.l.b16 %v7949
    %v8135 = vunpack.c.h.b16 %v7949
    %v8136 = vunpack.c.l.b16 %v7950
    %v8137 = vunpack.c.h.b16 %v7950
    %v8138 = vunpack.c.l.b16 %v7951
    %v8139 = vunpack.c.h.b16 %v7951
    %v8140 = vunpack.c.l.b16 %v7952
    %v8141 = vunpack.c.h.b16 %v7952
    %v8142 = vunpack.c.l.b16 %v7953
    %v8143 = vunpack.c.h.b16 %v7953
    %v8144 = vunpack.c.l.b16 %v7954
    %v8145 = vunpack.c.h.b16 %v7954
    %v8146 = vunpack.c.l.b16 %v7955
    %v8147 = vunpack.c.h.b16 %v7955
    %v8148 = vpack.c.b16 %v8028, %v8020
    %v8149 = vpack.c.b16 %v8029, %v8021
    %v8150 = vpack.c.b16 %v8030, %v8022
    %v8151 = vpack.c.b16 %v8031, %v8023
    %v8152 = vpack.c.b16 %v8032, %v8024
    %v8153 = vpack.c.b16 %v8033, %v8025
    %v8154 = vpack.c.b16 %v8034, %v8026
    %v8155 = vpack.c.b16 %v8035, %v8027
    %v8156 = vpack.c.b16 %v8044, %v8036
    %v8157 = vpack.c.b16 %v8045, %v8037
    %v8158 = vpack.c.b16 %v8046, %v8038
    %v8159 = vpack.c.b16 %v8047, %v8039
    %v8160 = vpack.c.b16 %v8048, %v8040
    %v8161 = vpack.c.b16 %v8049, %v8041
    %v8162 = vpack.c.b16 %v8050, %v8042
    %v8163 = vpack.c.b16 %v8051, %v8043
    %v8164 = vpack.c.b16 %v8060, %v8052
    %v8165 = vpack.c.b16 %v8061, %v8053
    %v8166 = vpack.c.b16 %v8062, %v8054
    %v8167 = vpack.c.b16 %v8063, %v8055
    %v8168 = vpack.c.b16 %v8064, %v8056
    %v8169 = vpack.c.b16 %v8065, %v8057
    %v8170 = vpack.c.b16 %v8066, %v8058
    %v8171 = vpack.c.b16 %v8067, %v8059
    %v8172 = vpack.c.b16 %v8076, %v8068
    %v8173 = vpack.c.b16 %v8077, %v8069
    %v8174 = vpack.c.b16 %v8078, %v8070
    %v8175 = vpack.c.b16 %v8079, %v8071
    %v8176 = vpack.c.b16 %v8080, %v8072
    %v8177 = vpack.c.b16 %v8081, %v8073
    %v8178 = vpack.c.b16 %v8082, %v8074
    %v8179 = vpack.c.b16 %v8083, %v8075
    %v8180 = vpack.c.b16 %v8092, %v8084
    %v8181 = vpack.c.b16 %v8093, %v8085
    %v8182 = vpack.c.b16 %v8094, %v8086
    %v8183 = vpack.c.b16 %v8095, %v8087
    %v8184 = vpack.c.b16 %v8096, %v8088
    %v8185 = vpack.c.b16 %v8097, %v8089
    %v8186 = vpack.c.b16 %v8098, %v8090
    %v8187 = vpack.c.b16 %v8099, %v8091
    %v8188 = vpack.c.b16 %v8108, %v8100
    %v8189 = vpack.c.b16 %v8109, %v8101
    %v8190 = vpack.c.b16 %v8110, %v8102
    %v8191 = vpack.c.b16 %v8111, %v8103
    %v8192 = vpack.c.b16 %v8112, %v8104
    %v8193 = vpack.c.b16 %v8113, %v8105
    %v8194 = vpack.c.b16 %v8114, %v8106
    %v8195 = vpack.c.b16 %v8115, %v8107
    %v8196 = vpack.c.b16 %v8124, %v8116
    %v8197 = vpack.c.b16 %v8125, %v8117
    %v8198 = vpack.c.b16 %v8126, %v8118
    %v8199 = vpack.c.b16 %v8127, %v8119
    %v8200 = vpack.c.b16 %v8128, %v8120
    %v8201 = vpack.c.b16 %v8129, %v8121
    %v8202 = vpack.c.b16 %v8130, %v8122
    %v8203 = vpack.c.b16 %v8131, %v8123
    %v8204 = vpack.c.b16 %v8140, %v8132
    %v8205 = vpack.c.b16 %v8141, %v8133
    %v8206 = vpack.c.b16 %v8142, %v8134
    %v8207 = vpack.c.b16 %v8143, %v8135
    %v8208 = vpack.c.b16 %v8144, %v8136
    %v8209 = vpack.c.b16 %v8145, %v8137
    %v8210 = vpack.c.b16 %v8146, %v8138
    %v8211 = vpack.c.b16 %v8147, %v8139
    %8276 = vmatprep.subr.bf16.mxu0 %v8205
    %8277 = vmatpush1.bf16.msra.mxu0 %v8204
    %8278 = vmatprep.subr.bf16.mxu0 %v8197
    %8279 = vmatpush1.bf16.msra.mxu0 %v8196
    %8280 = vmatprep.subr.bf16.mxu0 %v8189
    %8281 = vmatpush1.bf16.msra.mxu0 %v8188
    %8282 = vmatprep.subr.bf16.mxu0 %v8181
    %8283 = vmatpush1.bf16.msra.mxu0 %v8180
    %8284 = vmatprep.subr.bf16.mxu0 %v8173
    %8285 = vmatpush1.bf16.msra.mxu0 %v8172
    %8286 = vmatprep.subr.bf16.mxu0 %v8165
    %8287 = vmatpush1.bf16.msra.mxu0 %v8164
    %8288 = vmatprep.subr.bf16.mxu0 %v8157
    %8289 = vmatpush1.bf16.msra.mxu0 %v8156
    %8290 = vmatprep.subr.bf16.mxu0 %v8149
    %8291 = vmatpush1.bf16.msra.mxu0 %v8148
    %8292 = vmatprep.subr.bf16.mxu0 0
    %8293 = vmatpush2.bf16.msra.mxu0 0
    %8294 = vmatprep.subr.bf16.mxu0 0
    %8295 = vmatpush2.bf16.msra.mxu0 0
    %8296 = vmatprep.subr.bf16.mxu0 0
    %8297 = vmatpush2.bf16.msra.mxu0 0
    %8298 = vmatprep.subr.bf16.mxu0 0
    %8299 = vmatpush2.bf16.msra.mxu0 0
    %8300 = vmatprep.subr.bf16.mxu0 0
    %8301 = vmatpush2.bf16.msra.mxu0 0
    %8302 = vmatprep.subr.bf16.mxu0 0
    %8303 = vmatpush2.bf16.msra.mxu0 0
    %8304 = vmatprep.subr.bf16.mxu0 0
    %8305 = vmatpush2.bf16.msra.mxu0 0
    %8306 = vmatprep.subr.bf16.mxu0 0
    %8307 = vmatpush2.bf16.msra.mxu0 0
    %8308 = vmatprep.mubr.bf16.mxu0 0
    %8309 = vmatmul.mubr.bf16.gmra.mxu0 %v7890
    %v8310 = vpop.f32.mrf.mxu0
    %v8311 = vadd.f32 0.0, %v8310
    %v8312 = vpop.f32.mrf.mxu0
    %v8313 = vadd.f32 0.0, %v8312
    %v8314 = vpop.f32.mrf.mxu0
    %v8315 = vpop.f32.mrf.mxu0
    %8316 = vdwg.mxu0
    %8317 = vmatprep.subr.bf16.mxu0 %v8207
    %8318 = vmatpush1.bf16.msra.mxu0 %v8206
    %8319 = vmatprep.subr.bf16.mxu0 %v8199
    %8320 = vmatpush1.bf16.msra.mxu0 %v8198
    %8321 = vmatprep.subr.bf16.mxu0 %v8191
    %8322 = vmatpush1.bf16.msra.mxu0 %v8190
    %8323 = vmatprep.subr.bf16.mxu0 %v8183
    %8324 = vmatpush1.bf16.msra.mxu0 %v8182
    %8325 = vmatprep.subr.bf16.mxu0 %v8175
    %8326 = vmatpush1.bf16.msra.mxu0 %v8174
    %8327 = vmatprep.subr.bf16.mxu0 %v8167
    %8328 = vmatpush1.bf16.msra.mxu0 %v8166
    %8329 = vmatprep.subr.bf16.mxu0 %v8159
    %8330 = vmatpush1.bf16.msra.mxu0 %v8158
    %8331 = vmatprep.subr.bf16.mxu0 %v8151
    %8332 = vmatpush1.bf16.msra.mxu0 %v8150
    %8333 = vmatprep.subr.bf16.mxu0 0
    %8334 = vmatpush2.bf16.msra.mxu0 0
    %8335 = vmatprep.subr.bf16.mxu0 0
    %8336 = vmatpush2.bf16.msra.mxu0 0
    %8337 = vmatprep.subr.bf16.mxu0 0
    %8338 = vmatpush2.bf16.msra.mxu0 0
    %8339 = vmatprep.subr.bf16.mxu0 0
    %8340 = vmatpush2.bf16.msra.mxu0 0
    %8341 = vmatprep.subr.bf16.mxu0 0
    %8342 = vmatpush2.bf16.msra.mxu0 0
    %8343 = vmatprep.subr.bf16.mxu0 0
    %8344 = vmatpush2.bf16.msra.mxu0 0
    %8345 = vmatprep.subr.bf16.mxu0 0
    %8346 = vmatpush2.bf16.msra.mxu0 0
    %8347 = vmatprep.subr.bf16.mxu0 0
    %8348 = vmatpush2.bf16.msra.mxu0 0
    %8349 = vmatprep.mubr.bf16.mxu0 0
    %8350 = vmatmul.mubr.bf16.gmra.mxu0 %v7890
    %v8351 = vpop.f32.mrf.mxu0
    %v8352 = vadd.f32 0.0, %v8351
    %v8353 = vpop.f32.mrf.mxu0
    %v8354 = vadd.f32 0.0, %v8353
    %v8355 = vpop.f32.mrf.mxu0
    %v8356 = vpop.f32.mrf.mxu0
    %8357 = vdwg.mxu0
    %8358 = vmatprep.subr.bf16.mxu0 %v8209
    %8359 = vmatpush1.bf16.msra.mxu0 %v8208
    %8360 = vmatprep.subr.bf16.mxu0 %v8201
    %8361 = vmatpush1.bf16.msra.mxu0 %v8200
    %8362 = vmatprep.subr.bf16.mxu0 %v8193
    %8363 = vmatpush1.bf16.msra.mxu0 %v8192
    %8364 = vmatprep.subr.bf16.mxu0 %v8185
    %8365 = vmatpush1.bf16.msra.mxu0 %v8184
    %8366 = vmatprep.subr.bf16.mxu0 %v8177
    %8367 = vmatpush1.bf16.msra.mxu0 %v8176
    %8368 = vmatprep.subr.bf16.mxu0 %v8169
    %8369 = vmatpush1.bf16.msra.mxu0 %v8168
    %8370 = vmatprep.subr.bf16.mxu0 %v8161
    %8371 = vmatpush1.bf16.msra.mxu0 %v8160
    %8372 = vmatprep.subr.bf16.mxu0 %v8153
    %8373 = vmatpush1.bf16.msra.mxu0 %v8152
    %8374 = vmatprep.subr.bf16.mxu0 0
    %8375 = vmatpush2.bf16.msra.mxu0 0
    %8376 = vmatprep.subr.bf16.mxu0 0
    %8377 = vmatpush2.bf16.msra.mxu0 0
    %8378 = vmatprep.subr.bf16.mxu0 0
    %8379 = vmatpush2.bf16.msra.mxu0 0
    %8380 = vmatprep.subr.bf16.mxu0 0
    %8381 = vmatpush2.bf16.msra.mxu0 0
    %8382 = vmatprep.subr.bf16.mxu0 0
    %8383 = vmatpush2.bf16.msra.mxu0 0
    %8384 = vmatprep.subr.bf16.mxu0 0
    %8385 = vmatpush2.bf16.msra.mxu0 0
    %8386 = vmatprep.subr.bf16.mxu0 0
    %8387 = vmatpush2.bf16.msra.mxu0 0
    %8388 = vmatprep.subr.bf16.mxu0 0
    %8389 = vmatpush2.bf16.msra.mxu0 0
    %8390 = vmatprep.mubr.bf16.mxu0 0
    %8391 = vmatmul.mubr.bf16.gmra.mxu0 %v7890
    %v8392 = vpop.f32.mrf.mxu0
    %v8393 = vadd.f32 0.0, %v8392
    %v8394 = vpop.f32.mrf.mxu0
    %v8395 = vadd.f32 0.0, %v8394
    %v8396 = vpop.f32.mrf.mxu0
    %v8397 = vpop.f32.mrf.mxu0
    %8398 = vdwg.mxu0
    %8399 = vmatprep.subr.bf16.mxu0 %v8211
    %8400 = vmatpush1.bf16.msra.mxu0 %v8210
    %8401 = vmatprep.subr.bf16.mxu0 %v8203
    %8402 = vmatpush1.bf16.msra.mxu0 %v8202
    %8403 = vmatprep.subr.bf16.mxu0 %v8195
    %8404 = vmatpush1.bf16.msra.mxu0 %v8194
    %8405 = vmatprep.subr.bf16.mxu0 %v8187
    %8406 = vmatpush1.bf16.msra.mxu0 %v8186
    %8407 = vmatprep.subr.bf16.mxu0 %v8179
    %8408 = vmatpush1.bf16.msra.mxu0 %v8178
    %8409 = vmatprep.subr.bf16.mxu0 %v8171
    %8410 = vmatpush1.bf16.msra.mxu0 %v8170
    %8411 = vmatprep.subr.bf16.mxu0 %v8163
    %8412 = vmatpush1.bf16.msra.mxu0 %v8162
    %8413 = vmatprep.subr.bf16.mxu0 %v8155
    %8414 = vmatpush1.bf16.msra.mxu0 %v8154
    %8415 = vmatprep.subr.bf16.mxu0 0
    %8416 = vmatpush2.bf16.msra.mxu0 0
    %8417 = vmatprep.subr.bf16.mxu0 0
    %8418 = vmatpush2.bf16.msra.mxu0 0
    %8419 = vmatprep.subr.bf16.mxu0 0
    %8420 = vmatpush2.bf16.msra.mxu0 0
    %8421 = vmatprep.subr.bf16.mxu0 0
    %8422 = vmatpush2.bf16.msra.mxu0 0
    %8423 = vmatprep.subr.bf16.mxu0 0
    %8424 = vmatpush2.bf16.msra.mxu0 0
    %8425 = vmatprep.subr.bf16.mxu0 0
    %8426 = vmatpush2.bf16.msra.mxu0 0
    %8427 = vmatprep.subr.bf16.mxu0 0
    %8428 = vmatpush2.bf16.msra.mxu0 0
    %8429 = vmatprep.subr.bf16.mxu0 0
    %8430 = vmatpush2.bf16.msra.mxu0 0
    %8431 = vmatprep.mubr.bf16.mxu0 0
    %8432 = vmatmul.mubr.bf16.gmra.mxu0 %v7890
    %v8433 = vpop.f32.mrf.mxu0
    %v8434 = vadd.f32 0.0, %v8433
    %v8435 = vpop.f32.mrf.mxu0
    %v8436 = vadd.f32 0.0, %v8435
    %v8437 = vpop.f32.mrf.mxu0
    %v8438 = vpop.f32.mrf.mxu0
    %8439 = vdwg.mxu0
    %v8440 = vadd.f32 %v7877, %v8311
    %v8441 = vadd.f32 %v7878, %v8313
    %v8442 = vadd.f32 %v7879, %v8352
    %v8443 = vadd.f32 %v7880, %v8354
    %v8444 = vadd.f32 %v7881, %v8393
    %v8445 = vadd.f32 %v7882, %v8395
    %v8446 = vadd.f32 %v7883, %v8434
    %v8447 = vadd.f32 %v7884, %v8436
    %v8448 = vrot.slane %v327, 6
    %v8450 = vrot.slane %v585, 5
    %v8452 = vsel %vm589, %v8448, %v8450
    %v8453 = vpack.c.bf16 %v8452, %v8452
    %s8454 = scalar_lea.vmem [#allocation8], 7168
    %v8455 = vld [vmem:[%s8454] sm:$0xff]
    %v8456 = vld [vmem:[%s8454 + $0x8] sm:$0xff]
    %v8457 = vld [vmem:[%s8454 + $0x10] sm:$0xff]
    %v8458 = vld [vmem:[%s8454 + $0x18] sm:$0xff]
    %v8459 = vld [vmem:[%s8454 + $0x20] sm:$0xff]
    %v8460 = vld [vmem:[%s8454 + $0x28] sm:$0xff]
    %v8461 = vld [vmem:[%s8454 + $0x30] sm:$0xff]
    %v8462 = vld [vmem:[%s8454 + $0x38] sm:$0xff]
    %v8463 = vld [vmem:[%s8454 + $0x40] sm:$0xff]
    %v8464 = vld [vmem:[%s8454 + $0x48] sm:$0xff]
    %v8465 = vld [vmem:[%s8454 + $0x50] sm:$0xff]
    %v8466 = vld [vmem:[%s8454 + $0x58] sm:$0xff]
    %v8467 = vld [vmem:[%s8454 + $0x60] sm:$0xff]
    %v8468 = vld [vmem:[%s8454 + $0x68] sm:$0xff]
    %v8469 = vld [vmem:[%s8454 + $0x70] sm:$0xff]
    %v8470 = vld [vmem:[%s8454 + $0x78] sm:$0xff]
    %v8471 = vld [vmem:[%s8454 + $0x80] sm:$0xff]
    %v8472 = vld [vmem:[%s8454 + $0x88] sm:$0xff]
    %v8473 = vld [vmem:[%s8454 + $0x90] sm:$0xff]
    %v8474 = vld [vmem:[%s8454 + $0x98] sm:$0xff]
    %v8475 = vld [vmem:[%s8454 + $0xa0] sm:$0xff]
    %v8476 = vld [vmem:[%s8454 + $0xa8] sm:$0xff]
    %v8477 = vld [vmem:[%s8454 + $0xb0] sm:$0xff]
    %v8478 = vld [vmem:[%s8454 + $0xb8] sm:$0xff]
    %v8479 = vld [vmem:[%s8454 + $0xc0] sm:$0xff]
    %v8480 = vld [vmem:[%s8454 + $0xc8] sm:$0xff]
    %v8481 = vld [vmem:[%s8454 + $0xd0] sm:$0xff]
    %v8482 = vld [vmem:[%s8454 + $0xd8] sm:$0xff]
    %v8483 = vld [vmem:[%s8454 + $0xe0] sm:$0xff]
    %v8484 = vld [vmem:[%s8454 + $0xe8] sm:$0xff]
    %v8485 = vld [vmem:[%s8454 + $0xf0] sm:$0xff]
    %v8486 = vld [vmem:[%s8454 + $0xf8] sm:$0xff]
    %v8487 = vld [vmem:[%s8454 + $0x100] sm:$0xff]
    %v8488 = vld [vmem:[%s8454 + $0x108] sm:$0xff]
    %v8489 = vld [vmem:[%s8454 + $0x110] sm:$0xff]
    %v8490 = vld [vmem:[%s8454 + $0x118] sm:$0xff]
    %v8491 = vld [vmem:[%s8454 + $0x120] sm:$0xff]
    %v8492 = vld [vmem:[%s8454 + $0x128] sm:$0xff]
    %v8493 = vld [vmem:[%s8454 + $0x130] sm:$0xff]
    %v8494 = vld [vmem:[%s8454 + $0x138] sm:$0xff]
    %v8495 = vld [vmem:[%s8454 + $0x140] sm:$0xff]
    %v8496 = vld [vmem:[%s8454 + $0x148] sm:$0xff]
    %v8497 = vld [vmem:[%s8454 + $0x150] sm:$0xff]
    %v8498 = vld [vmem:[%s8454 + $0x158] sm:$0xff]
    %v8499 = vld [vmem:[%s8454 + $0x160] sm:$0xff]
    %v8500 = vld [vmem:[%s8454 + $0x168] sm:$0xff]
    %v8501 = vld [vmem:[%s8454 + $0x170] sm:$0xff]
    %v8502 = vld [vmem:[%s8454 + $0x178] sm:$0xff]
    %v8503 = vld [vmem:[%s8454 + $0x180] sm:$0xff]
    %v8504 = vld [vmem:[%s8454 + $0x188] sm:$0xff]
    %v8505 = vld [vmem:[%s8454 + $0x190] sm:$0xff]
    %v8506 = vld [vmem:[%s8454 + $0x198] sm:$0xff]
    %v8507 = vld [vmem:[%s8454 + $0x1a0] sm:$0xff]
    %v8508 = vld [vmem:[%s8454 + $0x1a8] sm:$0xff]
    %v8509 = vld [vmem:[%s8454 + $0x1b0] sm:$0xff]
    %v8510 = vld [vmem:[%s8454 + $0x1b8] sm:$0xff]
    %v8511 = vld [vmem:[%s8454 + $0x1c0] sm:$0xff]
    %v8512 = vld [vmem:[%s8454 + $0x1c8] sm:$0xff]
    %v8513 = vld [vmem:[%s8454 + $0x1d0] sm:$0xff]
    %v8514 = vld [vmem:[%s8454 + $0x1d8] sm:$0xff]
    %v8515 = vld [vmem:[%s8454 + $0x1e0] sm:$0xff]
    %v8516 = vld [vmem:[%s8454 + $0x1e8] sm:$0xff]
    %v8517 = vld [vmem:[%s8454 + $0x1f0] sm:$0xff]
    %v8518 = vld [vmem:[%s8454 + $0x1f8] sm:$0xff]
    %v8583 = vunpack.c.l.b16 %v8455
    %v8584 = vunpack.c.h.b16 %v8455
    %v8585 = vunpack.c.l.b16 %v8456
    %v8586 = vunpack.c.h.b16 %v8456
    %v8587 = vunpack.c.l.b16 %v8457
    %v8588 = vunpack.c.h.b16 %v8457
    %v8589 = vunpack.c.l.b16 %v8458
    %v8590 = vunpack.c.h.b16 %v8458
    %v8591 = vunpack.c.l.b16 %v8459
    %v8592 = vunpack.c.h.b16 %v8459
    %v8593 = vunpack.c.l.b16 %v8460
    %v8594 = vunpack.c.h.b16 %v8460
    %v8595 = vunpack.c.l.b16 %v8461
    %v8596 = vunpack.c.h.b16 %v8461
    %v8597 = vunpack.c.l.b16 %v8462
    %v8598 = vunpack.c.h.b16 %v8462
    %v8599 = vunpack.c.l.b16 %v8463
    %v8600 = vunpack.c.h.b16 %v8463
    %v8601 = vunpack.c.l.b16 %v8464
    %v8602 = vunpack.c.h.b16 %v8464
    %v8603 = vunpack.c.l.b16 %v8465
    %v8604 = vunpack.c.h.b16 %v8465
    %v8605 = vunpack.c.l.b16 %v8466
    %v8606 = vunpack.c.h.b16 %v8466
    %v8607 = vunpack.c.l.b16 %v8467
    %v8608 = vunpack.c.h.b16 %v8467
    %v8609 = vunpack.c.l.b16 %v8468
    %v8610 = vunpack.c.h.b16 %v8468
    %v8611 = vunpack.c.l.b16 %v8469
    %v8612 = vunpack.c.h.b16 %v8469
    %v8613 = vunpack.c.l.b16 %v8470
    %v8614 = vunpack.c.h.b16 %v8470
    %v8615 = vunpack.c.l.b16 %v8471
    %v8616 = vunpack.c.h.b16 %v8471
    %v8617 = vunpack.c.l.b16 %v8472
    %v8618 = vunpack.c.h.b16 %v8472
    %v8619 = vunpack.c.l.b16 %v8473
    %v8620 = vunpack.c.h.b16 %v8473
    %v8621 = vunpack.c.l.b16 %v8474
    %v8622 = vunpack.c.h.b16 %v8474
    %v8623 = vunpack.c.l.b16 %v8475
    %v8624 = vunpack.c.h.b16 %v8475
    %v8625 = vunpack.c.l.b16 %v8476
    %v8626 = vunpack.c.h.b16 %v8476
    %v8627 = vunpack.c.l.b16 %v8477
    %v8628 = vunpack.c.h.b16 %v8477
    %v8629 = vunpack.c.l.b16 %v8478
    %v8630 = vunpack.c.h.b16 %v8478
    %v8631 = vunpack.c.l.b16 %v8479
    %v8632 = vunpack.c.h.b16 %v8479
    %v8633 = vunpack.c.l.b16 %v8480
    %v8634 = vunpack.c.h.b16 %v8480
    %v8635 = vunpack.c.l.b16 %v8481
    %v8636 = vunpack.c.h.b16 %v8481
    %v8637 = vunpack.c.l.b16 %v8482
    %v8638 = vunpack.c.h.b16 %v8482
    %v8639 = vunpack.c.l.b16 %v8483
    %v8640 = vunpack.c.h.b16 %v8483
    %v8641 = vunpack.c.l.b16 %v8484
    %v8642 = vunpack.c.h.b16 %v8484
    %v8643 = vunpack.c.l.b16 %v8485
    %v8644 = vunpack.c.h.b16 %v8485
    %v8645 = vunpack.c.l.b16 %v8486
    %v8646 = vunpack.c.h.b16 %v8486
    %v8647 = vunpack.c.l.b16 %v8487
    %v8648 = vunpack.c.h.b16 %v8487
    %v8649 = vunpack.c.l.b16 %v8488
    %v8650 = vunpack.c.h.b16 %v8488
    %v8651 = vunpack.c.l.b16 %v8489
    %v8652 = vunpack.c.h.b16 %v8489
    %v8653 = vunpack.c.l.b16 %v8490
    %v8654 = vunpack.c.h.b16 %v8490
    %v8655 = vunpack.c.l.b16 %v8491
    %v8656 = vunpack.c.h.b16 %v8491
    %v8657 = vunpack.c.l.b16 %v8492
    %v8658 = vunpack.c.h.b16 %v8492
    %v8659 = vunpack.c.l.b16 %v8493
    %v8660 = vunpack.c.h.b16 %v8493
    %v8661 = vunpack.c.l.b16 %v8494
    %v8662 = vunpack.c.h.b16 %v8494
    %v8663 = vunpack.c.l.b16 %v8495
    %v8664 = vunpack.c.h.b16 %v8495
    %v8665 = vunpack.c.l.b16 %v8496
    %v8666 = vunpack.c.h.b16 %v8496
    %v8667 = vunpack.c.l.b16 %v8497
    %v8668 = vunpack.c.h.b16 %v8497
    %v8669 = vunpack.c.l.b16 %v8498
    %v8670 = vunpack.c.h.b16 %v8498
    %v8671 = vunpack.c.l.b16 %v8499
    %v8672 = vunpack.c.h.b16 %v8499
    %v8673 = vunpack.c.l.b16 %v8500
    %v8674 = vunpack.c.h.b16 %v8500
    %v8675 = vunpack.c.l.b16 %v8501
    %v8676 = vunpack.c.h.b16 %v8501
    %v8677 = vunpack.c.l.b16 %v8502
    %v8678 = vunpack.c.h.b16 %v8502
    %v8679 = vunpack.c.l.b16 %v8503
    %v8680 = vunpack.c.h.b16 %v8503
    %v8681 = vunpack.c.l.b16 %v8504
    %v8682 = vunpack.c.h.b16 %v8504
    %v8683 = vunpack.c.l.b16 %v8505
    %v8684 = vunpack.c.h.b16 %v8505
    %v8685 = vunpack.c.l.b16 %v8506
    %v8686 = vunpack.c.h.b16 %v8506
    %v8687 = vunpack.c.l.b16 %v8507
    %v8688 = vunpack.c.h.b16 %v8507
    %v8689 = vunpack.c.l.b16 %v8508
    %v8690 = vunpack.c.h.b16 %v8508
    %v8691 = vunpack.c.l.b16 %v8509
    %v8692 = vunpack.c.h.b16 %v8509
    %v8693 = vunpack.c.l.b16 %v8510
    %v8694 = vunpack.c.h.b16 %v8510
    %v8695 = vunpack.c.l.b16 %v8511
    %v8696 = vunpack.c.h.b16 %v8511
    %v8697 = vunpack.c.l.b16 %v8512
    %v8698 = vunpack.c.h.b16 %v8512
    %v8699 = vunpack.c.l.b16 %v8513
    %v8700 = vunpack.c.h.b16 %v8513
    %v8701 = vunpack.c.l.b16 %v8514
    %v8702 = vunpack.c.h.b16 %v8514
    %v8703 = vunpack.c.l.b16 %v8515
    %v8704 = vunpack.c.h.b16 %v8515
    %v8705 = vunpack.c.l.b16 %v8516
    %v8706 = vunpack.c.h.b16 %v8516
    %v8707 = vunpack.c.l.b16 %v8517
    %v8708 = vunpack.c.h.b16 %v8517
    %v8709 = vunpack.c.l.b16 %v8518
    %v8710 = vunpack.c.h.b16 %v8518
    %v8711 = vpack.c.b16 %v8591, %v8583
    %v8712 = vpack.c.b16 %v8592, %v8584
    %v8713 = vpack.c.b16 %v8593, %v8585
    %v8714 = vpack.c.b16 %v8594, %v8586
    %v8715 = vpack.c.b16 %v8595, %v8587
    %v8716 = vpack.c.b16 %v8596, %v8588
    %v8717 = vpack.c.b16 %v8597, %v8589
    %v8718 = vpack.c.b16 %v8598, %v8590
    %v8719 = vpack.c.b16 %v8607, %v8599
    %v8720 = vpack.c.b16 %v8608, %v8600
    %v8721 = vpack.c.b16 %v8609, %v8601
    %v8722 = vpack.c.b16 %v8610, %v8602
    %v8723 = vpack.c.b16 %v8611, %v8603
    %v8724 = vpack.c.b16 %v8612, %v8604
    %v8725 = vpack.c.b16 %v8613, %v8605
    %v8726 = vpack.c.b16 %v8614, %v8606
    %v8727 = vpack.c.b16 %v8623, %v8615
    %v8728 = vpack.c.b16 %v8624, %v8616
    %v8729 = vpack.c.b16 %v8625, %v8617
    %v8730 = vpack.c.b16 %v8626, %v8618
    %v8731 = vpack.c.b16 %v8627, %v8619
    %v8732 = vpack.c.b16 %v8628, %v8620
    %v8733 = vpack.c.b16 %v8629, %v8621
    %v8734 = vpack.c.b16 %v8630, %v8622
    %v8735 = vpack.c.b16 %v8639, %v8631
    %v8736 = vpack.c.b16 %v8640, %v8632
    %v8737 = vpack.c.b16 %v8641, %v8633
    %v8738 = vpack.c.b16 %v8642, %v8634
    %v8739 = vpack.c.b16 %v8643, %v8635
    %v8740 = vpack.c.b16 %v8644, %v8636
    %v8741 = vpack.c.b16 %v8645, %v8637
    %v8742 = vpack.c.b16 %v8646, %v8638
    %v8743 = vpack.c.b16 %v8655, %v8647
    %v8744 = vpack.c.b16 %v8656, %v8648
    %v8745 = vpack.c.b16 %v8657, %v8649
    %v8746 = vpack.c.b16 %v8658, %v8650
    %v8747 = vpack.c.b16 %v8659, %v8651
    %v8748 = vpack.c.b16 %v8660, %v8652
    %v8749 = vpack.c.b16 %v8661, %v8653
    %v8750 = vpack.c.b16 %v8662, %v8654
    %v8751 = vpack.c.b16 %v8671, %v8663
    %v8752 = vpack.c.b16 %v8672, %v8664
    %v8753 = vpack.c.b16 %v8673, %v8665
    %v8754 = vpack.c.b16 %v8674, %v8666
    %v8755 = vpack.c.b16 %v8675, %v8667
    %v8756 = vpack.c.b16 %v8676, %v8668
    %v8757 = vpack.c.b16 %v8677, %v8669
    %v8758 = vpack.c.b16 %v8678, %v8670
    %v8759 = vpack.c.b16 %v8687, %v8679
    %v8760 = vpack.c.b16 %v8688, %v8680
    %v8761 = vpack.c.b16 %v8689, %v8681
    %v8762 = vpack.c.b16 %v8690, %v8682
    %v8763 = vpack.c.b16 %v8691, %v8683
    %v8764 = vpack.c.b16 %v8692, %v8684
    %v8765 = vpack.c.b16 %v8693, %v8685
    %v8766 = vpack.c.b16 %v8694, %v8686
    %v8767 = vpack.c.b16 %v8703, %v8695
    %v8768 = vpack.c.b16 %v8704, %v8696
    %v8769 = vpack.c.b16 %v8705, %v8697
    %v8770 = vpack.c.b16 %v8706, %v8698
    %v8771 = vpack.c.b16 %v8707, %v8699
    %v8772 = vpack.c.b16 %v8708, %v8700
    %v8773 = vpack.c.b16 %v8709, %v8701
    %v8774 = vpack.c.b16 %v8710, %v8702
    %8839 = vmatprep.subr.bf16.mxu0 %v8768
    %8840 = vmatpush1.bf16.msra.mxu0 %v8767
    %8841 = vmatprep.subr.bf16.mxu0 %v8760
    %8842 = vmatpush1.bf16.msra.mxu0 %v8759
    %8843 = vmatprep.subr.bf16.mxu0 %v8752
    %8844 = vmatpush1.bf16.msra.mxu0 %v8751
    %8845 = vmatprep.subr.bf16.mxu0 %v8744
    %8846 = vmatpush1.bf16.msra.mxu0 %v8743
    %8847 = vmatprep.subr.bf16.mxu0 %v8736
    %8848 = vmatpush1.bf16.msra.mxu0 %v8735
    %8849 = vmatprep.subr.bf16.mxu0 %v8728
    %8850 = vmatpush1.bf16.msra.mxu0 %v8727
    %8851 = vmatprep.subr.bf16.mxu0 %v8720
    %8852 = vmatpush1.bf16.msra.mxu0 %v8719
    %8853 = vmatprep.subr.bf16.mxu0 %v8712
    %8854 = vmatpush1.bf16.msra.mxu0 %v8711
    %8855 = vmatprep.subr.bf16.mxu0 0
    %8856 = vmatpush2.bf16.msra.mxu0 0
    %8857 = vmatprep.subr.bf16.mxu0 0
    %8858 = vmatpush2.bf16.msra.mxu0 0
    %8859 = vmatprep.subr.bf16.mxu0 0
    %8860 = vmatpush2.bf16.msra.mxu0 0
    %8861 = vmatprep.subr.bf16.mxu0 0
    %8862 = vmatpush2.bf16.msra.mxu0 0
    %8863 = vmatprep.subr.bf16.mxu0 0
    %8864 = vmatpush2.bf16.msra.mxu0 0
    %8865 = vmatprep.subr.bf16.mxu0 0
    %8866 = vmatpush2.bf16.msra.mxu0 0
    %8867 = vmatprep.subr.bf16.mxu0 0
    %8868 = vmatpush2.bf16.msra.mxu0 0
    %8869 = vmatprep.subr.bf16.mxu0 0
    %8870 = vmatpush2.bf16.msra.mxu0 0
    %8871 = vmatprep.mubr.bf16.mxu0 0
    %8872 = vmatmul.mubr.bf16.gmra.mxu0 %v8453
    %v8873 = vpop.f32.mrf.mxu0
    %v8874 = vadd.f32 0.0, %v8873
    %v8875 = vpop.f32.mrf.mxu0
    %v8876 = vadd.f32 0.0, %v8875
    %v8877 = vpop.f32.mrf.mxu0
    %v8878 = vpop.f32.mrf.mxu0
    %8879 = vdwg.mxu0
    %8880 = vmatprep.subr.bf16.mxu0 %v8770
    %8881 = vmatpush1.bf16.msra.mxu0 %v8769
    %8882 = vmatprep.subr.bf16.mxu0 %v8762
    %8883 = vmatpush1.bf16.msra.mxu0 %v8761
    %8884 = vmatprep.subr.bf16.mxu0 %v8754
    %8885 = vmatpush1.bf16.msra.mxu0 %v8753
    %8886 = vmatprep.subr.bf16.mxu0 %v8746
    %8887 = vmatpush1.bf16.msra.mxu0 %v8745
    %8888 = vmatprep.subr.bf16.mxu0 %v8738
    %8889 = vmatpush1.bf16.msra.mxu0 %v8737
    %8890 = vmatprep.subr.bf16.mxu0 %v8730
    %8891 = vmatpush1.bf16.msra.mxu0 %v8729
    %8892 = vmatprep.subr.bf16.mxu0 %v8722
    %8893 = vmatpush1.bf16.msra.mxu0 %v8721
    %8894 = vmatprep.subr.bf16.mxu0 %v8714
    %8895 = vmatpush1.bf16.msra.mxu0 %v8713
    %8896 = vmatprep.subr.bf16.mxu0 0
    %8897 = vmatpush2.bf16.msra.mxu0 0
    %8898 = vmatprep.subr.bf16.mxu0 0
    %8899 = vmatpush2.bf16.msra.mxu0 0
    %8900 = vmatprep.subr.bf16.mxu0 0
    %8901 = vmatpush2.bf16.msra.mxu0 0
    %8902 = vmatprep.subr.bf16.mxu0 0
    %8903 = vmatpush2.bf16.msra.mxu0 0
    %8904 = vmatprep.subr.bf16.mxu0 0
    %8905 = vmatpush2.bf16.msra.mxu0 0
    %8906 = vmatprep.subr.bf16.mxu0 0
    %8907 = vmatpush2.bf16.msra.mxu0 0
    %8908 = vmatprep.subr.bf16.mxu0 0
    %8909 = vmatpush2.bf16.msra.mxu0 0
    %8910 = vmatprep.subr.bf16.mxu0 0
    %8911 = vmatpush2.bf16.msra.mxu0 0
    %8912 = vmatprep.mubr.bf16.mxu0 0
    %8913 = vmatmul.mubr.bf16.gmra.mxu0 %v8453
    %v8914 = vpop.f32.mrf.mxu0
    %v8915 = vadd.f32 0.0, %v8914
    %v8916 = vpop.f32.mrf.mxu0
    %v8917 = vadd.f32 0.0, %v8916
    %v8918 = vpop.f32.mrf.mxu0
    %v8919 = vpop.f32.mrf.mxu0
    %8920 = vdwg.mxu0
    %8921 = vmatprep.subr.bf16.mxu0 %v8772
    %8922 = vmatpush1.bf16.msra.mxu0 %v8771
    %8923 = vmatprep.subr.bf16.mxu0 %v8764
    %8924 = vmatpush1.bf16.msra.mxu0 %v8763
    %8925 = vmatprep.subr.bf16.mxu0 %v8756
    %8926 = vmatpush1.bf16.msra.mxu0 %v8755
    %8927 = vmatprep.subr.bf16.mxu0 %v8748
    %8928 = vmatpush1.bf16.msra.mxu0 %v8747
    %8929 = vmatprep.subr.bf16.mxu0 %v8740
    %8930 = vmatpush1.bf16.msra.mxu0 %v8739
    %8931 = vmatprep.subr.bf16.mxu0 %v8732
    %8932 = vmatpush1.bf16.msra.mxu0 %v8731
    %8933 = vmatprep.subr.bf16.mxu0 %v8724
    %8934 = vmatpush1.bf16.msra.mxu0 %v8723
    %8935 = vmatprep.subr.bf16.mxu0 %v8716
    %8936 = vmatpush1.bf16.msra.mxu0 %v8715
    %8937 = vmatprep.subr.bf16.mxu0 0
    %8938 = vmatpush2.bf16.msra.mxu0 0
    %8939 = vmatprep.subr.bf16.mxu0 0
    %8940 = vmatpush2.bf16.msra.mxu0 0
    %8941 = vmatprep.subr.bf16.mxu0 0
    %8942 = vmatpush2.bf16.msra.mxu0 0
    %8943 = vmatprep.subr.bf16.mxu0 0
    %8944 = vmatpush2.bf16.msra.mxu0 0
    %8945 = vmatprep.subr.bf16.mxu0 0
    %8946 = vmatpush2.bf16.msra.mxu0 0
    %8947 = vmatprep.subr.bf16.mxu0 0
    %8948 = vmatpush2.bf16.msra.mxu0 0
    %8949 = vmatprep.subr.bf16.mxu0 0
    %8950 = vmatpush2.bf16.msra.mxu0 0
    %8951 = vmatprep.subr.bf16.mxu0 0
    %8952 = vmatpush2.bf16.msra.mxu0 0
    %8953 = vmatprep.mubr.bf16.mxu0 0
    %8954 = vmatmul.mubr.bf16.gmra.mxu0 %v8453
    %v8955 = vpop.f32.mrf.mxu0
    %v8956 = vadd.f32 0.0, %v8955
    %v8957 = vpop.f32.mrf.mxu0
    %v8958 = vadd.f32 0.0, %v8957
    %v8959 = vpop.f32.mrf.mxu0
    %v8960 = vpop.f32.mrf.mxu0
    %8961 = vdwg.mxu0
    %8962 = vmatprep.subr.bf16.mxu0 %v8774
    %8963 = vmatpush1.bf16.msra.mxu0 %v8773
    %8964 = vmatprep.subr.bf16.mxu0 %v8766
    %8965 = vmatpush1.bf16.msra.mxu0 %v8765
    %8966 = vmatprep.subr.bf16.mxu0 %v8758
    %8967 = vmatpush1.bf16.msra.mxu0 %v8757
    %8968 = vmatprep.subr.bf16.mxu0 %v8750
    %8969 = vmatpush1.bf16.msra.mxu0 %v8749
    %8970 = vmatprep.subr.bf16.mxu0 %v8742
    %8971 = vmatpush1.bf16.msra.mxu0 %v8741
    %8972 = vmatprep.subr.bf16.mxu0 %v8734
    %8973 = vmatpush1.bf16.msra.mxu0 %v8733
    %8974 = vmatprep.subr.bf16.mxu0 %v8726
    %8975 = vmatpush1.bf16.msra.mxu0 %v8725
    %8976 = vmatprep.subr.bf16.mxu0 %v8718
    %8977 = vmatpush1.bf16.msra.mxu0 %v8717
    %8978 = vmatprep.subr.bf16.mxu0 0
    %8979 = vmatpush2.bf16.msra.mxu0 0
    %8980 = vmatprep.subr.bf16.mxu0 0
    %8981 = vmatpush2.bf16.msra.mxu0 0
    %8982 = vmatprep.subr.bf16.mxu0 0
    %8983 = vmatpush2.bf16.msra.mxu0 0
    %8984 = vmatprep.subr.bf16.mxu0 0
    %8985 = vmatpush2.bf16.msra.mxu0 0
    %8986 = vmatprep.subr.bf16.mxu0 0
    %8987 = vmatpush2.bf16.msra.mxu0 0
    %8988 = vmatprep.subr.bf16.mxu0 0
    %8989 = vmatpush2.bf16.msra.mxu0 0
    %8990 = vmatprep.subr.bf16.mxu0 0
    %8991 = vmatpush2.bf16.msra.mxu0 0
    %8992 = vmatprep.subr.bf16.mxu0 0
    %8993 = vmatpush2.bf16.msra.mxu0 0
    %8994 = vmatprep.mubr.bf16.mxu0 0
    %8995 = vmatmul.mubr.bf16.gmra.mxu0 %v8453
    %v8996 = vpop.f32.mrf.mxu0
    %v8997 = vadd.f32 0.0, %v8996
    %v8998 = vpop.f32.mrf.mxu0
    %v8999 = vadd.f32 0.0, %v8998
    %v9000 = vpop.f32.mrf.mxu0
    %v9001 = vpop.f32.mrf.mxu0
    %9002 = vdwg.mxu0
    %v9003 = vadd.f32 %v8440, %v8874
    %v9004 = vadd.f32 %v8441, %v8876
    %v9005 = vadd.f32 %v8442, %v8915
    %v9006 = vadd.f32 %v8443, %v8917
    %v9007 = vadd.f32 %v8444, %v8956
    %v9008 = vadd.f32 %v8445, %v8958
    %v9009 = vadd.f32 %v8446, %v8997
    %v9010 = vadd.f32 %v8447, %v8999
    %v9011 = vrot.slane %v327, 7
    %v9013 = vrot.slane %v585, 6
    %v9015 = vsel %vm589, %v9011, %v9013
    %v9016 = vpack.c.bf16 %v9015, %v9015
    %s9017 = scalar_lea.vmem [#allocation8], 7680
    %v9018 = vld [vmem:[%s9017] sm:$0xff]
    %v9019 = vld [vmem:[%s9017 + $0x8] sm:$0xff]
    %v9020 = vld [vmem:[%s9017 + $0x10] sm:$0xff]
    %v9021 = vld [vmem:[%s9017 + $0x18] sm:$0xff]
    %v9022 = vld [vmem:[%s9017 + $0x20] sm:$0xff]
    %v9023 = vld [vmem:[%s9017 + $0x28] sm:$0xff]
    %v9024 = vld [vmem:[%s9017 + $0x30] sm:$0xff]
    %v9025 = vld [vmem:[%s9017 + $0x38] sm:$0xff]
    %v9026 = vld [vmem:[%s9017 + $0x40] sm:$0xff]
    %v9027 = vld [vmem:[%s9017 + $0x48] sm:$0xff]
    %v9028 = vld [vmem:[%s9017 + $0x50] sm:$0xff]
    %v9029 = vld [vmem:[%s9017 + $0x58] sm:$0xff]
    %v9030 = vld [vmem:[%s9017 + $0x60] sm:$0xff]
    %v9031 = vld [vmem:[%s9017 + $0x68] sm:$0xff]
    %v9032 = vld [vmem:[%s9017 + $0x70] sm:$0xff]
    %v9033 = vld [vmem:[%s9017 + $0x78] sm:$0xff]
    %v9034 = vld [vmem:[%s9017 + $0x80] sm:$0xff]
    %v9035 = vld [vmem:[%s9017 + $0x88] sm:$0xff]
    %v9036 = vld [vmem:[%s9017 + $0x90] sm:$0xff]
    %v9037 = vld [vmem:[%s9017 + $0x98] sm:$0xff]
    %v9038 = vld [vmem:[%s9017 + $0xa0] sm:$0xff]
    %v9039 = vld [vmem:[%s9017 + $0xa8] sm:$0xff]
    %v9040 = vld [vmem:[%s9017 + $0xb0] sm:$0xff]
    %v9041 = vld [vmem:[%s9017 + $0xb8] sm:$0xff]
    %v9042 = vld [vmem:[%s9017 + $0xc0] sm:$0xff]
    %v9043 = vld [vmem:[%s9017 + $0xc8] sm:$0xff]
    %v9044 = vld [vmem:[%s9017 + $0xd0] sm:$0xff]
    %v9045 = vld [vmem:[%s9017 + $0xd8] sm:$0xff]
    %v9046 = vld [vmem:[%s9017 + $0xe0] sm:$0xff]
    %v9047 = vld [vmem:[%s9017 + $0xe8] sm:$0xff]
    %v9048 = vld [vmem:[%s9017 + $0xf0] sm:$0xff]
    %v9049 = vld [vmem:[%s9017 + $0xf8] sm:$0xff]
    %v9050 = vld [vmem:[%s9017 + $0x100] sm:$0xff]
    %v9051 = vld [vmem:[%s9017 + $0x108] sm:$0xff]
    %v9052 = vld [vmem:[%s9017 + $0x110] sm:$0xff]
    %v9053 = vld [vmem:[%s9017 + $0x118] sm:$0xff]
    %v9054 = vld [vmem:[%s9017 + $0x120] sm:$0xff]
    %v9055 = vld [vmem:[%s9017 + $0x128] sm:$0xff]
    %v9056 = vld [vmem:[%s9017 + $0x130] sm:$0xff]
    %v9057 = vld [vmem:[%s9017 + $0x138] sm:$0xff]
    %v9058 = vld [vmem:[%s9017 + $0x140] sm:$0xff]
    %v9059 = vld [vmem:[%s9017 + $0x148] sm:$0xff]
    %v9060 = vld [vmem:[%s9017 + $0x150] sm:$0xff]
    %v9061 = vld [vmem:[%s9017 + $0x158] sm:$0xff]
    %v9062 = vld [vmem:[%s9017 + $0x160] sm:$0xff]
    %v9063 = vld [vmem:[%s9017 + $0x168] sm:$0xff]
    %v9064 = vld [vmem:[%s9017 + $0x170] sm:$0xff]
    %v9065 = vld [vmem:[%s9017 + $0x178] sm:$0xff]
    %v9066 = vld [vmem:[%s9017 + $0x180] sm:$0xff]
    %v9067 = vld [vmem:[%s9017 + $0x188] sm:$0xff]
    %v9068 = vld [vmem:[%s9017 + $0x190] sm:$0xff]
    %v9069 = vld [vmem:[%s9017 + $0x198] sm:$0xff]
    %v9070 = vld [vmem:[%s9017 + $0x1a0] sm:$0xff]
    %v9071 = vld [vmem:[%s9017 + $0x1a8] sm:$0xff]
    %v9072 = vld [vmem:[%s9017 + $0x1b0] sm:$0xff]
    %v9073 = vld [vmem:[%s9017 + $0x1b8] sm:$0xff]
    %v9074 = vld [vmem:[%s9017 + $0x1c0] sm:$0xff]
    %v9075 = vld [vmem:[%s9017 + $0x1c8] sm:$0xff]
    %v9076 = vld [vmem:[%s9017 + $0x1d0] sm:$0xff]
    %v9077 = vld [vmem:[%s9017 + $0x1d8] sm:$0xff]
    %v9078 = vld [vmem:[%s9017 + $0x1e0] sm:$0xff]
    %v9079 = vld [vmem:[%s9017 + $0x1e8] sm:$0xff]
    %v9080 = vld [vmem:[%s9017 + $0x1f0] sm:$0xff]
    %v9081 = vld [vmem:[%s9017 + $0x1f8] sm:$0xff]
    %v9146 = vunpack.c.l.b16 %v9018
    %v9147 = vunpack.c.h.b16 %v9018
    %v9148 = vunpack.c.l.b16 %v9019
    %v9149 = vunpack.c.h.b16 %v9019
    %v9150 = vunpack.c.l.b16 %v9020
    %v9151 = vunpack.c.h.b16 %v9020
    %v9152 = vunpack.c.l.b16 %v9021
    %v9153 = vunpack.c.h.b16 %v9021
    %v9154 = vunpack.c.l.b16 %v9022
    %v9155 = vunpack.c.h.b16 %v9022
    %v9156 = vunpack.c.l.b16 %v9023
    %v9157 = vunpack.c.h.b16 %v9023
    %v9158 = vunpack.c.l.b16 %v9024
    %v9159 = vunpack.c.h.b16 %v9024
    %v9160 = vunpack.c.l.b16 %v9025
    %v9161 = vunpack.c.h.b16 %v9025
    %v9162 = vunpack.c.l.b16 %v9026
    %v9163 = vunpack.c.h.b16 %v9026
    %v9164 = vunpack.c.l.b16 %v9027
    %v9165 = vunpack.c.h.b16 %v9027
    %v9166 = vunpack.c.l.b16 %v9028
    %v9167 = vunpack.c.h.b16 %v9028
    %v9168 = vunpack.c.l.b16 %v9029
    %v9169 = vunpack.c.h.b16 %v9029
    %v9170 = vunpack.c.l.b16 %v9030
    %v9171 = vunpack.c.h.b16 %v9030
    %v9172 = vunpack.c.l.b16 %v9031
    %v9173 = vunpack.c.h.b16 %v9031
    %v9174 = vunpack.c.l.b16 %v9032
    %v9175 = vunpack.c.h.b16 %v9032
    %v9176 = vunpack.c.l.b16 %v9033
    %v9177 = vunpack.c.h.b16 %v9033
    %v9178 = vunpack.c.l.b16 %v9034
    %v9179 = vunpack.c.h.b16 %v9034
    %v9180 = vunpack.c.l.b16 %v9035
    %v9181 = vunpack.c.h.b16 %v9035
    %v9182 = vunpack.c.l.b16 %v9036
    %v9183 = vunpack.c.h.b16 %v9036
    %v9184 = vunpack.c.l.b16 %v9037
    %v9185 = vunpack.c.h.b16 %v9037
    %v9186 = vunpack.c.l.b16 %v9038
    %v9187 = vunpack.c.h.b16 %v9038
    %v9188 = vunpack.c.l.b16 %v9039
    %v9189 = vunpack.c.h.b16 %v9039
    %v9190 = vunpack.c.l.b16 %v9040
    %v9191 = vunpack.c.h.b16 %v9040
    %v9192 = vunpack.c.l.b16 %v9041
    %v9193 = vunpack.c.h.b16 %v9041
    %v9194 = vunpack.c.l.b16 %v9042
    %v9195 = vunpack.c.h.b16 %v9042
    %v9196 = vunpack.c.l.b16 %v9043
    %v9197 = vunpack.c.h.b16 %v9043
    %v9198 = vunpack.c.l.b16 %v9044
    %v9199 = vunpack.c.h.b16 %v9044
    %v9200 = vunpack.c.l.b16 %v9045
    %v9201 = vunpack.c.h.b16 %v9045
    %v9202 = vunpack.c.l.b16 %v9046
    %v9203 = vunpack.c.h.b16 %v9046
    %v9204 = vunpack.c.l.b16 %v9047
    %v9205 = vunpack.c.h.b16 %v9047
    %v9206 = vunpack.c.l.b16 %v9048
    %v9207 = vunpack.c.h.b16 %v9048
    %v9208 = vunpack.c.l.b16 %v9049
    %v9209 = vunpack.c.h.b16 %v9049
    %v9210 = vunpack.c.l.b16 %v9050
    %v9211 = vunpack.c.h.b16 %v9050
    %v9212 = vunpack.c.l.b16 %v9051
    %v9213 = vunpack.c.h.b16 %v9051
    %v9214 = vunpack.c.l.b16 %v9052
    %v9215 = vunpack.c.h.b16 %v9052
    %v9216 = vunpack.c.l.b16 %v9053
    %v9217 = vunpack.c.h.b16 %v9053
    %v9218 = vunpack.c.l.b16 %v9054
    %v9219 = vunpack.c.h.b16 %v9054
    %v9220 = vunpack.c.l.b16 %v9055
    %v9221 = vunpack.c.h.b16 %v9055
    %v9222 = vunpack.c.l.b16 %v9056
    %v9223 = vunpack.c.h.b16 %v9056
    %v9224 = vunpack.c.l.b16 %v9057
    %v9225 = vunpack.c.h.b16 %v9057
    %v9226 = vunpack.c.l.b16 %v9058
    %v9227 = vunpack.c.h.b16 %v9058
    %v9228 = vunpack.c.l.b16 %v9059
    %v9229 = vunpack.c.h.b16 %v9059
    %v9230 = vunpack.c.l.b16 %v9060
    %v9231 = vunpack.c.h.b16 %v9060
    %v9232 = vunpack.c.l.b16 %v9061
    %v9233 = vunpack.c.h.b16 %v9061
    %v9234 = vunpack.c.l.b16 %v9062
    %v9235 = vunpack.c.h.b16 %v9062
    %v9236 = vunpack.c.l.b16 %v9063
    %v9237 = vunpack.c.h.b16 %v9063
    %v9238 = vunpack.c.l.b16 %v9064
    %v9239 = vunpack.c.h.b16 %v9064
    %v9240 = vunpack.c.l.b16 %v9065
    %v9241 = vunpack.c.h.b16 %v9065
    %v9242 = vunpack.c.l.b16 %v9066
    %v9243 = vunpack.c.h.b16 %v9066
    %v9244 = vunpack.c.l.b16 %v9067
    %v9245 = vunpack.c.h.b16 %v9067
    %v9246 = vunpack.c.l.b16 %v9068
    %v9247 = vunpack.c.h.b16 %v9068
    %v9248 = vunpack.c.l.b16 %v9069
    %v9249 = vunpack.c.h.b16 %v9069
    %v9250 = vunpack.c.l.b16 %v9070
    %v9251 = vunpack.c.h.b16 %v9070
    %v9252 = vunpack.c.l.b16 %v9071
    %v9253 = vunpack.c.h.b16 %v9071
    %v9254 = vunpack.c.l.b16 %v9072
    %v9255 = vunpack.c.h.b16 %v9072
    %v9256 = vunpack.c.l.b16 %v9073
    %v9257 = vunpack.c.h.b16 %v9073
    %v9258 = vunpack.c.l.b16 %v9074
    %v9259 = vunpack.c.h.b16 %v9074
    %v9260 = vunpack.c.l.b16 %v9075
    %v9261 = vunpack.c.h.b16 %v9075
    %v9262 = vunpack.c.l.b16 %v9076
    %v9263 = vunpack.c.h.b16 %v9076
    %v9264 = vunpack.c.l.b16 %v9077
    %v9265 = vunpack.c.h.b16 %v9077
    %v9266 = vunpack.c.l.b16 %v9078
    %v9267 = vunpack.c.h.b16 %v9078
    %v9268 = vunpack.c.l.b16 %v9079
    %v9269 = vunpack.c.h.b16 %v9079
    %v9270 = vunpack.c.l.b16 %v9080
    %v9271 = vunpack.c.h.b16 %v9080
    %v9272 = vunpack.c.l.b16 %v9081
    %v9273 = vunpack.c.h.b16 %v9081
    %v9274 = vpack.c.b16 %v9154, %v9146
    %v9275 = vpack.c.b16 %v9155, %v9147
    %v9276 = vpack.c.b16 %v9156, %v9148
    %v9277 = vpack.c.b16 %v9157, %v9149
    %v9278 = vpack.c.b16 %v9158, %v9150
    %v9279 = vpack.c.b16 %v9159, %v9151
    %v9280 = vpack.c.b16 %v9160, %v9152
    %v9281 = vpack.c.b16 %v9161, %v9153
    %v9282 = vpack.c.b16 %v9170, %v9162
    %v9283 = vpack.c.b16 %v9171, %v9163
    %v9284 = vpack.c.b16 %v9172, %v9164
    %v9285 = vpack.c.b16 %v9173, %v9165
    %v9286 = vpack.c.b16 %v9174, %v9166
    %v9287 = vpack.c.b16 %v9175, %v9167
    %v9288 = vpack.c.b16 %v9176, %v9168
    %v9289 = vpack.c.b16 %v9177, %v9169
    %v9290 = vpack.c.b16 %v9186, %v9178
    %v9291 = vpack.c.b16 %v9187, %v9179
    %v9292 = vpack.c.b16 %v9188, %v9180
    %v9293 = vpack.c.b16 %v9189, %v9181
    %v9294 = vpack.c.b16 %v9190, %v9182
    %v9295 = vpack.c.b16 %v9191, %v9183
    %v9296 = vpack.c.b16 %v9192, %v9184
    %v9297 = vpack.c.b16 %v9193, %v9185
    %v9298 = vpack.c.b16 %v9202, %v9194
    %v9299 = vpack.c.b16 %v9203, %v9195
    %v9300 = vpack.c.b16 %v9204, %v9196
    %v9301 = vpack.c.b16 %v9205, %v9197
    %v9302 = vpack.c.b16 %v9206, %v9198
    %v9303 = vpack.c.b16 %v9207, %v9199
    %v9304 = vpack.c.b16 %v9208, %v9200
    %v9305 = vpack.c.b16 %v9209, %v9201
    %v9306 = vpack.c.b16 %v9218, %v9210
    %v9307 = vpack.c.b16 %v9219, %v9211
    %v9308 = vpack.c.b16 %v9220, %v9212
    %v9309 = vpack.c.b16 %v9221, %v9213
    %v9310 = vpack.c.b16 %v9222, %v9214
    %v9311 = vpack.c.b16 %v9223, %v9215
    %v9312 = vpack.c.b16 %v9224, %v9216
    %v9313 = vpack.c.b16 %v9225, %v9217
    %v9314 = vpack.c.b16 %v9234, %v9226
    %v9315 = vpack.c.b16 %v9235, %v9227
    %v9316 = vpack.c.b16 %v9236, %v9228
    %v9317 = vpack.c.b16 %v9237, %v9229
    %v9318 = vpack.c.b16 %v9238, %v9230
    %v9319 = vpack.c.b16 %v9239, %v9231
    %v9320 = vpack.c.b16 %v9240, %v9232
    %v9321 = vpack.c.b16 %v9241, %v9233
    %v9322 = vpack.c.b16 %v9250, %v9242
    %v9323 = vpack.c.b16 %v9251, %v9243
    %v9324 = vpack.c.b16 %v9252, %v9244
    %v9325 = vpack.c.b16 %v9253, %v9245
    %v9326 = vpack.c.b16 %v9254, %v9246
    %v9327 = vpack.c.b16 %v9255, %v9247
    %v9328 = vpack.c.b16 %v9256, %v9248
    %v9329 = vpack.c.b16 %v9257, %v9249
    %v9330 = vpack.c.b16 %v9266, %v9258
    %v9331 = vpack.c.b16 %v9267, %v9259
    %v9332 = vpack.c.b16 %v9268, %v9260
    %v9333 = vpack.c.b16 %v9269, %v9261
    %v9334 = vpack.c.b16 %v9270, %v9262
    %v9335 = vpack.c.b16 %v9271, %v9263
    %v9336 = vpack.c.b16 %v9272, %v9264
    %v9337 = vpack.c.b16 %v9273, %v9265
    %9402 = vmatprep.subr.bf16.mxu0 %v9331
    %9403 = vmatpush1.bf16.msra.mxu0 %v9330
    %9404 = vmatprep.subr.bf16.mxu0 %v9323
    %9405 = vmatpush1.bf16.msra.mxu0 %v9322
    %9406 = vmatprep.subr.bf16.mxu0 %v9315
    %9407 = vmatpush1.bf16.msra.mxu0 %v9314
    %9408 = vmatprep.subr.bf16.mxu0 %v9307
    %9409 = vmatpush1.bf16.msra.mxu0 %v9306
    %9410 = vmatprep.subr.bf16.mxu0 %v9299
    %9411 = vmatpush1.bf16.msra.mxu0 %v9298
    %9412 = vmatprep.subr.bf16.mxu0 %v9291
    %9413 = vmatpush1.bf16.msra.mxu0 %v9290
    %9414 = vmatprep.subr.bf16.mxu0 %v9283
    %9415 = vmatpush1.bf16.msra.mxu0 %v9282
    %9416 = vmatprep.subr.bf16.mxu0 %v9275
    %9417 = vmatpush1.bf16.msra.mxu0 %v9274
    %9418 = vmatprep.subr.bf16.mxu0 0
    %9419 = vmatpush2.bf16.msra.mxu0 0
    %9420 = vmatprep.subr.bf16.mxu0 0
    %9421 = vmatpush2.bf16.msra.mxu0 0
    %9422 = vmatprep.subr.bf16.mxu0 0
    %9423 = vmatpush2.bf16.msra.mxu0 0
    %9424 = vmatprep.subr.bf16.mxu0 0
    %9425 = vmatpush2.bf16.msra.mxu0 0
    %9426 = vmatprep.subr.bf16.mxu0 0
    %9427 = vmatpush2.bf16.msra.mxu0 0
    %9428 = vmatprep.subr.bf16.mxu0 0
    %9429 = vmatpush2.bf16.msra.mxu0 0
    %9430 = vmatprep.subr.bf16.mxu0 0
    %9431 = vmatpush2.bf16.msra.mxu0 0
    %9432 = vmatprep.subr.bf16.mxu0 0
    %9433 = vmatpush2.bf16.msra.mxu0 0
    %9434 = vmatprep.mubr.bf16.mxu0 0
    %9435 = vmatmul.mubr.bf16.gmra.mxu0 %v9016
    %v9436 = vpop.f32.mrf.mxu0
    %v9437 = vadd.f32 0.0, %v9436
    %v9438 = vpop.f32.mrf.mxu0
    %v9439 = vadd.f32 0.0, %v9438
    %v9440 = vpop.f32.mrf.mxu0
    %v9441 = vpop.f32.mrf.mxu0
    %9442 = vdwg.mxu0
    %9443 = vmatprep.subr.bf16.mxu0 %v9333
    %9444 = vmatpush1.bf16.msra.mxu0 %v9332
    %9445 = vmatprep.subr.bf16.mxu0 %v9325
    %9446 = vmatpush1.bf16.msra.mxu0 %v9324
    %9447 = vmatprep.subr.bf16.mxu0 %v9317
    %9448 = vmatpush1.bf16.msra.mxu0 %v9316
    %9449 = vmatprep.subr.bf16.mxu0 %v9309
    %9450 = vmatpush1.bf16.msra.mxu0 %v9308
    %9451 = vmatprep.subr.bf16.mxu0 %v9301
    %9452 = vmatpush1.bf16.msra.mxu0 %v9300
    %9453 = vmatprep.subr.bf16.mxu0 %v9293
    %9454 = vmatpush1.bf16.msra.mxu0 %v9292
    %9455 = vmatprep.subr.bf16.mxu0 %v9285
    %9456 = vmatpush1.bf16.msra.mxu0 %v9284
    %9457 = vmatprep.subr.bf16.mxu0 %v9277
    %9458 = vmatpush1.bf16.msra.mxu0 %v9276
    %9459 = vmatprep.subr.bf16.mxu0 0
    %9460 = vmatpush2.bf16.msra.mxu0 0
    %9461 = vmatprep.subr.bf16.mxu0 0
    %9462 = vmatpush2.bf16.msra.mxu0 0
    %9463 = vmatprep.subr.bf16.mxu0 0
    %9464 = vmatpush2.bf16.msra.mxu0 0
    %9465 = vmatprep.subr.bf16.mxu0 0
    %9466 = vmatpush2.bf16.msra.mxu0 0
    %9467 = vmatprep.subr.bf16.mxu0 0
    %9468 = vmatpush2.bf16.msra.mxu0 0
    %9469 = vmatprep.subr.bf16.mxu0 0
    %9470 = vmatpush2.bf16.msra.mxu0 0
    %9471 = vmatprep.subr.bf16.mxu0 0
    %9472 = vmatpush2.bf16.msra.mxu0 0
    %9473 = vmatprep.subr.bf16.mxu0 0
    %9474 = vmatpush2.bf16.msra.mxu0 0
    %9475 = vmatprep.mubr.bf16.mxu0 0
    %9476 = vmatmul.mubr.bf16.gmra.mxu0 %v9016
    %v9477 = vpop.f32.mrf.mxu0
    %v9478 = vadd.f32 0.0, %v9477
    %v9479 = vpop.f32.mrf.mxu0
    %v9480 = vadd.f32 0.0, %v9479
    %v9481 = vpop.f32.mrf.mxu0
    %v9482 = vpop.f32.mrf.mxu0
    %9483 = vdwg.mxu0
    %9484 = vmatprep.subr.bf16.mxu0 %v9335
    %9485 = vmatpush1.bf16.msra.mxu0 %v9334
    %9486 = vmatprep.subr.bf16.mxu0 %v9327
    %9487 = vmatpush1.bf16.msra.mxu0 %v9326
    %9488 = vmatprep.subr.bf16.mxu0 %v9319
    %9489 = vmatpush1.bf16.msra.mxu0 %v9318
    %9490 = vmatprep.subr.bf16.mxu0 %v9311
    %9491 = vmatpush1.bf16.msra.mxu0 %v9310
    %9492 = vmatprep.subr.bf16.mxu0 %v9303
    %9493 = vmatpush1.bf16.msra.mxu0 %v9302
    %9494 = vmatprep.subr.bf16.mxu0 %v9295
    %9495 = vmatpush1.bf16.msra.mxu0 %v9294
    %9496 = vmatprep.subr.bf16.mxu0 %v9287
    %9497 = vmatpush1.bf16.msra.mxu0 %v9286
    %9498 = vmatprep.subr.bf16.mxu0 %v9279
    %9499 = vmatpush1.bf16.msra.mxu0 %v9278
    %9500 = vmatprep.subr.bf16.mxu0 0
    %9501 = vmatpush2.bf16.msra.mxu0 0
    %9502 = vmatprep.subr.bf16.mxu0 0
    %9503 = vmatpush2.bf16.msra.mxu0 0
    %9504 = vmatprep.subr.bf16.mxu0 0
    %9505 = vmatpush2.bf16.msra.mxu0 0
    %9506 = vmatprep.subr.bf16.mxu0 0
    %9507 = vmatpush2.bf16.msra.mxu0 0
    %9508 = vmatprep.subr.bf16.mxu0 0
    %9509 = vmatpush2.bf16.msra.mxu0 0
    %9510 = vmatprep.subr.bf16.mxu0 0
    %9511 = vmatpush2.bf16.msra.mxu0 0
    %9512 = vmatprep.subr.bf16.mxu0 0
    %9513 = vmatpush2.bf16.msra.mxu0 0
    %9514 = vmatprep.subr.bf16.mxu0 0
    %9515 = vmatpush2.bf16.msra.mxu0 0
    %9516 = vmatprep.mubr.bf16.mxu0 0
    %9517 = vmatmul.mubr.bf16.gmra.mxu0 %v9016
    %v9518 = vpop.f32.mrf.mxu0
    %v9519 = vadd.f32 0.0, %v9518
    %v9520 = vpop.f32.mrf.mxu0
    %v9521 = vadd.f32 0.0, %v9520
    %v9522 = vpop.f32.mrf.mxu0
    %v9523 = vpop.f32.mrf.mxu0
    %9524 = vdwg.mxu0
    %9525 = vmatprep.subr.bf16.mxu0 %v9337
    %9526 = vmatpush1.bf16.msra.mxu0 %v9336
    %9527 = vmatprep.subr.bf16.mxu0 %v9329
    %9528 = vmatpush1.bf16.msra.mxu0 %v9328
    %9529 = vmatprep.subr.bf16.mxu0 %v9321
    %9530 = vmatpush1.bf16.msra.mxu0 %v9320
    %9531 = vmatprep.subr.bf16.mxu0 %v9313
    %9532 = vmatpush1.bf16.msra.mxu0 %v9312
    %9533 = vmatprep.subr.bf16.mxu0 %v9305
    %9534 = vmatpush1.bf16.msra.mxu0 %v9304
    %9535 = vmatprep.subr.bf16.mxu0 %v9297
    %9536 = vmatpush1.bf16.msra.mxu0 %v9296
    %9537 = vmatprep.subr.bf16.mxu0 %v9289
    %9538 = vmatpush1.bf16.msra.mxu0 %v9288
    %9539 = vmatprep.subr.bf16.mxu0 %v9281
    %9540 = vmatpush1.bf16.msra.mxu0 %v9280
    %9541 = vmatprep.subr.bf16.mxu0 0
    %9542 = vmatpush2.bf16.msra.mxu0 0
    %9543 = vmatprep.subr.bf16.mxu0 0
    %9544 = vmatpush2.bf16.msra.mxu0 0
    %9545 = vmatprep.subr.bf16.mxu0 0
    %9546 = vmatpush2.bf16.msra.mxu0 0
    %9547 = vmatprep.subr.bf16.mxu0 0
    %9548 = vmatpush2.bf16.msra.mxu0 0
    %9549 = vmatprep.subr.bf16.mxu0 0
    %9550 = vmatpush2.bf16.msra.mxu0 0
    %9551 = vmatprep.subr.bf16.mxu0 0
    %9552 = vmatpush2.bf16.msra.mxu0 0
    %9553 = vmatprep.subr.bf16.mxu0 0
    %9554 = vmatpush2.bf16.msra.mxu0 0
    %9555 = vmatprep.subr.bf16.mxu0 0
    %9556 = vmatpush2.bf16.msra.mxu0 0
    %9557 = vmatprep.mubr.bf16.mxu0 0
    %9558 = vmatmul.mubr.bf16.gmra.mxu0 %v9016
    %v9559 = vpop.f32.mrf.mxu0
    %v9560 = vadd.f32 0.0, %v9559
    %v9561 = vpop.f32.mrf.mxu0
    %v9562 = vadd.f32 0.0, %v9561
    %v9563 = vpop.f32.mrf.mxu0
    %v9564 = vpop.f32.mrf.mxu0
    %9565 = vdwg.mxu0
    %v9566 = vadd.f32 %v9003, %v9437
    %v9567 = vadd.f32 %v9004, %v9439
    %v9568 = vadd.f32 %v9005, %v9478
    %v9569 = vadd.f32 %v9006, %v9480
    %v9570 = vadd.f32 %v9007, %v9519
    %v9571 = vadd.f32 %v9008, %v9521
    %v9572 = vadd.f32 %v9009, %v9560
    %v9573 = vadd.f32 %v9010, %v9562
    %v9574 = vld [vmem:[#allocation10] sm:$0xff]
    %v9576 = vlaneseq
    %v9577 = vshrl.u32 %v9576, 7
    %v9578 = vsub.s32 0, %v9577
    %v9579 = vrot.slane %v9574, %v9578
    %v9580 = vlaneseq
    %v9581 = vshrl.u32 %v9580, 7
    %v9582 = vsub.s32 1, %v9581
    %v9583 = vrot.slane %v9574, %v9582
    %v9584 = vlaneseq
    %v9585 = vshrl.u32 %v9584, 7
    %v9586 = vsub.s32 2, %v9585
    %v9587 = vrot.slane %v9574, %v9586
    %v9588 = vlaneseq
    %v9589 = vshrl.u32 %v9588, 7
    %v9590 = vsub.s32 3, %v9589
    %v9591 = vrot.slane %v9574, %v9590
    %v9592 = vlaneseq
    %v9593 = vshrl.u32 %v9592, 7
    %v9594 = vsub.s32 4, %v9593
    %v9595 = vrot.slane %v9574, %v9594
    %v9596 = vlaneseq
    %v9597 = vshrl.u32 %v9596, 7
    %v9598 = vsub.s32 5, %v9597
    %v9599 = vrot.slane %v9574, %v9598
    %v9600 = vlaneseq
    %v9601 = vshrl.u32 %v9600, 7
    %v9602 = vsub.s32 6, %v9601
    %v9603 = vrot.slane %v9574, %v9602
    %v9604 = vlaneseq
    %v9605 = vshrl.u32 %v9604, 7
    %v9606 = vsub.s32 7, %v9605
    %v9607 = vrot.slane %v9574, %v9606
    %v9616 = vadd.f32 %v9566, %v9579
    %v9617 = vadd.f32 %v9567, %v9583
    %v9618 = vadd.f32 %v9568, %v9587
    %v9619 = vadd.f32 %v9569, %v9591
    %v9620 = vadd.f32 %v9570, %v9595
    %v9621 = vadd.f32 %v9571, %v9599
    %v9622 = vadd.f32 %v9572, %v9603
    %v9623 = vadd.f32 %v9573, %v9607
    %v9624 = vmax.f32 %v9616, 0.0
    %v9625 = vmax.f32 %v9617, 0.0
    %v9626 = vmax.f32 %v9618, 0.0
    %v9627 = vmax.f32 %v9619, 0.0
    %v9628 = vmax.f32 %v9620, 0.0
    %v9629 = vmax.f32 %v9621, 0.0
    %v9630 = vmax.f32 %v9622, 0.0
    %v9631 = vmax.f32 %v9623, 0.0
    %v9632 = vpack.c.bf16 %v9624, %v9624
    %v9633 = vpack.c.bf16 %v9625, %v9625
    %v9634 = vpack.c.bf16 %v9626, %v9626
    %v9635 = vpack.c.bf16 %v9627, %v9627
    %v9636 = vpack.c.bf16 %v9628, %v9628
    %v9637 = vpack.c.bf16 %v9629, %v9629
    %v9638 = vpack.c.bf16 %v9630, %v9630
    %v9639 = vpack.c.bf16 %v9631, %v9631
    %v9640 = vld [vmem:[#allocation11] sm:$0xf]
    %v9641 = vld [vmem:[#allocation11 + $0x4] sm:$0xf]
    %v9642 = vld [vmem:[#allocation11 + $0x8] sm:$0xf]
    %v9643 = vld [vmem:[#allocation11 + $0xc] sm:$0xf]
    %v9644 = vld [vmem:[#allocation11 + $0x10] sm:$0xf]
    %v9645 = vld [vmem:[#allocation11 + $0x14] sm:$0xf]
    %v9646 = vld [vmem:[#allocation11 + $0x18] sm:$0xf]
    %v9647 = vld [vmem:[#allocation11 + $0x1c] sm:$0xf]
    %v9648 = vld [vmem:[#allocation11 + $0x20] sm:$0xf]
    %v9649 = vld [vmem:[#allocation11 + $0x24] sm:$0xf]
    %v9650 = vld [vmem:[#allocation11 + $0x28] sm:$0xf]
    %v9651 = vld [vmem:[#allocation11 + $0x2c] sm:$0xf]
    %v9652 = vld [vmem:[#allocation11 + $0x30] sm:$0xf]
    %v9653 = vld [vmem:[#allocation11 + $0x34] sm:$0xf]
    %v9654 = vld [vmem:[#allocation11 + $0x38] sm:$0xf]
    %v9655 = vld [vmem:[#allocation11 + $0x3c] sm:$0xf]
    %v9656 = vld [vmem:[#allocation11 + $0x40] sm:$0xf]
    %v9657 = vld [vmem:[#allocation11 + $0x44] sm:$0xf]
    %v9658 = vld [vmem:[#allocation11 + $0x48] sm:$0xf]
    %v9659 = vld [vmem:[#allocation11 + $0x4c] sm:$0xf]
    %v9660 = vld [vmem:[#allocation11 + $0x50] sm:$0xf]
    %v9661 = vld [vmem:[#allocation11 + $0x54] sm:$0xf]
    %v9662 = vld [vmem:[#allocation11 + $0x58] sm:$0xf]
    %v9663 = vld [vmem:[#allocation11 + $0x5c] sm:$0xf]
    %v9664 = vld [vmem:[#allocation11 + $0x60] sm:$0xf]
    %v9665 = vld [vmem:[#allocation11 + $0x64] sm:$0xf]
    %v9666 = vld [vmem:[#allocation11 + $0x68] sm:$0xf]
    %v9667 = vld [vmem:[#allocation11 + $0x6c] sm:$0xf]
    %v9668 = vld [vmem:[#allocation11 + $0x70] sm:$0xf]
    %v9669 = vld [vmem:[#allocation11 + $0x74] sm:$0xf]
    %v9670 = vld [vmem:[#allocation11 + $0x78] sm:$0xf]
    %v9671 = vld [vmem:[#allocation11 + $0x7c] sm:$0xf]
    %v9672 = vld [vmem:[#allocation11 + $0x80] sm:$0xf]
    %v9673 = vld [vmem:[#allocation11 + $0x84] sm:$0xf]
    %v9674 = vld [vmem:[#allocation11 + $0x88] sm:$0xf]
    %v9675 = vld [vmem:[#allocation11 + $0x8c] sm:$0xf]
    %v9676 = vld [vmem:[#allocation11 + $0x90] sm:$0xf]
    %v9677 = vld [vmem:[#allocation11 + $0x94] sm:$0xf]
    %v9678 = vld [vmem:[#allocation11 + $0x98] sm:$0xf]
    %v9679 = vld [vmem:[#allocation11 + $0x9c] sm:$0xf]
    %v9680 = vld [vmem:[#allocation11 + $0xa0] sm:$0xf]
    %v9681 = vld [vmem:[#allocation11 + $0xa4] sm:$0xf]
    %v9682 = vld [vmem:[#allocation11 + $0xa8] sm:$0xf]
    %v9683 = vld [vmem:[#allocation11 + $0xac] sm:$0xf]
    %v9684 = vld [vmem:[#allocation11 + $0xb0] sm:$0xf]
    %v9685 = vld [vmem:[#allocation11 + $0xb4] sm:$0xf]
    %v9686 = vld [vmem:[#allocation11 + $0xb8] sm:$0xf]
    %v9687 = vld [vmem:[#allocation11 + $0xbc] sm:$0xf]
    %v9688 = vld [vmem:[#allocation11 + $0xc0] sm:$0xf]
    %v9689 = vld [vmem:[#allocation11 + $0xc4] sm:$0xf]
    %v9690 = vld [vmem:[#allocation11 + $0xc8] sm:$0xf]
    %v9691 = vld [vmem:[#allocation11 + $0xcc] sm:$0xf]
    %v9692 = vld [vmem:[#allocation11 + $0xd0] sm:$0xf]
    %v9693 = vld [vmem:[#allocation11 + $0xd4] sm:$0xf]
    %v9694 = vld [vmem:[#allocation11 + $0xd8] sm:$0xf]
    %v9695 = vld [vmem:[#allocation11 + $0xdc] sm:$0xf]
    %v9696 = vld [vmem:[#allocation11 + $0xe0] sm:$0xf]
    %v9697 = vld [vmem:[#allocation11 + $0xe4] sm:$0xf]
    %v9698 = vld [vmem:[#allocation11 + $0xe8] sm:$0xf]
    %v9699 = vld [vmem:[#allocation11 + $0xec] sm:$0xf]
    %v9700 = vld [vmem:[#allocation11 + $0xf0] sm:$0xf]
    %v9701 = vld [vmem:[#allocation11 + $0xf4] sm:$0xf]
    %v9702 = vld [vmem:[#allocation11 + $0xf8] sm:$0xf]
    %v9703 = vld [vmem:[#allocation11 + $0xfc] sm:$0xf]
    %v9704 = vld [vmem:[#allocation11 + $0x100] sm:$0xf]
    %v9705 = vld [vmem:[#allocation11 + $0x104] sm:$0xf]
    %v9706 = vld [vmem:[#allocation11 + $0x108] sm:$0xf]
    %v9707 = vld [vmem:[#allocation11 + $0x10c] sm:$0xf]
    %v9708 = vld [vmem:[#allocation11 + $0x110] sm:$0xf]
    %v9709 = vld [vmem:[#allocation11 + $0x114] sm:$0xf]
    %v9710 = vld [vmem:[#allocation11 + $0x118] sm:$0xf]
    %v9711 = vld [vmem:[#allocation11 + $0x11c] sm:$0xf]
    %v9712 = vld [vmem:[#allocation11 + $0x120] sm:$0xf]
    %v9713 = vld [vmem:[#allocation11 + $0x124] sm:$0xf]
    %v9714 = vld [vmem:[#allocation11 + $0x128] sm:$0xf]
    %v9715 = vld [vmem:[#allocation11 + $0x12c] sm:$0xf]
    %v9716 = vld [vmem:[#allocation11 + $0x130] sm:$0xf]
    %v9717 = vld [vmem:[#allocation11 + $0x134] sm:$0xf]
    %v9718 = vld [vmem:[#allocation11 + $0x138] sm:$0xf]
    %v9719 = vld [vmem:[#allocation11 + $0x13c] sm:$0xf]
    %v9720 = vld [vmem:[#allocation11 + $0x140] sm:$0xf]
    %v9721 = vld [vmem:[#allocation11 + $0x144] sm:$0xf]
    %v9722 = vld [vmem:[#allocation11 + $0x148] sm:$0xf]
    %v9723 = vld [vmem:[#allocation11 + $0x14c] sm:$0xf]
    %v9724 = vld [vmem:[#allocation11 + $0x150] sm:$0xf]
    %v9725 = vld [vmem:[#allocation11 + $0x154] sm:$0xf]
    %v9726 = vld [vmem:[#allocation11 + $0x158] sm:$0xf]
    %v9727 = vld [vmem:[#allocation11 + $0x15c] sm:$0xf]
    %v9728 = vld [vmem:[#allocation11 + $0x160] sm:$0xf]
    %v9729 = vld [vmem:[#allocation11 + $0x164] sm:$0xf]
    %v9730 = vld [vmem:[#allocation11 + $0x168] sm:$0xf]
    %v9731 = vld [vmem:[#allocation11 + $0x16c] sm:$0xf]
    %v9732 = vld [vmem:[#allocation11 + $0x170] sm:$0xf]
    %v9733 = vld [vmem:[#allocation11 + $0x174] sm:$0xf]
    %v9734 = vld [vmem:[#allocation11 + $0x178] sm:$0xf]
    %v9735 = vld [vmem:[#allocation11 + $0x17c] sm:$0xf]
    %v9736 = vld [vmem:[#allocation11 + $0x180] sm:$0xf]
    %v9737 = vld [vmem:[#allocation11 + $0x184] sm:$0xf]
    %v9738 = vld [vmem:[#allocation11 + $0x188] sm:$0xf]
    %v9739 = vld [vmem:[#allocation11 + $0x18c] sm:$0xf]
    %v9740 = vld [vmem:[#allocation11 + $0x190] sm:$0xf]
    %v9741 = vld [vmem:[#allocation11 + $0x194] sm:$0xf]
    %v9742 = vld [vmem:[#allocation11 + $0x198] sm:$0xf]
    %v9743 = vld [vmem:[#allocation11 + $0x19c] sm:$0xf]
    %v9744 = vld [vmem:[#allocation11 + $0x1a0] sm:$0xf]
    %v9745 = vld [vmem:[#allocation11 + $0x1a4] sm:$0xf]
    %v9746 = vld [vmem:[#allocation11 + $0x1a8] sm:$0xf]
    %v9747 = vld [vmem:[#allocation11 + $0x1ac] sm:$0xf]
    %v9748 = vld [vmem:[#allocation11 + $0x1b0] sm:$0xf]
    %v9749 = vld [vmem:[#allocation11 + $0x1b4] sm:$0xf]
    %v9750 = vld [vmem:[#allocation11 + $0x1b8] sm:$0xf]
    %v9751 = vld [vmem:[#allocation11 + $0x1bc] sm:$0xf]
    %v9752 = vld [vmem:[#allocation11 + $0x1c0] sm:$0xf]
    %v9753 = vld [vmem:[#allocation11 + $0x1c4] sm:$0xf]
    %v9754 = vld [vmem:[#allocation11 + $0x1c8] sm:$0xf]
    %v9755 = vld [vmem:[#allocation11 + $0x1cc] sm:$0xf]
    %v9756 = vld [vmem:[#allocation11 + $0x1d0] sm:$0xf]
    %v9757 = vld [vmem:[#allocation11 + $0x1d4] sm:$0xf]
    %v9758 = vld [vmem:[#allocation11 + $0x1d8] sm:$0xf]
    %v9759 = vld [vmem:[#allocation11 + $0x1dc] sm:$0xf]
    %v9760 = vld [vmem:[#allocation11 + $0x1e0] sm:$0xf]
    %v9761 = vld [vmem:[#allocation11 + $0x1e4] sm:$0xf]
    %v9762 = vld [vmem:[#allocation11 + $0x1e8] sm:$0xf]
    %v9763 = vld [vmem:[#allocation11 + $0x1ec] sm:$0xf]
    %v9764 = vld [vmem:[#allocation11 + $0x1f0] sm:$0xf]
    %v9765 = vld [vmem:[#allocation11 + $0x1f4] sm:$0xf]
    %v9766 = vld [vmem:[#allocation11 + $0x1f8] sm:$0xf]
    %v9767 = vld [vmem:[#allocation11 + $0x1fc] sm:$0xf]
    %v9768 = vld [vmem:[#allocation13] sm:$0x1]
    %v9770 = vlaneseq
    %v9771 = vshrl.u32 %v9770, 7
    %v9772 = vsub.s32 0, %v9771
    %v9773 = vrot.slane %v9768, %v9772
    %v9903 = vunpack.c.l.b16 %v9640
    %v9904 = vunpack.c.l.b16 %v9641
    %v9905 = vunpack.c.l.b16 %v9642
    %v9906 = vunpack.c.l.b16 %v9643
    %v9907 = vunpack.c.l.b16 %v9644
    %v9908 = vunpack.c.l.b16 %v9645
    %v9909 = vunpack.c.l.b16 %v9646
    %v9910 = vunpack.c.l.b16 %v9647
    %v9911 = vunpack.c.l.b16 %v9648
    %v9912 = vunpack.c.l.b16 %v9649
    %v9913 = vunpack.c.l.b16 %v9650
    %v9914 = vunpack.c.l.b16 %v9651
    %v9915 = vunpack.c.l.b16 %v9652
    %v9916 = vunpack.c.l.b16 %v9653
    %v9917 = vunpack.c.l.b16 %v9654
    %v9918 = vunpack.c.l.b16 %v9655
    %v9919 = vunpack.c.l.b16 %v9656
    %v9920 = vunpack.c.l.b16 %v9657
    %v9921 = vunpack.c.l.b16 %v9658
    %v9922 = vunpack.c.l.b16 %v9659
    %v9923 = vunpack.c.l.b16 %v9660
    %v9924 = vunpack.c.l.b16 %v9661
    %v9925 = vunpack.c.l.b16 %v9662
    %v9926 = vunpack.c.l.b16 %v9663
    %v9927 = vunpack.c.l.b16 %v9664
    %v9928 = vunpack.c.l.b16 %v9665
    %v9929 = vunpack.c.l.b16 %v9666
    %v9930 = vunpack.c.l.b16 %v9667
    %v9931 = vunpack.c.l.b16 %v9668
    %v9932 = vunpack.c.l.b16 %v9669
    %v9933 = vunpack.c.l.b16 %v9670
    %v9934 = vunpack.c.l.b16 %v9671
    %v9935 = vunpack.c.l.b16 %v9672
    %v9936 = vunpack.c.l.b16 %v9673
    %v9937 = vunpack.c.l.b16 %v9674
    %v9938 = vunpack.c.l.b16 %v9675
    %v9939 = vunpack.c.l.b16 %v9676
    %v9940 = vunpack.c.l.b16 %v9677
    %v9941 = vunpack.c.l.b16 %v9678
    %v9942 = vunpack.c.l.b16 %v9679
    %v9943 = vunpack.c.l.b16 %v9680
    %v9944 = vunpack.c.l.b16 %v9681
    %v9945 = vunpack.c.l.b16 %v9682
    %v9946 = vunpack.c.l.b16 %v9683
    %v9947 = vunpack.c.l.b16 %v9684
    %v9948 = vunpack.c.l.b16 %v9685
    %v9949 = vunpack.c.l.b16 %v9686
    %v9950 = vunpack.c.l.b16 %v9687
    %v9951 = vunpack.c.l.b16 %v9688
    %v9952 = vunpack.c.l.b16 %v9689
    %v9953 = vunpack.c.l.b16 %v9690
    %v9954 = vunpack.c.l.b16 %v9691
    %v9955 = vunpack.c.l.b16 %v9692
    %v9956 = vunpack.c.l.b16 %v9693
    %v9957 = vunpack.c.l.b16 %v9694
    %v9958 = vunpack.c.l.b16 %v9695
    %v9959 = vunpack.c.l.b16 %v9696
    %v9960 = vunpack.c.l.b16 %v9697
    %v9961 = vunpack.c.l.b16 %v9698
    %v9962 = vunpack.c.l.b16 %v9699
    %v9963 = vunpack.c.l.b16 %v9700
    %v9964 = vunpack.c.l.b16 %v9701
    %v9965 = vunpack.c.l.b16 %v9702
    %v9966 = vunpack.c.l.b16 %v9703
    %v9967 = vunpack.c.l.b16 %v9704
    %v9968 = vunpack.c.l.b16 %v9705
    %v9969 = vunpack.c.l.b16 %v9706
    %v9970 = vunpack.c.l.b16 %v9707
    %v9971 = vunpack.c.l.b16 %v9708
    %v9972 = vunpack.c.l.b16 %v9709
    %v9973 = vunpack.c.l.b16 %v9710
    %v9974 = vunpack.c.l.b16 %v9711
    %v9975 = vunpack.c.l.b16 %v9712
    %v9976 = vunpack.c.l.b16 %v9713
    %v9977 = vunpack.c.l.b16 %v9714
    %v9978 = vunpack.c.l.b16 %v9715
    %v9979 = vunpack.c.l.b16 %v9716
    %v9980 = vunpack.c.l.b16 %v9717
    %v9981 = vunpack.c.l.b16 %v9718
    %v9982 = vunpack.c.l.b16 %v9719
    %v9983 = vunpack.c.l.b16 %v9720
    %v9984 = vunpack.c.l.b16 %v9721
    %v9985 = vunpack.c.l.b16 %v9722
    %v9986 = vunpack.c.l.b16 %v9723
    %v9987 = vunpack.c.l.b16 %v9724
    %v9988 = vunpack.c.l.b16 %v9725
    %v9989 = vunpack.c.l.b16 %v9726
    %v9990 = vunpack.c.l.b16 %v9727
    %v9991 = vunpack.c.l.b16 %v9728
    %v9992 = vunpack.c.l.b16 %v9729
    %v9993 = vunpack.c.l.b16 %v9730
    %v9994 = vunpack.c.l.b16 %v9731
    %v9995 = vunpack.c.l.b16 %v9732
    %v9996 = vunpack.c.l.b16 %v9733
    %v9997 = vunpack.c.l.b16 %v9734
    %v9998 = vunpack.c.l.b16 %v9735
    %v9999 = vunpack.c.l.b16 %v9736
    %v10000 = vunpack.c.l.b16 %v9737
    %v10001 = vunpack.c.l.b16 %v9738
    %v10002 = vunpack.c.l.b16 %v9739
    %v10003 = vunpack.c.l.b16 %v9740
    %v10004 = vunpack.c.l.b16 %v9741
    %v10005 = vunpack.c.l.b16 %v9742
    %v10006 = vunpack.c.l.b16 %v9743
    %v10007 = vunpack.c.l.b16 %v9744
    %v10008 = vunpack.c.l.b16 %v9745
    %v10009 = vunpack.c.l.b16 %v9746
    %v10010 = vunpack.c.l.b16 %v9747
    %v10011 = vunpack.c.l.b16 %v9748
    %v10012 = vunpack.c.l.b16 %v9749
    %v10013 = vunpack.c.l.b16 %v9750
    %v10014 = vunpack.c.l.b16 %v9751
    %v10015 = vunpack.c.l.b16 %v9752
    %v10016 = vunpack.c.l.b16 %v9753
    %v10017 = vunpack.c.l.b16 %v9754
    %v10018 = vunpack.c.l.b16 %v9755
    %v10019 = vunpack.c.l.b16 %v9756
    %v10020 = vunpack.c.l.b16 %v9757
    %v10021 = vunpack.c.l.b16 %v9758
    %v10022 = vunpack.c.l.b16 %v9759
    %v10023 = vunpack.c.l.b16 %v9760
    %v10024 = vunpack.c.l.b16 %v9761
    %v10025 = vunpack.c.l.b16 %v9762
    %v10026 = vunpack.c.l.b16 %v9763
    %v10027 = vunpack.c.l.b16 %v9764
    %v10028 = vunpack.c.l.b16 %v9765
    %v10029 = vunpack.c.l.b16 %v9766
    %v10030 = vunpack.c.l.b16 %v9767
    %v10031 = vpack.c.b16 %v9904, %v9903
    %v10032 = vpack.c.b16 %v9906, %v9905
    %v10033 = vpack.c.b16 %v9908, %v9907
    %v10034 = vpack.c.b16 %v9910, %v9909
    %v10035 = vpack.c.b16 %v9912, %v9911
    %v10036 = vpack.c.b16 %v9914, %v9913
    %v10037 = vpack.c.b16 %v9916, %v9915
    %v10038 = vpack.c.b16 %v9918, %v9917
    %v10039 = vpack.c.b16 %v9920, %v9919
    %v10040 = vpack.c.b16 %v9922, %v9921
    %v10041 = vpack.c.b16 %v9924, %v9923
    %v10042 = vpack.c.b16 %v9926, %v9925
    %v10043 = vpack.c.b16 %v9928, %v9927
    %v10044 = vpack.c.b16 %v9930, %v9929
    %v10045 = vpack.c.b16 %v9932, %v9931
    %v10046 = vpack.c.b16 %v9934, %v9933
    %v10047 = vpack.c.b16 %v9936, %v9935
    %v10048 = vpack.c.b16 %v9938, %v9937
    %v10049 = vpack.c.b16 %v9940, %v9939
    %v10050 = vpack.c.b16 %v9942, %v9941
    %v10051 = vpack.c.b16 %v9944, %v9943
    %v10052 = vpack.c.b16 %v9946, %v9945
    %v10053 = vpack.c.b16 %v9948, %v9947
    %v10054 = vpack.c.b16 %v9950, %v9949
    %v10055 = vpack.c.b16 %v9952, %v9951
    %v10056 = vpack.c.b16 %v9954, %v9953
    %v10057 = vpack.c.b16 %v9956, %v9955
    %v10058 = vpack.c.b16 %v9958, %v9957
    %v10059 = vpack.c.b16 %v9960, %v9959
    %v10060 = vpack.c.b16 %v9962, %v9961
    %v10061 = vpack.c.b16 %v9964, %v9963
    %v10062 = vpack.c.b16 %v9966, %v9965
    %v10063 = vpack.c.b16 %v9968, %v9967
    %v10064 = vpack.c.b16 %v9970, %v9969
    %v10065 = vpack.c.b16 %v9972, %v9971
    %v10066 = vpack.c.b16 %v9974, %v9973
    %v10067 = vpack.c.b16 %v9976, %v9975
    %v10068 = vpack.c.b16 %v9978, %v9977
    %v10069 = vpack.c.b16 %v9980, %v9979
    %v10070 = vpack.c.b16 %v9982, %v9981
    %v10071 = vpack.c.b16 %v9984, %v9983
    %v10072 = vpack.c.b16 %v9986, %v9985
    %v10073 = vpack.c.b16 %v9988, %v9987
    %v10074 = vpack.c.b16 %v9990, %v9989
    %v10075 = vpack.c.b16 %v9992, %v9991
    %v10076 = vpack.c.b16 %v9994, %v9993
    %v10077 = vpack.c.b16 %v9996, %v9995
    %v10078 = vpack.c.b16 %v9998, %v9997
    %v10079 = vpack.c.b16 %v10000, %v9999
    %v10080 = vpack.c.b16 %v10002, %v10001
    %v10081 = vpack.c.b16 %v10004, %v10003
    %v10082 = vpack.c.b16 %v10006, %v10005
    %v10083 = vpack.c.b16 %v10008, %v10007
    %v10084 = vpack.c.b16 %v10010, %v10009
    %v10085 = vpack.c.b16 %v10012, %v10011
    %v10086 = vpack.c.b16 %v10014, %v10013
    %v10087 = vpack.c.b16 %v10016, %v10015
    %v10088 = vpack.c.b16 %v10018, %v10017
    %v10089 = vpack.c.b16 %v10020, %v10019
    %v10090 = vpack.c.b16 %v10022, %v10021
    %v10091 = vpack.c.b16 %v10024, %v10023
    %v10092 = vpack.c.b16 %v10026, %v10025
    %v10093 = vpack.c.b16 %v10028, %v10027
    %v10094 = vpack.c.b16 %v10030, %v10029
    %10159 = vmatprep.subr.bf16.mxu0 0
    %10160 = vmatpush1.bf16.msra.mxu0 %v10038
    %10161 = vmatprep.subr.bf16.mxu0 0
    %10162 = vmatpush1.bf16.msra.mxu0 %v10037
    %10163 = vmatprep.subr.bf16.mxu0 0
    %10164 = vmatpush1.bf16.msra.mxu0 %v10036
    %10165 = vmatprep.subr.bf16.mxu0 0
    %10166 = vmatpush1.bf16.msra.mxu0 %v10035
    %10167 = vmatprep.subr.bf16.mxu0 0
    %10168 = vmatpush1.bf16.msra.mxu0 %v10034
    %10169 = vmatprep.subr.bf16.mxu0 0
    %10170 = vmatpush1.bf16.msra.mxu0 %v10033
    %10171 = vmatprep.subr.bf16.mxu0 0
    %10172 = vmatpush1.bf16.msra.mxu0 %v10032
    %10173 = vmatprep.subr.bf16.mxu0 0
    %10174 = vmatpush1.bf16.msra.mxu0 %v10031
    %10175 = vmatprep.subr.bf16.mxu0 0
    %10176 = vmatpush2.bf16.msra.mxu0 %v10046
    %10177 = vmatprep.subr.bf16.mxu0 0
    %10178 = vmatpush2.bf16.msra.mxu0 %v10045
    %10179 = vmatprep.subr.bf16.mxu0 0
    %10180 = vmatpush2.bf16.msra.mxu0 %v10044
    %10181 = vmatprep.subr.bf16.mxu0 0
    %10182 = vmatpush2.bf16.msra.mxu0 %v10043
    %10183 = vmatprep.subr.bf16.mxu0 0
    %10184 = vmatpush2.bf16.msra.mxu0 %v10042
    %10185 = vmatprep.subr.bf16.mxu0 0
    %10186 = vmatpush2.bf16.msra.mxu0 %v10041
    %10187 = vmatprep.subr.bf16.mxu0 0
    %10188 = vmatpush2.bf16.msra.mxu0 %v10040
    %10189 = vmatprep.subr.bf16.mxu0 0
    %10190 = vmatpush2.bf16.msra.mxu0 %v10039
    %10191 = vmatprep.mubr.bf16.mxu0 %v9633
    %10192 = vmatmul.mubr.bf16.gmra.mxu0 %v9632
    %v10193 = vpop.f32.mrf.mxu0
    %v10194 = vadd.f32 %v9773, %v10193
    %v10195 = vpop.f32.mrf.mxu0
    %v10196 = vpop.f32.mrf.mxu0
    %v10197 = vpop.f32.mrf.mxu0
    %10198 = vdwg.mxu0
    %10199 = vmatprep.subr.bf16.mxu0 0
    %10200 = vmatpush1.bf16.msra.mxu0 %v10054
    %10201 = vmatprep.subr.bf16.mxu0 0
    %10202 = vmatpush1.bf16.msra.mxu0 %v10053
    %10203 = vmatprep.subr.bf16.mxu0 0
    %10204 = vmatpush1.bf16.msra.mxu0 %v10052
    %10205 = vmatprep.subr.bf16.mxu0 0
    %10206 = vmatpush1.bf16.msra.mxu0 %v10051
    %10207 = vmatprep.subr.bf16.mxu0 0
    %10208 = vmatpush1.bf16.msra.mxu0 %v10050
    %10209 = vmatprep.subr.bf16.mxu0 0
    %10210 = vmatpush1.bf16.msra.mxu0 %v10049
    %10211 = vmatprep.subr.bf16.mxu0 0
    %10212 = vmatpush1.bf16.msra.mxu0 %v10048
    %10213 = vmatprep.subr.bf16.mxu0 0
    %10214 = vmatpush1.bf16.msra.mxu0 %v10047
    %10215 = vmatprep.subr.bf16.mxu0 0
    %10216 = vmatpush2.bf16.msra.mxu0 %v10062
    %10217 = vmatprep.subr.bf16.mxu0 0
    %10218 = vmatpush2.bf16.msra.mxu0 %v10061
    %10219 = vmatprep.subr.bf16.mxu0 0
    %10220 = vmatpush2.bf16.msra.mxu0 %v10060
    %10221 = vmatprep.subr.bf16.mxu0 0
    %10222 = vmatpush2.bf16.msra.mxu0 %v10059
    %10223 = vmatprep.subr.bf16.mxu0 0
    %10224 = vmatpush2.bf16.msra.mxu0 %v10058
    %10225 = vmatprep.subr.bf16.mxu0 0
    %10226 = vmatpush2.bf16.msra.mxu0 %v10057
    %10227 = vmatprep.subr.bf16.mxu0 0
    %10228 = vmatpush2.bf16.msra.mxu0 %v10056
    %10229 = vmatprep.subr.bf16.mxu0 0
    %10230 = vmatpush2.bf16.msra.mxu0 %v10055
    %10231 = vmatprep.mubr.bf16.mxu0 %v9635
    %10232 = vmatmul.mubr.bf16.gmra.mxu0 %v9634
    %v10233 = vpop.f32.mrf.mxu0
    %v10234 = vadd.f32 %v10194, %v10233
    %v10235 = vpop.f32.mrf.mxu0
    %v10236 = vpop.f32.mrf.mxu0
    %v10237 = vpop.f32.mrf.mxu0
    %10238 = vdwg.mxu0
    %10239 = vmatprep.subr.bf16.mxu0 0
    %10240 = vmatpush1.bf16.msra.mxu0 %v10070
    %10241 = vmatprep.subr.bf16.mxu0 0
    %10242 = vmatpush1.bf16.msra.mxu0 %v10069
    %10243 = vmatprep.subr.bf16.mxu0 0
    %10244 = vmatpush1.bf16.msra.mxu0 %v10068
    %10245 = vmatprep.subr.bf16.mxu0 0
    %10246 = vmatpush1.bf16.msra.mxu0 %v10067
    %10247 = vmatprep.subr.bf16.mxu0 0
    %10248 = vmatpush1.bf16.msra.mxu0 %v10066
    %10249 = vmatprep.subr.bf16.mxu0 0
    %10250 = vmatpush1.bf16.msra.mxu0 %v10065
    %10251 = vmatprep.subr.bf16.mxu0 0
    %10252 = vmatpush1.bf16.msra.mxu0 %v10064
    %10253 = vmatprep.subr.bf16.mxu0 0
    %10254 = vmatpush1.bf16.msra.mxu0 %v10063
    %10255 = vmatprep.subr.bf16.mxu0 0
    %10256 = vmatpush2.bf16.msra.mxu0 %v10078
    %10257 = vmatprep.subr.bf16.mxu0 0
    %10258 = vmatpush2.bf16.msra.mxu0 %v10077
    %10259 = vmatprep.subr.bf16.mxu0 0
    %10260 = vmatpush2.bf16.msra.mxu0 %v10076
    %10261 = vmatprep.subr.bf16.mxu0 0
    %10262 = vmatpush2.bf16.msra.mxu0 %v10075
    %10263 = vmatprep.subr.bf16.mxu0 0
    %10264 = vmatpush2.bf16.msra.mxu0 %v10074
    %10265 = vmatprep.subr.bf16.mxu0 0
    %10266 = vmatpush2.bf16.msra.mxu0 %v10073
    %10267 = vmatprep.subr.bf16.mxu0 0
    %10268 = vmatpush2.bf16.msra.mxu0 %v10072
    %10269 = vmatprep.subr.bf16.mxu0 0
    %10270 = vmatpush2.bf16.msra.mxu0 %v10071
    %10271 = vmatprep.mubr.bf16.mxu0 %v9637
    %10272 = vmatmul.mubr.bf16.gmra.mxu0 %v9636
    %v10273 = vpop.f32.mrf.mxu0
    %v10274 = vadd.f32 %v10234, %v10273
    %v10275 = vpop.f32.mrf.mxu0
    %v10276 = vpop.f32.mrf.mxu0
    %v10277 = vpop.f32.mrf.mxu0
    %10278 = vdwg.mxu0
    %10279 = vmatprep.subr.bf16.mxu0 0
    %10280 = vmatpush1.bf16.msra.mxu0 %v10086
    %10281 = vmatprep.subr.bf16.mxu0 0
    %10282 = vmatpush1.bf16.msra.mxu0 %v10085
    %10283 = vmatprep.subr.bf16.mxu0 0
    %10284 = vmatpush1.bf16.msra.mxu0 %v10084
    %10285 = vmatprep.subr.bf16.mxu0 0
    %10286 = vmatpush1.bf16.msra.mxu0 %v10083
    %10287 = vmatprep.subr.bf16.mxu0 0
    %10288 = vmatpush1.bf16.msra.mxu0 %v10082
    %10289 = vmatprep.subr.bf16.mxu0 0
    %10290 = vmatpush1.bf16.msra.mxu0 %v10081
    %10291 = vmatprep.subr.bf16.mxu0 0
    %10292 = vmatpush1.bf16.msra.mxu0 %v10080
    %10293 = vmatprep.subr.bf16.mxu0 0
    %10294 = vmatpush1.bf16.msra.mxu0 %v10079
    %10295 = vmatprep.subr.bf16.mxu0 0
    %10296 = vmatpush2.bf16.msra.mxu0 %v10094
    %10297 = vmatprep.subr.bf16.mxu0 0
    %10298 = vmatpush2.bf16.msra.mxu0 %v10093
    %10299 = vmatprep.subr.bf16.mxu0 0
    %10300 = vmatpush2.bf16.msra.mxu0 %v10092
    %10301 = vmatprep.subr.bf16.mxu0 0
    %10302 = vmatpush2.bf16.msra.mxu0 %v10091
    %10303 = vmatprep.subr.bf16.mxu0 0
    %10304 = vmatpush2.bf16.msra.mxu0 %v10090
    %10305 = vmatprep.subr.bf16.mxu0 0
    %10306 = vmatpush2.bf16.msra.mxu0 %v10089
    %10307 = vmatprep.subr.bf16.mxu0 0
    %10308 = vmatpush2.bf16.msra.mxu0 %v10088
    %10309 = vmatprep.subr.bf16.mxu0 0
    %10310 = vmatpush2.bf16.msra.mxu0 %v10087
    %10311 = vmatprep.mubr.bf16.mxu0 %v9639
    %10312 = vmatmul.mubr.bf16.gmra.mxu0 %v9638
    %v10313 = vpop.f32.mrf.mxu0
    %v10314 = vadd.f32 %v10274, %v10313
    %v10315 = vpop.f32.mrf.mxu0
    %v10316 = vpop.f32.mrf.mxu0
    %v10317 = vpop.f32.mrf.mxu0
    %10318 = vdwg.mxu0
    %10319 = vst [vmem:[#allocation14] sm:$0x3] %v10314
    // Predicated region
    $region62: #{inception_aux_forward.1} parent=1 // pred_check
      _
    $region63: #{inception_aux_forward.1} parent=1 // pred_check_branch
      %10321 = sbr.rel (0) target = $region65
    $region64: #{inception_aux_forward.1} parent=1 // pred_region
      %s10323 = ssub.s32 32, 32
      %10324 = vsyncadd [#allocation4], %s10323
      %s10326 = sshll.u32 [#allocation14], 4
      %s10327 = int_to_ptr.vmem [resolvable:$true] %s10326
      %10329 = dma.vmem_to_hbm [thread:$0]  %s10327, 32, %s8, [#allocation4]
    $region65: #{inception_aux_forward.1} parent=1 // pred_fallthru
      _
    // Predicated region
    $region66: #{inception_aux_forward.1} parent=1 // pred_check
      _
    $region67: #{inception_aux_forward.1} parent=1 // pred_check_branch
      %10331 = sbr.rel (0) target = $region69
    $region68: #{inception_aux_forward.1} parent=1 // pred_region
      %10332 = dma.done [#allocation4], 32
    $region69: #{inception_aux_forward.1} parent=1 // pred_fallthru
      _
    %10333 = vsyncpa [#allocation3], 1
    %10334 = vsyncpa [#allocation6], 1
    %10335 = vsyncpa [#allocation9], 1
    %10336 = vsyncpa [#allocation12], 1
    %10337 = vsyncpa [#allocation4], 1

</llo_original>
